<compile_context>
chip_gen: v5e
topology: v5e:2x2
jax: 0.10.0
libtpu: 0.0.40
codegen_flags: <defaults>
</compile_context>

<pallas_src>
import jax
import jax.numpy as jnp
from jax.experimental import pallas as pl
from jax.experimental.pallas import tpu as pltpu


def vbmlp_kernel(x_ref, w1_ref, b1_ref, w2_ref, b2_ref,
                 mu_ref, sigma_ref, eps_ref, w3_ref, b3_ref,
                 out_ref, acc_ref):
    # x_ref:    (TB, D_in)  bf16   resident across the reduction grid
    # w1_ref:   (D_in, tk)  bf16   contiguous chunk-major slab of l1 weight
    # b1_ref:   (1, tk)     f32    matching bias chunk
    # w2_ref:   (tk, H)     bf16   row chunk of l2 weight
    # b2_ref:   (1, H)      f32
    # mu/sigma: (1, H)      f32    eps_ref: (TB, H) f32
    # w3_ref:   (H, C_pad)  bf16   b3_ref: (1, C_pad) f32
    # out_ref:  (TB, C_pad) f32    acc_ref: (TB, H) f32 VMEM scratch
    k = pl.program_id(0)

    @pl.when(k == 0)
    def _():
        acc_ref[...] = jnp.zeros_like(acc_ref)

    # l1 chunk + ReLU:  h1_chunk = relu(x @ w1[:, chunk] + b1[chunk])
    h1c = jnp.dot(x_ref[...], w1_ref[...],
                  preferred_element_type=jnp.float32) + b1_ref[...]
    h1c = jnp.maximum(h1c, 0.0)

    # l2 partial reduction over hidden chunks:  acc += h1_chunk @ w2[chunk, :]
    acc_ref[...] += jnp.dot(h1c.astype(w2_ref.dtype), w2_ref[...],
                            preferred_element_type=jnp.float32)

    @pl.when(k == pl.num_programs(0) - 1)
    def _():
        # l2 bias + ReLU
        h2 = jnp.maximum(acc_ref[...] + b2_ref[...], 0.0)
        # Variational bottleneck: per-unit multiplicative Gaussian gate.
        z = h2 * (mu_ref[...] + sigma_ref[...] * eps_ref[...])
        # l3 (logits), lane-dense padded output block (unmasked stores).
        logits = jnp.dot(z.astype(w3_ref.dtype), w3_ref[...],
                         preferred_element_type=jnp.float32) + b3_ref[...]
        out_ref[...] = logits.astype(out_ref.dtype)


def pick_tk(width):
    """Reduction tile: 512 everywhere; whole-width (grid=1) on v6e/v7x where the
    full bf16 weight set + double buffers fits the 32 MiB scoped-VMEM budget."""
    tk = 512
    try:
        kind = jax.devices()[0].device_kind.lower()
    except Exception:
        kind = ""
    if ("v6" in kind) or ("v7" in kind):
        tk = 1024
    tk = min(tk, width)
    while width % tk:
        tk //= 2
    return max(tk, 1)


def prepare_params(params, *, tk):
    """One-time relayout/cast of the params into kernel layout.

    Do this where the params live (once), NOT per forward call:
      * l3 weight/bias padded to a lane-dense 128-class block,
      * w1 stored chunk-major (H//tk, D_in, tk) so each grid step's w1 DMA is
        a single contiguous HBM slab,
      * matmul operands cast to bf16 (f32 accumulation happens on the MXU).
    """
    w1, b1, w2, b2, mu, sigma, w3, b3 = params
    d_in, h = w1.shape
    c = w3.shape[1]
    assert h % tk == 0, "hidden width must be divisible by the reduction tile"

    c_pad = max(128, ((c + 127) // 128) * 128)
    if c_pad != c:
        w3 = jnp.pad(w3, ((0, 0), (0, c_pad - c)))
        b3 = jnp.pad(b3, ((0, 0), (0, c_pad - c)))

    wdt = jnp.bfloat16
    w1c = jnp.transpose(w1.reshape(d_in, h // tk, tk), (1, 0, 2)).astype(wdt)

    return dict(w1c=w1c, b1=b1, w2=w2.astype(wdt), b2=b2, mu=mu, sigma=sigma,
                w3=w3.astype(wdt), b3=b3, num_classes=c)


def vbmlp_forward(x_flat, prepped, eps):
    """x_flat: (B, D_in) f32; eps: (B, H) f32.  Returns (B, num_classes) f32."""
    w1c, b1 = prepped["w1c"], prepped["b1"]
    w2, b2 = prepped["w2"], prepped["b2"]
    mu, sigma = prepped["mu"], prepped["sigma"]
    w3, b3 = prepped["w3"], prepped["b3"]
    C = prepped["num_classes"]

    B, D_in = x_flat.shape
    n_chunks, _, tk = w1c.shape
    H = n_chunks * tk
    C_pad = w3.shape[1]

    # Pad batch rows to a 16-row tile (full bf16 sublane packing).
    TB = max(16, ((B + 15) // 16) * 16)
    if TB != B:
        x_flat = jnp.pad(x_flat, ((0, TB - B), (0, 0)))
        eps = jnp.pad(eps, ((0, TB - B), (0, 0)))
    x_bf = x_flat.astype(jnp.bfloat16)

    const2d = lambda shape: pl.BlockSpec(shape, lambda k: (0, 0))

    # Advisory cost estimate so XLA schedules around the custom call correctly.
    flops = 2 * TB * (D_in * H + H * H + H * C_pad)
    bytes_accessed = (
        2 * (D_in * H + H * H + H * C_pad)   # bf16 weights
        + 2 * TB * D_in                      # bf16 x
        + 4 * TB * H                         # f32 eps
        + 4 * (4 * H + 2 * C_pad)            # biases / mu / sigma (approx)
        + 4 * TB * C_pad)                    # f32 logits out

    out = pl.pallas_call(
        vbmlp_kernel,
        out_shape=jax.ShapeDtypeStruct((TB, C_pad), jnp.float32),
        grid_spec=pltpu.PrefetchScalarGridSpec(
            num_scalar_prefetch=0,
            grid=(n_chunks,),
            in_specs=[
                const2d((TB, D_in)),                          # x (resident)
                pl.BlockSpec((pl.Squeezed(), D_in, tk),
                             lambda k: (k, 0, 0)),            # w1 contiguous chunk
                pl.BlockSpec((1, tk), lambda k: (0, k)),      # b1 chunk
                pl.BlockSpec((tk, H), lambda k: (k, 0)),      # w2 row chunk
                const2d((1, H)),                              # b2
                const2d((1, H)),                              # mu
                const2d((1, H)),                              # sigma
                const2d((TB, H)),                             # eps
                const2d((H, C_pad)),                          # w3
                const2d((1, C_pad)),                          # b3
            ],
            out_specs=pl.BlockSpec((TB, C_pad), lambda k: (0, 0)),
            scratch_shapes=[pltpu.VMEM((TB, H), jnp.float32)],
        ),
        compiler_params=pltpu.CompilerParams(
            dimension_semantics=("arbitrary",),       # hidden-reduction axis
            vmem_limit_bytes=32 * 1024 * 1024),
        cost_estimate=pl.CostEstimate(flops=flops, transcendentals=0,
                                      bytes_accessed=bytes_accessed),
    )(x_bf, w1c, b1, w2, b2, mu, sigma, eps, w3, b3)

    return out[:B, :C]


def init_params(key, d_in, width, num_classes):
    ks = jax.random.split(key, 8)

    # Roughly PyTorch-Linear-scaled init (uniform +-1/sqrt(fan_in)).
    def lin(kw, kb, fan_in, fan_out):
        bound = 1.0 / jnp.sqrt(fan_in)
        w = jax.random.uniform(kw, (fan_in, fan_out), jnp.float32, -bound, bound)
        b = jax.random.uniform(kb, (1, fan_out), jnp.float32, -bound, bound)
        return w, b

    w1, b1 = lin(ks[0], ks[1], d_in, width)
    w2, b2 = lin(ks[2], ks[3], width, width)
    w3, b3 = lin(ks[4], ks[5], width, num_classes)
    # VB parameters: gate mean ~1, small positive sigma.
    mu = jnp.ones((1, width), jnp.float32) \
        + 0.01 * jax.random.normal(ks[6], (1, width), jnp.float32)
    sigma = 0.1 * jnp.abs(jax.random.normal(ks[7], (1, width), jnp.float32)) + 0.01
    return (w1, b1, w2, b2, mu, sigma, w3, b3)


if __name__ == "__main__":
    key = jax.random.PRNGKey(0)
    k_x, k_p, k_eps = jax.random.split(key, 3)

    B = 2
    C_in, H_img, W_img = 3, 32, 32          # data_shape from the module
    D_in = C_in * H_img * W_img             # 3072
    WIDTH = 1024                            # module default width
    NUM_CLASSES = 10

    x = jax.random.normal(k_x, (B, C_in, H_img, W_img), jnp.float32)  # NCHW
    x_flat = x.reshape(B, D_in)             # nn.Flatten (row-major == torch)

    params = init_params(k_p, D_in, WIDTH, NUM_CLASSES)
    # eps for the (is_freeze=False) stochastic path, sampled deterministically.
    eps = jax.random.normal(k_eps, (B, WIDTH), jnp.float32)

    tk = pick_tk(WIDTH)
    prepped = prepare_params(params, tk=tk)   # one-time weight relayout/cast

    out = vbmlp_forward(x_flat, prepped, eps)
    out = jax.block_until_ready(out)

    # Pure-JAX reference with the SAME bf16 weight/activation casts the kernel
    # performs (f32 accumulation everywhere).
    w1, b1, w2, b2, mu, sigma, w3, b3 = params
    xb = x_flat.astype(jnp.bfloat16)
    h1 = jnp.maximum(
        jnp.dot(xb, w1.astype(jnp.bfloat16),
                preferred_element_type=jnp.float32) + b1, 0.0)
    h2 = jnp.maximum(
        jnp.dot(h1.astype(jnp.bfloat16), w2.astype(jnp.bfloat16),
                preferred_element_type=jnp.float32) + b2, 0.0)
    z = h2 * (mu + sigma * eps)
    ref = jnp.dot(z.astype(jnp.bfloat16), w3.astype(jnp.bfloat16),
                  preferred_element_type=jnp.float32) + b3

    assert out.shape == (B, NUM_CLASSES)
    assert jnp.allclose(out, ref, atol=1e-2, rtol=1e-2), \
        f"max abs err {jnp.max(jnp.abs(out - ref))}"

    print("KERNEL_OK")
</pallas_src>

<mosaic_0001>
module attributes {stable_mosaic.version = 11 : i64} {
  func.func @vbmlp_kernel(%arg0: i32, %arg1: memref<16x3072xbf16, #tpu.memory_space<vmem>>, %arg2: memref<1x3072x512xbf16, #tpu.memory_space<vmem>>, %arg3: memref<1x512xf32, #tpu.memory_space<vmem>>, %arg4: memref<512x1024xbf16, #tpu.memory_space<vmem>>, %arg5: memref<1x1024xf32, #tpu.memory_space<vmem>>, %arg6: memref<1x1024xf32, #tpu.memory_space<vmem>>, %arg7: memref<1x1024xf32, #tpu.memory_space<vmem>>, %arg8: memref<16x1024xf32, #tpu.memory_space<vmem>>, %arg9: memref<1024x128xbf16, #tpu.memory_space<vmem>>, %arg10: memref<1x128xf32, #tpu.memory_space<vmem>>, %arg11: memref<16x128xf32, #tpu.memory_space<vmem>>, %arg12: memref<16x1024xf32, #tpu.memory_space<vmem>>) attributes {dimension_semantics = [#tpu.dimension_semantics<arbitrary>], iteration_bounds = array<i64: 2>, scalar_prefetch = 0 : i64, scratch_operands = 1 : i64, tpu.core_type = #tpu.core_type<tc>, window_params = [{pipeline_mode = #tpu.pipeline_mode<synchronous>, transform_indices = @transform_0, window_bounds = array<i64: 16, 3072>}, {transform_indices = @transform_1, window_bounds = array<i64: 1, 3072, 512>}, {transform_indices = @transform_2, window_bounds = array<i64: 1, 512>}, {transform_indices = @transform_3, window_bounds = array<i64: 512, 1024>}, {pipeline_mode = #tpu.pipeline_mode<synchronous>, transform_indices = @transform_4, window_bounds = array<i64: 1, 1024>}, {pipeline_mode = #tpu.pipeline_mode<synchronous>, transform_indices = @transform_5, window_bounds = array<i64: 1, 1024>}, {pipeline_mode = #tpu.pipeline_mode<synchronous>, transform_indices = @transform_6, window_bounds = array<i64: 1, 1024>}, {pipeline_mode = #tpu.pipeline_mode<synchronous>, transform_indices = @transform_7, window_bounds = array<i64: 16, 1024>}, {pipeline_mode = #tpu.pipeline_mode<synchronous>, transform_indices = @transform_8, window_bounds = array<i64: 1024, 128>}, {pipeline_mode = #tpu.pipeline_mode<synchronous>, transform_indices = @transform_9, window_bounds = array<i64: 1, 128>}, {pipeline_mode = #tpu.pipeline_mode<synchronous>, transform_indices = @transform_10, window_bounds = array<i64: 16, 128>}]} {
    %c0_i32 = arith.constant 0 : i32
    %0 = arith.cmpi eq, %arg0, %c0_i32 : i32
    %1 = arith.extui %0 : i1 to i32
    %c0_i32_0 = arith.constant 0 : i32
    %2 = arith.cmpi ne, %1, %c0_i32_0 : i32
    scf.if %2 {
      %cst_16 = arith.constant 0.000000e+00 : f32
      %21 = vector.broadcast %cst_16 : f32 to vector<16x1024xf32>
      %c0_17 = arith.constant 0 : index
      %c0_18 = arith.constant 0 : index
      %22 = vector.load %arg12[%c0_17, %c0_18] : memref<16x1024xf32, #tpu.memory_space<vmem>>, vector<16x1024xf32>
      tpu.vector_store %arg12[%c0_17, %c0_18], %21 {strides = array<i32>} : memref<16x1024xf32, #tpu.memory_space<vmem>>, vector<16x1024xf32>,
    } else {
    }
    %c0 = arith.constant 0 : index
    %c0_1 = arith.constant 0 : index
    %3 = vector.load %arg1[%c0, %c0_1] : memref<16x3072xbf16, #tpu.memory_space<vmem>>, vector<16x3072xbf16>
    %c0_2 = arith.constant 0 : index
    %c0_3 = arith.constant 0 : index
    %c0_4 = arith.constant 0 : index
    %4 = vector.load %arg2[%c0_2, %c0_3, %c0_4] : memref<1x3072x512xbf16, #tpu.memory_space<vmem>>, vector<1x3072x512xbf16>
    %5 = vector.shape_cast %4 : vector<1x3072x512xbf16> to vector<3072x512xbf16>
    %cst = arith.constant dense<0.000000e+00> : vector<16x512xf32>
    %6 = tpu.matmul %3, %5, %cst {dimension_numbers = #tpu.dot_dimension_numbers<[1], [0], [0], [1], [0, 0, 1, 1], [], []>} : vector<16x3072xbf16>, vector<3072x512xbf16>, vector<16x512xf32> -> vector<16x512xf32>
    %c0_5 = arith.constant 0 : index
    %c0_6 = arith.constant 0 : index
    %7 = vector.load %arg3[%c0_5, %c0_6] : memref<1x512xf32, #tpu.memory_space<vmem>>, vector<1x512xf32>
    %8 = vector.broadcast %7 : vector<1x512xf32> to vector<16x512xf32>
    %9 = arith.addf %6, %8 : vector<16x512xf32>
    %cst_7 = arith.constant 0.000000e+00 : f32
    %10 = vector.broadcast %cst_7 : f32 to vector<16x512xf32>
    %11 = arith.maximumf %9, %10 : vector<16x512xf32>
    %c0_8 = arith.constant 0 : index
    %c0_9 = arith.constant 0 : index
    %12 = vector.load %arg12[%c0_8, %c0_9] : memref<16x1024xf32, #tpu.memory_space<vmem>>, vector<16x1024xf32>
    %13 = arith.truncf %11 : vector<16x512xf32> to vector<16x512xbf16>
    %c0_10 = arith.constant 0 : index
    %c0_11 = arith.constant 0 : index
    %14 = vector.load %arg4[%c0_10, %c0_11] : memref<512x1024xbf16, #tpu.memory_space<vmem>>, vector<512x1024xbf16>
    %cst_12 = arith.constant dense<0.000000e+00> : vector<16x1024xf32>
    %15 = tpu.matmul %13, %14, %cst_12 {dimension_numbers = #tpu.dot_dimension_numbers<[1], [0], [0], [1], [0, 0, 1, 1], [], []>} : vector<16x512xbf16>, vector<512x1024xbf16>, vector<16x1024xf32> -> vector<16x1024xf32>
    %16 = arith.addf %12, %15 : vector<16x1024xf32>
    %c0_13 = arith.constant 0 : index
    %c0_14 = arith.constant 0 : index
    %17 = vector.load %arg12[%c0_13, %c0_14] : memref<16x1024xf32, #tpu.memory_space<vmem>>, vector<16x1024xf32>
    tpu.vector_store %arg12[%c0_13, %c0_14], %16 {strides = array<i32>} : memref<16x1024xf32, #tpu.memory_space<vmem>>, vector<16x1024xf32>,
    %c1_i32 = arith.constant 1 : i32
    %18 = arith.cmpi eq, %arg0, %c1_i32 : i32
    %19 = arith.extui %18 : i1 to i32
    %c0_i32_15 = arith.constant 0 : i32
    %20 = arith.cmpi ne, %19, %c0_i32_15 : i32
    scf.if %20 {
      %c0_16 = arith.constant 0 : index
      %c0_17 = arith.constant 0 : index
      %21 = vector.load %arg12[%c0_16, %c0_17] : memref<16x1024xf32, #tpu.memory_space<vmem>>, vector<16x1024xf32>
      %c0_18 = arith.constant 0 : index
      %c0_19 = arith.constant 0 : index
      %22 = vector.load %arg5[%c0_18, %c0_19] : memref<1x1024xf32, #tpu.memory_space<vmem>>, vector<1x1024xf32>
      %23 = vector.broadcast %22 : vector<1x1024xf32> to vector<16x1024xf32>
      %24 = arith.addf %21, %23 : vector<16x1024xf32>
      %cst_20 = arith.constant 0.000000e+00 : f32
      %25 = vector.broadcast %cst_20 : f32 to vector<16x1024xf32>
      %26 = arith.maximumf %24, %25 : vector<16x1024xf32>
      %c0_21 = arith.constant 0 : index
      %c0_22 = arith.constant 0 : index
      %27 = vector.load %arg6[%c0_21, %c0_22] : memref<1x1024xf32, #tpu.memory_space<vmem>>, vector<1x1024xf32>
      %c0_23 = arith.constant 0 : index
      %c0_24 = arith.constant 0 : index
      %28 = vector.load %arg7[%c0_23, %c0_24] : memref<1x1024xf32, #tpu.memory_space<vmem>>, vector<1x1024xf32>
      %c0_25 = arith.constant 0 : index
      %c0_26 = arith.constant 0 : index
      %29 = vector.load %arg8[%c0_25, %c0_26] : memref<16x1024xf32, #tpu.memory_space<vmem>>, vector<16x1024xf32>
      %30 = vector.broadcast %28 : vector<1x1024xf32> to vector<16x1024xf32>
      %31 = arith.mulf %30, %29 : vector<16x1024xf32>
      %32 = vector.broadcast %27 : vector<1x1024xf32> to vector<16x1024xf32>
      %33 = arith.addf %32, %31 : vector<16x1024xf32>
      %34 = arith.mulf %26, %33 : vector<16x1024xf32>
      %35 = arith.truncf %34 : vector<16x1024xf32> to vector<16x1024xbf16>
      %c0_27 = arith.constant 0 : index
      %c0_28 = arith.constant 0 : index
      %36 = vector.load %arg9[%c0_27, %c0_28] : memref<1024x128xbf16, #tpu.memory_space<vmem>>, vector<1024x128xbf16>
      %cst_29 = arith.constant dense<0.000000e+00> : vector<16x128xf32>
      %37 = tpu.matmul %35, %36, %cst_29 {dimension_numbers = #tpu.dot_dimension_numbers<[1], [0], [0], [1], [0, 0, 1, 1], [], []>} : vector<16x1024xbf16>, vector<1024x128xbf16>, vector<16x128xf32> -> vector<16x128xf32>
      %c0_30 = arith.constant 0 : index
      %c0_31 = arith.constant 0 : index
      %38 = vector.load %arg10[%c0_30, %c0_31] : memref<1x128xf32, #tpu.memory_space<vmem>>, vector<1x128xf32>
      %39 = vector.broadcast %38 : vector<1x128xf32> to vector<16x128xf32>
      %40 = arith.addf %37, %39 : vector<16x128xf32>
      %c0_32 = arith.constant 0 : index
      %c0_33 = arith.constant 0 : index
      %41 = vector.load %arg11[%c0_32, %c0_33] : memref<16x128xf32, #tpu.memory_space<vmem>>, vector<16x128xf32>
      tpu.vector_store %arg11[%c0_32, %c0_33], %40 {strides = array<i32>} : memref<16x128xf32, #tpu.memory_space<vmem>>, vector<16x128xf32>,
    } else {
    }
    return
  }
  func.func @transform_0(%arg0: i32) -> (i32, i32) {
    %c0_i32 = arith.constant 0 : i32
    %c0_i32_0 = arith.constant 0 : i32
    %c0_i32_1 = arith.constant 0 : i32
    return %c0_i32, %c0_i32_0 : i32, i32
  }
  func.func @transform_1(%arg0: i32) -> (i32, i32, i32) {
    %c0_i32 = arith.constant 0 : i32
    %c0_i32_0 = arith.constant 0 : i32
    %c0_i32_1 = arith.constant 0 : i32
    return %arg0, %c0_i32, %c0_i32_0 : i32, i32, i32
  }
  func.func @transform_2(%arg0: i32) -> (i32, i32) {
    %c0_i32 = arith.constant 0 : i32
    %c0_i32_0 = arith.constant 0 : i32
    return %c0_i32, %arg0 : i32, i32
  }
  func.func @transform_3(%arg0: i32) -> (i32, i32) {
    %c0_i32 = arith.constant 0 : i32
    %c0_i32_0 = arith.constant 0 : i32
    return %arg0, %c0_i32 : i32, i32
  }
  func.func @transform_4(%arg0: i32) -> (i32, i32) {
    %c0_i32 = arith.constant 0 : i32
    %c0_i32_0 = arith.constant 0 : i32
    %c0_i32_1 = arith.constant 0 : i32
    return %c0_i32, %c0_i32_0 : i32, i32
  }
  func.func @transform_5(%arg0: i32) -> (i32, i32) {
    %c0_i32 = arith.constant 0 : i32
    %c0_i32_0 = arith.constant 0 : i32
    %c0_i32_1 = arith.constant 0 : i32
    return %c0_i32, %c0_i32_0 : i32, i32
  }
  func.func @transform_6(%arg0: i32) -> (i32, i32) {
    %c0_i32 = arith.constant 0 : i32
    %c0_i32_0 = arith.constant 0 : i32
    %c0_i32_1 = arith.constant 0 : i32
    return %c0_i32, %c0_i32_0 : i32, i32
  }
  func.func @transform_7(%arg0: i32) -> (i32, i32) {
    %c0_i32 = arith.constant 0 : i32
    %c0_i32_0 = arith.constant 0 : i32
    %c0_i32_1 = arith.constant 0 : i32
    return %c0_i32, %c0_i32_0 : i32, i32
  }
  func.func @transform_8(%arg0: i32) -> (i32, i32) {
    %c0_i32 = arith.constant 0 : i32
    %c0_i32_0 = arith.constant 0 : i32
    %c0_i32_1 = arith.constant 0 : i32
    return %c0_i32, %c0_i32_0 : i32, i32
  }
  func.func @transform_9(%arg0: i32) -> (i32, i32) {
    %c0_i32 = arith.constant 0 : i32
    %c0_i32_0 = arith.constant 0 : i32
    %c0_i32_1 = arith.constant 0 : i32
    return %c0_i32, %c0_i32_0 : i32, i32
  }
  func.func @transform_10(%arg0: i32) -> (i32, i32) {
    %c0_i32 = arith.constant 0 : i32
    %c0_i32_0 = arith.constant 0 : i32
    %c0_i32_1 = arith.constant 0 : i32
    return %c0_i32, %c0_i32_0 : i32, i32
  }
}

</mosaic_0001>

<llo_original>
// kernel: tpu_custom_call.1
$region0: #{tpu_custom_call.1}
  #allocation0 [shape = 'u32[]', space=smem, size = 0x4, offset = 0x4, fixed_abs, tag = 'smem constant byte address 0x4 - core index']
  #allocation1 [shape = 'u32[72,128]{1,0:T(1,128)}', space=vmem, size = 0x9000, scoped, tag = 'internal scratch']
  #allocation2 [shape = 'f32[16,1024]{1,0:T(8,128)}', space=vmem, size = 0x10000, scoped, tag = 'scratch operand']
  %s0 = inlined_call_operand.hbm [shape: bf16[16,3072], index: 0, kind: input, shape index: {}]
  %s1 = inlined_call_operand.hbm [shape: bf16[2,3072,512], index: 1, kind: input, shape index: {}]
  %s2 = inlined_call_operand.hbm [shape: f32[1,1024], index: 2, kind: input, shape index: {}]
  %s3 = inlined_call_operand.hbm [shape: bf16[1024,1024], index: 3, kind: input, shape index: {}]
  %s4 = inlined_call_operand.hbm [shape: f32[1,1024], index: 4, kind: input, shape index: {}]
  %s5 = inlined_call_operand.hbm [shape: f32[1,1024], index: 5, kind: input, shape index: {}]
  %s6 = inlined_call_operand.hbm [shape: f32[1,1024], index: 6, kind: input, shape index: {}]
  %s7 = inlined_call_operand.hbm [shape: f32[16,1024], index: 7, kind: input, shape index: {}]
  %s8 = inlined_call_operand.hbm [shape: bf16[1024,128], index: 8, kind: input, shape index: {}]
  %s9 = inlined_call_operand.hbm [shape: f32[1,128], index: 9, kind: input, shape index: {}]
  %s10 = inlined_call_operand.hbm [shape: f32[16,128], index: 10, kind: output, shape index: {}]
  %s11 = sld [smem:[#allocation0]]
  $region121: #{tpu_custom_call.1} parent=0
    _
  %s13 = ssub.s32 1, %s11
  %s14 = scalar_select 0, %s13, %s11
  $region1: #{tpu_custom_call.1} parent=0
    #allocation3 [shape = 'u8[98304]{0}', space=vmem, size = 0x18000, scoped, tag = 'input window, operand 0, single buffered']
    #allocation4 [shape = 's32[2]{0}', space=sflag, size = 0x8, scoped, tag = 'scoped memory for tpu_custom_call.1']
    #allocation5 [shape = 's32[2]{0}', space=sflag, size = 0x8, scoped, tag = 'scoped memory for tpu_custom_call.1']
    #allocation6 [shape = 'u8[6291456]{0}', space=vmem, size = 0x600000, scoped, tag = 'input window, operand 1']
    #allocation7 [shape = 's32[2]{0}', space=sflag, size = 0x8, scoped, tag = 'scoped memory for tpu_custom_call.1']
    #allocation8 [shape = 'u8[4096]{0}', space=vmem, size = 0x1000, scoped, tag = 'input window, operand 2']
    #allocation9 [shape = 'u8[2097152]{0}', space=vmem, size = 0x200000, scoped, tag = 'input window, operand 3']
    #allocation10 [shape = 's32[2]{0}', space=sflag, size = 0x8, scoped, tag = 'scoped memory for tpu_custom_call.1']
    #allocation11 [shape = 'u8[4096]{0}', space=vmem, size = 0x1000, scoped, tag = 'input window, operand 4, single buffered']
    #allocation12 [shape = 'u8[4096]{0}', space=vmem, size = 0x1000, scoped, tag = 'input window, operand 5, single buffered']
    #allocation13 [shape = 's32[1]{0}', space=sflag, size = 0x4, scoped, tag = 'scoped memory for tpu_custom_call.1']
    #allocation14 [shape = 'u8[4096]{0}', space=vmem, size = 0x1000, scoped, tag = 'input window, operand 6, single buffered']
    #allocation15 [shape = 'u8[65536]{0}', space=vmem, size = 0x10000, scoped, tag = 'input window, operand 7, single buffered']
    #allocation16 [shape = 's32[1]{0}', space=sflag, size = 0x4, scoped, tag = 'scoped memory for tpu_custom_call.1']
    #allocation17 [shape = 'u8[262144]{0}', space=vmem, size = 0x40000, scoped, tag = 'input window, operand 8, single buffered']
    #allocation18 [shape = 'u8[512]{0}', space=vmem, size = 0x400, scoped, tag = 'input window, operand 9, single buffered']
    #allocation19 [shape = 's32[1]{0}', space=sflag, size = 0x4, scoped, tag = 'scoped memory for tpu_custom_call.1']
    #allocation20 [shape = 'u8[8192]{0}', space=vmem, size = 0x2000, scoped, tag = 'output window, operand 0, single buffered']
    %15 = vsyncpa [#allocation4], 0
    %16 = vsyncpa [#allocation7], 0
    %s17 = scalar_lea.sflag [#allocation7], 1
    %18 = vsyncpa %s17, 0
    %19 = vsyncpa [#allocation10], 0
    %s20 = scalar_lea.sflag [#allocation10], 1
    %21 = vsyncpa %s20, 0
    %22 = vsyncpa [#allocation13], 0
    %23 = vsyncpa [#allocation16], 0
    %24 = vsyncpa [#allocation19], 0
    %25 = vsyncpa [#allocation5], 0
    loop: start=0, step=1, limit=4
    $region2: #{tpu_custom_call.1} parent=1 // loop_pre_header
      _
    $region3: #{tpu_custom_call.1} parent=1 // loop_header
      %s27 = sphi 0, %s31
      %p28 = scmp.ge.s32.totalorder %s27, 4
      %s35 = sphi 0, %s35
      %s37 = sphi 0, %s35
      %s38 = sphi 0, %s37
      %s52 = sphi 0, %s38
      %s58 = sphi 0, %s60
      %s61 = sphi 0, %s58
      %s62 = sphi 0, %s61
      %s78 = sphi 0, %s62
      %s84 = sphi 0, %s86
      %s87 = sphi 0, %s84
      %s88 = sphi 0, %s87
      %s104 = sphi 0, %s88
      %s110 = sphi 0, %s112
      %s113 = sphi 0, %s110
      %s114 = sphi 0, %s113
      %s130 = sphi 0, %s114
      %s134 = sphi 0, %s134
      %s136 = sphi 0, %s134
      %s137 = sphi 0, %s136
      %s151 = sphi 0, %s137
      %s155 = sphi 0, %s155
      %s157 = sphi 0, %s155
      %s158 = sphi 0, %s157
      %s172 = sphi 0, %s158
      %s176 = sphi 0, %s176
      %s178 = sphi 0, %s176
      %s179 = sphi 0, %s178
      %s193 = sphi 0, %s179
      %s197 = sphi 0, %s197
      %s199 = sphi 0, %s197
      %s200 = sphi 0, %s199
      %s214 = sphi 0, %s200
      %s218 = sphi 0, %s218
      %s220 = sphi 0, %s218
      %s221 = sphi 0, %s220
      %s235 = sphi 0, %s221
      %s239 = sphi 0, %s239
      %s241 = sphi 0, %s239
      %s242 = sphi 0, %s241
      %s256 = sphi 0, %s242
      %s260 = sphi 0, %s260
      %s262 = sphi 0, %s260
      %s263 = sphi 0, %s262
      %s277 = sphi 0, %s263
    $region4: #{tpu_custom_call.1} parent=1 // loop_header_branch
      %30 = sbr.rel (%p28) target = $region8
    $region5: #{tpu_custom_call.1} parent=1 // loop_body
      %s32 = ssub.s32 %s27, 1
      %s33 = ssub.s32 %s27, 2
      %s34 = sadd.s32 %s27, 1
      %s36 = sadd.s32 %s35, 1
      %p39 = scmp.eq.s32.totalorder %s27, 1
      %p40 = scmp.ne.s32.totalorder %s35, %s37
      %p41 = scmp.eq.s32.totalorder %s27, 0
      %p42 = por %p40, %p41
      %p43 = scmp.ne.s32.totalorder %s35, %s37
      %p44 = scmp.eq.s32.totalorder %s32, 1
      %p45 = por %p43, %p44
      %p46 = scmp.ne.s32.totalorder %s37, %s38
      %p47 = scmp.eq.s32.totalorder %s32, 0
      %p48 = por %p46, %p47
      %p49 = scmp.ne.s32.totalorder %s37, %s38
      %p50 = scmp.eq.s32.totalorder %s33, 1
      %p51 = por %p49, %p50
      %p53 = scmp.ne.s32.totalorder %s38, %s52
      %p54 = scmp.eq.s32.totalorder %s33, 0
      %p55 = por %p53, %p54
      %s56 = ssub.s32 %s27, %s34
      %p57 = scmp.eq.s32.totalorder %s56, 0
      %s59 = sadd.s32 %s58, 1
      %s60 = scalar_select %p57, %s58, %s59
      %p63 = pneg %p57
      %p64 = scmp.eq.s32.totalorder %s27, 1
      %p65 = por %p63, %p64
      %p66 = scmp.ne.s32.totalorder %s58, %s61
      %p67 = scmp.eq.s32.totalorder %s27, 0
      %p68 = por %p66, %p67
      %p69 = scmp.ne.s32.totalorder %s58, %s61
      %p70 = scmp.eq.s32.totalorder %s32, 1
      %p71 = por %p69, %p70
      %p72 = scmp.ne.s32.totalorder %s61, %s62
      %p73 = scmp.eq.s32.totalorder %s32, 0
      %p74 = por %p72, %p73
      %p75 = scmp.ne.s32.totalorder %s61, %s62
      %p76 = scmp.eq.s32.totalorder %s33, 1
      %p77 = por %p75, %p76
      %p79 = scmp.ne.s32.totalorder %s62, %s78
      %p80 = scmp.eq.s32.totalorder %s33, 0
      %p81 = por %p79, %p80
      %s82 = ssub.s32 %s27, %s34
      %p83 = scmp.eq.s32.totalorder %s82, 0
      %s85 = sadd.s32 %s84, 1
      %s86 = scalar_select %p83, %s84, %s85
      %p89 = pneg %p83
      %p90 = scmp.eq.s32.totalorder %s27, 1
      %p91 = por %p89, %p90
      %p92 = scmp.ne.s32.totalorder %s84, %s87
      %p93 = scmp.eq.s32.totalorder %s27, 0
      %p94 = por %p92, %p93
      %p95 = scmp.ne.s32.totalorder %s84, %s87
      %p96 = scmp.eq.s32.totalorder %s32, 1
      %p97 = por %p95, %p96
      %p98 = scmp.ne.s32.totalorder %s87, %s88
      %p99 = scmp.eq.s32.totalorder %s32, 0
      %p100 = por %p98, %p99
      %p101 = scmp.ne.s32.totalorder %s87, %s88
      %p102 = scmp.eq.s32.totalorder %s33, 1
      %p103 = por %p101, %p102
      %p105 = scmp.ne.s32.totalorder %s88, %s104
      %p106 = scmp.eq.s32.totalorder %s33, 0
      %p107 = por %p105, %p106
      %s108 = ssub.s32 %s27, %s34
      %p109 = scmp.eq.s32.totalorder %s108, 0
      %s111 = sadd.s32 %s110, 1
      %s112 = scalar_select %p109, %s110, %s111
      %p115 = pneg %p109
      %p116 = scmp.eq.s32.totalorder %s27, 1
      %p117 = por %p115, %p116
      %p118 = scmp.ne.s32.totalorder %s110, %s113
      %p119 = scmp.eq.s32.totalorder %s27, 0
      %p120 = por %p118, %p119
      %p121 = scmp.ne.s32.totalorder %s110, %s113
      %p122 = scmp.eq.s32.totalorder %s32, 1
      %p123 = por %p121, %p122
      %p124 = scmp.ne.s32.totalorder %s113, %s114
      %p125 = scmp.eq.s32.totalorder %s32, 0
      %p126 = por %p124, %p125
      %p127 = scmp.ne.s32.totalorder %s113, %s114
      %p128 = scmp.eq.s32.totalorder %s33, 1
      %p129 = por %p127, %p128
      %p131 = scmp.ne.s32.totalorder %s114, %s130
      %p132 = scmp.eq.s32.totalorder %s33, 0
      %p133 = por %p131, %p132
      %s135 = sadd.s32 %s134, 1
      %p138 = scmp.eq.s32.totalorder %s27, 1
      %p139 = scmp.ne.s32.totalorder %s134, %s136
      %p140 = scmp.eq.s32.totalorder %s27, 0
      %p141 = por %p139, %p140
      %p142 = scmp.ne.s32.totalorder %s134, %s136
      %p143 = scmp.eq.s32.totalorder %s32, 1
      %p144 = por %p142, %p143
      %p145 = scmp.ne.s32.totalorder %s136, %s137
      %p146 = scmp.eq.s32.totalorder %s32, 0
      %p147 = por %p145, %p146
      %p148 = scmp.ne.s32.totalorder %s136, %s137
      %p149 = scmp.eq.s32.totalorder %s33, 1
      %p150 = por %p148, %p149
      %p152 = scmp.ne.s32.totalorder %s137, %s151
      %p153 = scmp.eq.s32.totalorder %s33, 0
      %p154 = por %p152, %p153
      %s156 = sadd.s32 %s155, 1
      %p159 = scmp.eq.s32.totalorder %s27, 1
      %p160 = scmp.ne.s32.totalorder %s155, %s157
      %p161 = scmp.eq.s32.totalorder %s27, 0
      %p162 = por %p160, %p161
      %p163 = scmp.ne.s32.totalorder %s155, %s157
      %p164 = scmp.eq.s32.totalorder %s32, 1
      %p165 = por %p163, %p164
      %p166 = scmp.ne.s32.totalorder %s157, %s158
      %p167 = scmp.eq.s32.totalorder %s32, 0
      %p168 = por %p166, %p167
      %p169 = scmp.ne.s32.totalorder %s157, %s158
      %p170 = scmp.eq.s32.totalorder %s33, 1
      %p171 = por %p169, %p170
      %p173 = scmp.ne.s32.totalorder %s158, %s172
      %p174 = scmp.eq.s32.totalorder %s33, 0
      %p175 = por %p173, %p174
      %s177 = sadd.s32 %s176, 1
      %p180 = scmp.eq.s32.totalorder %s27, 1
      %p181 = scmp.ne.s32.totalorder %s176, %s178
      %p182 = scmp.eq.s32.totalorder %s27, 0
      %p183 = por %p181, %p182
      %p184 = scmp.ne.s32.totalorder %s176, %s178
      %p185 = scmp.eq.s32.totalorder %s32, 1
      %p186 = por %p184, %p185
      %p187 = scmp.ne.s32.totalorder %s178, %s179
      %p188 = scmp.eq.s32.totalorder %s32, 0
      %p189 = por %p187, %p188
      %p190 = scmp.ne.s32.totalorder %s178, %s179
      %p191 = scmp.eq.s32.totalorder %s33, 1
      %p192 = por %p190, %p191
      %p194 = scmp.ne.s32.totalorder %s179, %s193
      %p195 = scmp.eq.s32.totalorder %s33, 0
      %p196 = por %p194, %p195
      %s198 = sadd.s32 %s197, 1
      %p201 = scmp.eq.s32.totalorder %s27, 1
      %p202 = scmp.ne.s32.totalorder %s197, %s199
      %p203 = scmp.eq.s32.totalorder %s27, 0
      %p204 = por %p202, %p203
      %p205 = scmp.ne.s32.totalorder %s197, %s199
      %p206 = scmp.eq.s32.totalorder %s32, 1
      %p207 = por %p205, %p206
      %p208 = scmp.ne.s32.totalorder %s199, %s200
      %p209 = scmp.eq.s32.totalorder %s32, 0
      %p210 = por %p208, %p209
      %p211 = scmp.ne.s32.totalorder %s199, %s200
      %p212 = scmp.eq.s32.totalorder %s33, 1
      %p213 = por %p211, %p212
      %p215 = scmp.ne.s32.totalorder %s200, %s214
      %p216 = scmp.eq.s32.totalorder %s33, 0
      %p217 = por %p215, %p216
      %s219 = sadd.s32 %s218, 1
      %p222 = scmp.eq.s32.totalorder %s27, 1
      %p223 = scmp.ne.s32.totalorder %s218, %s220
      %p224 = scmp.eq.s32.totalorder %s27, 0
      %p225 = por %p223, %p224
      %p226 = scmp.ne.s32.totalorder %s218, %s220
      %p227 = scmp.eq.s32.totalorder %s32, 1
      %p228 = por %p226, %p227
      %p229 = scmp.ne.s32.totalorder %s220, %s221
      %p230 = scmp.eq.s32.totalorder %s32, 0
      %p231 = por %p229, %p230
      %p232 = scmp.ne.s32.totalorder %s220, %s221
      %p233 = scmp.eq.s32.totalorder %s33, 1
      %p234 = por %p232, %p233
      %p236 = scmp.ne.s32.totalorder %s221, %s235
      %p237 = scmp.eq.s32.totalorder %s33, 0
      %p238 = por %p236, %p237
      %s240 = sadd.s32 %s239, 1
      %p243 = scmp.eq.s32.totalorder %s27, 1
      %p244 = scmp.ne.s32.totalorder %s239, %s241
      %p245 = scmp.eq.s32.totalorder %s27, 0
      %p246 = por %p244, %p245
      %p247 = scmp.ne.s32.totalorder %s239, %s241
      %p248 = scmp.eq.s32.totalorder %s32, 1
      %p249 = por %p247, %p248
      %p250 = scmp.ne.s32.totalorder %s241, %s242
      %p251 = scmp.eq.s32.totalorder %s32, 0
      %p252 = por %p250, %p251
      %p253 = scmp.ne.s32.totalorder %s241, %s242
      %p254 = scmp.eq.s32.totalorder %s33, 1
      %p255 = por %p253, %p254
      %p257 = scmp.ne.s32.totalorder %s242, %s256
      %p258 = scmp.eq.s32.totalorder %s33, 0
      %p259 = por %p257, %p258
      %s261 = sadd.s32 %s260, 1
      %p264 = scmp.eq.s32.totalorder %s27, 1
      %p265 = scmp.ne.s32.totalorder %s260, %s262
      %p266 = scmp.eq.s32.totalorder %s27, 0
      %p267 = por %p265, %p266
      %p268 = scmp.ne.s32.totalorder %s260, %s262
      %p269 = scmp.eq.s32.totalorder %s32, 1
      %p270 = por %p268, %p269
      %p271 = scmp.ne.s32.totalorder %s262, %s263
      %p272 = scmp.eq.s32.totalorder %s32, 0
      %p273 = por %p271, %p272
      %p274 = scmp.ne.s32.totalorder %s262, %s263
      %p275 = scmp.eq.s32.totalorder %s33, 1
      %p276 = por %p274, %p275
      %p278 = scmp.ne.s32.totalorder %s263, %s277
      %p279 = scmp.eq.s32.totalorder %s33, 0
      %p280 = por %p278, %p279
      %p281 = scmp.le.s32.totalorder 1, %s27
      %p282 = scmp.lt.s32.totalorder %s27, 3
      %p283 = pnand %p281, %p282
      %p284 = pneg %p283
      // Predicated region
      $region9: #{tpu_custom_call.1} parent=5 // pred_check
        _
      $region10: #{tpu_custom_call.1} parent=5 // pred_check_branch
        %286 = sbr.rel (%p283) target = $region12
      $region11: #{tpu_custom_call.1} parent=5 // pred_region
        %s287 = ssub.s32 %s27, 1
        // Predicated region
        $region13: #{tpu_custom_call.1} parent=11 // pred_check
          %p288 = pneg %p48
        $region14: #{tpu_custom_call.1} parent=11 // pred_check_branch
          %290 = sbr.rel (%p288) target = $region16
        $region15: #{tpu_custom_call.1} parent=11 // pred_region
          %292 = vsyncadd [#allocation4], 0
          %s293 = sshll.u32 %s0, 4
          %s294 = int_to_ptr.hbm [resolvable:$true] %s293
          %s295 = sshll.u32 [#allocation3], 4
          %s296 = int_to_ptr.vmem [resolvable:$true] %s295
          %301 = dma.hbm_to_vmem [thread:$0]  %s294, 3072, %s296, [#allocation4], 1536, 1536, 96
        $region16: #{tpu_custom_call.1} parent=11 // pred_fallthru
          _
        // Predicated region
        $region17: #{tpu_custom_call.1} parent=11 // pred_check
          %p302 = pneg %p147
        $region18: #{tpu_custom_call.1} parent=11 // pred_check_branch
          %304 = sbr.rel (%p302) target = $region20
        $region19: #{tpu_custom_call.1} parent=11 // pred_region
          %306 = vsyncadd [#allocation10], 0
          %s308 = sshll.u32 %s4, 4
          %s309 = int_to_ptr.hbm [resolvable:$true] %s308
          %s310 = sshll.u32 [#allocation11], 4
          %s311 = int_to_ptr.vmem [resolvable:$true] %s310
          %313 = dma.hbm_to_vmem [thread:$0]  %s309, 128, %s311, [#allocation10]
        $region20: #{tpu_custom_call.1} parent=11 // pred_fallthru
          _
        // Predicated region
        $region21: #{tpu_custom_call.1} parent=11 // pred_check
          %p314 = pneg %p168
        $region22: #{tpu_custom_call.1} parent=11 // pred_check_branch
          %316 = sbr.rel (%p314) target = $region24
        $region23: #{tpu_custom_call.1} parent=11 // pred_region
          %318 = vsyncadd [#allocation13], 0
          %s320 = sshll.u32 %s5, 4
          %s321 = int_to_ptr.hbm [resolvable:$true] %s320
          %s322 = sshll.u32 [#allocation12], 4
          %s323 = int_to_ptr.vmem [resolvable:$true] %s322
          %325 = dma.hbm_to_vmem [thread:$0]  %s321, 128, %s323, [#allocation13]
        $region24: #{tpu_custom_call.1} parent=11 // pred_fallthru
          _
        // Predicated region
        $region25: #{tpu_custom_call.1} parent=11 // pred_check
          %p326 = pneg %p189
        $region26: #{tpu_custom_call.1} parent=11 // pred_check_branch
          %328 = sbr.rel (%p326) target = $region28
        $region27: #{tpu_custom_call.1} parent=11 // pred_region
          %330 = vsyncadd [#allocation13], 0
          %s332 = sshll.u32 %s6, 4
          %s333 = int_to_ptr.hbm [resolvable:$true] %s332
          %s334 = sshll.u32 [#allocation14], 4
          %s335 = int_to_ptr.vmem [resolvable:$true] %s334
          %337 = dma.hbm_to_vmem [thread:$0]  %s333, 128, %s335, [#allocation13]
        $region28: #{tpu_custom_call.1} parent=11 // pred_fallthru
          _
        // Predicated region
        $region29: #{tpu_custom_call.1} parent=11 // pred_check
          %p338 = pneg %p210
        $region30: #{tpu_custom_call.1} parent=11 // pred_check_branch
          %340 = sbr.rel (%p338) target = $region32
        $region31: #{tpu_custom_call.1} parent=11 // pred_region
          %342 = vsyncadd [#allocation16], 0
          %s343 = sshll.u32 %s7, 4
          %s344 = int_to_ptr.hbm [resolvable:$true] %s343
          %s345 = sshll.u32 [#allocation15], 4
          %s346 = int_to_ptr.vmem [resolvable:$true] %s345
          %351 = dma.hbm_to_vmem [thread:$0]  %s344, 2048, %s346, [#allocation16], 1024, 1024, 64
        $region32: #{tpu_custom_call.1} parent=11 // pred_fallthru
          _
        // Predicated region
        $region33: #{tpu_custom_call.1} parent=11 // pred_check
          %p352 = pneg %p231
        $region34: #{tpu_custom_call.1} parent=11 // pred_check_branch
          %354 = sbr.rel (%p352) target = $region36
        $region35: #{tpu_custom_call.1} parent=11 // pred_region
          %356 = vsyncadd [#allocation16], 0
          %s357 = sshll.u32 %s8, 4
          %s358 = int_to_ptr.hbm [resolvable:$true] %s357
          %s359 = sshll.u32 [#allocation17], 4
          %s360 = int_to_ptr.vmem [resolvable:$true] %s359
          %365 = dma.hbm_to_vmem [thread:$0]  %s358, 8192, %s360, [#allocation16], 64, 64, 4
        $region36: #{tpu_custom_call.1} parent=11 // pred_fallthru
          _
        // Predicated region
        $region37: #{tpu_custom_call.1} parent=11 // pred_check
          %p366 = pneg %p252
        $region38: #{tpu_custom_call.1} parent=11 // pred_check_branch
          %368 = sbr.rel (%p366) target = $region40
        $region39: #{tpu_custom_call.1} parent=11 // pred_region
          %370 = vsyncadd [#allocation19], 0
          %s372 = sshll.u32 %s9, 4
          %s373 = int_to_ptr.hbm [resolvable:$true] %s372
          %s374 = sshll.u32 [#allocation18], 4
          %s375 = int_to_ptr.vmem [resolvable:$true] %s374
          %377 = dma.hbm_to_vmem [thread:$0]  %s373, 16, %s375, [#allocation19]
        $region40: #{tpu_custom_call.1} parent=11 // pred_fallthru
          _
      $region12: #{tpu_custom_call.1} parent=5 // pred_fallthru
        _
      %p378 = scmp.lt.s32.totalorder %s27, 2
      // Predicated region
      $region41: #{tpu_custom_call.1} parent=5 // pred_check
        %p379 = pneg %p378
      $region42: #{tpu_custom_call.1} parent=5 // pred_check_branch
        %381 = sbr.rel (%p379) target = $region44
      $region43: #{tpu_custom_call.1} parent=5 // pred_region
        // Predicated region
        $region45: #{tpu_custom_call.1} parent=43 // pred_check
          %p382 = pneg %p68
        $region46: #{tpu_custom_call.1} parent=43 // pred_check_branch
          %384 = sbr.rel (%p382) target = $region48
        $region47: #{tpu_custom_call.1} parent=43 // pred_region
          %s385 = sand.u32 %s27, 1
          %s386 = scalar_lea.sflag [#allocation7], %s385
          %s387 = sand.u32 %s58, 1
          %s388 = smul.addr %s387, 6144
          %s389 = scalar_lea.vmem [#allocation6], %s388
          %391 = vsyncadd %s386, 0
          %s392 = smul.addr %s27, 1536
          %s393 = smul.addr %s392, 4
          %s394 = scalar_lea.hbm %s1, %s393
          %s395 = sshll.u32 %s394, 4
          %s396 = int_to_ptr.hbm [resolvable:$true] %s395
          %s397 = sshll.u32 %s389, 4
          %s398 = int_to_ptr.vmem [resolvable:$true] %s397
          %403 = dma.hbm_to_vmem [thread:$0]  %s396, 98304, %s398, %s386, 256, 256, 16
        $region48: #{tpu_custom_call.1} parent=43 // pred_fallthru
          _
        // Predicated region
        $region49: #{tpu_custom_call.1} parent=43 // pred_check
          %p404 = pneg %p94
        $region50: #{tpu_custom_call.1} parent=43 // pred_check_branch
          %406 = sbr.rel (%p404) target = $region52
        $region51: #{tpu_custom_call.1} parent=43 // pred_region
          %s407 = sand.u32 %s27, 1
          %s408 = scalar_lea.sflag [#allocation7], %s407
          %s409 = sand.u32 %s84, 1
          %s410 = smul.addr %s409, 4
          %s411 = scalar_lea.vmem [#allocation8], %s410
          %s412 = smul.u32 4, %s27
          %414 = vsyncadd %s408, 0
          %s415 = scalar_lea.hbm %s2, %s412
          %s417 = sshll.u32 %s415, 4
          %s418 = int_to_ptr.hbm [resolvable:$true] %s417
          %s419 = sshll.u32 %s411, 4
          %s420 = int_to_ptr.vmem [resolvable:$true] %s419
          %422 = dma.hbm_to_vmem [thread:$0]  %s418, 64, %s420, %s408
        $region52: #{tpu_custom_call.1} parent=43 // pred_fallthru
          _
        // Predicated region
        $region53: #{tpu_custom_call.1} parent=43 // pred_check
          %p423 = pneg %p120
        $region54: #{tpu_custom_call.1} parent=43 // pred_check_branch
          %425 = sbr.rel (%p423) target = $region56
        $region55: #{tpu_custom_call.1} parent=43 // pred_region
          %s426 = sand.u32 %s27, 1
          %s427 = scalar_lea.sflag [#allocation10], %s426
          %s428 = sand.u32 %s110, 1
          %s429 = smul.addr %s428, 2048
          %s430 = scalar_lea.vmem [#allocation9], %s429
          %s431 = smul.u32 64, %s27
          %433 = vsyncadd %s427, 0
          %s434 = smul.addr %s431, 8
          %s435 = smul.addr %s434, 4
          %s436 = scalar_lea.hbm %s3, %s435
          %s437 = sshll.u32 %s436, 4
          %s438 = int_to_ptr.hbm [resolvable:$true] %s437
          %s439 = sshll.u32 %s430, 4
          %s440 = int_to_ptr.vmem [resolvable:$true] %s439
          %445 = dma.hbm_to_vmem [thread:$0]  %s438, 32768, %s440, %s427, 512, 512, 32
        $region56: #{tpu_custom_call.1} parent=43 // pred_fallthru
          _
      $region44: #{tpu_custom_call.1} parent=5 // pred_fallthru
        _
      %p446 = scmp.le.s32.totalorder 1, %s27
      %p447 = scmp.lt.s32.totalorder %s27, 3
      %p448 = pnand %p446, %p447
      %p449 = pneg %p448
      // Predicated region
      $region57: #{tpu_custom_call.1} parent=5 // pred_check
        _
      $region58: #{tpu_custom_call.1} parent=5 // pred_check_branch
        %451 = sbr.rel (%p448) target = $region60
      $region59: #{tpu_custom_call.1} parent=5 // pred_region
        %s452 = ssub.s32 %s27, 1
        // Predicated region
        $region61: #{tpu_custom_call.1} parent=59 // pred_check
          %p453 = pneg %p48
        $region62: #{tpu_custom_call.1} parent=59 // pred_check_branch
          %455 = sbr.rel (%p453) target = $region64
        $region63: #{tpu_custom_call.1} parent=59 // pred_region
          %457 = dma.done [#allocation4], 3072
        $region64: #{tpu_custom_call.1} parent=59 // pred_fallthru
          _
        %s458 = sand.u32 %s32, 1
        %s459 = scalar_lea.sflag [#allocation7], %s458
        %s460 = sand.u32 %s61, 1
        %s461 = smul.addr %s460, 6144
        %s462 = scalar_lea.vmem [#allocation6], %s461
        // Predicated region
        $region65: #{tpu_custom_call.1} parent=59 // pred_check
          %p463 = pneg %p74
        $region66: #{tpu_custom_call.1} parent=59 // pred_check_branch
          %465 = sbr.rel (%p463) target = $region68
        $region67: #{tpu_custom_call.1} parent=59 // pred_region
          %467 = dma.done %s459, 98304
        $region68: #{tpu_custom_call.1} parent=59 // pred_fallthru
          _
        %s468 = sand.u32 %s32, 1
        %s469 = scalar_lea.sflag [#allocation7], %s468
        %s470 = sand.u32 %s87, 1
        %s471 = smul.addr %s470, 4
        %s472 = scalar_lea.vmem [#allocation8], %s471
        // Predicated region
        $region69: #{tpu_custom_call.1} parent=59 // pred_check
          %p473 = pneg %p100
        $region70: #{tpu_custom_call.1} parent=59 // pred_check_branch
          %475 = sbr.rel (%p473) target = $region72
        $region71: #{tpu_custom_call.1} parent=59 // pred_region
          %477 = dma.done %s469, 64
        $region72: #{tpu_custom_call.1} parent=59 // pred_fallthru
          _
        %s478 = sand.u32 %s32, 1
        %s479 = scalar_lea.sflag [#allocation10], %s478
        %s480 = sand.u32 %s113, 1
        %s481 = smul.addr %s480, 2048
        %s482 = scalar_lea.vmem [#allocation9], %s481
        // Predicated region
        $region73: #{tpu_custom_call.1} parent=59 // pred_check
          %p483 = pneg %p126
        $region74: #{tpu_custom_call.1} parent=59 // pred_check_branch
          %485 = sbr.rel (%p483) target = $region76
        $region75: #{tpu_custom_call.1} parent=59 // pred_region
          %487 = dma.done %s479, 32768
        $region76: #{tpu_custom_call.1} parent=59 // pred_fallthru
          _
        // Predicated region
        $region77: #{tpu_custom_call.1} parent=59 // pred_check
          %p488 = pneg %p147
        $region78: #{tpu_custom_call.1} parent=59 // pred_check_branch
          %490 = sbr.rel (%p488) target = $region80
        $region79: #{tpu_custom_call.1} parent=59 // pred_region
          %492 = dma.done [#allocation10], 128
        $region80: #{tpu_custom_call.1} parent=59 // pred_fallthru
          _
        // Predicated region
        $region81: #{tpu_custom_call.1} parent=59 // pred_check
          %p493 = pneg %p168
        $region82: #{tpu_custom_call.1} parent=59 // pred_check_branch
          %495 = sbr.rel (%p493) target = $region84
        $region83: #{tpu_custom_call.1} parent=59 // pred_region
          %497 = dma.done [#allocation13], 128
        $region84: #{tpu_custom_call.1} parent=59 // pred_fallthru
          _
        // Predicated region
        $region85: #{tpu_custom_call.1} parent=59 // pred_check
          %p498 = pneg %p189
        $region86: #{tpu_custom_call.1} parent=59 // pred_check_branch
          %500 = sbr.rel (%p498) target = $region88
        $region87: #{tpu_custom_call.1} parent=59 // pred_region
          %502 = dma.done [#allocation13], 128
        $region88: #{tpu_custom_call.1} parent=59 // pred_fallthru
          _
        // Predicated region
        $region89: #{tpu_custom_call.1} parent=59 // pred_check
          %p503 = pneg %p210
        $region90: #{tpu_custom_call.1} parent=59 // pred_check_branch
          %505 = sbr.rel (%p503) target = $region92
        $region91: #{tpu_custom_call.1} parent=59 // pred_region
          %507 = dma.done [#allocation16], 2048
        $region92: #{tpu_custom_call.1} parent=59 // pred_fallthru
          _
        // Predicated region
        $region93: #{tpu_custom_call.1} parent=59 // pred_check
          %p508 = pneg %p231
        $region94: #{tpu_custom_call.1} parent=59 // pred_check_branch
          %510 = sbr.rel (%p508) target = $region96
        $region95: #{tpu_custom_call.1} parent=59 // pred_region
          %512 = dma.done [#allocation16], 8192
        $region96: #{tpu_custom_call.1} parent=59 // pred_fallthru
          _
        // Predicated region
        $region97: #{tpu_custom_call.1} parent=59 // pred_check
          %p513 = pneg %p252
        $region98: #{tpu_custom_call.1} parent=59 // pred_check_branch
          %515 = sbr.rel (%p513) target = $region100
        $region99: #{tpu_custom_call.1} parent=59 // pred_region
          %517 = dma.done [#allocation19], 16
        $region100: #{tpu_custom_call.1} parent=59 // pred_fallthru
          _
        %p518 = pneg %p48
        %p519 = pneg %p45
        %s520 = sand.u32 %s32, 1
        %s521 = scalar_lea.sflag [#allocation7], %s520
        %s522 = sand.u32 %s61, 1
        %s523 = smul.addr %s522, 6144
        %s524 = scalar_lea.vmem [#allocation6], %s523
        %p525 = pneg %p74
        %p526 = pneg %p71
        %s527 = sand.u32 %s32, 1
        %s528 = scalar_lea.sflag [#allocation7], %s527
        %s529 = sand.u32 %s87, 1
        %s530 = smul.addr %s529, 4
        %s531 = scalar_lea.vmem [#allocation8], %s530
        %p532 = pneg %p100
        %p533 = pneg %p97
        %s534 = sand.u32 %s32, 1
        %s535 = scalar_lea.sflag [#allocation10], %s534
        %s536 = sand.u32 %s113, 1
        %s537 = smul.addr %s536, 2048
        %s538 = scalar_lea.vmem [#allocation9], %s537
        %p539 = pneg %p126
        %p540 = pneg %p123
        %p541 = pneg %p147
        %p542 = pneg %p144
        %p543 = pneg %p168
        %p544 = pneg %p165
        %p545 = pneg %p189
        %p546 = pneg %p186
        %p547 = pneg %p210
        %p548 = pneg %p207
        %p549 = pneg %p231
        %p550 = pneg %p228
        %p551 = pneg %p252
        %p552 = pneg %p249
        %p553 = pneg %p273
        %p554 = pneg %p270
        %s555 = smul.u32 4, %s32
        %s556 = smul.u32 64, %s32
        %p557 = scmp.eq.s32.totalorder %s32, 0
        // Predicated region
        $region101: #{tpu_custom_call.1} parent=59 // pred_check
          %p558 = pneg %p557
        $region102: #{tpu_custom_call.1} parent=59 // pred_check_branch
          %560 = sbr.rel (%p558) target = $region104
        $region103: #{tpu_custom_call.1} parent=59 // pred_region
          %561 = vst [vmem:[#allocation2] sm:$0xff] 0.0
          %562 = vst [vmem:[#allocation2 + $0x8] sm:$0xff] 0.0
          %563 = vst [vmem:[#allocation2 + $0x10] sm:$0xff] 0.0
          %564 = vst [vmem:[#allocation2 + $0x18] sm:$0xff] 0.0
          %565 = vst [vmem:[#allocation2 + $0x20] sm:$0xff] 0.0
          %566 = vst [vmem:[#allocation2 + $0x28] sm:$0xff] 0.0
          %567 = vst [vmem:[#allocation2 + $0x30] sm:$0xff] 0.0
          %568 = vst [vmem:[#allocation2 + $0x38] sm:$0xff] 0.0
          %569 = vst [vmem:[#allocation2 + $0x40] sm:$0xff] 0.0
          %570 = vst [vmem:[#allocation2 + $0x48] sm:$0xff] 0.0
          %571 = vst [vmem:[#allocation2 + $0x50] sm:$0xff] 0.0
          %572 = vst [vmem:[#allocation2 + $0x58] sm:$0xff] 0.0
          %573 = vst [vmem:[#allocation2 + $0x60] sm:$0xff] 0.0
          %574 = vst [vmem:[#allocation2 + $0x68] sm:$0xff] 0.0
          %575 = vst [vmem:[#allocation2 + $0x70] sm:$0xff] 0.0
          %576 = vst [vmem:[#allocation2 + $0x78] sm:$0xff] 0.0
        $region104: #{tpu_custom_call.1} parent=59 // pred_fallthru
          _
        %v577 = vld [vmem:[#allocation3] sm:$0xff]
        %v578 = vld [vmem:[#allocation3 + $0x8] sm:$0xff]
        %v579 = vld [vmem:[#allocation3 + $0x10] sm:$0xff]
        %v580 = vld [vmem:[#allocation3 + $0x18] sm:$0xff]
        %v581 = vld [vmem:[#allocation3 + $0x20] sm:$0xff]
        %v582 = vld [vmem:[#allocation3 + $0x28] sm:$0xff]
        %v583 = vld [vmem:[#allocation3 + $0x30] sm:$0xff]
        %v584 = vld [vmem:[#allocation3 + $0x38] sm:$0xff]
        %v585 = vld [vmem:[#allocation3 + $0x40] sm:$0xff]
        %v586 = vld [vmem:[#allocation3 + $0x48] sm:$0xff]
        %v587 = vld [vmem:[#allocation3 + $0x50] sm:$0xff]
        %v588 = vld [vmem:[#allocation3 + $0x58] sm:$0xff]
        %v589 = vld [vmem:[#allocation3 + $0x60] sm:$0xff]
        %v590 = vld [vmem:[#allocation3 + $0x68] sm:$0xff]
        %v591 = vld [vmem:[#allocation3 + $0x70] sm:$0xff]
        %v592 = vld [vmem:[#allocation3 + $0x78] sm:$0xff]
        %v593 = vld [vmem:[#allocation3 + $0x80] sm:$0xff]
        %v594 = vld [vmem:[#allocation3 + $0x88] sm:$0xff]
        %v595 = vld [vmem:[#allocation3 + $0x90] sm:$0xff]
        %v596 = vld [vmem:[#allocation3 + $0x98] sm:$0xff]
        %v597 = vld [vmem:[#allocation3 + $0xa0] sm:$0xff]
        %v598 = vld [vmem:[#allocation3 + $0xa8] sm:$0xff]
        %v599 = vld [vmem:[#allocation3 + $0xb0] sm:$0xff]
        %v600 = vld [vmem:[#allocation3 + $0xb8] sm:$0xff]
        %v601 = vld [vmem:[%s462] sm:$0xff]
        %v602 = vld [vmem:[%s462 + $0x8] sm:$0xff]
        %v603 = vld [vmem:[%s462 + $0x10] sm:$0xff]
        %v604 = vld [vmem:[%s462 + $0x18] sm:$0xff]
        %v605 = vld [vmem:[%s462 + $0x20] sm:$0xff]
        %v606 = vld [vmem:[%s462 + $0x28] sm:$0xff]
        %v607 = vld [vmem:[%s462 + $0x30] sm:$0xff]
        %v608 = vld [vmem:[%s462 + $0x38] sm:$0xff]
        %v609 = vld [vmem:[%s462 + $0x40] sm:$0xff]
        %v610 = vld [vmem:[%s462 + $0x48] sm:$0xff]
        %v611 = vld [vmem:[%s462 + $0x50] sm:$0xff]
        %v612 = vld [vmem:[%s462 + $0x58] sm:$0xff]
        %v613 = vld [vmem:[%s462 + $0x60] sm:$0xff]
        %v614 = vld [vmem:[%s462 + $0x68] sm:$0xff]
        %v615 = vld [vmem:[%s462 + $0x70] sm:$0xff]
        %v616 = vld [vmem:[%s462 + $0x78] sm:$0xff]
        %v617 = vld [vmem:[%s462 + $0x80] sm:$0xff]
        %v618 = vld [vmem:[%s462 + $0x88] sm:$0xff]
        %v619 = vld [vmem:[%s462 + $0x90] sm:$0xff]
        %v620 = vld [vmem:[%s462 + $0x98] sm:$0xff]
        %v621 = vld [vmem:[%s462 + $0xa0] sm:$0xff]
        %v622 = vld [vmem:[%s462 + $0xa8] sm:$0xff]
        %v623 = vld [vmem:[%s462 + $0xb0] sm:$0xff]
        %v624 = vld [vmem:[%s462 + $0xb8] sm:$0xff]
        %v625 = vld [vmem:[%s462 + $0xc0] sm:$0xff]
        %v626 = vld [vmem:[%s462 + $0xc8] sm:$0xff]
        %v627 = vld [vmem:[%s462 + $0xd0] sm:$0xff]
        %v628 = vld [vmem:[%s462 + $0xd8] sm:$0xff]
        %v629 = vld [vmem:[%s462 + $0xe0] sm:$0xff]
        %v630 = vld [vmem:[%s462 + $0xe8] sm:$0xff]
        %v631 = vld [vmem:[%s462 + $0xf0] sm:$0xff]
        %v632 = vld [vmem:[%s462 + $0xf8] sm:$0xff]
        %v633 = vld [vmem:[%s462 + $0x100] sm:$0xff]
        %v634 = vld [vmem:[%s462 + $0x108] sm:$0xff]
        %v635 = vld [vmem:[%s462 + $0x110] sm:$0xff]
        %v636 = vld [vmem:[%s462 + $0x118] sm:$0xff]
        %v637 = vld [vmem:[%s462 + $0x120] sm:$0xff]
        %v638 = vld [vmem:[%s462 + $0x128] sm:$0xff]
        %v639 = vld [vmem:[%s462 + $0x130] sm:$0xff]
        %v640 = vld [vmem:[%s462 + $0x138] sm:$0xff]
        %v641 = vld [vmem:[%s462 + $0x140] sm:$0xff]
        %v642 = vld [vmem:[%s462 + $0x148] sm:$0xff]
        %v643 = vld [vmem:[%s462 + $0x150] sm:$0xff]
        %v644 = vld [vmem:[%s462 + $0x158] sm:$0xff]
        %v645 = vld [vmem:[%s462 + $0x160] sm:$0xff]
        %v646 = vld [vmem:[%s462 + $0x168] sm:$0xff]
        %v647 = vld [vmem:[%s462 + $0x170] sm:$0xff]
        %v648 = vld [vmem:[%s462 + $0x178] sm:$0xff]
        %v649 = vld [vmem:[%s462 + $0x180] sm:$0xff]
        %v650 = vld [vmem:[%s462 + $0x188] sm:$0xff]
        %v651 = vld [vmem:[%s462 + $0x190] sm:$0xff]
        %v652 = vld [vmem:[%s462 + $0x198] sm:$0xff]
        %v653 = vld [vmem:[%s462 + $0x1a0] sm:$0xff]
        %v654 = vld [vmem:[%s462 + $0x1a8] sm:$0xff]
        %v655 = vld [vmem:[%s462 + $0x1b0] sm:$0xff]
        %v656 = vld [vmem:[%s462 + $0x1b8] sm:$0xff]
        %v657 = vld [vmem:[%s462 + $0x1c0] sm:$0xff]
        %v658 = vld [vmem:[%s462 + $0x1c8] sm:$0xff]
        %v659 = vld [vmem:[%s462 + $0x1d0] sm:$0xff]
        %v660 = vld [vmem:[%s462 + $0x1d8] sm:$0xff]
        %v661 = vld [vmem:[%s462 + $0x1e0] sm:$0xff]
        %v662 = vld [vmem:[%s462 + $0x1e8] sm:$0xff]
        %v663 = vld [vmem:[%s462 + $0x1f0] sm:$0xff]
        %v664 = vld [vmem:[%s462 + $0x1f8] sm:$0xff]
        %v665 = vld [vmem:[%s462 + $0x200] sm:$0xff]
        %v666 = vld [vmem:[%s462 + $0x208] sm:$0xff]
        %v667 = vld [vmem:[%s462 + $0x210] sm:$0xff]
        %v668 = vld [vmem:[%s462 + $0x218] sm:$0xff]
        %v669 = vld [vmem:[%s462 + $0x220] sm:$0xff]
        %v670 = vld [vmem:[%s462 + $0x228] sm:$0xff]
        %v671 = vld [vmem:[%s462 + $0x230] sm:$0xff]
        %v672 = vld [vmem:[%s462 + $0x238] sm:$0xff]
        %v673 = vld [vmem:[%s462 + $0x240] sm:$0xff]
        %v674 = vld [vmem:[%s462 + $0x248] sm:$0xff]
        %v675 = vld [vmem:[%s462 + $0x250] sm:$0xff]
        %v676 = vld [vmem:[%s462 + $0x258] sm:$0xff]
        %v677 = vld [vmem:[%s462 + $0x260] sm:$0xff]
        %v678 = vld [vmem:[%s462 + $0x268] sm:$0xff]
        %v679 = vld [vmem:[%s462 + $0x270] sm:$0xff]
        %v680 = vld [vmem:[%s462 + $0x278] sm:$0xff]
        %v681 = vld [vmem:[%s462 + $0x280] sm:$0xff]
        %v682 = vld [vmem:[%s462 + $0x288] sm:$0xff]
        %v683 = vld [vmem:[%s462 + $0x290] sm:$0xff]
        %v684 = vld [vmem:[%s462 + $0x298] sm:$0xff]
        %v685 = vld [vmem:[%s462 + $0x2a0] sm:$0xff]
        %v686 = vld [vmem:[%s462 + $0x2a8] sm:$0xff]
        %v687 = vld [vmem:[%s462 + $0x2b0] sm:$0xff]
        %v688 = vld [vmem:[%s462 + $0x2b8] sm:$0xff]
        %v689 = vld [vmem:[%s462 + $0x2c0] sm:$0xff]
        %v690 = vld [vmem:[%s462 + $0x2c8] sm:$0xff]
        %v691 = vld [vmem:[%s462 + $0x2d0] sm:$0xff]
        %v692 = vld [vmem:[%s462 + $0x2d8] sm:$0xff]
        %v693 = vld [vmem:[%s462 + $0x2e0] sm:$0xff]
        %v694 = vld [vmem:[%s462 + $0x2e8] sm:$0xff]
        %v695 = vld [vmem:[%s462 + $0x2f0] sm:$0xff]
        %v696 = vld [vmem:[%s462 + $0x2f8] sm:$0xff]
        %v697 = vld [vmem:[%s462 + $0x300] sm:$0xff]
        %v698 = vld [vmem:[%s462 + $0x308] sm:$0xff]
        %v699 = vld [vmem:[%s462 + $0x310] sm:$0xff]
        %v700 = vld [vmem:[%s462 + $0x318] sm:$0xff]
        %v701 = vld [vmem:[%s462 + $0x320] sm:$0xff]
        %v702 = vld [vmem:[%s462 + $0x328] sm:$0xff]
        %v703 = vld [vmem:[%s462 + $0x330] sm:$0xff]
        %v704 = vld [vmem:[%s462 + $0x338] sm:$0xff]
        %v705 = vld [vmem:[%s462 + $0x340] sm:$0xff]
        %v706 = vld [vmem:[%s462 + $0x348] sm:$0xff]
        %v707 = vld [vmem:[%s462 + $0x350] sm:$0xff]
        %v708 = vld [vmem:[%s462 + $0x358] sm:$0xff]
        %v709 = vld [vmem:[%s462 + $0x360] sm:$0xff]
        %v710 = vld [vmem:[%s462 + $0x368] sm:$0xff]
        %v711 = vld [vmem:[%s462 + $0x370] sm:$0xff]
        %v712 = vld [vmem:[%s462 + $0x378] sm:$0xff]
        %v713 = vld [vmem:[%s462 + $0x380] sm:$0xff]
        %v714 = vld [vmem:[%s462 + $0x388] sm:$0xff]
        %v715 = vld [vmem:[%s462 + $0x390] sm:$0xff]
        %v716 = vld [vmem:[%s462 + $0x398] sm:$0xff]
        %v717 = vld [vmem:[%s462 + $0x3a0] sm:$0xff]
        %v718 = vld [vmem:[%s462 + $0x3a8] sm:$0xff]
        %v719 = vld [vmem:[%s462 + $0x3b0] sm:$0xff]
        %v720 = vld [vmem:[%s462 + $0x3b8] sm:$0xff]
        %v721 = vld [vmem:[%s462 + $0x3c0] sm:$0xff]
        %v722 = vld [vmem:[%s462 + $0x3c8] sm:$0xff]
        %v723 = vld [vmem:[%s462 + $0x3d0] sm:$0xff]
        %v724 = vld [vmem:[%s462 + $0x3d8] sm:$0xff]
        %v725 = vld [vmem:[%s462 + $0x3e0] sm:$0xff]
        %v726 = vld [vmem:[%s462 + $0x3e8] sm:$0xff]
        %v727 = vld [vmem:[%s462 + $0x3f0] sm:$0xff]
        %v728 = vld [vmem:[%s462 + $0x3f8] sm:$0xff]
        %v729 = vld [vmem:[%s462 + $0x400] sm:$0xff]
        %v730 = vld [vmem:[%s462 + $0x408] sm:$0xff]
        %v731 = vld [vmem:[%s462 + $0x410] sm:$0xff]
        %v732 = vld [vmem:[%s462 + $0x418] sm:$0xff]
        %v733 = vld [vmem:[%s462 + $0x420] sm:$0xff]
        %v734 = vld [vmem:[%s462 + $0x428] sm:$0xff]
        %v735 = vld [vmem:[%s462 + $0x430] sm:$0xff]
        %v736 = vld [vmem:[%s462 + $0x438] sm:$0xff]
        %v737 = vld [vmem:[%s462 + $0x440] sm:$0xff]
        %v738 = vld [vmem:[%s462 + $0x448] sm:$0xff]
        %v739 = vld [vmem:[%s462 + $0x450] sm:$0xff]
        %v740 = vld [vmem:[%s462 + $0x458] sm:$0xff]
        %v741 = vld [vmem:[%s462 + $0x460] sm:$0xff]
        %v742 = vld [vmem:[%s462 + $0x468] sm:$0xff]
        %v743 = vld [vmem:[%s462 + $0x470] sm:$0xff]
        %v744 = vld [vmem:[%s462 + $0x478] sm:$0xff]
        %v745 = vld [vmem:[%s462 + $0x480] sm:$0xff]
        %v746 = vld [vmem:[%s462 + $0x488] sm:$0xff]
        %v747 = vld [vmem:[%s462 + $0x490] sm:$0xff]
        %v748 = vld [vmem:[%s462 + $0x498] sm:$0xff]
        %v749 = vld [vmem:[%s462 + $0x4a0] sm:$0xff]
        %v750 = vld [vmem:[%s462 + $0x4a8] sm:$0xff]
        %v751 = vld [vmem:[%s462 + $0x4b0] sm:$0xff]
        %v752 = vld [vmem:[%s462 + $0x4b8] sm:$0xff]
        %v753 = vld [vmem:[%s462 + $0x4c0] sm:$0xff]
        %v754 = vld [vmem:[%s462 + $0x4c8] sm:$0xff]
        %v755 = vld [vmem:[%s462 + $0x4d0] sm:$0xff]
        %v756 = vld [vmem:[%s462 + $0x4d8] sm:$0xff]
        %v757 = vld [vmem:[%s462 + $0x4e0] sm:$0xff]
        %v758 = vld [vmem:[%s462 + $0x4e8] sm:$0xff]
        %v759 = vld [vmem:[%s462 + $0x4f0] sm:$0xff]
        %v760 = vld [vmem:[%s462 + $0x4f8] sm:$0xff]
        %v761 = vld [vmem:[%s462 + $0x500] sm:$0xff]
        %v762 = vld [vmem:[%s462 + $0x508] sm:$0xff]
        %v763 = vld [vmem:[%s462 + $0x510] sm:$0xff]
        %v764 = vld [vmem:[%s462 + $0x518] sm:$0xff]
        %v765 = vld [vmem:[%s462 + $0x520] sm:$0xff]
        %v766 = vld [vmem:[%s462 + $0x528] sm:$0xff]
        %v767 = vld [vmem:[%s462 + $0x530] sm:$0xff]
        %v768 = vld [vmem:[%s462 + $0x538] sm:$0xff]
        %v769 = vld [vmem:[%s462 + $0x540] sm:$0xff]
        %v770 = vld [vmem:[%s462 + $0x548] sm:$0xff]
        %v771 = vld [vmem:[%s462 + $0x550] sm:$0xff]
        %v772 = vld [vmem:[%s462 + $0x558] sm:$0xff]
        %v773 = vld [vmem:[%s462 + $0x560] sm:$0xff]
        %v774 = vld [vmem:[%s462 + $0x568] sm:$0xff]
        %v775 = vld [vmem:[%s462 + $0x570] sm:$0xff]
        %v776 = vld [vmem:[%s462 + $0x578] sm:$0xff]
        %v777 = vld [vmem:[%s462 + $0x580] sm:$0xff]
        %v778 = vld [vmem:[%s462 + $0x588] sm:$0xff]
        %v779 = vld [vmem:[%s462 + $0x590] sm:$0xff]
        %v780 = vld [vmem:[%s462 + $0x598] sm:$0xff]
        %v781 = vld [vmem:[%s462 + $0x5a0] sm:$0xff]
        %v782 = vld [vmem:[%s462 + $0x5a8] sm:$0xff]
        %v783 = vld [vmem:[%s462 + $0x5b0] sm:$0xff]
        %v784 = vld [vmem:[%s462 + $0x5b8] sm:$0xff]
        %v785 = vld [vmem:[%s462 + $0x5c0] sm:$0xff]
        %v786 = vld [vmem:[%s462 + $0x5c8] sm:$0xff]
        %v787 = vld [vmem:[%s462 + $0x5d0] sm:$0xff]
        %v788 = vld [vmem:[%s462 + $0x5d8] sm:$0xff]
        %v789 = vld [vmem:[%s462 + $0x5e0] sm:$0xff]
        %v790 = vld [vmem:[%s462 + $0x5e8] sm:$0xff]
        %v791 = vld [vmem:[%s462 + $0x5f0] sm:$0xff]
        %v792 = vld [vmem:[%s462 + $0x5f8] sm:$0xff]
        %v793 = vld [vmem:[%s462 + $0x600] sm:$0xff]
        %v794 = vld [vmem:[%s462 + $0x608] sm:$0xff]
        %v795 = vld [vmem:[%s462 + $0x610] sm:$0xff]
        %v796 = vld [vmem:[%s462 + $0x618] sm:$0xff]
        %v797 = vld [vmem:[%s462 + $0x620] sm:$0xff]
        %v798 = vld [vmem:[%s462 + $0x628] sm:$0xff]
        %v799 = vld [vmem:[%s462 + $0x630] sm:$0xff]
        %v800 = vld [vmem:[%s462 + $0x638] sm:$0xff]
        %v801 = vld [vmem:[%s462 + $0x640] sm:$0xff]
        %v802 = vld [vmem:[%s462 + $0x648] sm:$0xff]
        %v803 = vld [vmem:[%s462 + $0x650] sm:$0xff]
        %v804 = vld [vmem:[%s462 + $0x658] sm:$0xff]
        %v805 = vld [vmem:[%s462 + $0x660] sm:$0xff]
        %v806 = vld [vmem:[%s462 + $0x668] sm:$0xff]
        %v807 = vld [vmem:[%s462 + $0x670] sm:$0xff]
        %v808 = vld [vmem:[%s462 + $0x678] sm:$0xff]
        %v809 = vld [vmem:[%s462 + $0x680] sm:$0xff]
        %v810 = vld [vmem:[%s462 + $0x688] sm:$0xff]
        %v811 = vld [vmem:[%s462 + $0x690] sm:$0xff]
        %v812 = vld [vmem:[%s462 + $0x698] sm:$0xff]
        %v813 = vld [vmem:[%s462 + $0x6a0] sm:$0xff]
        %v814 = vld [vmem:[%s462 + $0x6a8] sm:$0xff]
        %v815 = vld [vmem:[%s462 + $0x6b0] sm:$0xff]
        %v816 = vld [vmem:[%s462 + $0x6b8] sm:$0xff]
        %v817 = vld [vmem:[%s462 + $0x6c0] sm:$0xff]
        %v818 = vld [vmem:[%s462 + $0x6c8] sm:$0xff]
        %v819 = vld [vmem:[%s462 + $0x6d0] sm:$0xff]
        %v820 = vld [vmem:[%s462 + $0x6d8] sm:$0xff]
        %v821 = vld [vmem:[%s462 + $0x6e0] sm:$0xff]
        %v822 = vld [vmem:[%s462 + $0x6e8] sm:$0xff]
        %v823 = vld [vmem:[%s462 + $0x6f0] sm:$0xff]
        %v824 = vld [vmem:[%s462 + $0x6f8] sm:$0xff]
        %v825 = vld [vmem:[%s462 + $0x700] sm:$0xff]
        %v826 = vld [vmem:[%s462 + $0x708] sm:$0xff]
        %v827 = vld [vmem:[%s462 + $0x710] sm:$0xff]
        %v828 = vld [vmem:[%s462 + $0x718] sm:$0xff]
        %v829 = vld [vmem:[%s462 + $0x720] sm:$0xff]
        %v830 = vld [vmem:[%s462 + $0x728] sm:$0xff]
        %v831 = vld [vmem:[%s462 + $0x730] sm:$0xff]
        %v832 = vld [vmem:[%s462 + $0x738] sm:$0xff]
        %v833 = vld [vmem:[%s462 + $0x740] sm:$0xff]
        %v834 = vld [vmem:[%s462 + $0x748] sm:$0xff]
        %v835 = vld [vmem:[%s462 + $0x750] sm:$0xff]
        %v836 = vld [vmem:[%s462 + $0x758] sm:$0xff]
        %v837 = vld [vmem:[%s462 + $0x760] sm:$0xff]
        %v838 = vld [vmem:[%s462 + $0x768] sm:$0xff]
        %v839 = vld [vmem:[%s462 + $0x770] sm:$0xff]
        %v840 = vld [vmem:[%s462 + $0x778] sm:$0xff]
        %v841 = vld [vmem:[%s462 + $0x780] sm:$0xff]
        %v842 = vld [vmem:[%s462 + $0x788] sm:$0xff]
        %v843 = vld [vmem:[%s462 + $0x790] sm:$0xff]
        %v844 = vld [vmem:[%s462 + $0x798] sm:$0xff]
        %v845 = vld [vmem:[%s462 + $0x7a0] sm:$0xff]
        %v846 = vld [vmem:[%s462 + $0x7a8] sm:$0xff]
        %v847 = vld [vmem:[%s462 + $0x7b0] sm:$0xff]
        %v848 = vld [vmem:[%s462 + $0x7b8] sm:$0xff]
        %v849 = vld [vmem:[%s462 + $0x7c0] sm:$0xff]
        %v850 = vld [vmem:[%s462 + $0x7c8] sm:$0xff]
        %v851 = vld [vmem:[%s462 + $0x7d0] sm:$0xff]
        %v852 = vld [vmem:[%s462 + $0x7d8] sm:$0xff]
        %v853 = vld [vmem:[%s462 + $0x7e0] sm:$0xff]
        %v854 = vld [vmem:[%s462 + $0x7e8] sm:$0xff]
        %v855 = vld [vmem:[%s462 + $0x7f0] sm:$0xff]
        %v856 = vld [vmem:[%s462 + $0x7f8] sm:$0xff]
        %v857 = vld [vmem:[%s462 + $0x800] sm:$0xff]
        %v858 = vld [vmem:[%s462 + $0x808] sm:$0xff]
        %v859 = vld [vmem:[%s462 + $0x810] sm:$0xff]
        %v860 = vld [vmem:[%s462 + $0x818] sm:$0xff]
        %v861 = vld [vmem:[%s462 + $0x820] sm:$0xff]
        %v862 = vld [vmem:[%s462 + $0x828] sm:$0xff]
        %v863 = vld [vmem:[%s462 + $0x830] sm:$0xff]
        %v864 = vld [vmem:[%s462 + $0x838] sm:$0xff]
        %v865 = vld [vmem:[%s462 + $0x840] sm:$0xff]
        %v866 = vld [vmem:[%s462 + $0x848] sm:$0xff]
        %v867 = vld [vmem:[%s462 + $0x850] sm:$0xff]
        %v868 = vld [vmem:[%s462 + $0x858] sm:$0xff]
        %v869 = vld [vmem:[%s462 + $0x860] sm:$0xff]
        %v870 = vld [vmem:[%s462 + $0x868] sm:$0xff]
        %v871 = vld [vmem:[%s462 + $0x870] sm:$0xff]
        %v872 = vld [vmem:[%s462 + $0x878] sm:$0xff]
        %v873 = vld [vmem:[%s462 + $0x880] sm:$0xff]
        %v874 = vld [vmem:[%s462 + $0x888] sm:$0xff]
        %v875 = vld [vmem:[%s462 + $0x890] sm:$0xff]
        %v876 = vld [vmem:[%s462 + $0x898] sm:$0xff]
        %v877 = vld [vmem:[%s462 + $0x8a0] sm:$0xff]
        %v878 = vld [vmem:[%s462 + $0x8a8] sm:$0xff]
        %v879 = vld [vmem:[%s462 + $0x8b0] sm:$0xff]
        %v880 = vld [vmem:[%s462 + $0x8b8] sm:$0xff]
        %v881 = vld [vmem:[%s462 + $0x8c0] sm:$0xff]
        %v882 = vld [vmem:[%s462 + $0x8c8] sm:$0xff]
        %v883 = vld [vmem:[%s462 + $0x8d0] sm:$0xff]
        %v884 = vld [vmem:[%s462 + $0x8d8] sm:$0xff]
        %v885 = vld [vmem:[%s462 + $0x8e0] sm:$0xff]
        %v886 = vld [vmem:[%s462 + $0x8e8] sm:$0xff]
        %v887 = vld [vmem:[%s462 + $0x8f0] sm:$0xff]
        %v888 = vld [vmem:[%s462 + $0x8f8] sm:$0xff]
        %v889 = vld [vmem:[%s462 + $0x900] sm:$0xff]
        %v890 = vld [vmem:[%s462 + $0x908] sm:$0xff]
        %v891 = vld [vmem:[%s462 + $0x910] sm:$0xff]
        %v892 = vld [vmem:[%s462 + $0x918] sm:$0xff]
        %v893 = vld [vmem:[%s462 + $0x920] sm:$0xff]
        %v894 = vld [vmem:[%s462 + $0x928] sm:$0xff]
        %v895 = vld [vmem:[%s462 + $0x930] sm:$0xff]
        %v896 = vld [vmem:[%s462 + $0x938] sm:$0xff]
        %v897 = vld [vmem:[%s462 + $0x940] sm:$0xff]
        %v898 = vld [vmem:[%s462 + $0x948] sm:$0xff]
        %v899 = vld [vmem:[%s462 + $0x950] sm:$0xff]
        %v900 = vld [vmem:[%s462 + $0x958] sm:$0xff]
        %v901 = vld [vmem:[%s462 + $0x960] sm:$0xff]
        %v902 = vld [vmem:[%s462 + $0x968] sm:$0xff]
        %v903 = vld [vmem:[%s462 + $0x970] sm:$0xff]
        %v904 = vld [vmem:[%s462 + $0x978] sm:$0xff]
        %v905 = vld [vmem:[%s462 + $0x980] sm:$0xff]
        %v906 = vld [vmem:[%s462 + $0x988] sm:$0xff]
        %v907 = vld [vmem:[%s462 + $0x990] sm:$0xff]
        %v908 = vld [vmem:[%s462 + $0x998] sm:$0xff]
        %v909 = vld [vmem:[%s462 + $0x9a0] sm:$0xff]
        %v910 = vld [vmem:[%s462 + $0x9a8] sm:$0xff]
        %v911 = vld [vmem:[%s462 + $0x9b0] sm:$0xff]
        %v912 = vld [vmem:[%s462 + $0x9b8] sm:$0xff]
        %v913 = vld [vmem:[%s462 + $0x9c0] sm:$0xff]
        %v914 = vld [vmem:[%s462 + $0x9c8] sm:$0xff]
        %v915 = vld [vmem:[%s462 + $0x9d0] sm:$0xff]
        %v916 = vld [vmem:[%s462 + $0x9d8] sm:$0xff]
        %v917 = vld [vmem:[%s462 + $0x9e0] sm:$0xff]
        %v918 = vld [vmem:[%s462 + $0x9e8] sm:$0xff]
        %v919 = vld [vmem:[%s462 + $0x9f0] sm:$0xff]
        %v920 = vld [vmem:[%s462 + $0x9f8] sm:$0xff]
        %v921 = vld [vmem:[%s462 + $0xa00] sm:$0xff]
        %v922 = vld [vmem:[%s462 + $0xa08] sm:$0xff]
        %v923 = vld [vmem:[%s462 + $0xa10] sm:$0xff]
        %v924 = vld [vmem:[%s462 + $0xa18] sm:$0xff]
        %v925 = vld [vmem:[%s462 + $0xa20] sm:$0xff]
        %v926 = vld [vmem:[%s462 + $0xa28] sm:$0xff]
        %v927 = vld [vmem:[%s462 + $0xa30] sm:$0xff]
        %v928 = vld [vmem:[%s462 + $0xa38] sm:$0xff]
        %v929 = vld [vmem:[%s462 + $0xa40] sm:$0xff]
        %v930 = vld [vmem:[%s462 + $0xa48] sm:$0xff]
        %v931 = vld [vmem:[%s462 + $0xa50] sm:$0xff]
        %v932 = vld [vmem:[%s462 + $0xa58] sm:$0xff]
        %v933 = vld [vmem:[%s462 + $0xa60] sm:$0xff]
        %v934 = vld [vmem:[%s462 + $0xa68] sm:$0xff]
        %v935 = vld [vmem:[%s462 + $0xa70] sm:$0xff]
        %v936 = vld [vmem:[%s462 + $0xa78] sm:$0xff]
        %v937 = vld [vmem:[%s462 + $0xa80] sm:$0xff]
        %v938 = vld [vmem:[%s462 + $0xa88] sm:$0xff]
        %v939 = vld [vmem:[%s462 + $0xa90] sm:$0xff]
        %v940 = vld [vmem:[%s462 + $0xa98] sm:$0xff]
        %v941 = vld [vmem:[%s462 + $0xaa0] sm:$0xff]
        %v942 = vld [vmem:[%s462 + $0xaa8] sm:$0xff]
        %v943 = vld [vmem:[%s462 + $0xab0] sm:$0xff]
        %v944 = vld [vmem:[%s462 + $0xab8] sm:$0xff]
        %v945 = vld [vmem:[%s462 + $0xac0] sm:$0xff]
        %v946 = vld [vmem:[%s462 + $0xac8] sm:$0xff]
        %v947 = vld [vmem:[%s462 + $0xad0] sm:$0xff]
        %v948 = vld [vmem:[%s462 + $0xad8] sm:$0xff]
        %v949 = vld [vmem:[%s462 + $0xae0] sm:$0xff]
        %v950 = vld [vmem:[%s462 + $0xae8] sm:$0xff]
        %v951 = vld [vmem:[%s462 + $0xaf0] sm:$0xff]
        %v952 = vld [vmem:[%s462 + $0xaf8] sm:$0xff]
        %v953 = vld [vmem:[%s462 + $0xb00] sm:$0xff]
        %v954 = vld [vmem:[%s462 + $0xb08] sm:$0xff]
        %v955 = vld [vmem:[%s462 + $0xb10] sm:$0xff]
        %v956 = vld [vmem:[%s462 + $0xb18] sm:$0xff]
        %v957 = vld [vmem:[%s462 + $0xb20] sm:$0xff]
        %v958 = vld [vmem:[%s462 + $0xb28] sm:$0xff]
        %v959 = vld [vmem:[%s462 + $0xb30] sm:$0xff]
        %v960 = vld [vmem:[%s462 + $0xb38] sm:$0xff]
        %v961 = vld [vmem:[%s462 + $0xb40] sm:$0xff]
        %v962 = vld [vmem:[%s462 + $0xb48] sm:$0xff]
        %v963 = vld [vmem:[%s462 + $0xb50] sm:$0xff]
        %v964 = vld [vmem:[%s462 + $0xb58] sm:$0xff]
        %v965 = vld [vmem:[%s462 + $0xb60] sm:$0xff]
        %v966 = vld [vmem:[%s462 + $0xb68] sm:$0xff]
        %v967 = vld [vmem:[%s462 + $0xb70] sm:$0xff]
        %v968 = vld [vmem:[%s462 + $0xb78] sm:$0xff]
        %v969 = vld [vmem:[%s462 + $0xb80] sm:$0xff]
        %v970 = vld [vmem:[%s462 + $0xb88] sm:$0xff]
        %v971 = vld [vmem:[%s462 + $0xb90] sm:$0xff]
        %v972 = vld [vmem:[%s462 + $0xb98] sm:$0xff]
        %v973 = vld [vmem:[%s462 + $0xba0] sm:$0xff]
        %v974 = vld [vmem:[%s462 + $0xba8] sm:$0xff]
        %v975 = vld [vmem:[%s462 + $0xbb0] sm:$0xff]
        %v976 = vld [vmem:[%s462 + $0xbb8] sm:$0xff]
        %v977 = vld [vmem:[%s462 + $0xbc0] sm:$0xff]
        %v978 = vld [vmem:[%s462 + $0xbc8] sm:$0xff]
        %v979 = vld [vmem:[%s462 + $0xbd0] sm:$0xff]
        %v980 = vld [vmem:[%s462 + $0xbd8] sm:$0xff]
        %v981 = vld [vmem:[%s462 + $0xbe0] sm:$0xff]
        %v982 = vld [vmem:[%s462 + $0xbe8] sm:$0xff]
        %v983 = vld [vmem:[%s462 + $0xbf0] sm:$0xff]
        %v984 = vld [vmem:[%s462 + $0xbf8] sm:$0xff]
        %v985 = vld [vmem:[%s462 + $0xc00] sm:$0xff]
        %v986 = vld [vmem:[%s462 + $0xc08] sm:$0xff]
        %v987 = vld [vmem:[%s462 + $0xc10] sm:$0xff]
        %v988 = vld [vmem:[%s462 + $0xc18] sm:$0xff]
        %v989 = vld [vmem:[%s462 + $0xc20] sm:$0xff]
        %v990 = vld [vmem:[%s462 + $0xc28] sm:$0xff]
        %v991 = vld [vmem:[%s462 + $0xc30] sm:$0xff]
        %v992 = vld [vmem:[%s462 + $0xc38] sm:$0xff]
        %v993 = vld [vmem:[%s462 + $0xc40] sm:$0xff]
        %v994 = vld [vmem:[%s462 + $0xc48] sm:$0xff]
        %v995 = vld [vmem:[%s462 + $0xc50] sm:$0xff]
        %v996 = vld [vmem:[%s462 + $0xc58] sm:$0xff]
        %v997 = vld [vmem:[%s462 + $0xc60] sm:$0xff]
        %v998 = vld [vmem:[%s462 + $0xc68] sm:$0xff]
        %v999 = vld [vmem:[%s462 + $0xc70] sm:$0xff]
        %v1000 = vld [vmem:[%s462 + $0xc78] sm:$0xff]
        %v1001 = vld [vmem:[%s462 + $0xc80] sm:$0xff]
        %v1002 = vld [vmem:[%s462 + $0xc88] sm:$0xff]
        %v1003 = vld [vmem:[%s462 + $0xc90] sm:$0xff]
        %v1004 = vld [vmem:[%s462 + $0xc98] sm:$0xff]
        %v1005 = vld [vmem:[%s462 + $0xca0] sm:$0xff]
        %v1006 = vld [vmem:[%s462 + $0xca8] sm:$0xff]
        %v1007 = vld [vmem:[%s462 + $0xcb0] sm:$0xff]
        %v1008 = vld [vmem:[%s462 + $0xcb8] sm:$0xff]
        %v1009 = vld [vmem:[%s462 + $0xcc0] sm:$0xff]
        %v1010 = vld [vmem:[%s462 + $0xcc8] sm:$0xff]
        %v1011 = vld [vmem:[%s462 + $0xcd0] sm:$0xff]
        %v1012 = vld [vmem:[%s462 + $0xcd8] sm:$0xff]
        %v1013 = vld [vmem:[%s462 + $0xce0] sm:$0xff]
        %v1014 = vld [vmem:[%s462 + $0xce8] sm:$0xff]
        %v1015 = vld [vmem:[%s462 + $0xcf0] sm:$0xff]
        %v1016 = vld [vmem:[%s462 + $0xcf8] sm:$0xff]
        %v1017 = vld [vmem:[%s462 + $0xd00] sm:$0xff]
        %v1018 = vld [vmem:[%s462 + $0xd08] sm:$0xff]
        %v1019 = vld [vmem:[%s462 + $0xd10] sm:$0xff]
        %v1020 = vld [vmem:[%s462 + $0xd18] sm:$0xff]
        %v1021 = vld [vmem:[%s462 + $0xd20] sm:$0xff]
        %v1022 = vld [vmem:[%s462 + $0xd28] sm:$0xff]
        %v1023 = vld [vmem:[%s462 + $0xd30] sm:$0xff]
        %v1024 = vld [vmem:[%s462 + $0xd38] sm:$0xff]
        %v1025 = vld [vmem:[%s462 + $0xd40] sm:$0xff]
        %v1026 = vld [vmem:[%s462 + $0xd48] sm:$0xff]
        %v1027 = vld [vmem:[%s462 + $0xd50] sm:$0xff]
        %v1028 = vld [vmem:[%s462 + $0xd58] sm:$0xff]
        %v1029 = vld [vmem:[%s462 + $0xd60] sm:$0xff]
        %v1030 = vld [vmem:[%s462 + $0xd68] sm:$0xff]
        %v1031 = vld [vmem:[%s462 + $0xd70] sm:$0xff]
        %v1032 = vld [vmem:[%s462 + $0xd78] sm:$0xff]
        %v1033 = vld [vmem:[%s462 + $0xd80] sm:$0xff]
        %v1034 = vld [vmem:[%s462 + $0xd88] sm:$0xff]
        %v1035 = vld [vmem:[%s462 + $0xd90] sm:$0xff]
        %v1036 = vld [vmem:[%s462 + $0xd98] sm:$0xff]
        %v1037 = vld [vmem:[%s462 + $0xda0] sm:$0xff]
        %v1038 = vld [vmem:[%s462 + $0xda8] sm:$0xff]
        %v1039 = vld [vmem:[%s462 + $0xdb0] sm:$0xff]
        %v1040 = vld [vmem:[%s462 + $0xdb8] sm:$0xff]
        %v1041 = vld [vmem:[%s462 + $0xdc0] sm:$0xff]
        %v1042 = vld [vmem:[%s462 + $0xdc8] sm:$0xff]
        %v1043 = vld [vmem:[%s462 + $0xdd0] sm:$0xff]
        %v1044 = vld [vmem:[%s462 + $0xdd8] sm:$0xff]
        %v1045 = vld [vmem:[%s462 + $0xde0] sm:$0xff]
        %v1046 = vld [vmem:[%s462 + $0xde8] sm:$0xff]
        %v1047 = vld [vmem:[%s462 + $0xdf0] sm:$0xff]
        %v1048 = vld [vmem:[%s462 + $0xdf8] sm:$0xff]
        %v1049 = vld [vmem:[%s462 + $0xe00] sm:$0xff]
        %v1050 = vld [vmem:[%s462 + $0xe08] sm:$0xff]
        %v1051 = vld [vmem:[%s462 + $0xe10] sm:$0xff]
        %v1052 = vld [vmem:[%s462 + $0xe18] sm:$0xff]
        %v1053 = vld [vmem:[%s462 + $0xe20] sm:$0xff]
        %v1054 = vld [vmem:[%s462 + $0xe28] sm:$0xff]
        %v1055 = vld [vmem:[%s462 + $0xe30] sm:$0xff]
        %v1056 = vld [vmem:[%s462 + $0xe38] sm:$0xff]
        %v1057 = vld [vmem:[%s462 + $0xe40] sm:$0xff]
        %v1058 = vld [vmem:[%s462 + $0xe48] sm:$0xff]
        %v1059 = vld [vmem:[%s462 + $0xe50] sm:$0xff]
        %v1060 = vld [vmem:[%s462 + $0xe58] sm:$0xff]
        %v1061 = vld [vmem:[%s462 + $0xe60] sm:$0xff]
        %v1062 = vld [vmem:[%s462 + $0xe68] sm:$0xff]
        %v1063 = vld [vmem:[%s462 + $0xe70] sm:$0xff]
        %v1064 = vld [vmem:[%s462 + $0xe78] sm:$0xff]
        %v1065 = vld [vmem:[%s462 + $0xe80] sm:$0xff]
        %v1066 = vld [vmem:[%s462 + $0xe88] sm:$0xff]
        %v1067 = vld [vmem:[%s462 + $0xe90] sm:$0xff]
        %v1068 = vld [vmem:[%s462 + $0xe98] sm:$0xff]
        %v1069 = vld [vmem:[%s462 + $0xea0] sm:$0xff]
        %v1070 = vld [vmem:[%s462 + $0xea8] sm:$0xff]
        %v1071 = vld [vmem:[%s462 + $0xeb0] sm:$0xff]
        %v1072 = vld [vmem:[%s462 + $0xeb8] sm:$0xff]
        %v1073 = vld [vmem:[%s462 + $0xec0] sm:$0xff]
        %v1074 = vld [vmem:[%s462 + $0xec8] sm:$0xff]
        %v1075 = vld [vmem:[%s462 + $0xed0] sm:$0xff]
        %v1076 = vld [vmem:[%s462 + $0xed8] sm:$0xff]
        %v1077 = vld [vmem:[%s462 + $0xee0] sm:$0xff]
        %v1078 = vld [vmem:[%s462 + $0xee8] sm:$0xff]
        %v1079 = vld [vmem:[%s462 + $0xef0] sm:$0xff]
        %v1080 = vld [vmem:[%s462 + $0xef8] sm:$0xff]
        %v1081 = vld [vmem:[%s462 + $0xf00] sm:$0xff]
        %v1082 = vld [vmem:[%s462 + $0xf08] sm:$0xff]
        %v1083 = vld [vmem:[%s462 + $0xf10] sm:$0xff]
        %v1084 = vld [vmem:[%s462 + $0xf18] sm:$0xff]
        %v1085 = vld [vmem:[%s462 + $0xf20] sm:$0xff]
        %v1086 = vld [vmem:[%s462 + $0xf28] sm:$0xff]
        %v1087 = vld [vmem:[%s462 + $0xf30] sm:$0xff]
        %v1088 = vld [vmem:[%s462 + $0xf38] sm:$0xff]
        %v1089 = vld [vmem:[%s462 + $0xf40] sm:$0xff]
        %v1090 = vld [vmem:[%s462 + $0xf48] sm:$0xff]
        %v1091 = vld [vmem:[%s462 + $0xf50] sm:$0xff]
        %v1092 = vld [vmem:[%s462 + $0xf58] sm:$0xff]
        %v1093 = vld [vmem:[%s462 + $0xf60] sm:$0xff]
        %v1094 = vld [vmem:[%s462 + $0xf68] sm:$0xff]
        %v1095 = vld [vmem:[%s462 + $0xf70] sm:$0xff]
        %v1096 = vld [vmem:[%s462 + $0xf78] sm:$0xff]
        %v1097 = vld [vmem:[%s462 + $0xf80] sm:$0xff]
        %v1098 = vld [vmem:[%s462 + $0xf88] sm:$0xff]
        %v1099 = vld [vmem:[%s462 + $0xf90] sm:$0xff]
        %v1100 = vld [vmem:[%s462 + $0xf98] sm:$0xff]
        %v1101 = vld [vmem:[%s462 + $0xfa0] sm:$0xff]
        %v1102 = vld [vmem:[%s462 + $0xfa8] sm:$0xff]
        %v1103 = vld [vmem:[%s462 + $0xfb0] sm:$0xff]
        %v1104 = vld [vmem:[%s462 + $0xfb8] sm:$0xff]
        %v1105 = vld [vmem:[%s462 + $0xfc0] sm:$0xff]
        %v1106 = vld [vmem:[%s462 + $0xfc8] sm:$0xff]
        %v1107 = vld [vmem:[%s462 + $0xfd0] sm:$0xff]
        %v1108 = vld [vmem:[%s462 + $0xfd8] sm:$0xff]
        %v1109 = vld [vmem:[%s462 + $0xfe0] sm:$0xff]
        %v1110 = vld [vmem:[%s462 + $0xfe8] sm:$0xff]
        %v1111 = vld [vmem:[%s462 + $0xff0] sm:$0xff]
        %v1112 = vld [vmem:[%s462 + $0xff8] sm:$0xff]
        %v1113 = vld [vmem:[%s462 + $0x1000] sm:$0xff]
        %v1114 = vld [vmem:[%s462 + $0x1008] sm:$0xff]
        %v1115 = vld [vmem:[%s462 + $0x1010] sm:$0xff]
        %v1116 = vld [vmem:[%s462 + $0x1018] sm:$0xff]
        %v1117 = vld [vmem:[%s462 + $0x1020] sm:$0xff]
        %v1118 = vld [vmem:[%s462 + $0x1028] sm:$0xff]
        %v1119 = vld [vmem:[%s462 + $0x1030] sm:$0xff]
        %v1120 = vld [vmem:[%s462 + $0x1038] sm:$0xff]
        %v1121 = vld [vmem:[%s462 + $0x1040] sm:$0xff]
        %v1122 = vld [vmem:[%s462 + $0x1048] sm:$0xff]
        %v1123 = vld [vmem:[%s462 + $0x1050] sm:$0xff]
        %v1124 = vld [vmem:[%s462 + $0x1058] sm:$0xff]
        %v1125 = vld [vmem:[%s462 + $0x1060] sm:$0xff]
        %v1126 = vld [vmem:[%s462 + $0x1068] sm:$0xff]
        %v1127 = vld [vmem:[%s462 + $0x1070] sm:$0xff]
        %v1128 = vld [vmem:[%s462 + $0x1078] sm:$0xff]
        %v1129 = vld [vmem:[%s462 + $0x1080] sm:$0xff]
        %v1130 = vld [vmem:[%s462 + $0x1088] sm:$0xff]
        %v1131 = vld [vmem:[%s462 + $0x1090] sm:$0xff]
        %v1132 = vld [vmem:[%s462 + $0x1098] sm:$0xff]
        %v1133 = vld [vmem:[%s462 + $0x10a0] sm:$0xff]
        %v1134 = vld [vmem:[%s462 + $0x10a8] sm:$0xff]
        %v1135 = vld [vmem:[%s462 + $0x10b0] sm:$0xff]
        %v1136 = vld [vmem:[%s462 + $0x10b8] sm:$0xff]
        %v1137 = vld [vmem:[%s462 + $0x10c0] sm:$0xff]
        %v1138 = vld [vmem:[%s462 + $0x10c8] sm:$0xff]
        %v1139 = vld [vmem:[%s462 + $0x10d0] sm:$0xff]
        %v1140 = vld [vmem:[%s462 + $0x10d8] sm:$0xff]
        %v1141 = vld [vmem:[%s462 + $0x10e0] sm:$0xff]
        %v1142 = vld [vmem:[%s462 + $0x10e8] sm:$0xff]
        %v1143 = vld [vmem:[%s462 + $0x10f0] sm:$0xff]
        %v1144 = vld [vmem:[%s462 + $0x10f8] sm:$0xff]
        %v1145 = vld [vmem:[%s462 + $0x1100] sm:$0xff]
        %v1146 = vld [vmem:[%s462 + $0x1108] sm:$0xff]
        %v1147 = vld [vmem:[%s462 + $0x1110] sm:$0xff]
        %v1148 = vld [vmem:[%s462 + $0x1118] sm:$0xff]
        %v1149 = vld [vmem:[%s462 + $0x1120] sm:$0xff]
        %v1150 = vld [vmem:[%s462 + $0x1128] sm:$0xff]
        %v1151 = vld [vmem:[%s462 + $0x1130] sm:$0xff]
        %v1152 = vld [vmem:[%s462 + $0x1138] sm:$0xff]
        %v1153 = vld [vmem:[%s462 + $0x1140] sm:$0xff]
        %v1154 = vld [vmem:[%s462 + $0x1148] sm:$0xff]
        %v1155 = vld [vmem:[%s462 + $0x1150] sm:$0xff]
        %v1156 = vld [vmem:[%s462 + $0x1158] sm:$0xff]
        %v1157 = vld [vmem:[%s462 + $0x1160] sm:$0xff]
        %v1158 = vld [vmem:[%s462 + $0x1168] sm:$0xff]
        %v1159 = vld [vmem:[%s462 + $0x1170] sm:$0xff]
        %v1160 = vld [vmem:[%s462 + $0x1178] sm:$0xff]
        %v1161 = vld [vmem:[%s462 + $0x1180] sm:$0xff]
        %v1162 = vld [vmem:[%s462 + $0x1188] sm:$0xff]
        %v1163 = vld [vmem:[%s462 + $0x1190] sm:$0xff]
        %v1164 = vld [vmem:[%s462 + $0x1198] sm:$0xff]
        %v1165 = vld [vmem:[%s462 + $0x11a0] sm:$0xff]
        %v1166 = vld [vmem:[%s462 + $0x11a8] sm:$0xff]
        %v1167 = vld [vmem:[%s462 + $0x11b0] sm:$0xff]
        %v1168 = vld [vmem:[%s462 + $0x11b8] sm:$0xff]
        %v1169 = vld [vmem:[%s462 + $0x11c0] sm:$0xff]
        %v1170 = vld [vmem:[%s462 + $0x11c8] sm:$0xff]
        %v1171 = vld [vmem:[%s462 + $0x11d0] sm:$0xff]
        %v1172 = vld [vmem:[%s462 + $0x11d8] sm:$0xff]
        %v1173 = vld [vmem:[%s462 + $0x11e0] sm:$0xff]
        %v1174 = vld [vmem:[%s462 + $0x11e8] sm:$0xff]
        %v1175 = vld [vmem:[%s462 + $0x11f0] sm:$0xff]
        %v1176 = vld [vmem:[%s462 + $0x11f8] sm:$0xff]
        %v1177 = vld [vmem:[%s462 + $0x1200] sm:$0xff]
        %v1178 = vld [vmem:[%s462 + $0x1208] sm:$0xff]
        %v1179 = vld [vmem:[%s462 + $0x1210] sm:$0xff]
        %v1180 = vld [vmem:[%s462 + $0x1218] sm:$0xff]
        %v1181 = vld [vmem:[%s462 + $0x1220] sm:$0xff]
        %v1182 = vld [vmem:[%s462 + $0x1228] sm:$0xff]
        %v1183 = vld [vmem:[%s462 + $0x1230] sm:$0xff]
        %v1184 = vld [vmem:[%s462 + $0x1238] sm:$0xff]
        %v1185 = vld [vmem:[%s462 + $0x1240] sm:$0xff]
        %v1186 = vld [vmem:[%s462 + $0x1248] sm:$0xff]
        %v1187 = vld [vmem:[%s462 + $0x1250] sm:$0xff]
        %v1188 = vld [vmem:[%s462 + $0x1258] sm:$0xff]
        %v1189 = vld [vmem:[%s462 + $0x1260] sm:$0xff]
        %v1190 = vld [vmem:[%s462 + $0x1268] sm:$0xff]
        %v1191 = vld [vmem:[%s462 + $0x1270] sm:$0xff]
        %v1192 = vld [vmem:[%s462 + $0x1278] sm:$0xff]
        %v1193 = vld [vmem:[%s462 + $0x1280] sm:$0xff]
        %v1194 = vld [vmem:[%s462 + $0x1288] sm:$0xff]
        %v1195 = vld [vmem:[%s462 + $0x1290] sm:$0xff]
        %v1196 = vld [vmem:[%s462 + $0x1298] sm:$0xff]
        %v1197 = vld [vmem:[%s462 + $0x12a0] sm:$0xff]
        %v1198 = vld [vmem:[%s462 + $0x12a8] sm:$0xff]
        %v1199 = vld [vmem:[%s462 + $0x12b0] sm:$0xff]
        %v1200 = vld [vmem:[%s462 + $0x12b8] sm:$0xff]
        %v1201 = vld [vmem:[%s462 + $0x12c0] sm:$0xff]
        %v1202 = vld [vmem:[%s462 + $0x12c8] sm:$0xff]
        %v1203 = vld [vmem:[%s462 + $0x12d0] sm:$0xff]
        %v1204 = vld [vmem:[%s462 + $0x12d8] sm:$0xff]
        %v1205 = vld [vmem:[%s462 + $0x12e0] sm:$0xff]
        %v1206 = vld [vmem:[%s462 + $0x12e8] sm:$0xff]
        %v1207 = vld [vmem:[%s462 + $0x12f0] sm:$0xff]
        %v1208 = vld [vmem:[%s462 + $0x12f8] sm:$0xff]
        %v1209 = vld [vmem:[%s462 + $0x1300] sm:$0xff]
        %v1210 = vld [vmem:[%s462 + $0x1308] sm:$0xff]
        %v1211 = vld [vmem:[%s462 + $0x1310] sm:$0xff]
        %v1212 = vld [vmem:[%s462 + $0x1318] sm:$0xff]
        %v1213 = vld [vmem:[%s462 + $0x1320] sm:$0xff]
        %v1214 = vld [vmem:[%s462 + $0x1328] sm:$0xff]
        %v1215 = vld [vmem:[%s462 + $0x1330] sm:$0xff]
        %v1216 = vld [vmem:[%s462 + $0x1338] sm:$0xff]
        %v1217 = vld [vmem:[%s462 + $0x1340] sm:$0xff]
        %v1218 = vld [vmem:[%s462 + $0x1348] sm:$0xff]
        %v1219 = vld [vmem:[%s462 + $0x1350] sm:$0xff]
        %v1220 = vld [vmem:[%s462 + $0x1358] sm:$0xff]
        %v1221 = vld [vmem:[%s462 + $0x1360] sm:$0xff]
        %v1222 = vld [vmem:[%s462 + $0x1368] sm:$0xff]
        %v1223 = vld [vmem:[%s462 + $0x1370] sm:$0xff]
        %v1224 = vld [vmem:[%s462 + $0x1378] sm:$0xff]
        %v1225 = vld [vmem:[%s462 + $0x1380] sm:$0xff]
        %v1226 = vld [vmem:[%s462 + $0x1388] sm:$0xff]
        %v1227 = vld [vmem:[%s462 + $0x1390] sm:$0xff]
        %v1228 = vld [vmem:[%s462 + $0x1398] sm:$0xff]
        %v1229 = vld [vmem:[%s462 + $0x13a0] sm:$0xff]
        %v1230 = vld [vmem:[%s462 + $0x13a8] sm:$0xff]
        %v1231 = vld [vmem:[%s462 + $0x13b0] sm:$0xff]
        %v1232 = vld [vmem:[%s462 + $0x13b8] sm:$0xff]
        %v1233 = vld [vmem:[%s462 + $0x13c0] sm:$0xff]
        %v1234 = vld [vmem:[%s462 + $0x13c8] sm:$0xff]
        %v1235 = vld [vmem:[%s462 + $0x13d0] sm:$0xff]
        %v1236 = vld [vmem:[%s462 + $0x13d8] sm:$0xff]
        %v1237 = vld [vmem:[%s462 + $0x13e0] sm:$0xff]
        %v1238 = vld [vmem:[%s462 + $0x13e8] sm:$0xff]
        %v1239 = vld [vmem:[%s462 + $0x13f0] sm:$0xff]
        %v1240 = vld [vmem:[%s462 + $0x13f8] sm:$0xff]
        %v1241 = vld [vmem:[%s462 + $0x1400] sm:$0xff]
        %v1242 = vld [vmem:[%s462 + $0x1408] sm:$0xff]
        %v1243 = vld [vmem:[%s462 + $0x1410] sm:$0xff]
        %v1244 = vld [vmem:[%s462 + $0x1418] sm:$0xff]
        %v1245 = vld [vmem:[%s462 + $0x1420] sm:$0xff]
        %v1246 = vld [vmem:[%s462 + $0x1428] sm:$0xff]
        %v1247 = vld [vmem:[%s462 + $0x1430] sm:$0xff]
        %v1248 = vld [vmem:[%s462 + $0x1438] sm:$0xff]
        %v1249 = vld [vmem:[%s462 + $0x1440] sm:$0xff]
        %v1250 = vld [vmem:[%s462 + $0x1448] sm:$0xff]
        %v1251 = vld [vmem:[%s462 + $0x1450] sm:$0xff]
        %v1252 = vld [vmem:[%s462 + $0x1458] sm:$0xff]
        %v1253 = vld [vmem:[%s462 + $0x1460] sm:$0xff]
        %v1254 = vld [vmem:[%s462 + $0x1468] sm:$0xff]
        %v1255 = vld [vmem:[%s462 + $0x1470] sm:$0xff]
        %v1256 = vld [vmem:[%s462 + $0x1478] sm:$0xff]
        %v1257 = vld [vmem:[%s462 + $0x1480] sm:$0xff]
        %v1258 = vld [vmem:[%s462 + $0x1488] sm:$0xff]
        %v1259 = vld [vmem:[%s462 + $0x1490] sm:$0xff]
        %v1260 = vld [vmem:[%s462 + $0x1498] sm:$0xff]
        %v1261 = vld [vmem:[%s462 + $0x14a0] sm:$0xff]
        %v1262 = vld [vmem:[%s462 + $0x14a8] sm:$0xff]
        %v1263 = vld [vmem:[%s462 + $0x14b0] sm:$0xff]
        %v1264 = vld [vmem:[%s462 + $0x14b8] sm:$0xff]
        %v1265 = vld [vmem:[%s462 + $0x14c0] sm:$0xff]
        %v1266 = vld [vmem:[%s462 + $0x14c8] sm:$0xff]
        %v1267 = vld [vmem:[%s462 + $0x14d0] sm:$0xff]
        %v1268 = vld [vmem:[%s462 + $0x14d8] sm:$0xff]
        %v1269 = vld [vmem:[%s462 + $0x14e0] sm:$0xff]
        %v1270 = vld [vmem:[%s462 + $0x14e8] sm:$0xff]
        %v1271 = vld [vmem:[%s462 + $0x14f0] sm:$0xff]
        %v1272 = vld [vmem:[%s462 + $0x14f8] sm:$0xff]
        %v1273 = vld [vmem:[%s462 + $0x1500] sm:$0xff]
        %v1274 = vld [vmem:[%s462 + $0x1508] sm:$0xff]
        %v1275 = vld [vmem:[%s462 + $0x1510] sm:$0xff]
        %v1276 = vld [vmem:[%s462 + $0x1518] sm:$0xff]
        %v1277 = vld [vmem:[%s462 + $0x1520] sm:$0xff]
        %v1278 = vld [vmem:[%s462 + $0x1528] sm:$0xff]
        %v1279 = vld [vmem:[%s462 + $0x1530] sm:$0xff]
        %v1280 = vld [vmem:[%s462 + $0x1538] sm:$0xff]
        %v1281 = vld [vmem:[%s462 + $0x1540] sm:$0xff]
        %v1282 = vld [vmem:[%s462 + $0x1548] sm:$0xff]
        %v1283 = vld [vmem:[%s462 + $0x1550] sm:$0xff]
        %v1284 = vld [vmem:[%s462 + $0x1558] sm:$0xff]
        %v1285 = vld [vmem:[%s462 + $0x1560] sm:$0xff]
        %v1286 = vld [vmem:[%s462 + $0x1568] sm:$0xff]
        %v1287 = vld [vmem:[%s462 + $0x1570] sm:$0xff]
        %v1288 = vld [vmem:[%s462 + $0x1578] sm:$0xff]
        %v1289 = vld [vmem:[%s462 + $0x1580] sm:$0xff]
        %v1290 = vld [vmem:[%s462 + $0x1588] sm:$0xff]
        %v1291 = vld [vmem:[%s462 + $0x1590] sm:$0xff]
        %v1292 = vld [vmem:[%s462 + $0x1598] sm:$0xff]
        %v1293 = vld [vmem:[%s462 + $0x15a0] sm:$0xff]
        %v1294 = vld [vmem:[%s462 + $0x15a8] sm:$0xff]
        %v1295 = vld [vmem:[%s462 + $0x15b0] sm:$0xff]
        %v1296 = vld [vmem:[%s462 + $0x15b8] sm:$0xff]
        %v1297 = vld [vmem:[%s462 + $0x15c0] sm:$0xff]
        %v1298 = vld [vmem:[%s462 + $0x15c8] sm:$0xff]
        %v1299 = vld [vmem:[%s462 + $0x15d0] sm:$0xff]
        %v1300 = vld [vmem:[%s462 + $0x15d8] sm:$0xff]
        %v1301 = vld [vmem:[%s462 + $0x15e0] sm:$0xff]
        %v1302 = vld [vmem:[%s462 + $0x15e8] sm:$0xff]
        %v1303 = vld [vmem:[%s462 + $0x15f0] sm:$0xff]
        %v1304 = vld [vmem:[%s462 + $0x15f8] sm:$0xff]
        %v1305 = vld [vmem:[%s462 + $0x1600] sm:$0xff]
        %v1306 = vld [vmem:[%s462 + $0x1608] sm:$0xff]
        %v1307 = vld [vmem:[%s462 + $0x1610] sm:$0xff]
        %v1308 = vld [vmem:[%s462 + $0x1618] sm:$0xff]
        %v1309 = vld [vmem:[%s462 + $0x1620] sm:$0xff]
        %v1310 = vld [vmem:[%s462 + $0x1628] sm:$0xff]
        %v1311 = vld [vmem:[%s462 + $0x1630] sm:$0xff]
        %v1312 = vld [vmem:[%s462 + $0x1638] sm:$0xff]
        %v1313 = vld [vmem:[%s462 + $0x1640] sm:$0xff]
        %v1314 = vld [vmem:[%s462 + $0x1648] sm:$0xff]
        %v1315 = vld [vmem:[%s462 + $0x1650] sm:$0xff]
        %v1316 = vld [vmem:[%s462 + $0x1658] sm:$0xff]
        %v1317 = vld [vmem:[%s462 + $0x1660] sm:$0xff]
        %v1318 = vld [vmem:[%s462 + $0x1668] sm:$0xff]
        %v1319 = vld [vmem:[%s462 + $0x1670] sm:$0xff]
        %v1320 = vld [vmem:[%s462 + $0x1678] sm:$0xff]
        %v1321 = vld [vmem:[%s462 + $0x1680] sm:$0xff]
        %v1322 = vld [vmem:[%s462 + $0x1688] sm:$0xff]
        %v1323 = vld [vmem:[%s462 + $0x1690] sm:$0xff]
        %v1324 = vld [vmem:[%s462 + $0x1698] sm:$0xff]
        %v1325 = vld [vmem:[%s462 + $0x16a0] sm:$0xff]
        %v1326 = vld [vmem:[%s462 + $0x16a8] sm:$0xff]
        %v1327 = vld [vmem:[%s462 + $0x16b0] sm:$0xff]
        %v1328 = vld [vmem:[%s462 + $0x16b8] sm:$0xff]
        %v1329 = vld [vmem:[%s462 + $0x16c0] sm:$0xff]
        %v1330 = vld [vmem:[%s462 + $0x16c8] sm:$0xff]
        %v1331 = vld [vmem:[%s462 + $0x16d0] sm:$0xff]
        %v1332 = vld [vmem:[%s462 + $0x16d8] sm:$0xff]
        %v1333 = vld [vmem:[%s462 + $0x16e0] sm:$0xff]
        %v1334 = vld [vmem:[%s462 + $0x16e8] sm:$0xff]
        %v1335 = vld [vmem:[%s462 + $0x16f0] sm:$0xff]
        %v1336 = vld [vmem:[%s462 + $0x16f8] sm:$0xff]
        %v1337 = vld [vmem:[%s462 + $0x1700] sm:$0xff]
        %v1338 = vld [vmem:[%s462 + $0x1708] sm:$0xff]
        %v1339 = vld [vmem:[%s462 + $0x1710] sm:$0xff]
        %v1340 = vld [vmem:[%s462 + $0x1718] sm:$0xff]
        %v1341 = vld [vmem:[%s462 + $0x1720] sm:$0xff]
        %v1342 = vld [vmem:[%s462 + $0x1728] sm:$0xff]
        %v1343 = vld [vmem:[%s462 + $0x1730] sm:$0xff]
        %v1344 = vld [vmem:[%s462 + $0x1738] sm:$0xff]
        %v1345 = vld [vmem:[%s462 + $0x1740] sm:$0xff]
        %v1346 = vld [vmem:[%s462 + $0x1748] sm:$0xff]
        %v1347 = vld [vmem:[%s462 + $0x1750] sm:$0xff]
        %v1348 = vld [vmem:[%s462 + $0x1758] sm:$0xff]
        %v1349 = vld [vmem:[%s462 + $0x1760] sm:$0xff]
        %v1350 = vld [vmem:[%s462 + $0x1768] sm:$0xff]
        %v1351 = vld [vmem:[%s462 + $0x1770] sm:$0xff]
        %v1352 = vld [vmem:[%s462 + $0x1778] sm:$0xff]
        %v1353 = vld [vmem:[%s462 + $0x1780] sm:$0xff]
        %v1354 = vld [vmem:[%s462 + $0x1788] sm:$0xff]
        %v1355 = vld [vmem:[%s462 + $0x1790] sm:$0xff]
        %v1356 = vld [vmem:[%s462 + $0x1798] sm:$0xff]
        %v1357 = vld [vmem:[%s462 + $0x17a0] sm:$0xff]
        %v1358 = vld [vmem:[%s462 + $0x17a8] sm:$0xff]
        %v1359 = vld [vmem:[%s462 + $0x17b0] sm:$0xff]
        %v1360 = vld [vmem:[%s462 + $0x17b8] sm:$0xff]
        %v1361 = vld [vmem:[%s462 + $0x17c0] sm:$0xff]
        %v1362 = vld [vmem:[%s462 + $0x17c8] sm:$0xff]
        %v1363 = vld [vmem:[%s462 + $0x17d0] sm:$0xff]
        %v1364 = vld [vmem:[%s462 + $0x17d8] sm:$0xff]
        %v1365 = vld [vmem:[%s462 + $0x17e0] sm:$0xff]
        %v1366 = vld [vmem:[%s462 + $0x17e8] sm:$0xff]
        %v1367 = vld [vmem:[%s462 + $0x17f0] sm:$0xff]
        %v1368 = vld [vmem:[%s462 + $0x17f8] sm:$0xff]
        %v1369 = vld [vmem:[%s472] sm:$0xf]
        %v1371 = vperm.slane %v1369, 0
        %v1372 = vperm.slane %v1369, 1
        %v1373 = vperm.slane %v1369, 2
        %v1374 = vperm.slane %v1369, 3
        %v1403 = vunpack.c.l.b16 %v577
        %v1404 = vunpack.c.h.b16 %v577
        %v1405 = vunpack.c.l.b16 %v578
        %v1406 = vunpack.c.h.b16 %v578
        %v1407 = vunpack.c.l.b16 %v579
        %v1408 = vunpack.c.h.b16 %v579
        %v1409 = vunpack.c.l.b16 %v580
        %v1410 = vunpack.c.h.b16 %v580
        %v1411 = vunpack.c.l.b16 %v581
        %v1412 = vunpack.c.h.b16 %v581
        %v1413 = vunpack.c.l.b16 %v582
        %v1414 = vunpack.c.h.b16 %v582
        %v1415 = vunpack.c.l.b16 %v583
        %v1416 = vunpack.c.h.b16 %v583
        %v1417 = vunpack.c.l.b16 %v584
        %v1418 = vunpack.c.h.b16 %v584
        %v1419 = vunpack.c.l.b16 %v585
        %v1420 = vunpack.c.h.b16 %v585
        %v1421 = vunpack.c.l.b16 %v586
        %v1422 = vunpack.c.h.b16 %v586
        %v1423 = vunpack.c.l.b16 %v587
        %v1424 = vunpack.c.h.b16 %v587
        %v1425 = vunpack.c.l.b16 %v588
        %v1426 = vunpack.c.h.b16 %v588
        %v1427 = vunpack.c.l.b16 %v589
        %v1428 = vunpack.c.h.b16 %v589
        %v1429 = vunpack.c.l.b16 %v590
        %v1430 = vunpack.c.h.b16 %v590
        %v1431 = vunpack.c.l.b16 %v591
        %v1432 = vunpack.c.h.b16 %v591
        %v1433 = vunpack.c.l.b16 %v592
        %v1434 = vunpack.c.h.b16 %v592
        %v1435 = vunpack.c.l.b16 %v593
        %v1436 = vunpack.c.h.b16 %v593
        %v1437 = vunpack.c.l.b16 %v594
        %v1438 = vunpack.c.h.b16 %v594
        %v1439 = vunpack.c.l.b16 %v595
        %v1440 = vunpack.c.h.b16 %v595
        %v1441 = vunpack.c.l.b16 %v596
        %v1442 = vunpack.c.h.b16 %v596
        %v1443 = vunpack.c.l.b16 %v597
        %v1444 = vunpack.c.h.b16 %v597
        %v1445 = vunpack.c.l.b16 %v598
        %v1446 = vunpack.c.h.b16 %v598
        %v1447 = vunpack.c.l.b16 %v599
        %v1448 = vunpack.c.h.b16 %v599
        %v1449 = vunpack.c.l.b16 %v600
        %v1450 = vunpack.c.h.b16 %v600
        %v1451 = vpack.c.b16 %v1427, %v1403
        %v1452 = vpack.c.b16 %v1428, %v1404
        %v1453 = vpack.c.b16 %v1429, %v1405
        %v1454 = vpack.c.b16 %v1430, %v1406
        %v1455 = vpack.c.b16 %v1431, %v1407
        %v1456 = vpack.c.b16 %v1432, %v1408
        %v1457 = vpack.c.b16 %v1433, %v1409
        %v1458 = vpack.c.b16 %v1434, %v1410
        %v1459 = vpack.c.b16 %v1435, %v1411
        %v1460 = vpack.c.b16 %v1436, %v1412
        %v1461 = vpack.c.b16 %v1437, %v1413
        %v1462 = vpack.c.b16 %v1438, %v1414
        %v1463 = vpack.c.b16 %v1439, %v1415
        %v1464 = vpack.c.b16 %v1440, %v1416
        %v1465 = vpack.c.b16 %v1441, %v1417
        %v1466 = vpack.c.b16 %v1442, %v1418
        %v1467 = vpack.c.b16 %v1443, %v1419
        %v1468 = vpack.c.b16 %v1444, %v1420
        %v1469 = vpack.c.b16 %v1445, %v1421
        %v1470 = vpack.c.b16 %v1446, %v1422
        %v1471 = vpack.c.b16 %v1447, %v1423
        %v1472 = vpack.c.b16 %v1448, %v1424
        %v1473 = vpack.c.b16 %v1449, %v1425
        %v1474 = vpack.c.b16 %v1450, %v1426
        %v2267 = vunpack.c.l.b16 %v601
        %v2268 = vunpack.c.h.b16 %v601
        %v2269 = vunpack.c.l.b16 %v602
        %v2270 = vunpack.c.h.b16 %v602
        %v2271 = vunpack.c.l.b16 %v603
        %v2272 = vunpack.c.h.b16 %v603
        %v2273 = vunpack.c.l.b16 %v604
        %v2274 = vunpack.c.h.b16 %v604
        %v2275 = vunpack.c.l.b16 %v605
        %v2276 = vunpack.c.h.b16 %v605
        %v2277 = vunpack.c.l.b16 %v606
        %v2278 = vunpack.c.h.b16 %v606
        %v2279 = vunpack.c.l.b16 %v607
        %v2280 = vunpack.c.h.b16 %v607
        %v2281 = vunpack.c.l.b16 %v608
        %v2282 = vunpack.c.h.b16 %v608
        %v2283 = vunpack.c.l.b16 %v609
        %v2284 = vunpack.c.h.b16 %v609
        %v2285 = vunpack.c.l.b16 %v610
        %v2286 = vunpack.c.h.b16 %v610
        %v2287 = vunpack.c.l.b16 %v611
        %v2288 = vunpack.c.h.b16 %v611
        %v2289 = vunpack.c.l.b16 %v612
        %v2290 = vunpack.c.h.b16 %v612
        %v2291 = vunpack.c.l.b16 %v613
        %v2292 = vunpack.c.h.b16 %v613
        %v2293 = vunpack.c.l.b16 %v614
        %v2294 = vunpack.c.h.b16 %v614
        %v2295 = vunpack.c.l.b16 %v615
        %v2296 = vunpack.c.h.b16 %v615
        %v2297 = vunpack.c.l.b16 %v616
        %v2298 = vunpack.c.h.b16 %v616
        %v2299 = vunpack.c.l.b16 %v617
        %v2300 = vunpack.c.h.b16 %v617
        %v2301 = vunpack.c.l.b16 %v618
        %v2302 = vunpack.c.h.b16 %v618
        %v2303 = vunpack.c.l.b16 %v619
        %v2304 = vunpack.c.h.b16 %v619
        %v2305 = vunpack.c.l.b16 %v620
        %v2306 = vunpack.c.h.b16 %v620
        %v2307 = vunpack.c.l.b16 %v621
        %v2308 = vunpack.c.h.b16 %v621
        %v2309 = vunpack.c.l.b16 %v622
        %v2310 = vunpack.c.h.b16 %v622
        %v2311 = vunpack.c.l.b16 %v623
        %v2312 = vunpack.c.h.b16 %v623
        %v2313 = vunpack.c.l.b16 %v624
        %v2314 = vunpack.c.h.b16 %v624
        %v2315 = vunpack.c.l.b16 %v625
        %v2316 = vunpack.c.h.b16 %v625
        %v2317 = vunpack.c.l.b16 %v626
        %v2318 = vunpack.c.h.b16 %v626
        %v2319 = vunpack.c.l.b16 %v627
        %v2320 = vunpack.c.h.b16 %v627
        %v2321 = vunpack.c.l.b16 %v628
        %v2322 = vunpack.c.h.b16 %v628
        %v2323 = vunpack.c.l.b16 %v629
        %v2324 = vunpack.c.h.b16 %v629
        %v2325 = vunpack.c.l.b16 %v630
        %v2326 = vunpack.c.h.b16 %v630
        %v2327 = vunpack.c.l.b16 %v631
        %v2328 = vunpack.c.h.b16 %v631
        %v2329 = vunpack.c.l.b16 %v632
        %v2330 = vunpack.c.h.b16 %v632
        %v2331 = vunpack.c.l.b16 %v633
        %v2332 = vunpack.c.h.b16 %v633
        %v2333 = vunpack.c.l.b16 %v634
        %v2334 = vunpack.c.h.b16 %v634
        %v2335 = vunpack.c.l.b16 %v635
        %v2336 = vunpack.c.h.b16 %v635
        %v2337 = vunpack.c.l.b16 %v636
        %v2338 = vunpack.c.h.b16 %v636
        %v2339 = vunpack.c.l.b16 %v637
        %v2340 = vunpack.c.h.b16 %v637
        %v2341 = vunpack.c.l.b16 %v638
        %v2342 = vunpack.c.h.b16 %v638
        %v2343 = vunpack.c.l.b16 %v639
        %v2344 = vunpack.c.h.b16 %v639
        %v2345 = vunpack.c.l.b16 %v640
        %v2346 = vunpack.c.h.b16 %v640
        %v2347 = vunpack.c.l.b16 %v641
        %v2348 = vunpack.c.h.b16 %v641
        %v2349 = vunpack.c.l.b16 %v642
        %v2350 = vunpack.c.h.b16 %v642
        %v2351 = vunpack.c.l.b16 %v643
        %v2352 = vunpack.c.h.b16 %v643
        %v2353 = vunpack.c.l.b16 %v644
        %v2354 = vunpack.c.h.b16 %v644
        %v2355 = vunpack.c.l.b16 %v645
        %v2356 = vunpack.c.h.b16 %v645
        %v2357 = vunpack.c.l.b16 %v646
        %v2358 = vunpack.c.h.b16 %v646
        %v2359 = vunpack.c.l.b16 %v647
        %v2360 = vunpack.c.h.b16 %v647
        %v2361 = vunpack.c.l.b16 %v648
        %v2362 = vunpack.c.h.b16 %v648
        %v2363 = vunpack.c.l.b16 %v649
        %v2364 = vunpack.c.h.b16 %v649
        %v2365 = vunpack.c.l.b16 %v650
        %v2366 = vunpack.c.h.b16 %v650
        %v2367 = vunpack.c.l.b16 %v651
        %v2368 = vunpack.c.h.b16 %v651
        %v2369 = vunpack.c.l.b16 %v652
        %v2370 = vunpack.c.h.b16 %v652
        %v2371 = vunpack.c.l.b16 %v653
        %v2372 = vunpack.c.h.b16 %v653
        %v2373 = vunpack.c.l.b16 %v654
        %v2374 = vunpack.c.h.b16 %v654
        %v2375 = vunpack.c.l.b16 %v655
        %v2376 = vunpack.c.h.b16 %v655
        %v2377 = vunpack.c.l.b16 %v656
        %v2378 = vunpack.c.h.b16 %v656
        %v2379 = vunpack.c.l.b16 %v657
        %v2380 = vunpack.c.h.b16 %v657
        %v2381 = vunpack.c.l.b16 %v658
        %v2382 = vunpack.c.h.b16 %v658
        %v2383 = vunpack.c.l.b16 %v659
        %v2384 = vunpack.c.h.b16 %v659
        %v2385 = vunpack.c.l.b16 %v660
        %v2386 = vunpack.c.h.b16 %v660
        %v2387 = vunpack.c.l.b16 %v661
        %v2388 = vunpack.c.h.b16 %v661
        %v2389 = vunpack.c.l.b16 %v662
        %v2390 = vunpack.c.h.b16 %v662
        %v2391 = vunpack.c.l.b16 %v663
        %v2392 = vunpack.c.h.b16 %v663
        %v2393 = vunpack.c.l.b16 %v664
        %v2394 = vunpack.c.h.b16 %v664
        %v2395 = vunpack.c.l.b16 %v665
        %v2396 = vunpack.c.h.b16 %v665
        %v2397 = vunpack.c.l.b16 %v666
        %v2398 = vunpack.c.h.b16 %v666
        %v2399 = vunpack.c.l.b16 %v667
        %v2400 = vunpack.c.h.b16 %v667
        %v2401 = vunpack.c.l.b16 %v668
        %v2402 = vunpack.c.h.b16 %v668
        %v2403 = vunpack.c.l.b16 %v669
        %v2404 = vunpack.c.h.b16 %v669
        %v2405 = vunpack.c.l.b16 %v670
        %v2406 = vunpack.c.h.b16 %v670
        %v2407 = vunpack.c.l.b16 %v671
        %v2408 = vunpack.c.h.b16 %v671
        %v2409 = vunpack.c.l.b16 %v672
        %v2410 = vunpack.c.h.b16 %v672
        %v2411 = vunpack.c.l.b16 %v673
        %v2412 = vunpack.c.h.b16 %v673
        %v2413 = vunpack.c.l.b16 %v674
        %v2414 = vunpack.c.h.b16 %v674
        %v2415 = vunpack.c.l.b16 %v675
        %v2416 = vunpack.c.h.b16 %v675
        %v2417 = vunpack.c.l.b16 %v676
        %v2418 = vunpack.c.h.b16 %v676
        %v2419 = vunpack.c.l.b16 %v677
        %v2420 = vunpack.c.h.b16 %v677
        %v2421 = vunpack.c.l.b16 %v678
        %v2422 = vunpack.c.h.b16 %v678
        %v2423 = vunpack.c.l.b16 %v679
        %v2424 = vunpack.c.h.b16 %v679
        %v2425 = vunpack.c.l.b16 %v680
        %v2426 = vunpack.c.h.b16 %v680
        %v2427 = vunpack.c.l.b16 %v681
        %v2428 = vunpack.c.h.b16 %v681
        %v2429 = vunpack.c.l.b16 %v682
        %v2430 = vunpack.c.h.b16 %v682
        %v2431 = vunpack.c.l.b16 %v683
        %v2432 = vunpack.c.h.b16 %v683
        %v2433 = vunpack.c.l.b16 %v684
        %v2434 = vunpack.c.h.b16 %v684
        %v2435 = vunpack.c.l.b16 %v685
        %v2436 = vunpack.c.h.b16 %v685
        %v2437 = vunpack.c.l.b16 %v686
        %v2438 = vunpack.c.h.b16 %v686
        %v2439 = vunpack.c.l.b16 %v687
        %v2440 = vunpack.c.h.b16 %v687
        %v2441 = vunpack.c.l.b16 %v688
        %v2442 = vunpack.c.h.b16 %v688
        %v2443 = vunpack.c.l.b16 %v689
        %v2444 = vunpack.c.h.b16 %v689
        %v2445 = vunpack.c.l.b16 %v690
        %v2446 = vunpack.c.h.b16 %v690
        %v2447 = vunpack.c.l.b16 %v691
        %v2448 = vunpack.c.h.b16 %v691
        %v2449 = vunpack.c.l.b16 %v692
        %v2450 = vunpack.c.h.b16 %v692
        %v2451 = vunpack.c.l.b16 %v693
        %v2452 = vunpack.c.h.b16 %v693
        %v2453 = vunpack.c.l.b16 %v694
        %v2454 = vunpack.c.h.b16 %v694
        %v2455 = vunpack.c.l.b16 %v695
        %v2456 = vunpack.c.h.b16 %v695
        %v2457 = vunpack.c.l.b16 %v696
        %v2458 = vunpack.c.h.b16 %v696
        %v2459 = vunpack.c.l.b16 %v697
        %v2460 = vunpack.c.h.b16 %v697
        %v2461 = vunpack.c.l.b16 %v698
        %v2462 = vunpack.c.h.b16 %v698
        %v2463 = vunpack.c.l.b16 %v699
        %v2464 = vunpack.c.h.b16 %v699
        %v2465 = vunpack.c.l.b16 %v700
        %v2466 = vunpack.c.h.b16 %v700
        %v2467 = vunpack.c.l.b16 %v701
        %v2468 = vunpack.c.h.b16 %v701
        %v2469 = vunpack.c.l.b16 %v702
        %v2470 = vunpack.c.h.b16 %v702
        %v2471 = vunpack.c.l.b16 %v703
        %v2472 = vunpack.c.h.b16 %v703
        %v2473 = vunpack.c.l.b16 %v704
        %v2474 = vunpack.c.h.b16 %v704
        %v2475 = vunpack.c.l.b16 %v705
        %v2476 = vunpack.c.h.b16 %v705
        %v2477 = vunpack.c.l.b16 %v706
        %v2478 = vunpack.c.h.b16 %v706
        %v2479 = vunpack.c.l.b16 %v707
        %v2480 = vunpack.c.h.b16 %v707
        %v2481 = vunpack.c.l.b16 %v708
        %v2482 = vunpack.c.h.b16 %v708
        %v2483 = vunpack.c.l.b16 %v709
        %v2484 = vunpack.c.h.b16 %v709
        %v2485 = vunpack.c.l.b16 %v710
        %v2486 = vunpack.c.h.b16 %v710
        %v2487 = vunpack.c.l.b16 %v711
        %v2488 = vunpack.c.h.b16 %v711
        %v2489 = vunpack.c.l.b16 %v712
        %v2490 = vunpack.c.h.b16 %v712
        %v2491 = vunpack.c.l.b16 %v713
        %v2492 = vunpack.c.h.b16 %v713
        %v2493 = vunpack.c.l.b16 %v714
        %v2494 = vunpack.c.h.b16 %v714
        %v2495 = vunpack.c.l.b16 %v715
        %v2496 = vunpack.c.h.b16 %v715
        %v2497 = vunpack.c.l.b16 %v716
        %v2498 = vunpack.c.h.b16 %v716
        %v2499 = vunpack.c.l.b16 %v717
        %v2500 = vunpack.c.h.b16 %v717
        %v2501 = vunpack.c.l.b16 %v718
        %v2502 = vunpack.c.h.b16 %v718
        %v2503 = vunpack.c.l.b16 %v719
        %v2504 = vunpack.c.h.b16 %v719
        %v2505 = vunpack.c.l.b16 %v720
        %v2506 = vunpack.c.h.b16 %v720
        %v2507 = vunpack.c.l.b16 %v721
        %v2508 = vunpack.c.h.b16 %v721
        %v2509 = vunpack.c.l.b16 %v722
        %v2510 = vunpack.c.h.b16 %v722
        %v2511 = vunpack.c.l.b16 %v723
        %v2512 = vunpack.c.h.b16 %v723
        %v2513 = vunpack.c.l.b16 %v724
        %v2514 = vunpack.c.h.b16 %v724
        %v2515 = vunpack.c.l.b16 %v725
        %v2516 = vunpack.c.h.b16 %v725
        %v2517 = vunpack.c.l.b16 %v726
        %v2518 = vunpack.c.h.b16 %v726
        %v2519 = vunpack.c.l.b16 %v727
        %v2520 = vunpack.c.h.b16 %v727
        %v2521 = vunpack.c.l.b16 %v728
        %v2522 = vunpack.c.h.b16 %v728
        %v2523 = vunpack.c.l.b16 %v729
        %v2524 = vunpack.c.h.b16 %v729
        %v2525 = vunpack.c.l.b16 %v730
        %v2526 = vunpack.c.h.b16 %v730
        %v2527 = vunpack.c.l.b16 %v731
        %v2528 = vunpack.c.h.b16 %v731
        %v2529 = vunpack.c.l.b16 %v732
        %v2530 = vunpack.c.h.b16 %v732
        %v2531 = vunpack.c.l.b16 %v733
        %v2532 = vunpack.c.h.b16 %v733
        %v2533 = vunpack.c.l.b16 %v734
        %v2534 = vunpack.c.h.b16 %v734
        %v2535 = vunpack.c.l.b16 %v735
        %v2536 = vunpack.c.h.b16 %v735
        %v2537 = vunpack.c.l.b16 %v736
        %v2538 = vunpack.c.h.b16 %v736
        %v2539 = vunpack.c.l.b16 %v737
        %v2540 = vunpack.c.h.b16 %v737
        %v2541 = vunpack.c.l.b16 %v738
        %v2542 = vunpack.c.h.b16 %v738
        %v2543 = vunpack.c.l.b16 %v739
        %v2544 = vunpack.c.h.b16 %v739
        %v2545 = vunpack.c.l.b16 %v740
        %v2546 = vunpack.c.h.b16 %v740
        %v2547 = vunpack.c.l.b16 %v741
        %v2548 = vunpack.c.h.b16 %v741
        %v2549 = vunpack.c.l.b16 %v742
        %v2550 = vunpack.c.h.b16 %v742
        %v2551 = vunpack.c.l.b16 %v743
        %v2552 = vunpack.c.h.b16 %v743
        %v2553 = vunpack.c.l.b16 %v744
        %v2554 = vunpack.c.h.b16 %v744
        %v2555 = vunpack.c.l.b16 %v745
        %v2556 = vunpack.c.h.b16 %v745
        %v2557 = vunpack.c.l.b16 %v746
        %v2558 = vunpack.c.h.b16 %v746
        %v2559 = vunpack.c.l.b16 %v747
        %v2560 = vunpack.c.h.b16 %v747
        %v2561 = vunpack.c.l.b16 %v748
        %v2562 = vunpack.c.h.b16 %v748
        %v2563 = vunpack.c.l.b16 %v749
        %v2564 = vunpack.c.h.b16 %v749
        %v2565 = vunpack.c.l.b16 %v750
        %v2566 = vunpack.c.h.b16 %v750
        %v2567 = vunpack.c.l.b16 %v751
        %v2568 = vunpack.c.h.b16 %v751
        %v2569 = vunpack.c.l.b16 %v752
        %v2570 = vunpack.c.h.b16 %v752
        %v2571 = vunpack.c.l.b16 %v753
        %v2572 = vunpack.c.h.b16 %v753
        %v2573 = vunpack.c.l.b16 %v754
        %v2574 = vunpack.c.h.b16 %v754
        %v2575 = vunpack.c.l.b16 %v755
        %v2576 = vunpack.c.h.b16 %v755
        %v2577 = vunpack.c.l.b16 %v756
        %v2578 = vunpack.c.h.b16 %v756
        %v2579 = vunpack.c.l.b16 %v757
        %v2580 = vunpack.c.h.b16 %v757
        %v2581 = vunpack.c.l.b16 %v758
        %v2582 = vunpack.c.h.b16 %v758
        %v2583 = vunpack.c.l.b16 %v759
        %v2584 = vunpack.c.h.b16 %v759
        %v2585 = vunpack.c.l.b16 %v760
        %v2586 = vunpack.c.h.b16 %v760
        %v2587 = vunpack.c.l.b16 %v761
        %v2588 = vunpack.c.h.b16 %v761
        %v2589 = vunpack.c.l.b16 %v762
        %v2590 = vunpack.c.h.b16 %v762
        %v2591 = vunpack.c.l.b16 %v763
        %v2592 = vunpack.c.h.b16 %v763
        %v2593 = vunpack.c.l.b16 %v764
        %v2594 = vunpack.c.h.b16 %v764
        %v2595 = vunpack.c.l.b16 %v765
        %v2596 = vunpack.c.h.b16 %v765
        %v2597 = vunpack.c.l.b16 %v766
        %v2598 = vunpack.c.h.b16 %v766
        %v2599 = vunpack.c.l.b16 %v767
        %v2600 = vunpack.c.h.b16 %v767
        %v2601 = vunpack.c.l.b16 %v768
        %v2602 = vunpack.c.h.b16 %v768
        %v2603 = vunpack.c.l.b16 %v769
        %v2604 = vunpack.c.h.b16 %v769
        %v2605 = vunpack.c.l.b16 %v770
        %v2606 = vunpack.c.h.b16 %v770
        %v2607 = vunpack.c.l.b16 %v771
        %v2608 = vunpack.c.h.b16 %v771
        %v2609 = vunpack.c.l.b16 %v772
        %v2610 = vunpack.c.h.b16 %v772
        %v2611 = vunpack.c.l.b16 %v773
        %v2612 = vunpack.c.h.b16 %v773
        %v2613 = vunpack.c.l.b16 %v774
        %v2614 = vunpack.c.h.b16 %v774
        %v2615 = vunpack.c.l.b16 %v775
        %v2616 = vunpack.c.h.b16 %v775
        %v2617 = vunpack.c.l.b16 %v776
        %v2618 = vunpack.c.h.b16 %v776
        %v2619 = vunpack.c.l.b16 %v777
        %v2620 = vunpack.c.h.b16 %v777
        %v2621 = vunpack.c.l.b16 %v778
        %v2622 = vunpack.c.h.b16 %v778
        %v2623 = vunpack.c.l.b16 %v779
        %v2624 = vunpack.c.h.b16 %v779
        %v2625 = vunpack.c.l.b16 %v780
        %v2626 = vunpack.c.h.b16 %v780
        %v2627 = vunpack.c.l.b16 %v781
        %v2628 = vunpack.c.h.b16 %v781
        %v2629 = vunpack.c.l.b16 %v782
        %v2630 = vunpack.c.h.b16 %v782
        %v2631 = vunpack.c.l.b16 %v783
        %v2632 = vunpack.c.h.b16 %v783
        %v2633 = vunpack.c.l.b16 %v784
        %v2634 = vunpack.c.h.b16 %v784
        %v2635 = vunpack.c.l.b16 %v785
        %v2636 = vunpack.c.h.b16 %v785
        %v2637 = vunpack.c.l.b16 %v786
        %v2638 = vunpack.c.h.b16 %v786
        %v2639 = vunpack.c.l.b16 %v787
        %v2640 = vunpack.c.h.b16 %v787
        %v2641 = vunpack.c.l.b16 %v788
        %v2642 = vunpack.c.h.b16 %v788
        %v2643 = vunpack.c.l.b16 %v789
        %v2644 = vunpack.c.h.b16 %v789
        %v2645 = vunpack.c.l.b16 %v790
        %v2646 = vunpack.c.h.b16 %v790
        %v2647 = vunpack.c.l.b16 %v791
        %v2648 = vunpack.c.h.b16 %v791
        %v2649 = vunpack.c.l.b16 %v792
        %v2650 = vunpack.c.h.b16 %v792
        %v2651 = vunpack.c.l.b16 %v793
        %v2652 = vunpack.c.h.b16 %v793
        %v2653 = vunpack.c.l.b16 %v794
        %v2654 = vunpack.c.h.b16 %v794
        %v2655 = vunpack.c.l.b16 %v795
        %v2656 = vunpack.c.h.b16 %v795
        %v2657 = vunpack.c.l.b16 %v796
        %v2658 = vunpack.c.h.b16 %v796
        %v2659 = vunpack.c.l.b16 %v797
        %v2660 = vunpack.c.h.b16 %v797
        %v2661 = vunpack.c.l.b16 %v798
        %v2662 = vunpack.c.h.b16 %v798
        %v2663 = vunpack.c.l.b16 %v799
        %v2664 = vunpack.c.h.b16 %v799
        %v2665 = vunpack.c.l.b16 %v800
        %v2666 = vunpack.c.h.b16 %v800
        %v2667 = vunpack.c.l.b16 %v801
        %v2668 = vunpack.c.h.b16 %v801
        %v2669 = vunpack.c.l.b16 %v802
        %v2670 = vunpack.c.h.b16 %v802
        %v2671 = vunpack.c.l.b16 %v803
        %v2672 = vunpack.c.h.b16 %v803
        %v2673 = vunpack.c.l.b16 %v804
        %v2674 = vunpack.c.h.b16 %v804
        %v2675 = vunpack.c.l.b16 %v805
        %v2676 = vunpack.c.h.b16 %v805
        %v2677 = vunpack.c.l.b16 %v806
        %v2678 = vunpack.c.h.b16 %v806
        %v2679 = vunpack.c.l.b16 %v807
        %v2680 = vunpack.c.h.b16 %v807
        %v2681 = vunpack.c.l.b16 %v808
        %v2682 = vunpack.c.h.b16 %v808
        %v2683 = vunpack.c.l.b16 %v809
        %v2684 = vunpack.c.h.b16 %v809
        %v2685 = vunpack.c.l.b16 %v810
        %v2686 = vunpack.c.h.b16 %v810
        %v2687 = vunpack.c.l.b16 %v811
        %v2688 = vunpack.c.h.b16 %v811
        %v2689 = vunpack.c.l.b16 %v812
        %v2690 = vunpack.c.h.b16 %v812
        %v2691 = vunpack.c.l.b16 %v813
        %v2692 = vunpack.c.h.b16 %v813
        %v2693 = vunpack.c.l.b16 %v814
        %v2694 = vunpack.c.h.b16 %v814
        %v2695 = vunpack.c.l.b16 %v815
        %v2696 = vunpack.c.h.b16 %v815
        %v2697 = vunpack.c.l.b16 %v816
        %v2698 = vunpack.c.h.b16 %v816
        %v2699 = vunpack.c.l.b16 %v817
        %v2700 = vunpack.c.h.b16 %v817
        %v2701 = vunpack.c.l.b16 %v818
        %v2702 = vunpack.c.h.b16 %v818
        %v2703 = vunpack.c.l.b16 %v819
        %v2704 = vunpack.c.h.b16 %v819
        %v2705 = vunpack.c.l.b16 %v820
        %v2706 = vunpack.c.h.b16 %v820
        %v2707 = vunpack.c.l.b16 %v821
        %v2708 = vunpack.c.h.b16 %v821
        %v2709 = vunpack.c.l.b16 %v822
        %v2710 = vunpack.c.h.b16 %v822
        %v2711 = vunpack.c.l.b16 %v823
        %v2712 = vunpack.c.h.b16 %v823
        %v2713 = vunpack.c.l.b16 %v824
        %v2714 = vunpack.c.h.b16 %v824
        %v2715 = vunpack.c.l.b16 %v825
        %v2716 = vunpack.c.h.b16 %v825
        %v2717 = vunpack.c.l.b16 %v826
        %v2718 = vunpack.c.h.b16 %v826
        %v2719 = vunpack.c.l.b16 %v827
        %v2720 = vunpack.c.h.b16 %v827
        %v2721 = vunpack.c.l.b16 %v828
        %v2722 = vunpack.c.h.b16 %v828
        %v2723 = vunpack.c.l.b16 %v829
        %v2724 = vunpack.c.h.b16 %v829
        %v2725 = vunpack.c.l.b16 %v830
        %v2726 = vunpack.c.h.b16 %v830
        %v2727 = vunpack.c.l.b16 %v831
        %v2728 = vunpack.c.h.b16 %v831
        %v2729 = vunpack.c.l.b16 %v832
        %v2730 = vunpack.c.h.b16 %v832
        %v2731 = vunpack.c.l.b16 %v833
        %v2732 = vunpack.c.h.b16 %v833
        %v2733 = vunpack.c.l.b16 %v834
        %v2734 = vunpack.c.h.b16 %v834
        %v2735 = vunpack.c.l.b16 %v835
        %v2736 = vunpack.c.h.b16 %v835
        %v2737 = vunpack.c.l.b16 %v836
        %v2738 = vunpack.c.h.b16 %v836
        %v2739 = vunpack.c.l.b16 %v837
        %v2740 = vunpack.c.h.b16 %v837
        %v2741 = vunpack.c.l.b16 %v838
        %v2742 = vunpack.c.h.b16 %v838
        %v2743 = vunpack.c.l.b16 %v839
        %v2744 = vunpack.c.h.b16 %v839
        %v2745 = vunpack.c.l.b16 %v840
        %v2746 = vunpack.c.h.b16 %v840
        %v2747 = vunpack.c.l.b16 %v841
        %v2748 = vunpack.c.h.b16 %v841
        %v2749 = vunpack.c.l.b16 %v842
        %v2750 = vunpack.c.h.b16 %v842
        %v2751 = vunpack.c.l.b16 %v843
        %v2752 = vunpack.c.h.b16 %v843
        %v2753 = vunpack.c.l.b16 %v844
        %v2754 = vunpack.c.h.b16 %v844
        %v2755 = vunpack.c.l.b16 %v845
        %v2756 = vunpack.c.h.b16 %v845
        %v2757 = vunpack.c.l.b16 %v846
        %v2758 = vunpack.c.h.b16 %v846
        %v2759 = vunpack.c.l.b16 %v847
        %v2760 = vunpack.c.h.b16 %v847
        %v2761 = vunpack.c.l.b16 %v848
        %v2762 = vunpack.c.h.b16 %v848
        %v2763 = vunpack.c.l.b16 %v849
        %v2764 = vunpack.c.h.b16 %v849
        %v2765 = vunpack.c.l.b16 %v850
        %v2766 = vunpack.c.h.b16 %v850
        %v2767 = vunpack.c.l.b16 %v851
        %v2768 = vunpack.c.h.b16 %v851
        %v2769 = vunpack.c.l.b16 %v852
        %v2770 = vunpack.c.h.b16 %v852
        %v2771 = vunpack.c.l.b16 %v853
        %v2772 = vunpack.c.h.b16 %v853
        %v2773 = vunpack.c.l.b16 %v854
        %v2774 = vunpack.c.h.b16 %v854
        %v2775 = vunpack.c.l.b16 %v855
        %v2776 = vunpack.c.h.b16 %v855
        %v2777 = vunpack.c.l.b16 %v856
        %v2778 = vunpack.c.h.b16 %v856
        %v2779 = vunpack.c.l.b16 %v857
        %v2780 = vunpack.c.h.b16 %v857
        %v2781 = vunpack.c.l.b16 %v858
        %v2782 = vunpack.c.h.b16 %v858
        %v2783 = vunpack.c.l.b16 %v859
        %v2784 = vunpack.c.h.b16 %v859
        %v2785 = vunpack.c.l.b16 %v860
        %v2786 = vunpack.c.h.b16 %v860
        %v2787 = vunpack.c.l.b16 %v861
        %v2788 = vunpack.c.h.b16 %v861
        %v2789 = vunpack.c.l.b16 %v862
        %v2790 = vunpack.c.h.b16 %v862
        %v2791 = vunpack.c.l.b16 %v863
        %v2792 = vunpack.c.h.b16 %v863
        %v2793 = vunpack.c.l.b16 %v864
        %v2794 = vunpack.c.h.b16 %v864
        %v2795 = vunpack.c.l.b16 %v865
        %v2796 = vunpack.c.h.b16 %v865
        %v2797 = vunpack.c.l.b16 %v866
        %v2798 = vunpack.c.h.b16 %v866
        %v2799 = vunpack.c.l.b16 %v867
        %v2800 = vunpack.c.h.b16 %v867
        %v2801 = vunpack.c.l.b16 %v868
        %v2802 = vunpack.c.h.b16 %v868
        %v2803 = vunpack.c.l.b16 %v869
        %v2804 = vunpack.c.h.b16 %v869
        %v2805 = vunpack.c.l.b16 %v870
        %v2806 = vunpack.c.h.b16 %v870
        %v2807 = vunpack.c.l.b16 %v871
        %v2808 = vunpack.c.h.b16 %v871
        %v2809 = vunpack.c.l.b16 %v872
        %v2810 = vunpack.c.h.b16 %v872
        %v2811 = vunpack.c.l.b16 %v873
        %v2812 = vunpack.c.h.b16 %v873
        %v2813 = vunpack.c.l.b16 %v874
        %v2814 = vunpack.c.h.b16 %v874
        %v2815 = vunpack.c.l.b16 %v875
        %v2816 = vunpack.c.h.b16 %v875
        %v2817 = vunpack.c.l.b16 %v876
        %v2818 = vunpack.c.h.b16 %v876
        %v2819 = vunpack.c.l.b16 %v877
        %v2820 = vunpack.c.h.b16 %v877
        %v2821 = vunpack.c.l.b16 %v878
        %v2822 = vunpack.c.h.b16 %v878
        %v2823 = vunpack.c.l.b16 %v879
        %v2824 = vunpack.c.h.b16 %v879
        %v2825 = vunpack.c.l.b16 %v880
        %v2826 = vunpack.c.h.b16 %v880
        %v2827 = vunpack.c.l.b16 %v881
        %v2828 = vunpack.c.h.b16 %v881
        %v2829 = vunpack.c.l.b16 %v882
        %v2830 = vunpack.c.h.b16 %v882
        %v2831 = vunpack.c.l.b16 %v883
        %v2832 = vunpack.c.h.b16 %v883
        %v2833 = vunpack.c.l.b16 %v884
        %v2834 = vunpack.c.h.b16 %v884
        %v2835 = vunpack.c.l.b16 %v885
        %v2836 = vunpack.c.h.b16 %v885
        %v2837 = vunpack.c.l.b16 %v886
        %v2838 = vunpack.c.h.b16 %v886
        %v2839 = vunpack.c.l.b16 %v887
        %v2840 = vunpack.c.h.b16 %v887
        %v2841 = vunpack.c.l.b16 %v888
        %v2842 = vunpack.c.h.b16 %v888
        %v2843 = vunpack.c.l.b16 %v889
        %v2844 = vunpack.c.h.b16 %v889
        %v2845 = vunpack.c.l.b16 %v890
        %v2846 = vunpack.c.h.b16 %v890
        %v2847 = vunpack.c.l.b16 %v891
        %v2848 = vunpack.c.h.b16 %v891
        %v2849 = vunpack.c.l.b16 %v892
        %v2850 = vunpack.c.h.b16 %v892
        %v2851 = vunpack.c.l.b16 %v893
        %v2852 = vunpack.c.h.b16 %v893
        %v2853 = vunpack.c.l.b16 %v894
        %v2854 = vunpack.c.h.b16 %v894
        %v2855 = vunpack.c.l.b16 %v895
        %v2856 = vunpack.c.h.b16 %v895
        %v2857 = vunpack.c.l.b16 %v896
        %v2858 = vunpack.c.h.b16 %v896
        %v2859 = vunpack.c.l.b16 %v897
        %v2860 = vunpack.c.h.b16 %v897
        %v2861 = vunpack.c.l.b16 %v898
        %v2862 = vunpack.c.h.b16 %v898
        %v2863 = vunpack.c.l.b16 %v899
        %v2864 = vunpack.c.h.b16 %v899
        %v2865 = vunpack.c.l.b16 %v900
        %v2866 = vunpack.c.h.b16 %v900
        %v2867 = vunpack.c.l.b16 %v901
        %v2868 = vunpack.c.h.b16 %v901
        %v2869 = vunpack.c.l.b16 %v902
        %v2870 = vunpack.c.h.b16 %v902
        %v2871 = vunpack.c.l.b16 %v903
        %v2872 = vunpack.c.h.b16 %v903
        %v2873 = vunpack.c.l.b16 %v904
        %v2874 = vunpack.c.h.b16 %v904
        %v2875 = vunpack.c.l.b16 %v905
        %v2876 = vunpack.c.h.b16 %v905
        %v2877 = vunpack.c.l.b16 %v906
        %v2878 = vunpack.c.h.b16 %v906
        %v2879 = vunpack.c.l.b16 %v907
        %v2880 = vunpack.c.h.b16 %v907
        %v2881 = vunpack.c.l.b16 %v908
        %v2882 = vunpack.c.h.b16 %v908
        %v2883 = vunpack.c.l.b16 %v909
        %v2884 = vunpack.c.h.b16 %v909
        %v2885 = vunpack.c.l.b16 %v910
        %v2886 = vunpack.c.h.b16 %v910
        %v2887 = vunpack.c.l.b16 %v911
        %v2888 = vunpack.c.h.b16 %v911
        %v2889 = vunpack.c.l.b16 %v912
        %v2890 = vunpack.c.h.b16 %v912
        %v2891 = vunpack.c.l.b16 %v913
        %v2892 = vunpack.c.h.b16 %v913
        %v2893 = vunpack.c.l.b16 %v914
        %v2894 = vunpack.c.h.b16 %v914
        %v2895 = vunpack.c.l.b16 %v915
        %v2896 = vunpack.c.h.b16 %v915
        %v2897 = vunpack.c.l.b16 %v916
        %v2898 = vunpack.c.h.b16 %v916
        %v2899 = vunpack.c.l.b16 %v917
        %v2900 = vunpack.c.h.b16 %v917
        %v2901 = vunpack.c.l.b16 %v918
        %v2902 = vunpack.c.h.b16 %v918
        %v2903 = vunpack.c.l.b16 %v919
        %v2904 = vunpack.c.h.b16 %v919
        %v2905 = vunpack.c.l.b16 %v920
        %v2906 = vunpack.c.h.b16 %v920
        %v2907 = vunpack.c.l.b16 %v921
        %v2908 = vunpack.c.h.b16 %v921
        %v2909 = vunpack.c.l.b16 %v922
        %v2910 = vunpack.c.h.b16 %v922
        %v2911 = vunpack.c.l.b16 %v923
        %v2912 = vunpack.c.h.b16 %v923
        %v2913 = vunpack.c.l.b16 %v924
        %v2914 = vunpack.c.h.b16 %v924
        %v2915 = vunpack.c.l.b16 %v925
        %v2916 = vunpack.c.h.b16 %v925
        %v2917 = vunpack.c.l.b16 %v926
        %v2918 = vunpack.c.h.b16 %v926
        %v2919 = vunpack.c.l.b16 %v927
        %v2920 = vunpack.c.h.b16 %v927
        %v2921 = vunpack.c.l.b16 %v928
        %v2922 = vunpack.c.h.b16 %v928
        %v2923 = vunpack.c.l.b16 %v929
        %v2924 = vunpack.c.h.b16 %v929
        %v2925 = vunpack.c.l.b16 %v930
        %v2926 = vunpack.c.h.b16 %v930
        %v2927 = vunpack.c.l.b16 %v931
        %v2928 = vunpack.c.h.b16 %v931
        %v2929 = vunpack.c.l.b16 %v932
        %v2930 = vunpack.c.h.b16 %v932
        %v2931 = vunpack.c.l.b16 %v933
        %v2932 = vunpack.c.h.b16 %v933
        %v2933 = vunpack.c.l.b16 %v934
        %v2934 = vunpack.c.h.b16 %v934
        %v2935 = vunpack.c.l.b16 %v935
        %v2936 = vunpack.c.h.b16 %v935
        %v2937 = vunpack.c.l.b16 %v936
        %v2938 = vunpack.c.h.b16 %v936
        %v2939 = vunpack.c.l.b16 %v937
        %v2940 = vunpack.c.h.b16 %v937
        %v2941 = vunpack.c.l.b16 %v938
        %v2942 = vunpack.c.h.b16 %v938
        %v2943 = vunpack.c.l.b16 %v939
        %v2944 = vunpack.c.h.b16 %v939
        %v2945 = vunpack.c.l.b16 %v940
        %v2946 = vunpack.c.h.b16 %v940
        %v2947 = vunpack.c.l.b16 %v941
        %v2948 = vunpack.c.h.b16 %v941
        %v2949 = vunpack.c.l.b16 %v942
        %v2950 = vunpack.c.h.b16 %v942
        %v2951 = vunpack.c.l.b16 %v943
        %v2952 = vunpack.c.h.b16 %v943
        %v2953 = vunpack.c.l.b16 %v944
        %v2954 = vunpack.c.h.b16 %v944
        %v2955 = vunpack.c.l.b16 %v945
        %v2956 = vunpack.c.h.b16 %v945
        %v2957 = vunpack.c.l.b16 %v946
        %v2958 = vunpack.c.h.b16 %v946
        %v2959 = vunpack.c.l.b16 %v947
        %v2960 = vunpack.c.h.b16 %v947
        %v2961 = vunpack.c.l.b16 %v948
        %v2962 = vunpack.c.h.b16 %v948
        %v2963 = vunpack.c.l.b16 %v949
        %v2964 = vunpack.c.h.b16 %v949
        %v2965 = vunpack.c.l.b16 %v950
        %v2966 = vunpack.c.h.b16 %v950
        %v2967 = vunpack.c.l.b16 %v951
        %v2968 = vunpack.c.h.b16 %v951
        %v2969 = vunpack.c.l.b16 %v952
        %v2970 = vunpack.c.h.b16 %v952
        %v2971 = vunpack.c.l.b16 %v953
        %v2972 = vunpack.c.h.b16 %v953
        %v2973 = vunpack.c.l.b16 %v954
        %v2974 = vunpack.c.h.b16 %v954
        %v2975 = vunpack.c.l.b16 %v955
        %v2976 = vunpack.c.h.b16 %v955
        %v2977 = vunpack.c.l.b16 %v956
        %v2978 = vunpack.c.h.b16 %v956
        %v2979 = vunpack.c.l.b16 %v957
        %v2980 = vunpack.c.h.b16 %v957
        %v2981 = vunpack.c.l.b16 %v958
        %v2982 = vunpack.c.h.b16 %v958
        %v2983 = vunpack.c.l.b16 %v959
        %v2984 = vunpack.c.h.b16 %v959
        %v2985 = vunpack.c.l.b16 %v960
        %v2986 = vunpack.c.h.b16 %v960
        %v2987 = vunpack.c.l.b16 %v961
        %v2988 = vunpack.c.h.b16 %v961
        %v2989 = vunpack.c.l.b16 %v962
        %v2990 = vunpack.c.h.b16 %v962
        %v2991 = vunpack.c.l.b16 %v963
        %v2992 = vunpack.c.h.b16 %v963
        %v2993 = vunpack.c.l.b16 %v964
        %v2994 = vunpack.c.h.b16 %v964
        %v2995 = vunpack.c.l.b16 %v965
        %v2996 = vunpack.c.h.b16 %v965
        %v2997 = vunpack.c.l.b16 %v966
        %v2998 = vunpack.c.h.b16 %v966
        %v2999 = vunpack.c.l.b16 %v967
        %v3000 = vunpack.c.h.b16 %v967
        %v3001 = vunpack.c.l.b16 %v968
        %v3002 = vunpack.c.h.b16 %v968
        %v3003 = vunpack.c.l.b16 %v969
        %v3004 = vunpack.c.h.b16 %v969
        %v3005 = vunpack.c.l.b16 %v970
        %v3006 = vunpack.c.h.b16 %v970
        %v3007 = vunpack.c.l.b16 %v971
        %v3008 = vunpack.c.h.b16 %v971
        %v3009 = vunpack.c.l.b16 %v972
        %v3010 = vunpack.c.h.b16 %v972
        %v3011 = vunpack.c.l.b16 %v973
        %v3012 = vunpack.c.h.b16 %v973
        %v3013 = vunpack.c.l.b16 %v974
        %v3014 = vunpack.c.h.b16 %v974
        %v3015 = vunpack.c.l.b16 %v975
        %v3016 = vunpack.c.h.b16 %v975
        %v3017 = vunpack.c.l.b16 %v976
        %v3018 = vunpack.c.h.b16 %v976
        %v3019 = vunpack.c.l.b16 %v977
        %v3020 = vunpack.c.h.b16 %v977
        %v3021 = vunpack.c.l.b16 %v978
        %v3022 = vunpack.c.h.b16 %v978
        %v3023 = vunpack.c.l.b16 %v979
        %v3024 = vunpack.c.h.b16 %v979
        %v3025 = vunpack.c.l.b16 %v980
        %v3026 = vunpack.c.h.b16 %v980
        %v3027 = vunpack.c.l.b16 %v981
        %v3028 = vunpack.c.h.b16 %v981
        %v3029 = vunpack.c.l.b16 %v982
        %v3030 = vunpack.c.h.b16 %v982
        %v3031 = vunpack.c.l.b16 %v983
        %v3032 = vunpack.c.h.b16 %v983
        %v3033 = vunpack.c.l.b16 %v984
        %v3034 = vunpack.c.h.b16 %v984
        %v3035 = vunpack.c.l.b16 %v985
        %v3036 = vunpack.c.h.b16 %v985
        %v3037 = vunpack.c.l.b16 %v986
        %v3038 = vunpack.c.h.b16 %v986
        %v3039 = vunpack.c.l.b16 %v987
        %v3040 = vunpack.c.h.b16 %v987
        %v3041 = vunpack.c.l.b16 %v988
        %v3042 = vunpack.c.h.b16 %v988
        %v3043 = vunpack.c.l.b16 %v989
        %v3044 = vunpack.c.h.b16 %v989
        %v3045 = vunpack.c.l.b16 %v990
        %v3046 = vunpack.c.h.b16 %v990
        %v3047 = vunpack.c.l.b16 %v991
        %v3048 = vunpack.c.h.b16 %v991
        %v3049 = vunpack.c.l.b16 %v992
        %v3050 = vunpack.c.h.b16 %v992
        %v3051 = vunpack.c.l.b16 %v993
        %v3052 = vunpack.c.h.b16 %v993
        %v3053 = vunpack.c.l.b16 %v994
        %v3054 = vunpack.c.h.b16 %v994
        %v3055 = vunpack.c.l.b16 %v995
        %v3056 = vunpack.c.h.b16 %v995
        %v3057 = vunpack.c.l.b16 %v996
        %v3058 = vunpack.c.h.b16 %v996
        %v3059 = vunpack.c.l.b16 %v997
        %v3060 = vunpack.c.h.b16 %v997
        %v3061 = vunpack.c.l.b16 %v998
        %v3062 = vunpack.c.h.b16 %v998
        %v3063 = vunpack.c.l.b16 %v999
        %v3064 = vunpack.c.h.b16 %v999
        %v3065 = vunpack.c.l.b16 %v1000
        %v3066 = vunpack.c.h.b16 %v1000
        %v3067 = vunpack.c.l.b16 %v1001
        %v3068 = vunpack.c.h.b16 %v1001
        %v3069 = vunpack.c.l.b16 %v1002
        %v3070 = vunpack.c.h.b16 %v1002
        %v3071 = vunpack.c.l.b16 %v1003
        %v3072 = vunpack.c.h.b16 %v1003
        %v3073 = vunpack.c.l.b16 %v1004
        %v3074 = vunpack.c.h.b16 %v1004
        %v3075 = vunpack.c.l.b16 %v1005
        %v3076 = vunpack.c.h.b16 %v1005
        %v3077 = vunpack.c.l.b16 %v1006
        %v3078 = vunpack.c.h.b16 %v1006
        %v3079 = vunpack.c.l.b16 %v1007
        %v3080 = vunpack.c.h.b16 %v1007
        %v3081 = vunpack.c.l.b16 %v1008
        %v3082 = vunpack.c.h.b16 %v1008
        %v3083 = vunpack.c.l.b16 %v1009
        %v3084 = vunpack.c.h.b16 %v1009
        %v3085 = vunpack.c.l.b16 %v1010
        %v3086 = vunpack.c.h.b16 %v1010
        %v3087 = vunpack.c.l.b16 %v1011
        %v3088 = vunpack.c.h.b16 %v1011
        %v3089 = vunpack.c.l.b16 %v1012
        %v3090 = vunpack.c.h.b16 %v1012
        %v3091 = vunpack.c.l.b16 %v1013
        %v3092 = vunpack.c.h.b16 %v1013
        %v3093 = vunpack.c.l.b16 %v1014
        %v3094 = vunpack.c.h.b16 %v1014
        %v3095 = vunpack.c.l.b16 %v1015
        %v3096 = vunpack.c.h.b16 %v1015
        %v3097 = vunpack.c.l.b16 %v1016
        %v3098 = vunpack.c.h.b16 %v1016
        %v3099 = vunpack.c.l.b16 %v1017
        %v3100 = vunpack.c.h.b16 %v1017
        %v3101 = vunpack.c.l.b16 %v1018
        %v3102 = vunpack.c.h.b16 %v1018
        %v3103 = vunpack.c.l.b16 %v1019
        %v3104 = vunpack.c.h.b16 %v1019
        %v3105 = vunpack.c.l.b16 %v1020
        %v3106 = vunpack.c.h.b16 %v1020
        %v3107 = vunpack.c.l.b16 %v1021
        %v3108 = vunpack.c.h.b16 %v1021
        %v3109 = vunpack.c.l.b16 %v1022
        %v3110 = vunpack.c.h.b16 %v1022
        %v3111 = vunpack.c.l.b16 %v1023
        %v3112 = vunpack.c.h.b16 %v1023
        %v3113 = vunpack.c.l.b16 %v1024
        %v3114 = vunpack.c.h.b16 %v1024
        %v3115 = vunpack.c.l.b16 %v1025
        %v3116 = vunpack.c.h.b16 %v1025
        %v3117 = vunpack.c.l.b16 %v1026
        %v3118 = vunpack.c.h.b16 %v1026
        %v3119 = vunpack.c.l.b16 %v1027
        %v3120 = vunpack.c.h.b16 %v1027
        %v3121 = vunpack.c.l.b16 %v1028
        %v3122 = vunpack.c.h.b16 %v1028
        %v3123 = vunpack.c.l.b16 %v1029
        %v3124 = vunpack.c.h.b16 %v1029
        %v3125 = vunpack.c.l.b16 %v1030
        %v3126 = vunpack.c.h.b16 %v1030
        %v3127 = vunpack.c.l.b16 %v1031
        %v3128 = vunpack.c.h.b16 %v1031
        %v3129 = vunpack.c.l.b16 %v1032
        %v3130 = vunpack.c.h.b16 %v1032
        %v3131 = vunpack.c.l.b16 %v1033
        %v3132 = vunpack.c.h.b16 %v1033
        %v3133 = vunpack.c.l.b16 %v1034
        %v3134 = vunpack.c.h.b16 %v1034
        %v3135 = vunpack.c.l.b16 %v1035
        %v3136 = vunpack.c.h.b16 %v1035
        %v3137 = vunpack.c.l.b16 %v1036
        %v3138 = vunpack.c.h.b16 %v1036
        %v3139 = vunpack.c.l.b16 %v1037
        %v3140 = vunpack.c.h.b16 %v1037
        %v3141 = vunpack.c.l.b16 %v1038
        %v3142 = vunpack.c.h.b16 %v1038
        %v3143 = vunpack.c.l.b16 %v1039
        %v3144 = vunpack.c.h.b16 %v1039
        %v3145 = vunpack.c.l.b16 %v1040
        %v3146 = vunpack.c.h.b16 %v1040
        %v3147 = vunpack.c.l.b16 %v1041
        %v3148 = vunpack.c.h.b16 %v1041
        %v3149 = vunpack.c.l.b16 %v1042
        %v3150 = vunpack.c.h.b16 %v1042
        %v3151 = vunpack.c.l.b16 %v1043
        %v3152 = vunpack.c.h.b16 %v1043
        %v3153 = vunpack.c.l.b16 %v1044
        %v3154 = vunpack.c.h.b16 %v1044
        %v3155 = vunpack.c.l.b16 %v1045
        %v3156 = vunpack.c.h.b16 %v1045
        %v3157 = vunpack.c.l.b16 %v1046
        %v3158 = vunpack.c.h.b16 %v1046
        %v3159 = vunpack.c.l.b16 %v1047
        %v3160 = vunpack.c.h.b16 %v1047
        %v3161 = vunpack.c.l.b16 %v1048
        %v3162 = vunpack.c.h.b16 %v1048
        %v3163 = vunpack.c.l.b16 %v1049
        %v3164 = vunpack.c.h.b16 %v1049
        %v3165 = vunpack.c.l.b16 %v1050
        %v3166 = vunpack.c.h.b16 %v1050
        %v3167 = vunpack.c.l.b16 %v1051
        %v3168 = vunpack.c.h.b16 %v1051
        %v3169 = vunpack.c.l.b16 %v1052
        %v3170 = vunpack.c.h.b16 %v1052
        %v3171 = vunpack.c.l.b16 %v1053
        %v3172 = vunpack.c.h.b16 %v1053
        %v3173 = vunpack.c.l.b16 %v1054
        %v3174 = vunpack.c.h.b16 %v1054
        %v3175 = vunpack.c.l.b16 %v1055
        %v3176 = vunpack.c.h.b16 %v1055
        %v3177 = vunpack.c.l.b16 %v1056
        %v3178 = vunpack.c.h.b16 %v1056
        %v3179 = vunpack.c.l.b16 %v1057
        %v3180 = vunpack.c.h.b16 %v1057
        %v3181 = vunpack.c.l.b16 %v1058
        %v3182 = vunpack.c.h.b16 %v1058
        %v3183 = vunpack.c.l.b16 %v1059
        %v3184 = vunpack.c.h.b16 %v1059
        %v3185 = vunpack.c.l.b16 %v1060
        %v3186 = vunpack.c.h.b16 %v1060
        %v3187 = vunpack.c.l.b16 %v1061
        %v3188 = vunpack.c.h.b16 %v1061
        %v3189 = vunpack.c.l.b16 %v1062
        %v3190 = vunpack.c.h.b16 %v1062
        %v3191 = vunpack.c.l.b16 %v1063
        %v3192 = vunpack.c.h.b16 %v1063
        %v3193 = vunpack.c.l.b16 %v1064
        %v3194 = vunpack.c.h.b16 %v1064
        %v3195 = vunpack.c.l.b16 %v1065
        %v3196 = vunpack.c.h.b16 %v1065
        %v3197 = vunpack.c.l.b16 %v1066
        %v3198 = vunpack.c.h.b16 %v1066
        %v3199 = vunpack.c.l.b16 %v1067
        %v3200 = vunpack.c.h.b16 %v1067
        %v3201 = vunpack.c.l.b16 %v1068
        %v3202 = vunpack.c.h.b16 %v1068
        %v3203 = vunpack.c.l.b16 %v1069
        %v3204 = vunpack.c.h.b16 %v1069
        %v3205 = vunpack.c.l.b16 %v1070
        %v3206 = vunpack.c.h.b16 %v1070
        %v3207 = vunpack.c.l.b16 %v1071
        %v3208 = vunpack.c.h.b16 %v1071
        %v3209 = vunpack.c.l.b16 %v1072
        %v3210 = vunpack.c.h.b16 %v1072
        %v3211 = vunpack.c.l.b16 %v1073
        %v3212 = vunpack.c.h.b16 %v1073
        %v3213 = vunpack.c.l.b16 %v1074
        %v3214 = vunpack.c.h.b16 %v1074
        %v3215 = vunpack.c.l.b16 %v1075
        %v3216 = vunpack.c.h.b16 %v1075
        %v3217 = vunpack.c.l.b16 %v1076
        %v3218 = vunpack.c.h.b16 %v1076
        %v3219 = vunpack.c.l.b16 %v1077
        %v3220 = vunpack.c.h.b16 %v1077
        %v3221 = vunpack.c.l.b16 %v1078
        %v3222 = vunpack.c.h.b16 %v1078
        %v3223 = vunpack.c.l.b16 %v1079
        %v3224 = vunpack.c.h.b16 %v1079
        %v3225 = vunpack.c.l.b16 %v1080
        %v3226 = vunpack.c.h.b16 %v1080
        %v3227 = vunpack.c.l.b16 %v1081
        %v3228 = vunpack.c.h.b16 %v1081
        %v3229 = vunpack.c.l.b16 %v1082
        %v3230 = vunpack.c.h.b16 %v1082
        %v3231 = vunpack.c.l.b16 %v1083
        %v3232 = vunpack.c.h.b16 %v1083
        %v3233 = vunpack.c.l.b16 %v1084
        %v3234 = vunpack.c.h.b16 %v1084
        %v3235 = vunpack.c.l.b16 %v1085
        %v3236 = vunpack.c.h.b16 %v1085
        %v3237 = vunpack.c.l.b16 %v1086
        %v3238 = vunpack.c.h.b16 %v1086
        %v3239 = vunpack.c.l.b16 %v1087
        %v3240 = vunpack.c.h.b16 %v1087
        %v3241 = vunpack.c.l.b16 %v1088
        %v3242 = vunpack.c.h.b16 %v1088
        %v3243 = vunpack.c.l.b16 %v1089
        %v3244 = vunpack.c.h.b16 %v1089
        %v3245 = vunpack.c.l.b16 %v1090
        %v3246 = vunpack.c.h.b16 %v1090
        %v3247 = vunpack.c.l.b16 %v1091
        %v3248 = vunpack.c.h.b16 %v1091
        %v3249 = vunpack.c.l.b16 %v1092
        %v3250 = vunpack.c.h.b16 %v1092
        %v3251 = vunpack.c.l.b16 %v1093
        %v3252 = vunpack.c.h.b16 %v1093
        %v3253 = vunpack.c.l.b16 %v1094
        %v3254 = vunpack.c.h.b16 %v1094
        %v3255 = vunpack.c.l.b16 %v1095
        %v3256 = vunpack.c.h.b16 %v1095
        %v3257 = vunpack.c.l.b16 %v1096
        %v3258 = vunpack.c.h.b16 %v1096
        %v3259 = vunpack.c.l.b16 %v1097
        %v3260 = vunpack.c.h.b16 %v1097
        %v3261 = vunpack.c.l.b16 %v1098
        %v3262 = vunpack.c.h.b16 %v1098
        %v3263 = vunpack.c.l.b16 %v1099
        %v3264 = vunpack.c.h.b16 %v1099
        %v3265 = vunpack.c.l.b16 %v1100
        %v3266 = vunpack.c.h.b16 %v1100
        %v3267 = vunpack.c.l.b16 %v1101
        %v3268 = vunpack.c.h.b16 %v1101
        %v3269 = vunpack.c.l.b16 %v1102
        %v3270 = vunpack.c.h.b16 %v1102
        %v3271 = vunpack.c.l.b16 %v1103
        %v3272 = vunpack.c.h.b16 %v1103
        %v3273 = vunpack.c.l.b16 %v1104
        %v3274 = vunpack.c.h.b16 %v1104
        %v3275 = vunpack.c.l.b16 %v1105
        %v3276 = vunpack.c.h.b16 %v1105
        %v3277 = vunpack.c.l.b16 %v1106
        %v3278 = vunpack.c.h.b16 %v1106
        %v3279 = vunpack.c.l.b16 %v1107
        %v3280 = vunpack.c.h.b16 %v1107
        %v3281 = vunpack.c.l.b16 %v1108
        %v3282 = vunpack.c.h.b16 %v1108
        %v3283 = vunpack.c.l.b16 %v1109
        %v3284 = vunpack.c.h.b16 %v1109
        %v3285 = vunpack.c.l.b16 %v1110
        %v3286 = vunpack.c.h.b16 %v1110
        %v3287 = vunpack.c.l.b16 %v1111
        %v3288 = vunpack.c.h.b16 %v1111
        %v3289 = vunpack.c.l.b16 %v1112
        %v3290 = vunpack.c.h.b16 %v1112
        %v3291 = vunpack.c.l.b16 %v1113
        %v3292 = vunpack.c.h.b16 %v1113
        %v3293 = vunpack.c.l.b16 %v1114
        %v3294 = vunpack.c.h.b16 %v1114
        %v3295 = vunpack.c.l.b16 %v1115
        %v3296 = vunpack.c.h.b16 %v1115
        %v3297 = vunpack.c.l.b16 %v1116
        %v3298 = vunpack.c.h.b16 %v1116
        %v3299 = vunpack.c.l.b16 %v1117
        %v3300 = vunpack.c.h.b16 %v1117
        %v3301 = vunpack.c.l.b16 %v1118
        %v3302 = vunpack.c.h.b16 %v1118
        %v3303 = vunpack.c.l.b16 %v1119
        %v3304 = vunpack.c.h.b16 %v1119
        %v3305 = vunpack.c.l.b16 %v1120
        %v3306 = vunpack.c.h.b16 %v1120
        %v3307 = vunpack.c.l.b16 %v1121
        %v3308 = vunpack.c.h.b16 %v1121
        %v3309 = vunpack.c.l.b16 %v1122
        %v3310 = vunpack.c.h.b16 %v1122
        %v3311 = vunpack.c.l.b16 %v1123
        %v3312 = vunpack.c.h.b16 %v1123
        %v3313 = vunpack.c.l.b16 %v1124
        %v3314 = vunpack.c.h.b16 %v1124
        %v3315 = vunpack.c.l.b16 %v1125
        %v3316 = vunpack.c.h.b16 %v1125
        %v3317 = vunpack.c.l.b16 %v1126
        %v3318 = vunpack.c.h.b16 %v1126
        %v3319 = vunpack.c.l.b16 %v1127
        %v3320 = vunpack.c.h.b16 %v1127
        %v3321 = vunpack.c.l.b16 %v1128
        %v3322 = vunpack.c.h.b16 %v1128
        %v3323 = vunpack.c.l.b16 %v1129
        %v3324 = vunpack.c.h.b16 %v1129
        %v3325 = vunpack.c.l.b16 %v1130
        %v3326 = vunpack.c.h.b16 %v1130
        %v3327 = vunpack.c.l.b16 %v1131
        %v3328 = vunpack.c.h.b16 %v1131
        %v3329 = vunpack.c.l.b16 %v1132
        %v3330 = vunpack.c.h.b16 %v1132
        %v3331 = vunpack.c.l.b16 %v1133
        %v3332 = vunpack.c.h.b16 %v1133
        %v3333 = vunpack.c.l.b16 %v1134
        %v3334 = vunpack.c.h.b16 %v1134
        %v3335 = vunpack.c.l.b16 %v1135
        %v3336 = vunpack.c.h.b16 %v1135
        %v3337 = vunpack.c.l.b16 %v1136
        %v3338 = vunpack.c.h.b16 %v1136
        %v3339 = vunpack.c.l.b16 %v1137
        %v3340 = vunpack.c.h.b16 %v1137
        %v3341 = vunpack.c.l.b16 %v1138
        %v3342 = vunpack.c.h.b16 %v1138
        %v3343 = vunpack.c.l.b16 %v1139
        %v3344 = vunpack.c.h.b16 %v1139
        %v3345 = vunpack.c.l.b16 %v1140
        %v3346 = vunpack.c.h.b16 %v1140
        %v3347 = vunpack.c.l.b16 %v1141
        %v3348 = vunpack.c.h.b16 %v1141
        %v3349 = vunpack.c.l.b16 %v1142
        %v3350 = vunpack.c.h.b16 %v1142
        %v3351 = vunpack.c.l.b16 %v1143
        %v3352 = vunpack.c.h.b16 %v1143
        %v3353 = vunpack.c.l.b16 %v1144
        %v3354 = vunpack.c.h.b16 %v1144
        %v3355 = vunpack.c.l.b16 %v1145
        %v3356 = vunpack.c.h.b16 %v1145
        %v3357 = vunpack.c.l.b16 %v1146
        %v3358 = vunpack.c.h.b16 %v1146
        %v3359 = vunpack.c.l.b16 %v1147
        %v3360 = vunpack.c.h.b16 %v1147
        %v3361 = vunpack.c.l.b16 %v1148
        %v3362 = vunpack.c.h.b16 %v1148
        %v3363 = vunpack.c.l.b16 %v1149
        %v3364 = vunpack.c.h.b16 %v1149
        %v3365 = vunpack.c.l.b16 %v1150
        %v3366 = vunpack.c.h.b16 %v1150
        %v3367 = vunpack.c.l.b16 %v1151
        %v3368 = vunpack.c.h.b16 %v1151
        %v3369 = vunpack.c.l.b16 %v1152
        %v3370 = vunpack.c.h.b16 %v1152
        %v3371 = vunpack.c.l.b16 %v1153
        %v3372 = vunpack.c.h.b16 %v1153
        %v3373 = vunpack.c.l.b16 %v1154
        %v3374 = vunpack.c.h.b16 %v1154
        %v3375 = vunpack.c.l.b16 %v1155
        %v3376 = vunpack.c.h.b16 %v1155
        %v3377 = vunpack.c.l.b16 %v1156
        %v3378 = vunpack.c.h.b16 %v1156
        %v3379 = vunpack.c.l.b16 %v1157
        %v3380 = vunpack.c.h.b16 %v1157
        %v3381 = vunpack.c.l.b16 %v1158
        %v3382 = vunpack.c.h.b16 %v1158
        %v3383 = vunpack.c.l.b16 %v1159
        %v3384 = vunpack.c.h.b16 %v1159
        %v3385 = vunpack.c.l.b16 %v1160
        %v3386 = vunpack.c.h.b16 %v1160
        %v3387 = vunpack.c.l.b16 %v1161
        %v3388 = vunpack.c.h.b16 %v1161
        %v3389 = vunpack.c.l.b16 %v1162
        %v3390 = vunpack.c.h.b16 %v1162
        %v3391 = vunpack.c.l.b16 %v1163
        %v3392 = vunpack.c.h.b16 %v1163
        %v3393 = vunpack.c.l.b16 %v1164
        %v3394 = vunpack.c.h.b16 %v1164
        %v3395 = vunpack.c.l.b16 %v1165
        %v3396 = vunpack.c.h.b16 %v1165
        %v3397 = vunpack.c.l.b16 %v1166
        %v3398 = vunpack.c.h.b16 %v1166
        %v3399 = vunpack.c.l.b16 %v1167
        %v3400 = vunpack.c.h.b16 %v1167
        %v3401 = vunpack.c.l.b16 %v1168
        %v3402 = vunpack.c.h.b16 %v1168
        %v3403 = vunpack.c.l.b16 %v1169
        %v3404 = vunpack.c.h.b16 %v1169
        %v3405 = vunpack.c.l.b16 %v1170
        %v3406 = vunpack.c.h.b16 %v1170
        %v3407 = vunpack.c.l.b16 %v1171
        %v3408 = vunpack.c.h.b16 %v1171
        %v3409 = vunpack.c.l.b16 %v1172
        %v3410 = vunpack.c.h.b16 %v1172
        %v3411 = vunpack.c.l.b16 %v1173
        %v3412 = vunpack.c.h.b16 %v1173
        %v3413 = vunpack.c.l.b16 %v1174
        %v3414 = vunpack.c.h.b16 %v1174
        %v3415 = vunpack.c.l.b16 %v1175
        %v3416 = vunpack.c.h.b16 %v1175
        %v3417 = vunpack.c.l.b16 %v1176
        %v3418 = vunpack.c.h.b16 %v1176
        %v3419 = vunpack.c.l.b16 %v1177
        %v3420 = vunpack.c.h.b16 %v1177
        %v3421 = vunpack.c.l.b16 %v1178
        %v3422 = vunpack.c.h.b16 %v1178
        %v3423 = vunpack.c.l.b16 %v1179
        %v3424 = vunpack.c.h.b16 %v1179
        %v3425 = vunpack.c.l.b16 %v1180
        %v3426 = vunpack.c.h.b16 %v1180
        %v3427 = vunpack.c.l.b16 %v1181
        %v3428 = vunpack.c.h.b16 %v1181
        %v3429 = vunpack.c.l.b16 %v1182
        %v3430 = vunpack.c.h.b16 %v1182
        %v3431 = vunpack.c.l.b16 %v1183
        %v3432 = vunpack.c.h.b16 %v1183
        %v3433 = vunpack.c.l.b16 %v1184
        %v3434 = vunpack.c.h.b16 %v1184
        %v3435 = vunpack.c.l.b16 %v1185
        %v3436 = vunpack.c.h.b16 %v1185
        %v3437 = vunpack.c.l.b16 %v1186
        %v3438 = vunpack.c.h.b16 %v1186
        %v3439 = vunpack.c.l.b16 %v1187
        %v3440 = vunpack.c.h.b16 %v1187
        %v3441 = vunpack.c.l.b16 %v1188
        %v3442 = vunpack.c.h.b16 %v1188
        %v3443 = vunpack.c.l.b16 %v1189
        %v3444 = vunpack.c.h.b16 %v1189
        %v3445 = vunpack.c.l.b16 %v1190
        %v3446 = vunpack.c.h.b16 %v1190
        %v3447 = vunpack.c.l.b16 %v1191
        %v3448 = vunpack.c.h.b16 %v1191
        %v3449 = vunpack.c.l.b16 %v1192
        %v3450 = vunpack.c.h.b16 %v1192
        %v3451 = vunpack.c.l.b16 %v1193
        %v3452 = vunpack.c.h.b16 %v1193
        %v3453 = vunpack.c.l.b16 %v1194
        %v3454 = vunpack.c.h.b16 %v1194
        %v3455 = vunpack.c.l.b16 %v1195
        %v3456 = vunpack.c.h.b16 %v1195
        %v3457 = vunpack.c.l.b16 %v1196
        %v3458 = vunpack.c.h.b16 %v1196
        %v3459 = vunpack.c.l.b16 %v1197
        %v3460 = vunpack.c.h.b16 %v1197
        %v3461 = vunpack.c.l.b16 %v1198
        %v3462 = vunpack.c.h.b16 %v1198
        %v3463 = vunpack.c.l.b16 %v1199
        %v3464 = vunpack.c.h.b16 %v1199
        %v3465 = vunpack.c.l.b16 %v1200
        %v3466 = vunpack.c.h.b16 %v1200
        %v3467 = vunpack.c.l.b16 %v1201
        %v3468 = vunpack.c.h.b16 %v1201
        %v3469 = vunpack.c.l.b16 %v1202
        %v3470 = vunpack.c.h.b16 %v1202
        %v3471 = vunpack.c.l.b16 %v1203
        %v3472 = vunpack.c.h.b16 %v1203
        %v3473 = vunpack.c.l.b16 %v1204
        %v3474 = vunpack.c.h.b16 %v1204
        %v3475 = vunpack.c.l.b16 %v1205
        %v3476 = vunpack.c.h.b16 %v1205
        %v3477 = vunpack.c.l.b16 %v1206
        %v3478 = vunpack.c.h.b16 %v1206
        %v3479 = vunpack.c.l.b16 %v1207
        %v3480 = vunpack.c.h.b16 %v1207
        %v3481 = vunpack.c.l.b16 %v1208
        %v3482 = vunpack.c.h.b16 %v1208
        %v3483 = vunpack.c.l.b16 %v1209
        %v3484 = vunpack.c.h.b16 %v1209
        %v3485 = vunpack.c.l.b16 %v1210
        %v3486 = vunpack.c.h.b16 %v1210
        %v3487 = vunpack.c.l.b16 %v1211
        %v3488 = vunpack.c.h.b16 %v1211
        %v3489 = vunpack.c.l.b16 %v1212
        %v3490 = vunpack.c.h.b16 %v1212
        %v3491 = vunpack.c.l.b16 %v1213
        %v3492 = vunpack.c.h.b16 %v1213
        %v3493 = vunpack.c.l.b16 %v1214
        %v3494 = vunpack.c.h.b16 %v1214
        %v3495 = vunpack.c.l.b16 %v1215
        %v3496 = vunpack.c.h.b16 %v1215
        %v3497 = vunpack.c.l.b16 %v1216
        %v3498 = vunpack.c.h.b16 %v1216
        %v3499 = vunpack.c.l.b16 %v1217
        %v3500 = vunpack.c.h.b16 %v1217
        %v3501 = vunpack.c.l.b16 %v1218
        %v3502 = vunpack.c.h.b16 %v1218
        %v3503 = vunpack.c.l.b16 %v1219
        %v3504 = vunpack.c.h.b16 %v1219
        %v3505 = vunpack.c.l.b16 %v1220
        %v3506 = vunpack.c.h.b16 %v1220
        %v3507 = vunpack.c.l.b16 %v1221
        %v3508 = vunpack.c.h.b16 %v1221
        %v3509 = vunpack.c.l.b16 %v1222
        %v3510 = vunpack.c.h.b16 %v1222
        %v3511 = vunpack.c.l.b16 %v1223
        %v3512 = vunpack.c.h.b16 %v1223
        %v3513 = vunpack.c.l.b16 %v1224
        %v3514 = vunpack.c.h.b16 %v1224
        %v3515 = vunpack.c.l.b16 %v1225
        %v3516 = vunpack.c.h.b16 %v1225
        %v3517 = vunpack.c.l.b16 %v1226
        %v3518 = vunpack.c.h.b16 %v1226
        %v3519 = vunpack.c.l.b16 %v1227
        %v3520 = vunpack.c.h.b16 %v1227
        %v3521 = vunpack.c.l.b16 %v1228
        %v3522 = vunpack.c.h.b16 %v1228
        %v3523 = vunpack.c.l.b16 %v1229
        %v3524 = vunpack.c.h.b16 %v1229
        %v3525 = vunpack.c.l.b16 %v1230
        %v3526 = vunpack.c.h.b16 %v1230
        %v3527 = vunpack.c.l.b16 %v1231
        %v3528 = vunpack.c.h.b16 %v1231
        %v3529 = vunpack.c.l.b16 %v1232
        %v3530 = vunpack.c.h.b16 %v1232
        %v3531 = vunpack.c.l.b16 %v1233
        %v3532 = vunpack.c.h.b16 %v1233
        %v3533 = vunpack.c.l.b16 %v1234
        %v3534 = vunpack.c.h.b16 %v1234
        %v3535 = vunpack.c.l.b16 %v1235
        %v3536 = vunpack.c.h.b16 %v1235
        %v3537 = vunpack.c.l.b16 %v1236
        %v3538 = vunpack.c.h.b16 %v1236
        %v3539 = vunpack.c.l.b16 %v1237
        %v3540 = vunpack.c.h.b16 %v1237
        %v3541 = vunpack.c.l.b16 %v1238
        %v3542 = vunpack.c.h.b16 %v1238
        %v3543 = vunpack.c.l.b16 %v1239
        %v3544 = vunpack.c.h.b16 %v1239
        %v3545 = vunpack.c.l.b16 %v1240
        %v3546 = vunpack.c.h.b16 %v1240
        %v3547 = vunpack.c.l.b16 %v1241
        %v3548 = vunpack.c.h.b16 %v1241
        %v3549 = vunpack.c.l.b16 %v1242
        %v3550 = vunpack.c.h.b16 %v1242
        %v3551 = vunpack.c.l.b16 %v1243
        %v3552 = vunpack.c.h.b16 %v1243
        %v3553 = vunpack.c.l.b16 %v1244
        %v3554 = vunpack.c.h.b16 %v1244
        %v3555 = vunpack.c.l.b16 %v1245
        %v3556 = vunpack.c.h.b16 %v1245
        %v3557 = vunpack.c.l.b16 %v1246
        %v3558 = vunpack.c.h.b16 %v1246
        %v3559 = vunpack.c.l.b16 %v1247
        %v3560 = vunpack.c.h.b16 %v1247
        %v3561 = vunpack.c.l.b16 %v1248
        %v3562 = vunpack.c.h.b16 %v1248
        %v3563 = vunpack.c.l.b16 %v1249
        %v3564 = vunpack.c.h.b16 %v1249
        %v3565 = vunpack.c.l.b16 %v1250
        %v3566 = vunpack.c.h.b16 %v1250
        %v3567 = vunpack.c.l.b16 %v1251
        %v3568 = vunpack.c.h.b16 %v1251
        %v3569 = vunpack.c.l.b16 %v1252
        %v3570 = vunpack.c.h.b16 %v1252
        %v3571 = vunpack.c.l.b16 %v1253
        %v3572 = vunpack.c.h.b16 %v1253
        %v3573 = vunpack.c.l.b16 %v1254
        %v3574 = vunpack.c.h.b16 %v1254
        %v3575 = vunpack.c.l.b16 %v1255
        %v3576 = vunpack.c.h.b16 %v1255
        %v3577 = vunpack.c.l.b16 %v1256
        %v3578 = vunpack.c.h.b16 %v1256
        %v3579 = vunpack.c.l.b16 %v1257
        %v3580 = vunpack.c.h.b16 %v1257
        %v3581 = vunpack.c.l.b16 %v1258
        %v3582 = vunpack.c.h.b16 %v1258
        %v3583 = vunpack.c.l.b16 %v1259
        %v3584 = vunpack.c.h.b16 %v1259
        %v3585 = vunpack.c.l.b16 %v1260
        %v3586 = vunpack.c.h.b16 %v1260
        %v3587 = vunpack.c.l.b16 %v1261
        %v3588 = vunpack.c.h.b16 %v1261
        %v3589 = vunpack.c.l.b16 %v1262
        %v3590 = vunpack.c.h.b16 %v1262
        %v3591 = vunpack.c.l.b16 %v1263
        %v3592 = vunpack.c.h.b16 %v1263
        %v3593 = vunpack.c.l.b16 %v1264
        %v3594 = vunpack.c.h.b16 %v1264
        %v3595 = vunpack.c.l.b16 %v1265
        %v3596 = vunpack.c.h.b16 %v1265
        %v3597 = vunpack.c.l.b16 %v1266
        %v3598 = vunpack.c.h.b16 %v1266
        %v3599 = vunpack.c.l.b16 %v1267
        %v3600 = vunpack.c.h.b16 %v1267
        %v3601 = vunpack.c.l.b16 %v1268
        %v3602 = vunpack.c.h.b16 %v1268
        %v3603 = vunpack.c.l.b16 %v1269
        %v3604 = vunpack.c.h.b16 %v1269
        %v3605 = vunpack.c.l.b16 %v1270
        %v3606 = vunpack.c.h.b16 %v1270
        %v3607 = vunpack.c.l.b16 %v1271
        %v3608 = vunpack.c.h.b16 %v1271
        %v3609 = vunpack.c.l.b16 %v1272
        %v3610 = vunpack.c.h.b16 %v1272
        %v3611 = vunpack.c.l.b16 %v1273
        %v3612 = vunpack.c.h.b16 %v1273
        %v3613 = vunpack.c.l.b16 %v1274
        %v3614 = vunpack.c.h.b16 %v1274
        %v3615 = vunpack.c.l.b16 %v1275
        %v3616 = vunpack.c.h.b16 %v1275
        %v3617 = vunpack.c.l.b16 %v1276
        %v3618 = vunpack.c.h.b16 %v1276
        %v3619 = vunpack.c.l.b16 %v1277
        %v3620 = vunpack.c.h.b16 %v1277
        %v3621 = vunpack.c.l.b16 %v1278
        %v3622 = vunpack.c.h.b16 %v1278
        %v3623 = vunpack.c.l.b16 %v1279
        %v3624 = vunpack.c.h.b16 %v1279
        %v3625 = vunpack.c.l.b16 %v1280
        %v3626 = vunpack.c.h.b16 %v1280
        %v3627 = vunpack.c.l.b16 %v1281
        %v3628 = vunpack.c.h.b16 %v1281
        %v3629 = vunpack.c.l.b16 %v1282
        %v3630 = vunpack.c.h.b16 %v1282
        %v3631 = vunpack.c.l.b16 %v1283
        %v3632 = vunpack.c.h.b16 %v1283
        %v3633 = vunpack.c.l.b16 %v1284
        %v3634 = vunpack.c.h.b16 %v1284
        %v3635 = vunpack.c.l.b16 %v1285
        %v3636 = vunpack.c.h.b16 %v1285
        %v3637 = vunpack.c.l.b16 %v1286
        %v3638 = vunpack.c.h.b16 %v1286
        %v3639 = vunpack.c.l.b16 %v1287
        %v3640 = vunpack.c.h.b16 %v1287
        %v3641 = vunpack.c.l.b16 %v1288
        %v3642 = vunpack.c.h.b16 %v1288
        %v3643 = vunpack.c.l.b16 %v1289
        %v3644 = vunpack.c.h.b16 %v1289
        %v3645 = vunpack.c.l.b16 %v1290
        %v3646 = vunpack.c.h.b16 %v1290
        %v3647 = vunpack.c.l.b16 %v1291
        %v3648 = vunpack.c.h.b16 %v1291
        %v3649 = vunpack.c.l.b16 %v1292
        %v3650 = vunpack.c.h.b16 %v1292
        %v3651 = vunpack.c.l.b16 %v1293
        %v3652 = vunpack.c.h.b16 %v1293
        %v3653 = vunpack.c.l.b16 %v1294
        %v3654 = vunpack.c.h.b16 %v1294
        %v3655 = vunpack.c.l.b16 %v1295
        %v3656 = vunpack.c.h.b16 %v1295
        %v3657 = vunpack.c.l.b16 %v1296
        %v3658 = vunpack.c.h.b16 %v1296
        %v3659 = vunpack.c.l.b16 %v1297
        %v3660 = vunpack.c.h.b16 %v1297
        %v3661 = vunpack.c.l.b16 %v1298
        %v3662 = vunpack.c.h.b16 %v1298
        %v3663 = vunpack.c.l.b16 %v1299
        %v3664 = vunpack.c.h.b16 %v1299
        %v3665 = vunpack.c.l.b16 %v1300
        %v3666 = vunpack.c.h.b16 %v1300
        %v3667 = vunpack.c.l.b16 %v1301
        %v3668 = vunpack.c.h.b16 %v1301
        %v3669 = vunpack.c.l.b16 %v1302
        %v3670 = vunpack.c.h.b16 %v1302
        %v3671 = vunpack.c.l.b16 %v1303
        %v3672 = vunpack.c.h.b16 %v1303
        %v3673 = vunpack.c.l.b16 %v1304
        %v3674 = vunpack.c.h.b16 %v1304
        %v3675 = vunpack.c.l.b16 %v1305
        %v3676 = vunpack.c.h.b16 %v1305
        %v3677 = vunpack.c.l.b16 %v1306
        %v3678 = vunpack.c.h.b16 %v1306
        %v3679 = vunpack.c.l.b16 %v1307
        %v3680 = vunpack.c.h.b16 %v1307
        %v3681 = vunpack.c.l.b16 %v1308
        %v3682 = vunpack.c.h.b16 %v1308
        %v3683 = vunpack.c.l.b16 %v1309
        %v3684 = vunpack.c.h.b16 %v1309
        %v3685 = vunpack.c.l.b16 %v1310
        %v3686 = vunpack.c.h.b16 %v1310
        %v3687 = vunpack.c.l.b16 %v1311
        %v3688 = vunpack.c.h.b16 %v1311
        %v3689 = vunpack.c.l.b16 %v1312
        %v3690 = vunpack.c.h.b16 %v1312
        %v3691 = vunpack.c.l.b16 %v1313
        %v3692 = vunpack.c.h.b16 %v1313
        %v3693 = vunpack.c.l.b16 %v1314
        %v3694 = vunpack.c.h.b16 %v1314
        %v3695 = vunpack.c.l.b16 %v1315
        %v3696 = vunpack.c.h.b16 %v1315
        %v3697 = vunpack.c.l.b16 %v1316
        %v3698 = vunpack.c.h.b16 %v1316
        %v3699 = vunpack.c.l.b16 %v1317
        %v3700 = vunpack.c.h.b16 %v1317
        %v3701 = vunpack.c.l.b16 %v1318
        %v3702 = vunpack.c.h.b16 %v1318
        %v3703 = vunpack.c.l.b16 %v1319
        %v3704 = vunpack.c.h.b16 %v1319
        %v3705 = vunpack.c.l.b16 %v1320
        %v3706 = vunpack.c.h.b16 %v1320
        %v3707 = vunpack.c.l.b16 %v1321
        %v3708 = vunpack.c.h.b16 %v1321
        %v3709 = vunpack.c.l.b16 %v1322
        %v3710 = vunpack.c.h.b16 %v1322
        %v3711 = vunpack.c.l.b16 %v1323
        %v3712 = vunpack.c.h.b16 %v1323
        %v3713 = vunpack.c.l.b16 %v1324
        %v3714 = vunpack.c.h.b16 %v1324
        %v3715 = vunpack.c.l.b16 %v1325
        %v3716 = vunpack.c.h.b16 %v1325
        %v3717 = vunpack.c.l.b16 %v1326
        %v3718 = vunpack.c.h.b16 %v1326
        %v3719 = vunpack.c.l.b16 %v1327
        %v3720 = vunpack.c.h.b16 %v1327
        %v3721 = vunpack.c.l.b16 %v1328
        %v3722 = vunpack.c.h.b16 %v1328
        %v3723 = vunpack.c.l.b16 %v1329
        %v3724 = vunpack.c.h.b16 %v1329
        %v3725 = vunpack.c.l.b16 %v1330
        %v3726 = vunpack.c.h.b16 %v1330
        %v3727 = vunpack.c.l.b16 %v1331
        %v3728 = vunpack.c.h.b16 %v1331
        %v3729 = vunpack.c.l.b16 %v1332
        %v3730 = vunpack.c.h.b16 %v1332
        %v3731 = vunpack.c.l.b16 %v1333
        %v3732 = vunpack.c.h.b16 %v1333
        %v3733 = vunpack.c.l.b16 %v1334
        %v3734 = vunpack.c.h.b16 %v1334
        %v3735 = vunpack.c.l.b16 %v1335
        %v3736 = vunpack.c.h.b16 %v1335
        %v3737 = vunpack.c.l.b16 %v1336
        %v3738 = vunpack.c.h.b16 %v1336
        %v3739 = vunpack.c.l.b16 %v1337
        %v3740 = vunpack.c.h.b16 %v1337
        %v3741 = vunpack.c.l.b16 %v1338
        %v3742 = vunpack.c.h.b16 %v1338
        %v3743 = vunpack.c.l.b16 %v1339
        %v3744 = vunpack.c.h.b16 %v1339
        %v3745 = vunpack.c.l.b16 %v1340
        %v3746 = vunpack.c.h.b16 %v1340
        %v3747 = vunpack.c.l.b16 %v1341
        %v3748 = vunpack.c.h.b16 %v1341
        %v3749 = vunpack.c.l.b16 %v1342
        %v3750 = vunpack.c.h.b16 %v1342
        %v3751 = vunpack.c.l.b16 %v1343
        %v3752 = vunpack.c.h.b16 %v1343
        %v3753 = vunpack.c.l.b16 %v1344
        %v3754 = vunpack.c.h.b16 %v1344
        %v3755 = vunpack.c.l.b16 %v1345
        %v3756 = vunpack.c.h.b16 %v1345
        %v3757 = vunpack.c.l.b16 %v1346
        %v3758 = vunpack.c.h.b16 %v1346
        %v3759 = vunpack.c.l.b16 %v1347
        %v3760 = vunpack.c.h.b16 %v1347
        %v3761 = vunpack.c.l.b16 %v1348
        %v3762 = vunpack.c.h.b16 %v1348
        %v3763 = vunpack.c.l.b16 %v1349
        %v3764 = vunpack.c.h.b16 %v1349
        %v3765 = vunpack.c.l.b16 %v1350
        %v3766 = vunpack.c.h.b16 %v1350
        %v3767 = vunpack.c.l.b16 %v1351
        %v3768 = vunpack.c.h.b16 %v1351
        %v3769 = vunpack.c.l.b16 %v1352
        %v3770 = vunpack.c.h.b16 %v1352
        %v3771 = vunpack.c.l.b16 %v1353
        %v3772 = vunpack.c.h.b16 %v1353
        %v3773 = vunpack.c.l.b16 %v1354
        %v3774 = vunpack.c.h.b16 %v1354
        %v3775 = vunpack.c.l.b16 %v1355
        %v3776 = vunpack.c.h.b16 %v1355
        %v3777 = vunpack.c.l.b16 %v1356
        %v3778 = vunpack.c.h.b16 %v1356
        %v3779 = vunpack.c.l.b16 %v1357
        %v3780 = vunpack.c.h.b16 %v1357
        %v3781 = vunpack.c.l.b16 %v1358
        %v3782 = vunpack.c.h.b16 %v1358
        %v3783 = vunpack.c.l.b16 %v1359
        %v3784 = vunpack.c.h.b16 %v1359
        %v3785 = vunpack.c.l.b16 %v1360
        %v3786 = vunpack.c.h.b16 %v1360
        %v3787 = vunpack.c.l.b16 %v1361
        %v3788 = vunpack.c.h.b16 %v1361
        %v3789 = vunpack.c.l.b16 %v1362
        %v3790 = vunpack.c.h.b16 %v1362
        %v3791 = vunpack.c.l.b16 %v1363
        %v3792 = vunpack.c.h.b16 %v1363
        %v3793 = vunpack.c.l.b16 %v1364
        %v3794 = vunpack.c.h.b16 %v1364
        %v3795 = vunpack.c.l.b16 %v1365
        %v3796 = vunpack.c.h.b16 %v1365
        %v3797 = vunpack.c.l.b16 %v1366
        %v3798 = vunpack.c.h.b16 %v1366
        %v3799 = vunpack.c.l.b16 %v1367
        %v3800 = vunpack.c.h.b16 %v1367
        %v3801 = vunpack.c.l.b16 %v1368
        %v3802 = vunpack.c.h.b16 %v1368
        %v3803 = vpack.c.b16 %v2271, %v2267
        %v3804 = vpack.c.b16 %v2272, %v2268
        %v3805 = vpack.c.b16 %v2273, %v2269
        %v3806 = vpack.c.b16 %v2274, %v2270
        %v3807 = vpack.c.b16 %v2279, %v2275
        %v3808 = vpack.c.b16 %v2280, %v2276
        %v3809 = vpack.c.b16 %v2281, %v2277
        %v3810 = vpack.c.b16 %v2282, %v2278
        %v3811 = vpack.c.b16 %v2287, %v2283
        %v3812 = vpack.c.b16 %v2288, %v2284
        %v3813 = vpack.c.b16 %v2289, %v2285
        %v3814 = vpack.c.b16 %v2290, %v2286
        %v3815 = vpack.c.b16 %v2295, %v2291
        %v3816 = vpack.c.b16 %v2296, %v2292
        %v3817 = vpack.c.b16 %v2297, %v2293
        %v3818 = vpack.c.b16 %v2298, %v2294
        %v3819 = vpack.c.b16 %v2303, %v2299
        %v3820 = vpack.c.b16 %v2304, %v2300
        %v3821 = vpack.c.b16 %v2305, %v2301
        %v3822 = vpack.c.b16 %v2306, %v2302
        %v3823 = vpack.c.b16 %v2311, %v2307
        %v3824 = vpack.c.b16 %v2312, %v2308
        %v3825 = vpack.c.b16 %v2313, %v2309
        %v3826 = vpack.c.b16 %v2314, %v2310
        %v3827 = vpack.c.b16 %v2319, %v2315
        %v3828 = vpack.c.b16 %v2320, %v2316
        %v3829 = vpack.c.b16 %v2321, %v2317
        %v3830 = vpack.c.b16 %v2322, %v2318
        %v3831 = vpack.c.b16 %v2327, %v2323
        %v3832 = vpack.c.b16 %v2328, %v2324
        %v3833 = vpack.c.b16 %v2329, %v2325
        %v3834 = vpack.c.b16 %v2330, %v2326
        %v3835 = vpack.c.b16 %v2335, %v2331
        %v3836 = vpack.c.b16 %v2336, %v2332
        %v3837 = vpack.c.b16 %v2337, %v2333
        %v3838 = vpack.c.b16 %v2338, %v2334
        %v3839 = vpack.c.b16 %v2343, %v2339
        %v3840 = vpack.c.b16 %v2344, %v2340
        %v3841 = vpack.c.b16 %v2345, %v2341
        %v3842 = vpack.c.b16 %v2346, %v2342
        %v3843 = vpack.c.b16 %v2351, %v2347
        %v3844 = vpack.c.b16 %v2352, %v2348
        %v3845 = vpack.c.b16 %v2353, %v2349
        %v3846 = vpack.c.b16 %v2354, %v2350
        %v3847 = vpack.c.b16 %v2359, %v2355
        %v3848 = vpack.c.b16 %v2360, %v2356
        %v3849 = vpack.c.b16 %v2361, %v2357
        %v3850 = vpack.c.b16 %v2362, %v2358
        %v3851 = vpack.c.b16 %v2367, %v2363
        %v3852 = vpack.c.b16 %v2368, %v2364
        %v3853 = vpack.c.b16 %v2369, %v2365
        %v3854 = vpack.c.b16 %v2370, %v2366
        %v3855 = vpack.c.b16 %v2375, %v2371
        %v3856 = vpack.c.b16 %v2376, %v2372
        %v3857 = vpack.c.b16 %v2377, %v2373
        %v3858 = vpack.c.b16 %v2378, %v2374
        %v3859 = vpack.c.b16 %v2383, %v2379
        %v3860 = vpack.c.b16 %v2384, %v2380
        %v3861 = vpack.c.b16 %v2385, %v2381
        %v3862 = vpack.c.b16 %v2386, %v2382
        %v3863 = vpack.c.b16 %v2391, %v2387
        %v3864 = vpack.c.b16 %v2392, %v2388
        %v3865 = vpack.c.b16 %v2393, %v2389
        %v3866 = vpack.c.b16 %v2394, %v2390
        %v3867 = vpack.c.b16 %v2399, %v2395
        %v3868 = vpack.c.b16 %v2400, %v2396
        %v3869 = vpack.c.b16 %v2401, %v2397
        %v3870 = vpack.c.b16 %v2402, %v2398
        %v3871 = vpack.c.b16 %v2407, %v2403
        %v3872 = vpack.c.b16 %v2408, %v2404
        %v3873 = vpack.c.b16 %v2409, %v2405
        %v3874 = vpack.c.b16 %v2410, %v2406
        %v3875 = vpack.c.b16 %v2415, %v2411
        %v3876 = vpack.c.b16 %v2416, %v2412
        %v3877 = vpack.c.b16 %v2417, %v2413
        %v3878 = vpack.c.b16 %v2418, %v2414
        %v3879 = vpack.c.b16 %v2423, %v2419
        %v3880 = vpack.c.b16 %v2424, %v2420
        %v3881 = vpack.c.b16 %v2425, %v2421
        %v3882 = vpack.c.b16 %v2426, %v2422
        %v3883 = vpack.c.b16 %v2431, %v2427
        %v3884 = vpack.c.b16 %v2432, %v2428
        %v3885 = vpack.c.b16 %v2433, %v2429
        %v3886 = vpack.c.b16 %v2434, %v2430
        %v3887 = vpack.c.b16 %v2439, %v2435
        %v3888 = vpack.c.b16 %v2440, %v2436
        %v3889 = vpack.c.b16 %v2441, %v2437
        %v3890 = vpack.c.b16 %v2442, %v2438
        %v3891 = vpack.c.b16 %v2447, %v2443
        %v3892 = vpack.c.b16 %v2448, %v2444
        %v3893 = vpack.c.b16 %v2449, %v2445
        %v3894 = vpack.c.b16 %v2450, %v2446
        %v3895 = vpack.c.b16 %v2455, %v2451
        %v3896 = vpack.c.b16 %v2456, %v2452
        %v3897 = vpack.c.b16 %v2457, %v2453
        %v3898 = vpack.c.b16 %v2458, %v2454
        %v3899 = vpack.c.b16 %v2463, %v2459
        %v3900 = vpack.c.b16 %v2464, %v2460
        %v3901 = vpack.c.b16 %v2465, %v2461
        %v3902 = vpack.c.b16 %v2466, %v2462
        %v3903 = vpack.c.b16 %v2471, %v2467
        %v3904 = vpack.c.b16 %v2472, %v2468
        %v3905 = vpack.c.b16 %v2473, %v2469
        %v3906 = vpack.c.b16 %v2474, %v2470
        %v3907 = vpack.c.b16 %v2479, %v2475
        %v3908 = vpack.c.b16 %v2480, %v2476
        %v3909 = vpack.c.b16 %v2481, %v2477
        %v3910 = vpack.c.b16 %v2482, %v2478
        %v3911 = vpack.c.b16 %v2487, %v2483
        %v3912 = vpack.c.b16 %v2488, %v2484
        %v3913 = vpack.c.b16 %v2489, %v2485
        %v3914 = vpack.c.b16 %v2490, %v2486
        %v3915 = vpack.c.b16 %v2495, %v2491
        %v3916 = vpack.c.b16 %v2496, %v2492
        %v3917 = vpack.c.b16 %v2497, %v2493
        %v3918 = vpack.c.b16 %v2498, %v2494
        %v3919 = vpack.c.b16 %v2503, %v2499
        %v3920 = vpack.c.b16 %v2504, %v2500
        %v3921 = vpack.c.b16 %v2505, %v2501
        %v3922 = vpack.c.b16 %v2506, %v2502
        %v3923 = vpack.c.b16 %v2511, %v2507
        %v3924 = vpack.c.b16 %v2512, %v2508
        %v3925 = vpack.c.b16 %v2513, %v2509
        %v3926 = vpack.c.b16 %v2514, %v2510
        %v3927 = vpack.c.b16 %v2519, %v2515
        %v3928 = vpack.c.b16 %v2520, %v2516
        %v3929 = vpack.c.b16 %v2521, %v2517
        %v3930 = vpack.c.b16 %v2522, %v2518
        %v3931 = vpack.c.b16 %v2527, %v2523
        %v3932 = vpack.c.b16 %v2528, %v2524
        %v3933 = vpack.c.b16 %v2529, %v2525
        %v3934 = vpack.c.b16 %v2530, %v2526
        %v3935 = vpack.c.b16 %v2535, %v2531
        %v3936 = vpack.c.b16 %v2536, %v2532
        %v3937 = vpack.c.b16 %v2537, %v2533
        %v3938 = vpack.c.b16 %v2538, %v2534
        %v3939 = vpack.c.b16 %v2543, %v2539
        %v3940 = vpack.c.b16 %v2544, %v2540
        %v3941 = vpack.c.b16 %v2545, %v2541
        %v3942 = vpack.c.b16 %v2546, %v2542
        %v3943 = vpack.c.b16 %v2551, %v2547
        %v3944 = vpack.c.b16 %v2552, %v2548
        %v3945 = vpack.c.b16 %v2553, %v2549
        %v3946 = vpack.c.b16 %v2554, %v2550
        %v3947 = vpack.c.b16 %v2559, %v2555
        %v3948 = vpack.c.b16 %v2560, %v2556
        %v3949 = vpack.c.b16 %v2561, %v2557
        %v3950 = vpack.c.b16 %v2562, %v2558
        %v3951 = vpack.c.b16 %v2567, %v2563
        %v3952 = vpack.c.b16 %v2568, %v2564
        %v3953 = vpack.c.b16 %v2569, %v2565
        %v3954 = vpack.c.b16 %v2570, %v2566
        %v3955 = vpack.c.b16 %v2575, %v2571
        %v3956 = vpack.c.b16 %v2576, %v2572
        %v3957 = vpack.c.b16 %v2577, %v2573
        %v3958 = vpack.c.b16 %v2578, %v2574
        %v3959 = vpack.c.b16 %v2583, %v2579
        %v3960 = vpack.c.b16 %v2584, %v2580
        %v3961 = vpack.c.b16 %v2585, %v2581
        %v3962 = vpack.c.b16 %v2586, %v2582
        %v3963 = vpack.c.b16 %v2591, %v2587
        %v3964 = vpack.c.b16 %v2592, %v2588
        %v3965 = vpack.c.b16 %v2593, %v2589
        %v3966 = vpack.c.b16 %v2594, %v2590
        %v3967 = vpack.c.b16 %v2599, %v2595
        %v3968 = vpack.c.b16 %v2600, %v2596
        %v3969 = vpack.c.b16 %v2601, %v2597
        %v3970 = vpack.c.b16 %v2602, %v2598
        %v3971 = vpack.c.b16 %v2607, %v2603
        %v3972 = vpack.c.b16 %v2608, %v2604
        %v3973 = vpack.c.b16 %v2609, %v2605
        %v3974 = vpack.c.b16 %v2610, %v2606
        %v3975 = vpack.c.b16 %v2615, %v2611
        %v3976 = vpack.c.b16 %v2616, %v2612
        %v3977 = vpack.c.b16 %v2617, %v2613
        %v3978 = vpack.c.b16 %v2618, %v2614
        %v3979 = vpack.c.b16 %v2623, %v2619
        %v3980 = vpack.c.b16 %v2624, %v2620
        %v3981 = vpack.c.b16 %v2625, %v2621
        %v3982 = vpack.c.b16 %v2626, %v2622
        %v3983 = vpack.c.b16 %v2631, %v2627
        %v3984 = vpack.c.b16 %v2632, %v2628
        %v3985 = vpack.c.b16 %v2633, %v2629
        %v3986 = vpack.c.b16 %v2634, %v2630
        %v3987 = vpack.c.b16 %v2639, %v2635
        %v3988 = vpack.c.b16 %v2640, %v2636
        %v3989 = vpack.c.b16 %v2641, %v2637
        %v3990 = vpack.c.b16 %v2642, %v2638
        %v3991 = vpack.c.b16 %v2647, %v2643
        %v3992 = vpack.c.b16 %v2648, %v2644
        %v3993 = vpack.c.b16 %v2649, %v2645
        %v3994 = vpack.c.b16 %v2650, %v2646
        %v3995 = vpack.c.b16 %v2655, %v2651
        %v3996 = vpack.c.b16 %v2656, %v2652
        %v3997 = vpack.c.b16 %v2657, %v2653
        %v3998 = vpack.c.b16 %v2658, %v2654
        %v3999 = vpack.c.b16 %v2663, %v2659
        %v4000 = vpack.c.b16 %v2664, %v2660
        %v4001 = vpack.c.b16 %v2665, %v2661
        %v4002 = vpack.c.b16 %v2666, %v2662
        %v4003 = vpack.c.b16 %v2671, %v2667
        %v4004 = vpack.c.b16 %v2672, %v2668
        %v4005 = vpack.c.b16 %v2673, %v2669
        %v4006 = vpack.c.b16 %v2674, %v2670
        %v4007 = vpack.c.b16 %v2679, %v2675
        %v4008 = vpack.c.b16 %v2680, %v2676
        %v4009 = vpack.c.b16 %v2681, %v2677
        %v4010 = vpack.c.b16 %v2682, %v2678
        %v4011 = vpack.c.b16 %v2687, %v2683
        %v4012 = vpack.c.b16 %v2688, %v2684
        %v4013 = vpack.c.b16 %v2689, %v2685
        %v4014 = vpack.c.b16 %v2690, %v2686
        %v4015 = vpack.c.b16 %v2695, %v2691
        %v4016 = vpack.c.b16 %v2696, %v2692
        %v4017 = vpack.c.b16 %v2697, %v2693
        %v4018 = vpack.c.b16 %v2698, %v2694
        %v4019 = vpack.c.b16 %v2703, %v2699
        %v4020 = vpack.c.b16 %v2704, %v2700
        %v4021 = vpack.c.b16 %v2705, %v2701
        %v4022 = vpack.c.b16 %v2706, %v2702
        %v4023 = vpack.c.b16 %v2711, %v2707
        %v4024 = vpack.c.b16 %v2712, %v2708
        %v4025 = vpack.c.b16 %v2713, %v2709
        %v4026 = vpack.c.b16 %v2714, %v2710
        %v4027 = vpack.c.b16 %v2719, %v2715
        %v4028 = vpack.c.b16 %v2720, %v2716
        %v4029 = vpack.c.b16 %v2721, %v2717
        %v4030 = vpack.c.b16 %v2722, %v2718
        %v4031 = vpack.c.b16 %v2727, %v2723
        %v4032 = vpack.c.b16 %v2728, %v2724
        %v4033 = vpack.c.b16 %v2729, %v2725
        %v4034 = vpack.c.b16 %v2730, %v2726
        %v4035 = vpack.c.b16 %v2735, %v2731
        %v4036 = vpack.c.b16 %v2736, %v2732
        %v4037 = vpack.c.b16 %v2737, %v2733
        %v4038 = vpack.c.b16 %v2738, %v2734
        %v4039 = vpack.c.b16 %v2743, %v2739
        %v4040 = vpack.c.b16 %v2744, %v2740
        %v4041 = vpack.c.b16 %v2745, %v2741
        %v4042 = vpack.c.b16 %v2746, %v2742
        %v4043 = vpack.c.b16 %v2751, %v2747
        %v4044 = vpack.c.b16 %v2752, %v2748
        %v4045 = vpack.c.b16 %v2753, %v2749
        %v4046 = vpack.c.b16 %v2754, %v2750
        %v4047 = vpack.c.b16 %v2759, %v2755
        %v4048 = vpack.c.b16 %v2760, %v2756
        %v4049 = vpack.c.b16 %v2761, %v2757
        %v4050 = vpack.c.b16 %v2762, %v2758
        %v4051 = vpack.c.b16 %v2767, %v2763
        %v4052 = vpack.c.b16 %v2768, %v2764
        %v4053 = vpack.c.b16 %v2769, %v2765
        %v4054 = vpack.c.b16 %v2770, %v2766
        %v4055 = vpack.c.b16 %v2775, %v2771
        %v4056 = vpack.c.b16 %v2776, %v2772
        %v4057 = vpack.c.b16 %v2777, %v2773
        %v4058 = vpack.c.b16 %v2778, %v2774
        %v4059 = vpack.c.b16 %v2783, %v2779
        %v4060 = vpack.c.b16 %v2784, %v2780
        %v4061 = vpack.c.b16 %v2785, %v2781
        %v4062 = vpack.c.b16 %v2786, %v2782
        %v4063 = vpack.c.b16 %v2791, %v2787
        %v4064 = vpack.c.b16 %v2792, %v2788
        %v4065 = vpack.c.b16 %v2793, %v2789
        %v4066 = vpack.c.b16 %v2794, %v2790
        %v4067 = vpack.c.b16 %v2799, %v2795
        %v4068 = vpack.c.b16 %v2800, %v2796
        %v4069 = vpack.c.b16 %v2801, %v2797
        %v4070 = vpack.c.b16 %v2802, %v2798
        %v4071 = vpack.c.b16 %v2807, %v2803
        %v4072 = vpack.c.b16 %v2808, %v2804
        %v4073 = vpack.c.b16 %v2809, %v2805
        %v4074 = vpack.c.b16 %v2810, %v2806
        %v4075 = vpack.c.b16 %v2815, %v2811
        %v4076 = vpack.c.b16 %v2816, %v2812
        %v4077 = vpack.c.b16 %v2817, %v2813
        %v4078 = vpack.c.b16 %v2818, %v2814
        %v4079 = vpack.c.b16 %v2823, %v2819
        %v4080 = vpack.c.b16 %v2824, %v2820
        %v4081 = vpack.c.b16 %v2825, %v2821
        %v4082 = vpack.c.b16 %v2826, %v2822
        %v4083 = vpack.c.b16 %v2831, %v2827
        %v4084 = vpack.c.b16 %v2832, %v2828
        %v4085 = vpack.c.b16 %v2833, %v2829
        %v4086 = vpack.c.b16 %v2834, %v2830
        %v4087 = vpack.c.b16 %v2839, %v2835
        %v4088 = vpack.c.b16 %v2840, %v2836
        %v4089 = vpack.c.b16 %v2841, %v2837
        %v4090 = vpack.c.b16 %v2842, %v2838
        %v4091 = vpack.c.b16 %v2847, %v2843
        %v4092 = vpack.c.b16 %v2848, %v2844
        %v4093 = vpack.c.b16 %v2849, %v2845
        %v4094 = vpack.c.b16 %v2850, %v2846
        %v4095 = vpack.c.b16 %v2855, %v2851
        %v4096 = vpack.c.b16 %v2856, %v2852
        %v4097 = vpack.c.b16 %v2857, %v2853
        %v4098 = vpack.c.b16 %v2858, %v2854
        %v4099 = vpack.c.b16 %v2863, %v2859
        %v4100 = vpack.c.b16 %v2864, %v2860
        %v4101 = vpack.c.b16 %v2865, %v2861
        %v4102 = vpack.c.b16 %v2866, %v2862
        %v4103 = vpack.c.b16 %v2871, %v2867
        %v4104 = vpack.c.b16 %v2872, %v2868
        %v4105 = vpack.c.b16 %v2873, %v2869
        %v4106 = vpack.c.b16 %v2874, %v2870
        %v4107 = vpack.c.b16 %v2879, %v2875
        %v4108 = vpack.c.b16 %v2880, %v2876
        %v4109 = vpack.c.b16 %v2881, %v2877
        %v4110 = vpack.c.b16 %v2882, %v2878
        %v4111 = vpack.c.b16 %v2887, %v2883
        %v4112 = vpack.c.b16 %v2888, %v2884
        %v4113 = vpack.c.b16 %v2889, %v2885
        %v4114 = vpack.c.b16 %v2890, %v2886
        %v4115 = vpack.c.b16 %v2895, %v2891
        %v4116 = vpack.c.b16 %v2896, %v2892
        %v4117 = vpack.c.b16 %v2897, %v2893
        %v4118 = vpack.c.b16 %v2898, %v2894
        %v4119 = vpack.c.b16 %v2903, %v2899
        %v4120 = vpack.c.b16 %v2904, %v2900
        %v4121 = vpack.c.b16 %v2905, %v2901
        %v4122 = vpack.c.b16 %v2906, %v2902
        %v4123 = vpack.c.b16 %v2911, %v2907
        %v4124 = vpack.c.b16 %v2912, %v2908
        %v4125 = vpack.c.b16 %v2913, %v2909
        %v4126 = vpack.c.b16 %v2914, %v2910
        %v4127 = vpack.c.b16 %v2919, %v2915
        %v4128 = vpack.c.b16 %v2920, %v2916
        %v4129 = vpack.c.b16 %v2921, %v2917
        %v4130 = vpack.c.b16 %v2922, %v2918
        %v4131 = vpack.c.b16 %v2927, %v2923
        %v4132 = vpack.c.b16 %v2928, %v2924
        %v4133 = vpack.c.b16 %v2929, %v2925
        %v4134 = vpack.c.b16 %v2930, %v2926
        %v4135 = vpack.c.b16 %v2935, %v2931
        %v4136 = vpack.c.b16 %v2936, %v2932
        %v4137 = vpack.c.b16 %v2937, %v2933
        %v4138 = vpack.c.b16 %v2938, %v2934
        %v4139 = vpack.c.b16 %v2943, %v2939
        %v4140 = vpack.c.b16 %v2944, %v2940
        %v4141 = vpack.c.b16 %v2945, %v2941
        %v4142 = vpack.c.b16 %v2946, %v2942
        %v4143 = vpack.c.b16 %v2951, %v2947
        %v4144 = vpack.c.b16 %v2952, %v2948
        %v4145 = vpack.c.b16 %v2953, %v2949
        %v4146 = vpack.c.b16 %v2954, %v2950
        %v4147 = vpack.c.b16 %v2959, %v2955
        %v4148 = vpack.c.b16 %v2960, %v2956
        %v4149 = vpack.c.b16 %v2961, %v2957
        %v4150 = vpack.c.b16 %v2962, %v2958
        %v4151 = vpack.c.b16 %v2967, %v2963
        %v4152 = vpack.c.b16 %v2968, %v2964
        %v4153 = vpack.c.b16 %v2969, %v2965
        %v4154 = vpack.c.b16 %v2970, %v2966
        %v4155 = vpack.c.b16 %v2975, %v2971
        %v4156 = vpack.c.b16 %v2976, %v2972
        %v4157 = vpack.c.b16 %v2977, %v2973
        %v4158 = vpack.c.b16 %v2978, %v2974
        %v4159 = vpack.c.b16 %v2983, %v2979
        %v4160 = vpack.c.b16 %v2984, %v2980
        %v4161 = vpack.c.b16 %v2985, %v2981
        %v4162 = vpack.c.b16 %v2986, %v2982
        %v4163 = vpack.c.b16 %v2991, %v2987
        %v4164 = vpack.c.b16 %v2992, %v2988
        %v4165 = vpack.c.b16 %v2993, %v2989
        %v4166 = vpack.c.b16 %v2994, %v2990
        %v4167 = vpack.c.b16 %v2999, %v2995
        %v4168 = vpack.c.b16 %v3000, %v2996
        %v4169 = vpack.c.b16 %v3001, %v2997
        %v4170 = vpack.c.b16 %v3002, %v2998
        %v4171 = vpack.c.b16 %v3007, %v3003
        %v4172 = vpack.c.b16 %v3008, %v3004
        %v4173 = vpack.c.b16 %v3009, %v3005
        %v4174 = vpack.c.b16 %v3010, %v3006
        %v4175 = vpack.c.b16 %v3015, %v3011
        %v4176 = vpack.c.b16 %v3016, %v3012
        %v4177 = vpack.c.b16 %v3017, %v3013
        %v4178 = vpack.c.b16 %v3018, %v3014
        %v4179 = vpack.c.b16 %v3023, %v3019
        %v4180 = vpack.c.b16 %v3024, %v3020
        %v4181 = vpack.c.b16 %v3025, %v3021
        %v4182 = vpack.c.b16 %v3026, %v3022
        %v4183 = vpack.c.b16 %v3031, %v3027
        %v4184 = vpack.c.b16 %v3032, %v3028
        %v4185 = vpack.c.b16 %v3033, %v3029
        %v4186 = vpack.c.b16 %v3034, %v3030
        %v4187 = vpack.c.b16 %v3039, %v3035
        %v4188 = vpack.c.b16 %v3040, %v3036
        %v4189 = vpack.c.b16 %v3041, %v3037
        %v4190 = vpack.c.b16 %v3042, %v3038
        %v4191 = vpack.c.b16 %v3047, %v3043
        %v4192 = vpack.c.b16 %v3048, %v3044
        %v4193 = vpack.c.b16 %v3049, %v3045
        %v4194 = vpack.c.b16 %v3050, %v3046
        %v4195 = vpack.c.b16 %v3055, %v3051
        %v4196 = vpack.c.b16 %v3056, %v3052
        %v4197 = vpack.c.b16 %v3057, %v3053
        %v4198 = vpack.c.b16 %v3058, %v3054
        %v4199 = vpack.c.b16 %v3063, %v3059
        %v4200 = vpack.c.b16 %v3064, %v3060
        %v4201 = vpack.c.b16 %v3065, %v3061
        %v4202 = vpack.c.b16 %v3066, %v3062
        %v4203 = vpack.c.b16 %v3071, %v3067
        %v4204 = vpack.c.b16 %v3072, %v3068
        %v4205 = vpack.c.b16 %v3073, %v3069
        %v4206 = vpack.c.b16 %v3074, %v3070
        %v4207 = vpack.c.b16 %v3079, %v3075
        %v4208 = vpack.c.b16 %v3080, %v3076
        %v4209 = vpack.c.b16 %v3081, %v3077
        %v4210 = vpack.c.b16 %v3082, %v3078
        %v4211 = vpack.c.b16 %v3087, %v3083
        %v4212 = vpack.c.b16 %v3088, %v3084
        %v4213 = vpack.c.b16 %v3089, %v3085
        %v4214 = vpack.c.b16 %v3090, %v3086
        %v4215 = vpack.c.b16 %v3095, %v3091
        %v4216 = vpack.c.b16 %v3096, %v3092
        %v4217 = vpack.c.b16 %v3097, %v3093
        %v4218 = vpack.c.b16 %v3098, %v3094
        %v4219 = vpack.c.b16 %v3103, %v3099
        %v4220 = vpack.c.b16 %v3104, %v3100
        %v4221 = vpack.c.b16 %v3105, %v3101
        %v4222 = vpack.c.b16 %v3106, %v3102
        %v4223 = vpack.c.b16 %v3111, %v3107
        %v4224 = vpack.c.b16 %v3112, %v3108
        %v4225 = vpack.c.b16 %v3113, %v3109
        %v4226 = vpack.c.b16 %v3114, %v3110
        %v4227 = vpack.c.b16 %v3119, %v3115
        %v4228 = vpack.c.b16 %v3120, %v3116
        %v4229 = vpack.c.b16 %v3121, %v3117
        %v4230 = vpack.c.b16 %v3122, %v3118
        %v4231 = vpack.c.b16 %v3127, %v3123
        %v4232 = vpack.c.b16 %v3128, %v3124
        %v4233 = vpack.c.b16 %v3129, %v3125
        %v4234 = vpack.c.b16 %v3130, %v3126
        %v4235 = vpack.c.b16 %v3135, %v3131
        %v4236 = vpack.c.b16 %v3136, %v3132
        %v4237 = vpack.c.b16 %v3137, %v3133
        %v4238 = vpack.c.b16 %v3138, %v3134
        %v4239 = vpack.c.b16 %v3143, %v3139
        %v4240 = vpack.c.b16 %v3144, %v3140
        %v4241 = vpack.c.b16 %v3145, %v3141
        %v4242 = vpack.c.b16 %v3146, %v3142
        %v4243 = vpack.c.b16 %v3151, %v3147
        %v4244 = vpack.c.b16 %v3152, %v3148
        %v4245 = vpack.c.b16 %v3153, %v3149
        %v4246 = vpack.c.b16 %v3154, %v3150
        %v4247 = vpack.c.b16 %v3159, %v3155
        %v4248 = vpack.c.b16 %v3160, %v3156
        %v4249 = vpack.c.b16 %v3161, %v3157
        %v4250 = vpack.c.b16 %v3162, %v3158
        %v4251 = vpack.c.b16 %v3167, %v3163
        %v4252 = vpack.c.b16 %v3168, %v3164
        %v4253 = vpack.c.b16 %v3169, %v3165
        %v4254 = vpack.c.b16 %v3170, %v3166
        %v4255 = vpack.c.b16 %v3175, %v3171
        %v4256 = vpack.c.b16 %v3176, %v3172
        %v4257 = vpack.c.b16 %v3177, %v3173
        %v4258 = vpack.c.b16 %v3178, %v3174
        %v4259 = vpack.c.b16 %v3183, %v3179
        %v4260 = vpack.c.b16 %v3184, %v3180
        %v4261 = vpack.c.b16 %v3185, %v3181
        %v4262 = vpack.c.b16 %v3186, %v3182
        %v4263 = vpack.c.b16 %v3191, %v3187
        %v4264 = vpack.c.b16 %v3192, %v3188
        %v4265 = vpack.c.b16 %v3193, %v3189
        %v4266 = vpack.c.b16 %v3194, %v3190
        %v4267 = vpack.c.b16 %v3199, %v3195
        %v4268 = vpack.c.b16 %v3200, %v3196
        %v4269 = vpack.c.b16 %v3201, %v3197
        %v4270 = vpack.c.b16 %v3202, %v3198
        %v4271 = vpack.c.b16 %v3207, %v3203
        %v4272 = vpack.c.b16 %v3208, %v3204
        %v4273 = vpack.c.b16 %v3209, %v3205
        %v4274 = vpack.c.b16 %v3210, %v3206
        %v4275 = vpack.c.b16 %v3215, %v3211
        %v4276 = vpack.c.b16 %v3216, %v3212
        %v4277 = vpack.c.b16 %v3217, %v3213
        %v4278 = vpack.c.b16 %v3218, %v3214
        %v4279 = vpack.c.b16 %v3223, %v3219
        %v4280 = vpack.c.b16 %v3224, %v3220
        %v4281 = vpack.c.b16 %v3225, %v3221
        %v4282 = vpack.c.b16 %v3226, %v3222
        %v4283 = vpack.c.b16 %v3231, %v3227
        %v4284 = vpack.c.b16 %v3232, %v3228
        %v4285 = vpack.c.b16 %v3233, %v3229
        %v4286 = vpack.c.b16 %v3234, %v3230
        %v4287 = vpack.c.b16 %v3239, %v3235
        %v4288 = vpack.c.b16 %v3240, %v3236
        %v4289 = vpack.c.b16 %v3241, %v3237
        %v4290 = vpack.c.b16 %v3242, %v3238
        %v4291 = vpack.c.b16 %v3247, %v3243
        %v4292 = vpack.c.b16 %v3248, %v3244
        %v4293 = vpack.c.b16 %v3249, %v3245
        %v4294 = vpack.c.b16 %v3250, %v3246
        %v4295 = vpack.c.b16 %v3255, %v3251
        %v4296 = vpack.c.b16 %v3256, %v3252
        %v4297 = vpack.c.b16 %v3257, %v3253
        %v4298 = vpack.c.b16 %v3258, %v3254
        %v4299 = vpack.c.b16 %v3263, %v3259
        %v4300 = vpack.c.b16 %v3264, %v3260
        %v4301 = vpack.c.b16 %v3265, %v3261
        %v4302 = vpack.c.b16 %v3266, %v3262
        %v4303 = vpack.c.b16 %v3271, %v3267
        %v4304 = vpack.c.b16 %v3272, %v3268
        %v4305 = vpack.c.b16 %v3273, %v3269
        %v4306 = vpack.c.b16 %v3274, %v3270
        %v4307 = vpack.c.b16 %v3279, %v3275
        %v4308 = vpack.c.b16 %v3280, %v3276
        %v4309 = vpack.c.b16 %v3281, %v3277
        %v4310 = vpack.c.b16 %v3282, %v3278
        %v4311 = vpack.c.b16 %v3287, %v3283
        %v4312 = vpack.c.b16 %v3288, %v3284
        %v4313 = vpack.c.b16 %v3289, %v3285
        %v4314 = vpack.c.b16 %v3290, %v3286
        %v4315 = vpack.c.b16 %v3295, %v3291
        %v4316 = vpack.c.b16 %v3296, %v3292
        %v4317 = vpack.c.b16 %v3297, %v3293
        %v4318 = vpack.c.b16 %v3298, %v3294
        %v4319 = vpack.c.b16 %v3303, %v3299
        %v4320 = vpack.c.b16 %v3304, %v3300
        %v4321 = vpack.c.b16 %v3305, %v3301
        %v4322 = vpack.c.b16 %v3306, %v3302
        %v4323 = vpack.c.b16 %v3311, %v3307
        %v4324 = vpack.c.b16 %v3312, %v3308
        %v4325 = vpack.c.b16 %v3313, %v3309
        %v4326 = vpack.c.b16 %v3314, %v3310
        %v4327 = vpack.c.b16 %v3319, %v3315
        %v4328 = vpack.c.b16 %v3320, %v3316
        %v4329 = vpack.c.b16 %v3321, %v3317
        %v4330 = vpack.c.b16 %v3322, %v3318
        %v4331 = vpack.c.b16 %v3327, %v3323
        %v4332 = vpack.c.b16 %v3328, %v3324
        %v4333 = vpack.c.b16 %v3329, %v3325
        %v4334 = vpack.c.b16 %v3330, %v3326
        %v4335 = vpack.c.b16 %v3335, %v3331
        %v4336 = vpack.c.b16 %v3336, %v3332
        %v4337 = vpack.c.b16 %v3337, %v3333
        %v4338 = vpack.c.b16 %v3338, %v3334
        %v4339 = vpack.c.b16 %v3343, %v3339
        %v4340 = vpack.c.b16 %v3344, %v3340
        %v4341 = vpack.c.b16 %v3345, %v3341
        %v4342 = vpack.c.b16 %v3346, %v3342
        %v4343 = vpack.c.b16 %v3351, %v3347
        %v4344 = vpack.c.b16 %v3352, %v3348
        %v4345 = vpack.c.b16 %v3353, %v3349
        %v4346 = vpack.c.b16 %v3354, %v3350
        %v4347 = vpack.c.b16 %v3359, %v3355
        %v4348 = vpack.c.b16 %v3360, %v3356
        %v4349 = vpack.c.b16 %v3361, %v3357
        %v4350 = vpack.c.b16 %v3362, %v3358
        %v4351 = vpack.c.b16 %v3367, %v3363
        %v4352 = vpack.c.b16 %v3368, %v3364
        %v4353 = vpack.c.b16 %v3369, %v3365
        %v4354 = vpack.c.b16 %v3370, %v3366
        %v4355 = vpack.c.b16 %v3375, %v3371
        %v4356 = vpack.c.b16 %v3376, %v3372
        %v4357 = vpack.c.b16 %v3377, %v3373
        %v4358 = vpack.c.b16 %v3378, %v3374
        %v4359 = vpack.c.b16 %v3383, %v3379
        %v4360 = vpack.c.b16 %v3384, %v3380
        %v4361 = vpack.c.b16 %v3385, %v3381
        %v4362 = vpack.c.b16 %v3386, %v3382
        %v4363 = vpack.c.b16 %v3391, %v3387
        %v4364 = vpack.c.b16 %v3392, %v3388
        %v4365 = vpack.c.b16 %v3393, %v3389
        %v4366 = vpack.c.b16 %v3394, %v3390
        %v4367 = vpack.c.b16 %v3399, %v3395
        %v4368 = vpack.c.b16 %v3400, %v3396
        %v4369 = vpack.c.b16 %v3401, %v3397
        %v4370 = vpack.c.b16 %v3402, %v3398
        %v4371 = vpack.c.b16 %v3407, %v3403
        %v4372 = vpack.c.b16 %v3408, %v3404
        %v4373 = vpack.c.b16 %v3409, %v3405
        %v4374 = vpack.c.b16 %v3410, %v3406
        %v4375 = vpack.c.b16 %v3415, %v3411
        %v4376 = vpack.c.b16 %v3416, %v3412
        %v4377 = vpack.c.b16 %v3417, %v3413
        %v4378 = vpack.c.b16 %v3418, %v3414
        %v4379 = vpack.c.b16 %v3423, %v3419
        %v4380 = vpack.c.b16 %v3424, %v3420
        %v4381 = vpack.c.b16 %v3425, %v3421
        %v4382 = vpack.c.b16 %v3426, %v3422
        %v4383 = vpack.c.b16 %v3431, %v3427
        %v4384 = vpack.c.b16 %v3432, %v3428
        %v4385 = vpack.c.b16 %v3433, %v3429
        %v4386 = vpack.c.b16 %v3434, %v3430
        %v4387 = vpack.c.b16 %v3439, %v3435
        %v4388 = vpack.c.b16 %v3440, %v3436
        %v4389 = vpack.c.b16 %v3441, %v3437
        %v4390 = vpack.c.b16 %v3442, %v3438
        %v4391 = vpack.c.b16 %v3447, %v3443
        %v4392 = vpack.c.b16 %v3448, %v3444
        %v4393 = vpack.c.b16 %v3449, %v3445
        %v4394 = vpack.c.b16 %v3450, %v3446
        %v4395 = vpack.c.b16 %v3455, %v3451
        %v4396 = vpack.c.b16 %v3456, %v3452
        %v4397 = vpack.c.b16 %v3457, %v3453
        %v4398 = vpack.c.b16 %v3458, %v3454
        %v4399 = vpack.c.b16 %v3463, %v3459
        %v4400 = vpack.c.b16 %v3464, %v3460
        %v4401 = vpack.c.b16 %v3465, %v3461
        %v4402 = vpack.c.b16 %v3466, %v3462
        %v4403 = vpack.c.b16 %v3471, %v3467
        %v4404 = vpack.c.b16 %v3472, %v3468
        %v4405 = vpack.c.b16 %v3473, %v3469
        %v4406 = vpack.c.b16 %v3474, %v3470
        %v4407 = vpack.c.b16 %v3479, %v3475
        %v4408 = vpack.c.b16 %v3480, %v3476
        %v4409 = vpack.c.b16 %v3481, %v3477
        %v4410 = vpack.c.b16 %v3482, %v3478
        %v4411 = vpack.c.b16 %v3487, %v3483
        %v4412 = vpack.c.b16 %v3488, %v3484
        %v4413 = vpack.c.b16 %v3489, %v3485
        %v4414 = vpack.c.b16 %v3490, %v3486
        %v4415 = vpack.c.b16 %v3495, %v3491
        %v4416 = vpack.c.b16 %v3496, %v3492
        %v4417 = vpack.c.b16 %v3497, %v3493
        %v4418 = vpack.c.b16 %v3498, %v3494
        %v4419 = vpack.c.b16 %v3503, %v3499
        %v4420 = vpack.c.b16 %v3504, %v3500
        %v4421 = vpack.c.b16 %v3505, %v3501
        %v4422 = vpack.c.b16 %v3506, %v3502
        %v4423 = vpack.c.b16 %v3511, %v3507
        %v4424 = vpack.c.b16 %v3512, %v3508
        %v4425 = vpack.c.b16 %v3513, %v3509
        %v4426 = vpack.c.b16 %v3514, %v3510
        %v4427 = vpack.c.b16 %v3519, %v3515
        %v4428 = vpack.c.b16 %v3520, %v3516
        %v4429 = vpack.c.b16 %v3521, %v3517
        %v4430 = vpack.c.b16 %v3522, %v3518
        %v4431 = vpack.c.b16 %v3527, %v3523
        %v4432 = vpack.c.b16 %v3528, %v3524
        %v4433 = vpack.c.b16 %v3529, %v3525
        %v4434 = vpack.c.b16 %v3530, %v3526
        %v4435 = vpack.c.b16 %v3535, %v3531
        %v4436 = vpack.c.b16 %v3536, %v3532
        %v4437 = vpack.c.b16 %v3537, %v3533
        %v4438 = vpack.c.b16 %v3538, %v3534
        %v4439 = vpack.c.b16 %v3543, %v3539
        %v4440 = vpack.c.b16 %v3544, %v3540
        %v4441 = vpack.c.b16 %v3545, %v3541
        %v4442 = vpack.c.b16 %v3546, %v3542
        %v4443 = vpack.c.b16 %v3551, %v3547
        %v4444 = vpack.c.b16 %v3552, %v3548
        %v4445 = vpack.c.b16 %v3553, %v3549
        %v4446 = vpack.c.b16 %v3554, %v3550
        %v4447 = vpack.c.b16 %v3559, %v3555
        %v4448 = vpack.c.b16 %v3560, %v3556
        %v4449 = vpack.c.b16 %v3561, %v3557
        %v4450 = vpack.c.b16 %v3562, %v3558
        %v4451 = vpack.c.b16 %v3567, %v3563
        %v4452 = vpack.c.b16 %v3568, %v3564
        %v4453 = vpack.c.b16 %v3569, %v3565
        %v4454 = vpack.c.b16 %v3570, %v3566
        %v4455 = vpack.c.b16 %v3575, %v3571
        %v4456 = vpack.c.b16 %v3576, %v3572
        %v4457 = vpack.c.b16 %v3577, %v3573
        %v4458 = vpack.c.b16 %v3578, %v3574
        %v4459 = vpack.c.b16 %v3583, %v3579
        %v4460 = vpack.c.b16 %v3584, %v3580
        %v4461 = vpack.c.b16 %v3585, %v3581
        %v4462 = vpack.c.b16 %v3586, %v3582
        %v4463 = vpack.c.b16 %v3591, %v3587
        %v4464 = vpack.c.b16 %v3592, %v3588
        %v4465 = vpack.c.b16 %v3593, %v3589
        %v4466 = vpack.c.b16 %v3594, %v3590
        %v4467 = vpack.c.b16 %v3599, %v3595
        %v4468 = vpack.c.b16 %v3600, %v3596
        %v4469 = vpack.c.b16 %v3601, %v3597
        %v4470 = vpack.c.b16 %v3602, %v3598
        %v4471 = vpack.c.b16 %v3607, %v3603
        %v4472 = vpack.c.b16 %v3608, %v3604
        %v4473 = vpack.c.b16 %v3609, %v3605
        %v4474 = vpack.c.b16 %v3610, %v3606
        %v4475 = vpack.c.b16 %v3615, %v3611
        %v4476 = vpack.c.b16 %v3616, %v3612
        %v4477 = vpack.c.b16 %v3617, %v3613
        %v4478 = vpack.c.b16 %v3618, %v3614
        %v4479 = vpack.c.b16 %v3623, %v3619
        %v4480 = vpack.c.b16 %v3624, %v3620
        %v4481 = vpack.c.b16 %v3625, %v3621
        %v4482 = vpack.c.b16 %v3626, %v3622
        %v4483 = vpack.c.b16 %v3631, %v3627
        %v4484 = vpack.c.b16 %v3632, %v3628
        %v4485 = vpack.c.b16 %v3633, %v3629
        %v4486 = vpack.c.b16 %v3634, %v3630
        %v4487 = vpack.c.b16 %v3639, %v3635
        %v4488 = vpack.c.b16 %v3640, %v3636
        %v4489 = vpack.c.b16 %v3641, %v3637
        %v4490 = vpack.c.b16 %v3642, %v3638
        %v4491 = vpack.c.b16 %v3647, %v3643
        %v4492 = vpack.c.b16 %v3648, %v3644
        %v4493 = vpack.c.b16 %v3649, %v3645
        %v4494 = vpack.c.b16 %v3650, %v3646
        %v4495 = vpack.c.b16 %v3655, %v3651
        %v4496 = vpack.c.b16 %v3656, %v3652
        %v4497 = vpack.c.b16 %v3657, %v3653
        %v4498 = vpack.c.b16 %v3658, %v3654
        %v4499 = vpack.c.b16 %v3663, %v3659
        %v4500 = vpack.c.b16 %v3664, %v3660
        %v4501 = vpack.c.b16 %v3665, %v3661
        %v4502 = vpack.c.b16 %v3666, %v3662
        %v4503 = vpack.c.b16 %v3671, %v3667
        %v4504 = vpack.c.b16 %v3672, %v3668
        %v4505 = vpack.c.b16 %v3673, %v3669
        %v4506 = vpack.c.b16 %v3674, %v3670
        %v4507 = vpack.c.b16 %v3679, %v3675
        %v4508 = vpack.c.b16 %v3680, %v3676
        %v4509 = vpack.c.b16 %v3681, %v3677
        %v4510 = vpack.c.b16 %v3682, %v3678
        %v4511 = vpack.c.b16 %v3687, %v3683
        %v4512 = vpack.c.b16 %v3688, %v3684
        %v4513 = vpack.c.b16 %v3689, %v3685
        %v4514 = vpack.c.b16 %v3690, %v3686
        %v4515 = vpack.c.b16 %v3695, %v3691
        %v4516 = vpack.c.b16 %v3696, %v3692
        %v4517 = vpack.c.b16 %v3697, %v3693
        %v4518 = vpack.c.b16 %v3698, %v3694
        %v4519 = vpack.c.b16 %v3703, %v3699
        %v4520 = vpack.c.b16 %v3704, %v3700
        %v4521 = vpack.c.b16 %v3705, %v3701
        %v4522 = vpack.c.b16 %v3706, %v3702
        %v4523 = vpack.c.b16 %v3711, %v3707
        %v4524 = vpack.c.b16 %v3712, %v3708
        %v4525 = vpack.c.b16 %v3713, %v3709
        %v4526 = vpack.c.b16 %v3714, %v3710
        %v4527 = vpack.c.b16 %v3719, %v3715
        %v4528 = vpack.c.b16 %v3720, %v3716
        %v4529 = vpack.c.b16 %v3721, %v3717
        %v4530 = vpack.c.b16 %v3722, %v3718
        %v4531 = vpack.c.b16 %v3727, %v3723
        %v4532 = vpack.c.b16 %v3728, %v3724
        %v4533 = vpack.c.b16 %v3729, %v3725
        %v4534 = vpack.c.b16 %v3730, %v3726
        %v4535 = vpack.c.b16 %v3735, %v3731
        %v4536 = vpack.c.b16 %v3736, %v3732
        %v4537 = vpack.c.b16 %v3737, %v3733
        %v4538 = vpack.c.b16 %v3738, %v3734
        %v4539 = vpack.c.b16 %v3743, %v3739
        %v4540 = vpack.c.b16 %v3744, %v3740
        %v4541 = vpack.c.b16 %v3745, %v3741
        %v4542 = vpack.c.b16 %v3746, %v3742
        %v4543 = vpack.c.b16 %v3751, %v3747
        %v4544 = vpack.c.b16 %v3752, %v3748
        %v4545 = vpack.c.b16 %v3753, %v3749
        %v4546 = vpack.c.b16 %v3754, %v3750
        %v4547 = vpack.c.b16 %v3759, %v3755
        %v4548 = vpack.c.b16 %v3760, %v3756
        %v4549 = vpack.c.b16 %v3761, %v3757
        %v4550 = vpack.c.b16 %v3762, %v3758
        %v4551 = vpack.c.b16 %v3767, %v3763
        %v4552 = vpack.c.b16 %v3768, %v3764
        %v4553 = vpack.c.b16 %v3769, %v3765
        %v4554 = vpack.c.b16 %v3770, %v3766
        %v4555 = vpack.c.b16 %v3775, %v3771
        %v4556 = vpack.c.b16 %v3776, %v3772
        %v4557 = vpack.c.b16 %v3777, %v3773
        %v4558 = vpack.c.b16 %v3778, %v3774
        %v4559 = vpack.c.b16 %v3783, %v3779
        %v4560 = vpack.c.b16 %v3784, %v3780
        %v4561 = vpack.c.b16 %v3785, %v3781
        %v4562 = vpack.c.b16 %v3786, %v3782
        %v4563 = vpack.c.b16 %v3791, %v3787
        %v4564 = vpack.c.b16 %v3792, %v3788
        %v4565 = vpack.c.b16 %v3793, %v3789
        %v4566 = vpack.c.b16 %v3794, %v3790
        %v4567 = vpack.c.b16 %v3799, %v3795
        %v4568 = vpack.c.b16 %v3800, %v3796
        %v4569 = vpack.c.b16 %v3801, %v3797
        %v4570 = vpack.c.b16 %v3802, %v3798
        %5339 = vmatpush.bf16.msra.mxu0 %v3831
        %5340 = vmatpush.bf16.msra.mxu0 %v3827
        %5341 = vmatpush.bf16.msra.mxu0 %v3823
        %5342 = vmatpush.bf16.msra.mxu0 %v3819
        %5343 = vmatpush.bf16.msra.mxu0 %v3815
        %5344 = vmatpush.bf16.msra.mxu0 %v3811
        %5345 = vmatpush.bf16.msra.mxu0 %v3807
        %5346 = vmatpush.bf16.msra.mxu0 %v3803
        %5347 = vmatmul.bf16.gmra.mxu0 %v1451
        %v5348 = vpop.f32.mrf.mxu0
        %v5349 = vadd.f32 %v1371, %v5348
        %v5350 = vpop.f32.mrf.mxu0
        %v5351 = vadd.f32 %v1371, %v5350
        %5352 = vdwg.mxu0
        %5353 = vmatpush.bf16.msra.mxu0 %v3863
        %5354 = vmatpush.bf16.msra.mxu0 %v3859
        %5355 = vmatpush.bf16.msra.mxu0 %v3855
        %5356 = vmatpush.bf16.msra.mxu0 %v3851
        %5357 = vmatpush.bf16.msra.mxu0 %v3847
        %5358 = vmatpush.bf16.msra.mxu0 %v3843
        %5359 = vmatpush.bf16.msra.mxu0 %v3839
        %5360 = vmatpush.bf16.msra.mxu0 %v3835
        %5361 = vmatmul.bf16.gmra.mxu0 %v1452
        %v5362 = vpop.f32.mrf.mxu0
        %v5363 = vadd.f32 %v5349, %v5362
        %v5364 = vpop.f32.mrf.mxu0
        %v5365 = vadd.f32 %v5351, %v5364
        %5366 = vdwg.mxu0
        %5367 = vmatpush.bf16.msra.mxu0 %v3895
        %5368 = vmatpush.bf16.msra.mxu0 %v3891
        %5369 = vmatpush.bf16.msra.mxu0 %v3887
        %5370 = vmatpush.bf16.msra.mxu0 %v3883
        %5371 = vmatpush.bf16.msra.mxu0 %v3879
        %5372 = vmatpush.bf16.msra.mxu0 %v3875
        %5373 = vmatpush.bf16.msra.mxu0 %v3871
        %5374 = vmatpush.bf16.msra.mxu0 %v3867
        %5375 = vmatmul.bf16.gmra.mxu0 %v1453
        %v5376 = vpop.f32.mrf.mxu0
        %v5377 = vadd.f32 %v5363, %v5376
        %v5378 = vpop.f32.mrf.mxu0
        %v5379 = vadd.f32 %v5365, %v5378
        %5380 = vdwg.mxu0
        %5381 = vmatpush.bf16.msra.mxu0 %v3927
        %5382 = vmatpush.bf16.msra.mxu0 %v3923
        %5383 = vmatpush.bf16.msra.mxu0 %v3919
        %5384 = vmatpush.bf16.msra.mxu0 %v3915
        %5385 = vmatpush.bf16.msra.mxu0 %v3911
        %5386 = vmatpush.bf16.msra.mxu0 %v3907
        %5387 = vmatpush.bf16.msra.mxu0 %v3903
        %5388 = vmatpush.bf16.msra.mxu0 %v3899
        %5389 = vmatmul.bf16.gmra.mxu0 %v1454
        %v5390 = vpop.f32.mrf.mxu0
        %v5391 = vadd.f32 %v5377, %v5390
        %v5392 = vpop.f32.mrf.mxu0
        %v5393 = vadd.f32 %v5379, %v5392
        %5394 = vdwg.mxu0
        %5395 = vmatpush.bf16.msra.mxu0 %v3959
        %5396 = vmatpush.bf16.msra.mxu0 %v3955
        %5397 = vmatpush.bf16.msra.mxu0 %v3951
        %5398 = vmatpush.bf16.msra.mxu0 %v3947
        %5399 = vmatpush.bf16.msra.mxu0 %v3943
        %5400 = vmatpush.bf16.msra.mxu0 %v3939
        %5401 = vmatpush.bf16.msra.mxu0 %v3935
        %5402 = vmatpush.bf16.msra.mxu0 %v3931
        %5403 = vmatmul.bf16.gmra.mxu0 %v1455
        %v5404 = vpop.f32.mrf.mxu0
        %v5405 = vadd.f32 %v5391, %v5404
        %v5406 = vpop.f32.mrf.mxu0
        %v5407 = vadd.f32 %v5393, %v5406
        %5408 = vdwg.mxu0
        %5409 = vmatpush.bf16.msra.mxu0 %v3991
        %5410 = vmatpush.bf16.msra.mxu0 %v3987
        %5411 = vmatpush.bf16.msra.mxu0 %v3983
        %5412 = vmatpush.bf16.msra.mxu0 %v3979
        %5413 = vmatpush.bf16.msra.mxu0 %v3975
        %5414 = vmatpush.bf16.msra.mxu0 %v3971
        %5415 = vmatpush.bf16.msra.mxu0 %v3967
        %5416 = vmatpush.bf16.msra.mxu0 %v3963
        %5417 = vmatmul.bf16.gmra.mxu0 %v1456
        %v5418 = vpop.f32.mrf.mxu0
        %v5419 = vadd.f32 %v5405, %v5418
        %v5420 = vpop.f32.mrf.mxu0
        %v5421 = vadd.f32 %v5407, %v5420
        %5422 = vdwg.mxu0
        %5423 = vmatpush.bf16.msra.mxu0 %v4023
        %5424 = vmatpush.bf16.msra.mxu0 %v4019
        %5425 = vmatpush.bf16.msra.mxu0 %v4015
        %5426 = vmatpush.bf16.msra.mxu0 %v4011
        %5427 = vmatpush.bf16.msra.mxu0 %v4007
        %5428 = vmatpush.bf16.msra.mxu0 %v4003
        %5429 = vmatpush.bf16.msra.mxu0 %v3999
        %5430 = vmatpush.bf16.msra.mxu0 %v3995
        %5431 = vmatmul.bf16.gmra.mxu0 %v1457
        %v5432 = vpop.f32.mrf.mxu0
        %v5433 = vadd.f32 %v5419, %v5432
        %v5434 = vpop.f32.mrf.mxu0
        %v5435 = vadd.f32 %v5421, %v5434
        %5436 = vdwg.mxu0
        %5437 = vmatpush.bf16.msra.mxu0 %v4055
        %5438 = vmatpush.bf16.msra.mxu0 %v4051
        %5439 = vmatpush.bf16.msra.mxu0 %v4047
        %5440 = vmatpush.bf16.msra.mxu0 %v4043
        %5441 = vmatpush.bf16.msra.mxu0 %v4039
        %5442 = vmatpush.bf16.msra.mxu0 %v4035
        %5443 = vmatpush.bf16.msra.mxu0 %v4031
        %5444 = vmatpush.bf16.msra.mxu0 %v4027
        %5445 = vmatmul.bf16.gmra.mxu0 %v1458
        %v5446 = vpop.f32.mrf.mxu0
        %v5447 = vadd.f32 %v5433, %v5446
        %v5448 = vpop.f32.mrf.mxu0
        %v5449 = vadd.f32 %v5435, %v5448
        %5450 = vdwg.mxu0
        %5451 = vmatpush.bf16.msra.mxu0 %v4087
        %5452 = vmatpush.bf16.msra.mxu0 %v4083
        %5453 = vmatpush.bf16.msra.mxu0 %v4079
        %5454 = vmatpush.bf16.msra.mxu0 %v4075
        %5455 = vmatpush.bf16.msra.mxu0 %v4071
        %5456 = vmatpush.bf16.msra.mxu0 %v4067
        %5457 = vmatpush.bf16.msra.mxu0 %v4063
        %5458 = vmatpush.bf16.msra.mxu0 %v4059
        %5459 = vmatmul.bf16.gmra.mxu0 %v1459
        %v5460 = vpop.f32.mrf.mxu0
        %v5461 = vadd.f32 %v5447, %v5460
        %v5462 = vpop.f32.mrf.mxu0
        %v5463 = vadd.f32 %v5449, %v5462
        %5464 = vdwg.mxu0
        %5465 = vmatpush.bf16.msra.mxu0 %v4119
        %5466 = vmatpush.bf16.msra.mxu0 %v4115
        %5467 = vmatpush.bf16.msra.mxu0 %v4111
        %5468 = vmatpush.bf16.msra.mxu0 %v4107
        %5469 = vmatpush.bf16.msra.mxu0 %v4103
        %5470 = vmatpush.bf16.msra.mxu0 %v4099
        %5471 = vmatpush.bf16.msra.mxu0 %v4095
        %5472 = vmatpush.bf16.msra.mxu0 %v4091
        %5473 = vmatmul.bf16.gmra.mxu0 %v1460
        %v5474 = vpop.f32.mrf.mxu0
        %v5475 = vadd.f32 %v5461, %v5474
        %v5476 = vpop.f32.mrf.mxu0
        %v5477 = vadd.f32 %v5463, %v5476
        %5478 = vdwg.mxu0
        %5479 = vmatpush.bf16.msra.mxu0 %v4151
        %5480 = vmatpush.bf16.msra.mxu0 %v4147
        %5481 = vmatpush.bf16.msra.mxu0 %v4143
        %5482 = vmatpush.bf16.msra.mxu0 %v4139
        %5483 = vmatpush.bf16.msra.mxu0 %v4135
        %5484 = vmatpush.bf16.msra.mxu0 %v4131
        %5485 = vmatpush.bf16.msra.mxu0 %v4127
        %5486 = vmatpush.bf16.msra.mxu0 %v4123
        %5487 = vmatmul.bf16.gmra.mxu0 %v1461
        %v5488 = vpop.f32.mrf.mxu0
        %v5489 = vadd.f32 %v5475, %v5488
        %v5490 = vpop.f32.mrf.mxu0
        %v5491 = vadd.f32 %v5477, %v5490
        %5492 = vdwg.mxu0
        %5493 = vmatpush.bf16.msra.mxu0 %v4183
        %5494 = vmatpush.bf16.msra.mxu0 %v4179
        %5495 = vmatpush.bf16.msra.mxu0 %v4175
        %5496 = vmatpush.bf16.msra.mxu0 %v4171
        %5497 = vmatpush.bf16.msra.mxu0 %v4167
        %5498 = vmatpush.bf16.msra.mxu0 %v4163
        %5499 = vmatpush.bf16.msra.mxu0 %v4159
        %5500 = vmatpush.bf16.msra.mxu0 %v4155
        %5501 = vmatmul.bf16.gmra.mxu0 %v1462
        %v5502 = vpop.f32.mrf.mxu0
        %v5503 = vadd.f32 %v5489, %v5502
        %v5504 = vpop.f32.mrf.mxu0
        %v5505 = vadd.f32 %v5491, %v5504
        %5506 = vdwg.mxu0
        %5507 = vmatpush.bf16.msra.mxu0 %v4215
        %5508 = vmatpush.bf16.msra.mxu0 %v4211
        %5509 = vmatpush.bf16.msra.mxu0 %v4207
        %5510 = vmatpush.bf16.msra.mxu0 %v4203
        %5511 = vmatpush.bf16.msra.mxu0 %v4199
        %5512 = vmatpush.bf16.msra.mxu0 %v4195
        %5513 = vmatpush.bf16.msra.mxu0 %v4191
        %5514 = vmatpush.bf16.msra.mxu0 %v4187
        %5515 = vmatmul.bf16.gmra.mxu0 %v1463
        %v5516 = vpop.f32.mrf.mxu0
        %v5517 = vadd.f32 %v5503, %v5516
        %v5518 = vpop.f32.mrf.mxu0
        %v5519 = vadd.f32 %v5505, %v5518
        %5520 = vdwg.mxu0
        %5521 = vmatpush.bf16.msra.mxu0 %v4247
        %5522 = vmatpush.bf16.msra.mxu0 %v4243
        %5523 = vmatpush.bf16.msra.mxu0 %v4239
        %5524 = vmatpush.bf16.msra.mxu0 %v4235
        %5525 = vmatpush.bf16.msra.mxu0 %v4231
        %5526 = vmatpush.bf16.msra.mxu0 %v4227
        %5527 = vmatpush.bf16.msra.mxu0 %v4223
        %5528 = vmatpush.bf16.msra.mxu0 %v4219
        %5529 = vmatmul.bf16.gmra.mxu0 %v1464
        %v5530 = vpop.f32.mrf.mxu0
        %v5531 = vadd.f32 %v5517, %v5530
        %v5532 = vpop.f32.mrf.mxu0
        %v5533 = vadd.f32 %v5519, %v5532
        %5534 = vdwg.mxu0
        %5535 = vmatpush.bf16.msra.mxu0 %v4279
        %5536 = vmatpush.bf16.msra.mxu0 %v4275
        %5537 = vmatpush.bf16.msra.mxu0 %v4271
        %5538 = vmatpush.bf16.msra.mxu0 %v4267
        %5539 = vmatpush.bf16.msra.mxu0 %v4263
        %5540 = vmatpush.bf16.msra.mxu0 %v4259
        %5541 = vmatpush.bf16.msra.mxu0 %v4255
        %5542 = vmatpush.bf16.msra.mxu0 %v4251
        %5543 = vmatmul.bf16.gmra.mxu0 %v1465
        %v5544 = vpop.f32.mrf.mxu0
        %v5545 = vadd.f32 %v5531, %v5544
        %v5546 = vpop.f32.mrf.mxu0
        %v5547 = vadd.f32 %v5533, %v5546
        %5548 = vdwg.mxu0
        %5549 = vmatpush.bf16.msra.mxu0 %v4311
        %5550 = vmatpush.bf16.msra.mxu0 %v4307
        %5551 = vmatpush.bf16.msra.mxu0 %v4303
        %5552 = vmatpush.bf16.msra.mxu0 %v4299
        %5553 = vmatpush.bf16.msra.mxu0 %v4295
        %5554 = vmatpush.bf16.msra.mxu0 %v4291
        %5555 = vmatpush.bf16.msra.mxu0 %v4287
        %5556 = vmatpush.bf16.msra.mxu0 %v4283
        %5557 = vmatmul.bf16.gmra.mxu0 %v1466
        %v5558 = vpop.f32.mrf.mxu0
        %v5559 = vadd.f32 %v5545, %v5558
        %v5560 = vpop.f32.mrf.mxu0
        %v5561 = vadd.f32 %v5547, %v5560
        %5562 = vdwg.mxu0
        %5563 = vmatpush.bf16.msra.mxu0 %v4343
        %5564 = vmatpush.bf16.msra.mxu0 %v4339
        %5565 = vmatpush.bf16.msra.mxu0 %v4335
        %5566 = vmatpush.bf16.msra.mxu0 %v4331
        %5567 = vmatpush.bf16.msra.mxu0 %v4327
        %5568 = vmatpush.bf16.msra.mxu0 %v4323
        %5569 = vmatpush.bf16.msra.mxu0 %v4319
        %5570 = vmatpush.bf16.msra.mxu0 %v4315
        %5571 = vmatmul.bf16.gmra.mxu0 %v1467
        %v5572 = vpop.f32.mrf.mxu0
        %v5573 = vadd.f32 %v5559, %v5572
        %v5574 = vpop.f32.mrf.mxu0
        %v5575 = vadd.f32 %v5561, %v5574
        %5576 = vdwg.mxu0
        %5577 = vmatpush.bf16.msra.mxu0 %v4375
        %5578 = vmatpush.bf16.msra.mxu0 %v4371
        %5579 = vmatpush.bf16.msra.mxu0 %v4367
        %5580 = vmatpush.bf16.msra.mxu0 %v4363
        %5581 = vmatpush.bf16.msra.mxu0 %v4359
        %5582 = vmatpush.bf16.msra.mxu0 %v4355
        %5583 = vmatpush.bf16.msra.mxu0 %v4351
        %5584 = vmatpush.bf16.msra.mxu0 %v4347
        %5585 = vmatmul.bf16.gmra.mxu0 %v1468
        %v5586 = vpop.f32.mrf.mxu0
        %v5587 = vadd.f32 %v5573, %v5586
        %v5588 = vpop.f32.mrf.mxu0
        %v5589 = vadd.f32 %v5575, %v5588
        %5590 = vdwg.mxu0
        %5591 = vmatpush.bf16.msra.mxu0 %v4407
        %5592 = vmatpush.bf16.msra.mxu0 %v4403
        %5593 = vmatpush.bf16.msra.mxu0 %v4399
        %5594 = vmatpush.bf16.msra.mxu0 %v4395
        %5595 = vmatpush.bf16.msra.mxu0 %v4391
        %5596 = vmatpush.bf16.msra.mxu0 %v4387
        %5597 = vmatpush.bf16.msra.mxu0 %v4383
        %5598 = vmatpush.bf16.msra.mxu0 %v4379
        %5599 = vmatmul.bf16.gmra.mxu0 %v1469
        %v5600 = vpop.f32.mrf.mxu0
        %v5601 = vadd.f32 %v5587, %v5600
        %v5602 = vpop.f32.mrf.mxu0
        %v5603 = vadd.f32 %v5589, %v5602
        %5604 = vdwg.mxu0
        %5605 = vmatpush.bf16.msra.mxu0 %v4439
        %5606 = vmatpush.bf16.msra.mxu0 %v4435
        %5607 = vmatpush.bf16.msra.mxu0 %v4431
        %5608 = vmatpush.bf16.msra.mxu0 %v4427
        %5609 = vmatpush.bf16.msra.mxu0 %v4423
        %5610 = vmatpush.bf16.msra.mxu0 %v4419
        %5611 = vmatpush.bf16.msra.mxu0 %v4415
        %5612 = vmatpush.bf16.msra.mxu0 %v4411
        %5613 = vmatmul.bf16.gmra.mxu0 %v1470
        %v5614 = vpop.f32.mrf.mxu0
        %v5615 = vadd.f32 %v5601, %v5614
        %v5616 = vpop.f32.mrf.mxu0
        %v5617 = vadd.f32 %v5603, %v5616
        %5618 = vdwg.mxu0
        %5619 = vmatpush.bf16.msra.mxu0 %v4471
        %5620 = vmatpush.bf16.msra.mxu0 %v4467
        %5621 = vmatpush.bf16.msra.mxu0 %v4463
        %5622 = vmatpush.bf16.msra.mxu0 %v4459
        %5623 = vmatpush.bf16.msra.mxu0 %v4455
        %5624 = vmatpush.bf16.msra.mxu0 %v4451
        %5625 = vmatpush.bf16.msra.mxu0 %v4447
        %5626 = vmatpush.bf16.msra.mxu0 %v4443
        %5627 = vmatmul.bf16.gmra.mxu0 %v1471
        %v5628 = vpop.f32.mrf.mxu0
        %v5629 = vadd.f32 %v5615, %v5628
        %v5630 = vpop.f32.mrf.mxu0
        %v5631 = vadd.f32 %v5617, %v5630
        %5632 = vdwg.mxu0
        %5633 = vmatpush.bf16.msra.mxu0 %v4503
        %5634 = vmatpush.bf16.msra.mxu0 %v4499
        %5635 = vmatpush.bf16.msra.mxu0 %v4495
        %5636 = vmatpush.bf16.msra.mxu0 %v4491
        %5637 = vmatpush.bf16.msra.mxu0 %v4487
        %5638 = vmatpush.bf16.msra.mxu0 %v4483
        %5639 = vmatpush.bf16.msra.mxu0 %v4479
        %5640 = vmatpush.bf16.msra.mxu0 %v4475
        %5641 = vmatmul.bf16.gmra.mxu0 %v1472
        %v5642 = vpop.f32.mrf.mxu0
        %v5643 = vadd.f32 %v5629, %v5642
        %v5644 = vpop.f32.mrf.mxu0
        %v5645 = vadd.f32 %v5631, %v5644
        %5646 = vdwg.mxu0
        %5647 = vmatpush.bf16.msra.mxu0 %v4535
        %5648 = vmatpush.bf16.msra.mxu0 %v4531
        %5649 = vmatpush.bf16.msra.mxu0 %v4527
        %5650 = vmatpush.bf16.msra.mxu0 %v4523
        %5651 = vmatpush.bf16.msra.mxu0 %v4519
        %5652 = vmatpush.bf16.msra.mxu0 %v4515
        %5653 = vmatpush.bf16.msra.mxu0 %v4511
        %5654 = vmatpush.bf16.msra.mxu0 %v4507
        %5655 = vmatmul.bf16.gmra.mxu0 %v1473
        %v5656 = vpop.f32.mrf.mxu0
        %v5657 = vadd.f32 %v5643, %v5656
        %v5658 = vpop.f32.mrf.mxu0
        %v5659 = vadd.f32 %v5645, %v5658
        %5660 = vdwg.mxu0
        %5661 = vmatpush.bf16.msra.mxu0 %v4567
        %5662 = vmatpush.bf16.msra.mxu0 %v4563
        %5663 = vmatpush.bf16.msra.mxu0 %v4559
        %5664 = vmatpush.bf16.msra.mxu0 %v4555
        %5665 = vmatpush.bf16.msra.mxu0 %v4551
        %5666 = vmatpush.bf16.msra.mxu0 %v4547
        %5667 = vmatpush.bf16.msra.mxu0 %v4543
        %5668 = vmatpush.bf16.msra.mxu0 %v4539
        %5669 = vmatmul.bf16.gmra.mxu0 %v1474
        %v5670 = vpop.f32.mrf.mxu0
        %v5671 = vadd.f32 %v5657, %v5670
        %v5672 = vpop.f32.mrf.mxu0
        %v5673 = vadd.f32 %v5659, %v5672
        %5674 = vdwg.mxu0
        %5675 = vmatpush.bf16.msra.mxu0 %v3832
        %5676 = vmatpush.bf16.msra.mxu0 %v3828
        %5677 = vmatpush.bf16.msra.mxu0 %v3824
        %5678 = vmatpush.bf16.msra.mxu0 %v3820
        %5679 = vmatpush.bf16.msra.mxu0 %v3816
        %5680 = vmatpush.bf16.msra.mxu0 %v3812
        %5681 = vmatpush.bf16.msra.mxu0 %v3808
        %5682 = vmatpush.bf16.msra.mxu0 %v3804
        %5683 = vmatmul.bf16.gmra.mxu0 %v1451
        %v5684 = vpop.f32.mrf.mxu0
        %v5685 = vadd.f32 %v1372, %v5684
        %v5686 = vpop.f32.mrf.mxu0
        %v5687 = vadd.f32 %v1372, %v5686
        %5688 = vdwg.mxu0
        %5689 = vmatpush.bf16.msra.mxu0 %v3864
        %5690 = vmatpush.bf16.msra.mxu0 %v3860
        %5691 = vmatpush.bf16.msra.mxu0 %v3856
        %5692 = vmatpush.bf16.msra.mxu0 %v3852
        %5693 = vmatpush.bf16.msra.mxu0 %v3848
        %5694 = vmatpush.bf16.msra.mxu0 %v3844
        %5695 = vmatpush.bf16.msra.mxu0 %v3840
        %5696 = vmatpush.bf16.msra.mxu0 %v3836
        %5697 = vmatmul.bf16.gmra.mxu0 %v1452
        %v5698 = vpop.f32.mrf.mxu0
        %v5699 = vadd.f32 %v5685, %v5698
        %v5700 = vpop.f32.mrf.mxu0
        %v5701 = vadd.f32 %v5687, %v5700
        %5702 = vdwg.mxu0
        %5703 = vmatpush.bf16.msra.mxu0 %v3896
        %5704 = vmatpush.bf16.msra.mxu0 %v3892
        %5705 = vmatpush.bf16.msra.mxu0 %v3888
        %5706 = vmatpush.bf16.msra.mxu0 %v3884
        %5707 = vmatpush.bf16.msra.mxu0 %v3880
        %5708 = vmatpush.bf16.msra.mxu0 %v3876
        %5709 = vmatpush.bf16.msra.mxu0 %v3872
        %5710 = vmatpush.bf16.msra.mxu0 %v3868
        %5711 = vmatmul.bf16.gmra.mxu0 %v1453
        %v5712 = vpop.f32.mrf.mxu0
        %v5713 = vadd.f32 %v5699, %v5712
        %v5714 = vpop.f32.mrf.mxu0
        %v5715 = vadd.f32 %v5701, %v5714
        %5716 = vdwg.mxu0
        %5717 = vmatpush.bf16.msra.mxu0 %v3928
        %5718 = vmatpush.bf16.msra.mxu0 %v3924
        %5719 = vmatpush.bf16.msra.mxu0 %v3920
        %5720 = vmatpush.bf16.msra.mxu0 %v3916
        %5721 = vmatpush.bf16.msra.mxu0 %v3912
        %5722 = vmatpush.bf16.msra.mxu0 %v3908
        %5723 = vmatpush.bf16.msra.mxu0 %v3904
        %5724 = vmatpush.bf16.msra.mxu0 %v3900
        %5725 = vmatmul.bf16.gmra.mxu0 %v1454
        %v5726 = vpop.f32.mrf.mxu0
        %v5727 = vadd.f32 %v5713, %v5726
        %v5728 = vpop.f32.mrf.mxu0
        %v5729 = vadd.f32 %v5715, %v5728
        %5730 = vdwg.mxu0
        %5731 = vmatpush.bf16.msra.mxu0 %v3960
        %5732 = vmatpush.bf16.msra.mxu0 %v3956
        %5733 = vmatpush.bf16.msra.mxu0 %v3952
        %5734 = vmatpush.bf16.msra.mxu0 %v3948
        %5735 = vmatpush.bf16.msra.mxu0 %v3944
        %5736 = vmatpush.bf16.msra.mxu0 %v3940
        %5737 = vmatpush.bf16.msra.mxu0 %v3936
        %5738 = vmatpush.bf16.msra.mxu0 %v3932
        %5739 = vmatmul.bf16.gmra.mxu0 %v1455
        %v5740 = vpop.f32.mrf.mxu0
        %v5741 = vadd.f32 %v5727, %v5740
        %v5742 = vpop.f32.mrf.mxu0
        %v5743 = vadd.f32 %v5729, %v5742
        %5744 = vdwg.mxu0
        %5745 = vmatpush.bf16.msra.mxu0 %v3992
        %5746 = vmatpush.bf16.msra.mxu0 %v3988
        %5747 = vmatpush.bf16.msra.mxu0 %v3984
        %5748 = vmatpush.bf16.msra.mxu0 %v3980
        %5749 = vmatpush.bf16.msra.mxu0 %v3976
        %5750 = vmatpush.bf16.msra.mxu0 %v3972
        %5751 = vmatpush.bf16.msra.mxu0 %v3968
        %5752 = vmatpush.bf16.msra.mxu0 %v3964
        %5753 = vmatmul.bf16.gmra.mxu0 %v1456
        %v5754 = vpop.f32.mrf.mxu0
        %v5755 = vadd.f32 %v5741, %v5754
        %v5756 = vpop.f32.mrf.mxu0
        %v5757 = vadd.f32 %v5743, %v5756
        %5758 = vdwg.mxu0
        %5759 = vmatpush.bf16.msra.mxu0 %v4024
        %5760 = vmatpush.bf16.msra.mxu0 %v4020
        %5761 = vmatpush.bf16.msra.mxu0 %v4016
        %5762 = vmatpush.bf16.msra.mxu0 %v4012
        %5763 = vmatpush.bf16.msra.mxu0 %v4008
        %5764 = vmatpush.bf16.msra.mxu0 %v4004
        %5765 = vmatpush.bf16.msra.mxu0 %v4000
        %5766 = vmatpush.bf16.msra.mxu0 %v3996
        %5767 = vmatmul.bf16.gmra.mxu0 %v1457
        %v5768 = vpop.f32.mrf.mxu0
        %v5769 = vadd.f32 %v5755, %v5768
        %v5770 = vpop.f32.mrf.mxu0
        %v5771 = vadd.f32 %v5757, %v5770
        %5772 = vdwg.mxu0
        %5773 = vmatpush.bf16.msra.mxu0 %v4056
        %5774 = vmatpush.bf16.msra.mxu0 %v4052
        %5775 = vmatpush.bf16.msra.mxu0 %v4048
        %5776 = vmatpush.bf16.msra.mxu0 %v4044
        %5777 = vmatpush.bf16.msra.mxu0 %v4040
        %5778 = vmatpush.bf16.msra.mxu0 %v4036
        %5779 = vmatpush.bf16.msra.mxu0 %v4032
        %5780 = vmatpush.bf16.msra.mxu0 %v4028
        %5781 = vmatmul.bf16.gmra.mxu0 %v1458
        %v5782 = vpop.f32.mrf.mxu0
        %v5783 = vadd.f32 %v5769, %v5782
        %v5784 = vpop.f32.mrf.mxu0
        %v5785 = vadd.f32 %v5771, %v5784
        %5786 = vdwg.mxu0
        %5787 = vmatpush.bf16.msra.mxu0 %v4088
        %5788 = vmatpush.bf16.msra.mxu0 %v4084
        %5789 = vmatpush.bf16.msra.mxu0 %v4080
        %5790 = vmatpush.bf16.msra.mxu0 %v4076
        %5791 = vmatpush.bf16.msra.mxu0 %v4072
        %5792 = vmatpush.bf16.msra.mxu0 %v4068
        %5793 = vmatpush.bf16.msra.mxu0 %v4064
        %5794 = vmatpush.bf16.msra.mxu0 %v4060
        %5795 = vmatmul.bf16.gmra.mxu0 %v1459
        %v5796 = vpop.f32.mrf.mxu0
        %v5797 = vadd.f32 %v5783, %v5796
        %v5798 = vpop.f32.mrf.mxu0
        %v5799 = vadd.f32 %v5785, %v5798
        %5800 = vdwg.mxu0
        %5801 = vmatpush.bf16.msra.mxu0 %v4120
        %5802 = vmatpush.bf16.msra.mxu0 %v4116
        %5803 = vmatpush.bf16.msra.mxu0 %v4112
        %5804 = vmatpush.bf16.msra.mxu0 %v4108
        %5805 = vmatpush.bf16.msra.mxu0 %v4104
        %5806 = vmatpush.bf16.msra.mxu0 %v4100
        %5807 = vmatpush.bf16.msra.mxu0 %v4096
        %5808 = vmatpush.bf16.msra.mxu0 %v4092
        %5809 = vmatmul.bf16.gmra.mxu0 %v1460
        %v5810 = vpop.f32.mrf.mxu0
        %v5811 = vadd.f32 %v5797, %v5810
        %v5812 = vpop.f32.mrf.mxu0
        %v5813 = vadd.f32 %v5799, %v5812
        %5814 = vdwg.mxu0
        %5815 = vmatpush.bf16.msra.mxu0 %v4152
        %5816 = vmatpush.bf16.msra.mxu0 %v4148
        %5817 = vmatpush.bf16.msra.mxu0 %v4144
        %5818 = vmatpush.bf16.msra.mxu0 %v4140
        %5819 = vmatpush.bf16.msra.mxu0 %v4136
        %5820 = vmatpush.bf16.msra.mxu0 %v4132
        %5821 = vmatpush.bf16.msra.mxu0 %v4128
        %5822 = vmatpush.bf16.msra.mxu0 %v4124
        %5823 = vmatmul.bf16.gmra.mxu0 %v1461
        %v5824 = vpop.f32.mrf.mxu0
        %v5825 = vadd.f32 %v5811, %v5824
        %v5826 = vpop.f32.mrf.mxu0
        %v5827 = vadd.f32 %v5813, %v5826
        %5828 = vdwg.mxu0
        %5829 = vmatpush.bf16.msra.mxu0 %v4184
        %5830 = vmatpush.bf16.msra.mxu0 %v4180
        %5831 = vmatpush.bf16.msra.mxu0 %v4176
        %5832 = vmatpush.bf16.msra.mxu0 %v4172
        %5833 = vmatpush.bf16.msra.mxu0 %v4168
        %5834 = vmatpush.bf16.msra.mxu0 %v4164
        %5835 = vmatpush.bf16.msra.mxu0 %v4160
        %5836 = vmatpush.bf16.msra.mxu0 %v4156
        %5837 = vmatmul.bf16.gmra.mxu0 %v1462
        %v5838 = vpop.f32.mrf.mxu0
        %v5839 = vadd.f32 %v5825, %v5838
        %v5840 = vpop.f32.mrf.mxu0
        %v5841 = vadd.f32 %v5827, %v5840
        %5842 = vdwg.mxu0
        %5843 = vmatpush.bf16.msra.mxu0 %v4216
        %5844 = vmatpush.bf16.msra.mxu0 %v4212
        %5845 = vmatpush.bf16.msra.mxu0 %v4208
        %5846 = vmatpush.bf16.msra.mxu0 %v4204
        %5847 = vmatpush.bf16.msra.mxu0 %v4200
        %5848 = vmatpush.bf16.msra.mxu0 %v4196
        %5849 = vmatpush.bf16.msra.mxu0 %v4192
        %5850 = vmatpush.bf16.msra.mxu0 %v4188
        %5851 = vmatmul.bf16.gmra.mxu0 %v1463
        %v5852 = vpop.f32.mrf.mxu0
        %v5853 = vadd.f32 %v5839, %v5852
        %v5854 = vpop.f32.mrf.mxu0
        %v5855 = vadd.f32 %v5841, %v5854
        %5856 = vdwg.mxu0
        %5857 = vmatpush.bf16.msra.mxu0 %v4248
        %5858 = vmatpush.bf16.msra.mxu0 %v4244
        %5859 = vmatpush.bf16.msra.mxu0 %v4240
        %5860 = vmatpush.bf16.msra.mxu0 %v4236
        %5861 = vmatpush.bf16.msra.mxu0 %v4232
        %5862 = vmatpush.bf16.msra.mxu0 %v4228
        %5863 = vmatpush.bf16.msra.mxu0 %v4224
        %5864 = vmatpush.bf16.msra.mxu0 %v4220
        %5865 = vmatmul.bf16.gmra.mxu0 %v1464
        %v5866 = vpop.f32.mrf.mxu0
        %v5867 = vadd.f32 %v5853, %v5866
        %v5868 = vpop.f32.mrf.mxu0
        %v5869 = vadd.f32 %v5855, %v5868
        %5870 = vdwg.mxu0
        %5871 = vmatpush.bf16.msra.mxu0 %v4280
        %5872 = vmatpush.bf16.msra.mxu0 %v4276
        %5873 = vmatpush.bf16.msra.mxu0 %v4272
        %5874 = vmatpush.bf16.msra.mxu0 %v4268
        %5875 = vmatpush.bf16.msra.mxu0 %v4264
        %5876 = vmatpush.bf16.msra.mxu0 %v4260
        %5877 = vmatpush.bf16.msra.mxu0 %v4256
        %5878 = vmatpush.bf16.msra.mxu0 %v4252
        %5879 = vmatmul.bf16.gmra.mxu0 %v1465
        %v5880 = vpop.f32.mrf.mxu0
        %v5881 = vadd.f32 %v5867, %v5880
        %v5882 = vpop.f32.mrf.mxu0
        %v5883 = vadd.f32 %v5869, %v5882
        %5884 = vdwg.mxu0
        %5885 = vmatpush.bf16.msra.mxu0 %v4312
        %5886 = vmatpush.bf16.msra.mxu0 %v4308
        %5887 = vmatpush.bf16.msra.mxu0 %v4304
        %5888 = vmatpush.bf16.msra.mxu0 %v4300
        %5889 = vmatpush.bf16.msra.mxu0 %v4296
        %5890 = vmatpush.bf16.msra.mxu0 %v4292
        %5891 = vmatpush.bf16.msra.mxu0 %v4288
        %5892 = vmatpush.bf16.msra.mxu0 %v4284
        %5893 = vmatmul.bf16.gmra.mxu0 %v1466
        %v5894 = vpop.f32.mrf.mxu0
        %v5895 = vadd.f32 %v5881, %v5894
        %v5896 = vpop.f32.mrf.mxu0
        %v5897 = vadd.f32 %v5883, %v5896
        %5898 = vdwg.mxu0
        %5899 = vmatpush.bf16.msra.mxu0 %v4344
        %5900 = vmatpush.bf16.msra.mxu0 %v4340
        %5901 = vmatpush.bf16.msra.mxu0 %v4336
        %5902 = vmatpush.bf16.msra.mxu0 %v4332
        %5903 = vmatpush.bf16.msra.mxu0 %v4328
        %5904 = vmatpush.bf16.msra.mxu0 %v4324
        %5905 = vmatpush.bf16.msra.mxu0 %v4320
        %5906 = vmatpush.bf16.msra.mxu0 %v4316
        %5907 = vmatmul.bf16.gmra.mxu0 %v1467
        %v5908 = vpop.f32.mrf.mxu0
        %v5909 = vadd.f32 %v5895, %v5908
        %v5910 = vpop.f32.mrf.mxu0
        %v5911 = vadd.f32 %v5897, %v5910
        %5912 = vdwg.mxu0
        %5913 = vmatpush.bf16.msra.mxu0 %v4376
        %5914 = vmatpush.bf16.msra.mxu0 %v4372
        %5915 = vmatpush.bf16.msra.mxu0 %v4368
        %5916 = vmatpush.bf16.msra.mxu0 %v4364
        %5917 = vmatpush.bf16.msra.mxu0 %v4360
        %5918 = vmatpush.bf16.msra.mxu0 %v4356
        %5919 = vmatpush.bf16.msra.mxu0 %v4352
        %5920 = vmatpush.bf16.msra.mxu0 %v4348
        %5921 = vmatmul.bf16.gmra.mxu0 %v1468
        %v5922 = vpop.f32.mrf.mxu0
        %v5923 = vadd.f32 %v5909, %v5922
        %v5924 = vpop.f32.mrf.mxu0
        %v5925 = vadd.f32 %v5911, %v5924
        %5926 = vdwg.mxu0
        %5927 = vmatpush.bf16.msra.mxu0 %v4408
        %5928 = vmatpush.bf16.msra.mxu0 %v4404
        %5929 = vmatpush.bf16.msra.mxu0 %v4400
        %5930 = vmatpush.bf16.msra.mxu0 %v4396
        %5931 = vmatpush.bf16.msra.mxu0 %v4392
        %5932 = vmatpush.bf16.msra.mxu0 %v4388
        %5933 = vmatpush.bf16.msra.mxu0 %v4384
        %5934 = vmatpush.bf16.msra.mxu0 %v4380
        %5935 = vmatmul.bf16.gmra.mxu0 %v1469
        %v5936 = vpop.f32.mrf.mxu0
        %v5937 = vadd.f32 %v5923, %v5936
        %v5938 = vpop.f32.mrf.mxu0
        %v5939 = vadd.f32 %v5925, %v5938
        %5940 = vdwg.mxu0
        %5941 = vmatpush.bf16.msra.mxu0 %v4440
        %5942 = vmatpush.bf16.msra.mxu0 %v4436
        %5943 = vmatpush.bf16.msra.mxu0 %v4432
        %5944 = vmatpush.bf16.msra.mxu0 %v4428
        %5945 = vmatpush.bf16.msra.mxu0 %v4424
        %5946 = vmatpush.bf16.msra.mxu0 %v4420
        %5947 = vmatpush.bf16.msra.mxu0 %v4416
        %5948 = vmatpush.bf16.msra.mxu0 %v4412
        %5949 = vmatmul.bf16.gmra.mxu0 %v1470
        %v5950 = vpop.f32.mrf.mxu0
        %v5951 = vadd.f32 %v5937, %v5950
        %v5952 = vpop.f32.mrf.mxu0
        %v5953 = vadd.f32 %v5939, %v5952
        %5954 = vdwg.mxu0
        %5955 = vmatpush.bf16.msra.mxu0 %v4472
        %5956 = vmatpush.bf16.msra.mxu0 %v4468
        %5957 = vmatpush.bf16.msra.mxu0 %v4464
        %5958 = vmatpush.bf16.msra.mxu0 %v4460
        %5959 = vmatpush.bf16.msra.mxu0 %v4456
        %5960 = vmatpush.bf16.msra.mxu0 %v4452
        %5961 = vmatpush.bf16.msra.mxu0 %v4448
        %5962 = vmatpush.bf16.msra.mxu0 %v4444
        %5963 = vmatmul.bf16.gmra.mxu0 %v1471
        %v5964 = vpop.f32.mrf.mxu0
        %v5965 = vadd.f32 %v5951, %v5964
        %v5966 = vpop.f32.mrf.mxu0
        %v5967 = vadd.f32 %v5953, %v5966
        %5968 = vdwg.mxu0
        %5969 = vmatpush.bf16.msra.mxu0 %v4504
        %5970 = vmatpush.bf16.msra.mxu0 %v4500
        %5971 = vmatpush.bf16.msra.mxu0 %v4496
        %5972 = vmatpush.bf16.msra.mxu0 %v4492
        %5973 = vmatpush.bf16.msra.mxu0 %v4488
        %5974 = vmatpush.bf16.msra.mxu0 %v4484
        %5975 = vmatpush.bf16.msra.mxu0 %v4480
        %5976 = vmatpush.bf16.msra.mxu0 %v4476
        %5977 = vmatmul.bf16.gmra.mxu0 %v1472
        %v5978 = vpop.f32.mrf.mxu0
        %v5979 = vadd.f32 %v5965, %v5978
        %v5980 = vpop.f32.mrf.mxu0
        %v5981 = vadd.f32 %v5967, %v5980
        %5982 = vdwg.mxu0
        %5983 = vmatpush.bf16.msra.mxu0 %v4536
        %5984 = vmatpush.bf16.msra.mxu0 %v4532
        %5985 = vmatpush.bf16.msra.mxu0 %v4528
        %5986 = vmatpush.bf16.msra.mxu0 %v4524
        %5987 = vmatpush.bf16.msra.mxu0 %v4520
        %5988 = vmatpush.bf16.msra.mxu0 %v4516
        %5989 = vmatpush.bf16.msra.mxu0 %v4512
        %5990 = vmatpush.bf16.msra.mxu0 %v4508
        %5991 = vmatmul.bf16.gmra.mxu0 %v1473
        %v5992 = vpop.f32.mrf.mxu0
        %v5993 = vadd.f32 %v5979, %v5992
        %v5994 = vpop.f32.mrf.mxu0
        %v5995 = vadd.f32 %v5981, %v5994
        %5996 = vdwg.mxu0
        %5997 = vmatpush.bf16.msra.mxu0 %v4568
        %5998 = vmatpush.bf16.msra.mxu0 %v4564
        %5999 = vmatpush.bf16.msra.mxu0 %v4560
        %6000 = vmatpush.bf16.msra.mxu0 %v4556
        %6001 = vmatpush.bf16.msra.mxu0 %v4552
        %6002 = vmatpush.bf16.msra.mxu0 %v4548
        %6003 = vmatpush.bf16.msra.mxu0 %v4544
        %6004 = vmatpush.bf16.msra.mxu0 %v4540
        %6005 = vmatmul.bf16.gmra.mxu0 %v1474
        %v6006 = vpop.f32.mrf.mxu0
        %v6007 = vadd.f32 %v5993, %v6006
        %v6008 = vpop.f32.mrf.mxu0
        %v6009 = vadd.f32 %v5995, %v6008
        %6010 = vdwg.mxu0
        %6011 = vmatpush.bf16.msra.mxu0 %v3833
        %6012 = vmatpush.bf16.msra.mxu0 %v3829
        %6013 = vmatpush.bf16.msra.mxu0 %v3825
        %6014 = vmatpush.bf16.msra.mxu0 %v3821
        %6015 = vmatpush.bf16.msra.mxu0 %v3817
        %6016 = vmatpush.bf16.msra.mxu0 %v3813
        %6017 = vmatpush.bf16.msra.mxu0 %v3809
        %6018 = vmatpush.bf16.msra.mxu0 %v3805
        %6019 = vmatmul.bf16.gmra.mxu0 %v1451
        %v6020 = vpop.f32.mrf.mxu0
        %v6021 = vadd.f32 %v1373, %v6020
        %v6022 = vpop.f32.mrf.mxu0
        %v6023 = vadd.f32 %v1373, %v6022
        %6024 = vdwg.mxu0
        %6025 = vmatpush.bf16.msra.mxu0 %v3865
        %6026 = vmatpush.bf16.msra.mxu0 %v3861
        %6027 = vmatpush.bf16.msra.mxu0 %v3857
        %6028 = vmatpush.bf16.msra.mxu0 %v3853
        %6029 = vmatpush.bf16.msra.mxu0 %v3849
        %6030 = vmatpush.bf16.msra.mxu0 %v3845
        %6031 = vmatpush.bf16.msra.mxu0 %v3841
        %6032 = vmatpush.bf16.msra.mxu0 %v3837
        %6033 = vmatmul.bf16.gmra.mxu0 %v1452
        %v6034 = vpop.f32.mrf.mxu0
        %v6035 = vadd.f32 %v6021, %v6034
        %v6036 = vpop.f32.mrf.mxu0
        %v6037 = vadd.f32 %v6023, %v6036
        %6038 = vdwg.mxu0
        %6039 = vmatpush.bf16.msra.mxu0 %v3897
        %6040 = vmatpush.bf16.msra.mxu0 %v3893
        %6041 = vmatpush.bf16.msra.mxu0 %v3889
        %6042 = vmatpush.bf16.msra.mxu0 %v3885
        %6043 = vmatpush.bf16.msra.mxu0 %v3881
        %6044 = vmatpush.bf16.msra.mxu0 %v3877
        %6045 = vmatpush.bf16.msra.mxu0 %v3873
        %6046 = vmatpush.bf16.msra.mxu0 %v3869
        %6047 = vmatmul.bf16.gmra.mxu0 %v1453
        %v6048 = vpop.f32.mrf.mxu0
        %v6049 = vadd.f32 %v6035, %v6048
        %v6050 = vpop.f32.mrf.mxu0
        %v6051 = vadd.f32 %v6037, %v6050
        %6052 = vdwg.mxu0
        %6053 = vmatpush.bf16.msra.mxu0 %v3929
        %6054 = vmatpush.bf16.msra.mxu0 %v3925
        %6055 = vmatpush.bf16.msra.mxu0 %v3921
        %6056 = vmatpush.bf16.msra.mxu0 %v3917
        %6057 = vmatpush.bf16.msra.mxu0 %v3913
        %6058 = vmatpush.bf16.msra.mxu0 %v3909
        %6059 = vmatpush.bf16.msra.mxu0 %v3905
        %6060 = vmatpush.bf16.msra.mxu0 %v3901
        %6061 = vmatmul.bf16.gmra.mxu0 %v1454
        %v6062 = vpop.f32.mrf.mxu0
        %v6063 = vadd.f32 %v6049, %v6062
        %v6064 = vpop.f32.mrf.mxu0
        %v6065 = vadd.f32 %v6051, %v6064
        %6066 = vdwg.mxu0
        %6067 = vmatpush.bf16.msra.mxu0 %v3961
        %6068 = vmatpush.bf16.msra.mxu0 %v3957
        %6069 = vmatpush.bf16.msra.mxu0 %v3953
        %6070 = vmatpush.bf16.msra.mxu0 %v3949
        %6071 = vmatpush.bf16.msra.mxu0 %v3945
        %6072 = vmatpush.bf16.msra.mxu0 %v3941
        %6073 = vmatpush.bf16.msra.mxu0 %v3937
        %6074 = vmatpush.bf16.msra.mxu0 %v3933
        %6075 = vmatmul.bf16.gmra.mxu0 %v1455
        %v6076 = vpop.f32.mrf.mxu0
        %v6077 = vadd.f32 %v6063, %v6076
        %v6078 = vpop.f32.mrf.mxu0
        %v6079 = vadd.f32 %v6065, %v6078
        %6080 = vdwg.mxu0
        %6081 = vmatpush.bf16.msra.mxu0 %v3993
        %6082 = vmatpush.bf16.msra.mxu0 %v3989
        %6083 = vmatpush.bf16.msra.mxu0 %v3985
        %6084 = vmatpush.bf16.msra.mxu0 %v3981
        %6085 = vmatpush.bf16.msra.mxu0 %v3977
        %6086 = vmatpush.bf16.msra.mxu0 %v3973
        %6087 = vmatpush.bf16.msra.mxu0 %v3969
        %6088 = vmatpush.bf16.msra.mxu0 %v3965
        %6089 = vmatmul.bf16.gmra.mxu0 %v1456
        %v6090 = vpop.f32.mrf.mxu0
        %v6091 = vadd.f32 %v6077, %v6090
        %v6092 = vpop.f32.mrf.mxu0
        %v6093 = vadd.f32 %v6079, %v6092
        %6094 = vdwg.mxu0
        %6095 = vmatpush.bf16.msra.mxu0 %v4025
        %6096 = vmatpush.bf16.msra.mxu0 %v4021
        %6097 = vmatpush.bf16.msra.mxu0 %v4017
        %6098 = vmatpush.bf16.msra.mxu0 %v4013
        %6099 = vmatpush.bf16.msra.mxu0 %v4009
        %6100 = vmatpush.bf16.msra.mxu0 %v4005
        %6101 = vmatpush.bf16.msra.mxu0 %v4001
        %6102 = vmatpush.bf16.msra.mxu0 %v3997
        %6103 = vmatmul.bf16.gmra.mxu0 %v1457
        %v6104 = vpop.f32.mrf.mxu0
        %v6105 = vadd.f32 %v6091, %v6104
        %v6106 = vpop.f32.mrf.mxu0
        %v6107 = vadd.f32 %v6093, %v6106
        %6108 = vdwg.mxu0
        %6109 = vmatpush.bf16.msra.mxu0 %v4057
        %6110 = vmatpush.bf16.msra.mxu0 %v4053
        %6111 = vmatpush.bf16.msra.mxu0 %v4049
        %6112 = vmatpush.bf16.msra.mxu0 %v4045
        %6113 = vmatpush.bf16.msra.mxu0 %v4041
        %6114 = vmatpush.bf16.msra.mxu0 %v4037
        %6115 = vmatpush.bf16.msra.mxu0 %v4033
        %6116 = vmatpush.bf16.msra.mxu0 %v4029
        %6117 = vmatmul.bf16.gmra.mxu0 %v1458
        %v6118 = vpop.f32.mrf.mxu0
        %v6119 = vadd.f32 %v6105, %v6118
        %v6120 = vpop.f32.mrf.mxu0
        %v6121 = vadd.f32 %v6107, %v6120
        %6122 = vdwg.mxu0
        %6123 = vmatpush.bf16.msra.mxu0 %v4089
        %6124 = vmatpush.bf16.msra.mxu0 %v4085
        %6125 = vmatpush.bf16.msra.mxu0 %v4081
        %6126 = vmatpush.bf16.msra.mxu0 %v4077
        %6127 = vmatpush.bf16.msra.mxu0 %v4073
        %6128 = vmatpush.bf16.msra.mxu0 %v4069
        %6129 = vmatpush.bf16.msra.mxu0 %v4065
        %6130 = vmatpush.bf16.msra.mxu0 %v4061
        %6131 = vmatmul.bf16.gmra.mxu0 %v1459
        %v6132 = vpop.f32.mrf.mxu0
        %v6133 = vadd.f32 %v6119, %v6132
        %v6134 = vpop.f32.mrf.mxu0
        %v6135 = vadd.f32 %v6121, %v6134
        %6136 = vdwg.mxu0
        %6137 = vmatpush.bf16.msra.mxu0 %v4121
        %6138 = vmatpush.bf16.msra.mxu0 %v4117
        %6139 = vmatpush.bf16.msra.mxu0 %v4113
        %6140 = vmatpush.bf16.msra.mxu0 %v4109
        %6141 = vmatpush.bf16.msra.mxu0 %v4105
        %6142 = vmatpush.bf16.msra.mxu0 %v4101
        %6143 = vmatpush.bf16.msra.mxu0 %v4097
        %6144 = vmatpush.bf16.msra.mxu0 %v4093
        %6145 = vmatmul.bf16.gmra.mxu0 %v1460
        %v6146 = vpop.f32.mrf.mxu0
        %v6147 = vadd.f32 %v6133, %v6146
        %v6148 = vpop.f32.mrf.mxu0
        %v6149 = vadd.f32 %v6135, %v6148
        %6150 = vdwg.mxu0
        %6151 = vmatpush.bf16.msra.mxu0 %v4153
        %6152 = vmatpush.bf16.msra.mxu0 %v4149
        %6153 = vmatpush.bf16.msra.mxu0 %v4145
        %6154 = vmatpush.bf16.msra.mxu0 %v4141
        %6155 = vmatpush.bf16.msra.mxu0 %v4137
        %6156 = vmatpush.bf16.msra.mxu0 %v4133
        %6157 = vmatpush.bf16.msra.mxu0 %v4129
        %6158 = vmatpush.bf16.msra.mxu0 %v4125
        %6159 = vmatmul.bf16.gmra.mxu0 %v1461
        %v6160 = vpop.f32.mrf.mxu0
        %v6161 = vadd.f32 %v6147, %v6160
        %v6162 = vpop.f32.mrf.mxu0
        %v6163 = vadd.f32 %v6149, %v6162
        %6164 = vdwg.mxu0
        %6165 = vmatpush.bf16.msra.mxu0 %v4185
        %6166 = vmatpush.bf16.msra.mxu0 %v4181
        %6167 = vmatpush.bf16.msra.mxu0 %v4177
        %6168 = vmatpush.bf16.msra.mxu0 %v4173
        %6169 = vmatpush.bf16.msra.mxu0 %v4169
        %6170 = vmatpush.bf16.msra.mxu0 %v4165
        %6171 = vmatpush.bf16.msra.mxu0 %v4161
        %6172 = vmatpush.bf16.msra.mxu0 %v4157
        %6173 = vmatmul.bf16.gmra.mxu0 %v1462
        %v6174 = vpop.f32.mrf.mxu0
        %v6175 = vadd.f32 %v6161, %v6174
        %v6176 = vpop.f32.mrf.mxu0
        %v6177 = vadd.f32 %v6163, %v6176
        %6178 = vdwg.mxu0
        %6179 = vmatpush.bf16.msra.mxu0 %v4217
        %6180 = vmatpush.bf16.msra.mxu0 %v4213
        %6181 = vmatpush.bf16.msra.mxu0 %v4209
        %6182 = vmatpush.bf16.msra.mxu0 %v4205
        %6183 = vmatpush.bf16.msra.mxu0 %v4201
        %6184 = vmatpush.bf16.msra.mxu0 %v4197
        %6185 = vmatpush.bf16.msra.mxu0 %v4193
        %6186 = vmatpush.bf16.msra.mxu0 %v4189
        %6187 = vmatmul.bf16.gmra.mxu0 %v1463
        %v6188 = vpop.f32.mrf.mxu0
        %v6189 = vadd.f32 %v6175, %v6188
        %v6190 = vpop.f32.mrf.mxu0
        %v6191 = vadd.f32 %v6177, %v6190
        %6192 = vdwg.mxu0
        %6193 = vmatpush.bf16.msra.mxu0 %v4249
        %6194 = vmatpush.bf16.msra.mxu0 %v4245
        %6195 = vmatpush.bf16.msra.mxu0 %v4241
        %6196 = vmatpush.bf16.msra.mxu0 %v4237
        %6197 = vmatpush.bf16.msra.mxu0 %v4233
        %6198 = vmatpush.bf16.msra.mxu0 %v4229
        %6199 = vmatpush.bf16.msra.mxu0 %v4225
        %6200 = vmatpush.bf16.msra.mxu0 %v4221
        %6201 = vmatmul.bf16.gmra.mxu0 %v1464
        %v6202 = vpop.f32.mrf.mxu0
        %v6203 = vadd.f32 %v6189, %v6202
        %v6204 = vpop.f32.mrf.mxu0
        %v6205 = vadd.f32 %v6191, %v6204
        %6206 = vdwg.mxu0
        %6207 = vmatpush.bf16.msra.mxu0 %v4281
        %6208 = vmatpush.bf16.msra.mxu0 %v4277
        %6209 = vmatpush.bf16.msra.mxu0 %v4273
        %6210 = vmatpush.bf16.msra.mxu0 %v4269
        %6211 = vmatpush.bf16.msra.mxu0 %v4265
        %6212 = vmatpush.bf16.msra.mxu0 %v4261
        %6213 = vmatpush.bf16.msra.mxu0 %v4257
        %6214 = vmatpush.bf16.msra.mxu0 %v4253
        %6215 = vmatmul.bf16.gmra.mxu0 %v1465
        %v6216 = vpop.f32.mrf.mxu0
        %v6217 = vadd.f32 %v6203, %v6216
        %v6218 = vpop.f32.mrf.mxu0
        %v6219 = vadd.f32 %v6205, %v6218
        %6220 = vdwg.mxu0
        %6221 = vmatpush.bf16.msra.mxu0 %v4313
        %6222 = vmatpush.bf16.msra.mxu0 %v4309
        %6223 = vmatpush.bf16.msra.mxu0 %v4305
        %6224 = vmatpush.bf16.msra.mxu0 %v4301
        %6225 = vmatpush.bf16.msra.mxu0 %v4297
        %6226 = vmatpush.bf16.msra.mxu0 %v4293
        %6227 = vmatpush.bf16.msra.mxu0 %v4289
        %6228 = vmatpush.bf16.msra.mxu0 %v4285
        %6229 = vmatmul.bf16.gmra.mxu0 %v1466
        %v6230 = vpop.f32.mrf.mxu0
        %v6231 = vadd.f32 %v6217, %v6230
        %v6232 = vpop.f32.mrf.mxu0
        %v6233 = vadd.f32 %v6219, %v6232
        %6234 = vdwg.mxu0
        %6235 = vmatpush.bf16.msra.mxu0 %v4345
        %6236 = vmatpush.bf16.msra.mxu0 %v4341
        %6237 = vmatpush.bf16.msra.mxu0 %v4337
        %6238 = vmatpush.bf16.msra.mxu0 %v4333
        %6239 = vmatpush.bf16.msra.mxu0 %v4329
        %6240 = vmatpush.bf16.msra.mxu0 %v4325
        %6241 = vmatpush.bf16.msra.mxu0 %v4321
        %6242 = vmatpush.bf16.msra.mxu0 %v4317
        %6243 = vmatmul.bf16.gmra.mxu0 %v1467
        %v6244 = vpop.f32.mrf.mxu0
        %v6245 = vadd.f32 %v6231, %v6244
        %v6246 = vpop.f32.mrf.mxu0
        %v6247 = vadd.f32 %v6233, %v6246
        %6248 = vdwg.mxu0
        %6249 = vmatpush.bf16.msra.mxu0 %v4377
        %6250 = vmatpush.bf16.msra.mxu0 %v4373
        %6251 = vmatpush.bf16.msra.mxu0 %v4369
        %6252 = vmatpush.bf16.msra.mxu0 %v4365
        %6253 = vmatpush.bf16.msra.mxu0 %v4361
        %6254 = vmatpush.bf16.msra.mxu0 %v4357
        %6255 = vmatpush.bf16.msra.mxu0 %v4353
        %6256 = vmatpush.bf16.msra.mxu0 %v4349
        %6257 = vmatmul.bf16.gmra.mxu0 %v1468
        %v6258 = vpop.f32.mrf.mxu0
        %v6259 = vadd.f32 %v6245, %v6258
        %v6260 = vpop.f32.mrf.mxu0
        %v6261 = vadd.f32 %v6247, %v6260
        %6262 = vdwg.mxu0
        %6263 = vmatpush.bf16.msra.mxu0 %v4409
        %6264 = vmatpush.bf16.msra.mxu0 %v4405
        %6265 = vmatpush.bf16.msra.mxu0 %v4401
        %6266 = vmatpush.bf16.msra.mxu0 %v4397
        %6267 = vmatpush.bf16.msra.mxu0 %v4393
        %6268 = vmatpush.bf16.msra.mxu0 %v4389
        %6269 = vmatpush.bf16.msra.mxu0 %v4385
        %6270 = vmatpush.bf16.msra.mxu0 %v4381
        %6271 = vmatmul.bf16.gmra.mxu0 %v1469
        %v6272 = vpop.f32.mrf.mxu0
        %v6273 = vadd.f32 %v6259, %v6272
        %v6274 = vpop.f32.mrf.mxu0
        %v6275 = vadd.f32 %v6261, %v6274
        %6276 = vdwg.mxu0
        %6277 = vmatpush.bf16.msra.mxu0 %v4441
        %6278 = vmatpush.bf16.msra.mxu0 %v4437
        %6279 = vmatpush.bf16.msra.mxu0 %v4433
        %6280 = vmatpush.bf16.msra.mxu0 %v4429
        %6281 = vmatpush.bf16.msra.mxu0 %v4425
        %6282 = vmatpush.bf16.msra.mxu0 %v4421
        %6283 = vmatpush.bf16.msra.mxu0 %v4417
        %6284 = vmatpush.bf16.msra.mxu0 %v4413
        %6285 = vmatmul.bf16.gmra.mxu0 %v1470
        %v6286 = vpop.f32.mrf.mxu0
        %v6287 = vadd.f32 %v6273, %v6286
        %v6288 = vpop.f32.mrf.mxu0
        %v6289 = vadd.f32 %v6275, %v6288
        %6290 = vdwg.mxu0
        %6291 = vmatpush.bf16.msra.mxu0 %v4473
        %6292 = vmatpush.bf16.msra.mxu0 %v4469
        %6293 = vmatpush.bf16.msra.mxu0 %v4465
        %6294 = vmatpush.bf16.msra.mxu0 %v4461
        %6295 = vmatpush.bf16.msra.mxu0 %v4457
        %6296 = vmatpush.bf16.msra.mxu0 %v4453
        %6297 = vmatpush.bf16.msra.mxu0 %v4449
        %6298 = vmatpush.bf16.msra.mxu0 %v4445
        %6299 = vmatmul.bf16.gmra.mxu0 %v1471
        %v6300 = vpop.f32.mrf.mxu0
        %v6301 = vadd.f32 %v6287, %v6300
        %v6302 = vpop.f32.mrf.mxu0
        %v6303 = vadd.f32 %v6289, %v6302
        %6304 = vdwg.mxu0
        %6305 = vmatpush.bf16.msra.mxu0 %v4505
        %6306 = vmatpush.bf16.msra.mxu0 %v4501
        %6307 = vmatpush.bf16.msra.mxu0 %v4497
        %6308 = vmatpush.bf16.msra.mxu0 %v4493
        %6309 = vmatpush.bf16.msra.mxu0 %v4489
        %6310 = vmatpush.bf16.msra.mxu0 %v4485
        %6311 = vmatpush.bf16.msra.mxu0 %v4481
        %6312 = vmatpush.bf16.msra.mxu0 %v4477
        %6313 = vmatmul.bf16.gmra.mxu0 %v1472
        %v6314 = vpop.f32.mrf.mxu0
        %v6315 = vadd.f32 %v6301, %v6314
        %v6316 = vpop.f32.mrf.mxu0
        %v6317 = vadd.f32 %v6303, %v6316
        %6318 = vdwg.mxu0
        %6319 = vmatpush.bf16.msra.mxu0 %v4537
        %6320 = vmatpush.bf16.msra.mxu0 %v4533
        %6321 = vmatpush.bf16.msra.mxu0 %v4529
        %6322 = vmatpush.bf16.msra.mxu0 %v4525
        %6323 = vmatpush.bf16.msra.mxu0 %v4521
        %6324 = vmatpush.bf16.msra.mxu0 %v4517
        %6325 = vmatpush.bf16.msra.mxu0 %v4513
        %6326 = vmatpush.bf16.msra.mxu0 %v4509
        %6327 = vmatmul.bf16.gmra.mxu0 %v1473
        %v6328 = vpop.f32.mrf.mxu0
        %v6329 = vadd.f32 %v6315, %v6328
        %v6330 = vpop.f32.mrf.mxu0
        %v6331 = vadd.f32 %v6317, %v6330
        %6332 = vdwg.mxu0
        %6333 = vmatpush.bf16.msra.mxu0 %v4569
        %6334 = vmatpush.bf16.msra.mxu0 %v4565
        %6335 = vmatpush.bf16.msra.mxu0 %v4561
        %6336 = vmatpush.bf16.msra.mxu0 %v4557
        %6337 = vmatpush.bf16.msra.mxu0 %v4553
        %6338 = vmatpush.bf16.msra.mxu0 %v4549
        %6339 = vmatpush.bf16.msra.mxu0 %v4545
        %6340 = vmatpush.bf16.msra.mxu0 %v4541
        %6341 = vmatmul.bf16.gmra.mxu0 %v1474
        %v6342 = vpop.f32.mrf.mxu0
        %v6343 = vadd.f32 %v6329, %v6342
        %v6344 = vpop.f32.mrf.mxu0
        %v6345 = vadd.f32 %v6331, %v6344
        %6346 = vdwg.mxu0
        %6347 = vmatpush.bf16.msra.mxu0 %v3834
        %6348 = vmatpush.bf16.msra.mxu0 %v3830
        %6349 = vmatpush.bf16.msra.mxu0 %v3826
        %6350 = vmatpush.bf16.msra.mxu0 %v3822
        %6351 = vmatpush.bf16.msra.mxu0 %v3818
        %6352 = vmatpush.bf16.msra.mxu0 %v3814
        %6353 = vmatpush.bf16.msra.mxu0 %v3810
        %6354 = vmatpush.bf16.msra.mxu0 %v3806
        %6355 = vmatmul.bf16.gmra.mxu0 %v1451
        %v6356 = vpop.f32.mrf.mxu0
        %v6357 = vadd.f32 %v1374, %v6356
        %v6358 = vpop.f32.mrf.mxu0
        %v6359 = vadd.f32 %v1374, %v6358
        %6360 = vdwg.mxu0
        %6361 = vmatpush.bf16.msra.mxu0 %v3866
        %6362 = vmatpush.bf16.msra.mxu0 %v3862
        %6363 = vmatpush.bf16.msra.mxu0 %v3858
        %6364 = vmatpush.bf16.msra.mxu0 %v3854
        %6365 = vmatpush.bf16.msra.mxu0 %v3850
        %6366 = vmatpush.bf16.msra.mxu0 %v3846
        %6367 = vmatpush.bf16.msra.mxu0 %v3842
        %6368 = vmatpush.bf16.msra.mxu0 %v3838
        %6369 = vmatmul.bf16.gmra.mxu0 %v1452
        %v6370 = vpop.f32.mrf.mxu0
        %v6371 = vadd.f32 %v6357, %v6370
        %v6372 = vpop.f32.mrf.mxu0
        %v6373 = vadd.f32 %v6359, %v6372
        %6374 = vdwg.mxu0
        %6375 = vmatpush.bf16.msra.mxu0 %v3898
        %6376 = vmatpush.bf16.msra.mxu0 %v3894
        %6377 = vmatpush.bf16.msra.mxu0 %v3890
        %6378 = vmatpush.bf16.msra.mxu0 %v3886
        %6379 = vmatpush.bf16.msra.mxu0 %v3882
        %6380 = vmatpush.bf16.msra.mxu0 %v3878
        %6381 = vmatpush.bf16.msra.mxu0 %v3874
        %6382 = vmatpush.bf16.msra.mxu0 %v3870
        %6383 = vmatmul.bf16.gmra.mxu0 %v1453
        %v6384 = vpop.f32.mrf.mxu0
        %v6385 = vadd.f32 %v6371, %v6384
        %v6386 = vpop.f32.mrf.mxu0
        %v6387 = vadd.f32 %v6373, %v6386
        %6388 = vdwg.mxu0
        %6389 = vmatpush.bf16.msra.mxu0 %v3930
        %6390 = vmatpush.bf16.msra.mxu0 %v3926
        %6391 = vmatpush.bf16.msra.mxu0 %v3922
        %6392 = vmatpush.bf16.msra.mxu0 %v3918
        %6393 = vmatpush.bf16.msra.mxu0 %v3914
        %6394 = vmatpush.bf16.msra.mxu0 %v3910
        %6395 = vmatpush.bf16.msra.mxu0 %v3906
        %6396 = vmatpush.bf16.msra.mxu0 %v3902
        %6397 = vmatmul.bf16.gmra.mxu0 %v1454
        %v6398 = vpop.f32.mrf.mxu0
        %v6399 = vadd.f32 %v6385, %v6398
        %v6400 = vpop.f32.mrf.mxu0
        %v6401 = vadd.f32 %v6387, %v6400
        %6402 = vdwg.mxu0
        %6403 = vmatpush.bf16.msra.mxu0 %v3962
        %6404 = vmatpush.bf16.msra.mxu0 %v3958
        %6405 = vmatpush.bf16.msra.mxu0 %v3954
        %6406 = vmatpush.bf16.msra.mxu0 %v3950
        %6407 = vmatpush.bf16.msra.mxu0 %v3946
        %6408 = vmatpush.bf16.msra.mxu0 %v3942
        %6409 = vmatpush.bf16.msra.mxu0 %v3938
        %6410 = vmatpush.bf16.msra.mxu0 %v3934
        %6411 = vmatmul.bf16.gmra.mxu0 %v1455
        %v6412 = vpop.f32.mrf.mxu0
        %v6413 = vadd.f32 %v6399, %v6412
        %v6414 = vpop.f32.mrf.mxu0
        %v6415 = vadd.f32 %v6401, %v6414
        %6416 = vdwg.mxu0
        %6417 = vmatpush.bf16.msra.mxu0 %v3994
        %6418 = vmatpush.bf16.msra.mxu0 %v3990
        %6419 = vmatpush.bf16.msra.mxu0 %v3986
        %6420 = vmatpush.bf16.msra.mxu0 %v3982
        %6421 = vmatpush.bf16.msra.mxu0 %v3978
        %6422 = vmatpush.bf16.msra.mxu0 %v3974
        %6423 = vmatpush.bf16.msra.mxu0 %v3970
        %6424 = vmatpush.bf16.msra.mxu0 %v3966
        %6425 = vmatmul.bf16.gmra.mxu0 %v1456
        %v6426 = vpop.f32.mrf.mxu0
        %v6427 = vadd.f32 %v6413, %v6426
        %v6428 = vpop.f32.mrf.mxu0
        %v6429 = vadd.f32 %v6415, %v6428
        %6430 = vdwg.mxu0
        %6431 = vmatpush.bf16.msra.mxu0 %v4026
        %6432 = vmatpush.bf16.msra.mxu0 %v4022
        %6433 = vmatpush.bf16.msra.mxu0 %v4018
        %6434 = vmatpush.bf16.msra.mxu0 %v4014
        %6435 = vmatpush.bf16.msra.mxu0 %v4010
        %6436 = vmatpush.bf16.msra.mxu0 %v4006
        %6437 = vmatpush.bf16.msra.mxu0 %v4002
        %6438 = vmatpush.bf16.msra.mxu0 %v3998
        %6439 = vmatmul.bf16.gmra.mxu0 %v1457
        %v6440 = vpop.f32.mrf.mxu0
        %v6441 = vadd.f32 %v6427, %v6440
        %v6442 = vpop.f32.mrf.mxu0
        %v6443 = vadd.f32 %v6429, %v6442
        %6444 = vdwg.mxu0
        %6445 = vmatpush.bf16.msra.mxu0 %v4058
        %6446 = vmatpush.bf16.msra.mxu0 %v4054
        %6447 = vmatpush.bf16.msra.mxu0 %v4050
        %6448 = vmatpush.bf16.msra.mxu0 %v4046
        %6449 = vmatpush.bf16.msra.mxu0 %v4042
        %6450 = vmatpush.bf16.msra.mxu0 %v4038
        %6451 = vmatpush.bf16.msra.mxu0 %v4034
        %6452 = vmatpush.bf16.msra.mxu0 %v4030
        %6453 = vmatmul.bf16.gmra.mxu0 %v1458
        %v6454 = vpop.f32.mrf.mxu0
        %v6455 = vadd.f32 %v6441, %v6454
        %v6456 = vpop.f32.mrf.mxu0
        %v6457 = vadd.f32 %v6443, %v6456
        %6458 = vdwg.mxu0
        %6459 = vmatpush.bf16.msra.mxu0 %v4090
        %6460 = vmatpush.bf16.msra.mxu0 %v4086
        %6461 = vmatpush.bf16.msra.mxu0 %v4082
        %6462 = vmatpush.bf16.msra.mxu0 %v4078
        %6463 = vmatpush.bf16.msra.mxu0 %v4074
        %6464 = vmatpush.bf16.msra.mxu0 %v4070
        %6465 = vmatpush.bf16.msra.mxu0 %v4066
        %6466 = vmatpush.bf16.msra.mxu0 %v4062
        %6467 = vmatmul.bf16.gmra.mxu0 %v1459
        %v6468 = vpop.f32.mrf.mxu0
        %v6469 = vadd.f32 %v6455, %v6468
        %v6470 = vpop.f32.mrf.mxu0
        %v6471 = vadd.f32 %v6457, %v6470
        %6472 = vdwg.mxu0
        %6473 = vmatpush.bf16.msra.mxu0 %v4122
        %6474 = vmatpush.bf16.msra.mxu0 %v4118
        %6475 = vmatpush.bf16.msra.mxu0 %v4114
        %6476 = vmatpush.bf16.msra.mxu0 %v4110
        %6477 = vmatpush.bf16.msra.mxu0 %v4106
        %6478 = vmatpush.bf16.msra.mxu0 %v4102
        %6479 = vmatpush.bf16.msra.mxu0 %v4098
        %6480 = vmatpush.bf16.msra.mxu0 %v4094
        %6481 = vmatmul.bf16.gmra.mxu0 %v1460
        %v6482 = vpop.f32.mrf.mxu0
        %v6483 = vadd.f32 %v6469, %v6482
        %v6484 = vpop.f32.mrf.mxu0
        %v6485 = vadd.f32 %v6471, %v6484
        %6486 = vdwg.mxu0
        %6487 = vmatpush.bf16.msra.mxu0 %v4154
        %6488 = vmatpush.bf16.msra.mxu0 %v4150
        %6489 = vmatpush.bf16.msra.mxu0 %v4146
        %6490 = vmatpush.bf16.msra.mxu0 %v4142
        %6491 = vmatpush.bf16.msra.mxu0 %v4138
        %6492 = vmatpush.bf16.msra.mxu0 %v4134
        %6493 = vmatpush.bf16.msra.mxu0 %v4130
        %6494 = vmatpush.bf16.msra.mxu0 %v4126
        %6495 = vmatmul.bf16.gmra.mxu0 %v1461
        %v6496 = vpop.f32.mrf.mxu0
        %v6497 = vadd.f32 %v6483, %v6496
        %v6498 = vpop.f32.mrf.mxu0
        %v6499 = vadd.f32 %v6485, %v6498
        %6500 = vdwg.mxu0
        %6501 = vmatpush.bf16.msra.mxu0 %v4186
        %6502 = vmatpush.bf16.msra.mxu0 %v4182
        %6503 = vmatpush.bf16.msra.mxu0 %v4178
        %6504 = vmatpush.bf16.msra.mxu0 %v4174
        %6505 = vmatpush.bf16.msra.mxu0 %v4170
        %6506 = vmatpush.bf16.msra.mxu0 %v4166
        %6507 = vmatpush.bf16.msra.mxu0 %v4162
        %6508 = vmatpush.bf16.msra.mxu0 %v4158
        %6509 = vmatmul.bf16.gmra.mxu0 %v1462
        %v6510 = vpop.f32.mrf.mxu0
        %v6511 = vadd.f32 %v6497, %v6510
        %v6512 = vpop.f32.mrf.mxu0
        %v6513 = vadd.f32 %v6499, %v6512
        %6514 = vdwg.mxu0
        %6515 = vmatpush.bf16.msra.mxu0 %v4218
        %6516 = vmatpush.bf16.msra.mxu0 %v4214
        %6517 = vmatpush.bf16.msra.mxu0 %v4210
        %6518 = vmatpush.bf16.msra.mxu0 %v4206
        %6519 = vmatpush.bf16.msra.mxu0 %v4202
        %6520 = vmatpush.bf16.msra.mxu0 %v4198
        %6521 = vmatpush.bf16.msra.mxu0 %v4194
        %6522 = vmatpush.bf16.msra.mxu0 %v4190
        %6523 = vmatmul.bf16.gmra.mxu0 %v1463
        %v6524 = vpop.f32.mrf.mxu0
        %v6525 = vadd.f32 %v6511, %v6524
        %v6526 = vpop.f32.mrf.mxu0
        %v6527 = vadd.f32 %v6513, %v6526
        %6528 = vdwg.mxu0
        %6529 = vmatpush.bf16.msra.mxu0 %v4250
        %6530 = vmatpush.bf16.msra.mxu0 %v4246
        %6531 = vmatpush.bf16.msra.mxu0 %v4242
        %6532 = vmatpush.bf16.msra.mxu0 %v4238
        %6533 = vmatpush.bf16.msra.mxu0 %v4234
        %6534 = vmatpush.bf16.msra.mxu0 %v4230
        %6535 = vmatpush.bf16.msra.mxu0 %v4226
        %6536 = vmatpush.bf16.msra.mxu0 %v4222
        %6537 = vmatmul.bf16.gmra.mxu0 %v1464
        %v6538 = vpop.f32.mrf.mxu0
        %v6539 = vadd.f32 %v6525, %v6538
        %v6540 = vpop.f32.mrf.mxu0
        %v6541 = vadd.f32 %v6527, %v6540
        %6542 = vdwg.mxu0
        %6543 = vmatpush.bf16.msra.mxu0 %v4282
        %6544 = vmatpush.bf16.msra.mxu0 %v4278
        %6545 = vmatpush.bf16.msra.mxu0 %v4274
        %6546 = vmatpush.bf16.msra.mxu0 %v4270
        %6547 = vmatpush.bf16.msra.mxu0 %v4266
        %6548 = vmatpush.bf16.msra.mxu0 %v4262
        %6549 = vmatpush.bf16.msra.mxu0 %v4258
        %6550 = vmatpush.bf16.msra.mxu0 %v4254
        %6551 = vmatmul.bf16.gmra.mxu0 %v1465
        %v6552 = vpop.f32.mrf.mxu0
        %v6553 = vadd.f32 %v6539, %v6552
        %v6554 = vpop.f32.mrf.mxu0
        %v6555 = vadd.f32 %v6541, %v6554
        %6556 = vdwg.mxu0
        %6557 = vmatpush.bf16.msra.mxu0 %v4314
        %6558 = vmatpush.bf16.msra.mxu0 %v4310
        %6559 = vmatpush.bf16.msra.mxu0 %v4306
        %6560 = vmatpush.bf16.msra.mxu0 %v4302
        %6561 = vmatpush.bf16.msra.mxu0 %v4298
        %6562 = vmatpush.bf16.msra.mxu0 %v4294
        %6563 = vmatpush.bf16.msra.mxu0 %v4290
        %6564 = vmatpush.bf16.msra.mxu0 %v4286
        %6565 = vmatmul.bf16.gmra.mxu0 %v1466
        %v6566 = vpop.f32.mrf.mxu0
        %v6567 = vadd.f32 %v6553, %v6566
        %v6568 = vpop.f32.mrf.mxu0
        %v6569 = vadd.f32 %v6555, %v6568
        %6570 = vdwg.mxu0
        %6571 = vmatpush.bf16.msra.mxu0 %v4346
        %6572 = vmatpush.bf16.msra.mxu0 %v4342
        %6573 = vmatpush.bf16.msra.mxu0 %v4338
        %6574 = vmatpush.bf16.msra.mxu0 %v4334
        %6575 = vmatpush.bf16.msra.mxu0 %v4330
        %6576 = vmatpush.bf16.msra.mxu0 %v4326
        %6577 = vmatpush.bf16.msra.mxu0 %v4322
        %6578 = vmatpush.bf16.msra.mxu0 %v4318
        %6579 = vmatmul.bf16.gmra.mxu0 %v1467
        %v6580 = vpop.f32.mrf.mxu0
        %v6581 = vadd.f32 %v6567, %v6580
        %v6582 = vpop.f32.mrf.mxu0
        %v6583 = vadd.f32 %v6569, %v6582
        %6584 = vdwg.mxu0
        %6585 = vmatpush.bf16.msra.mxu0 %v4378
        %6586 = vmatpush.bf16.msra.mxu0 %v4374
        %6587 = vmatpush.bf16.msra.mxu0 %v4370
        %6588 = vmatpush.bf16.msra.mxu0 %v4366
        %6589 = vmatpush.bf16.msra.mxu0 %v4362
        %6590 = vmatpush.bf16.msra.mxu0 %v4358
        %6591 = vmatpush.bf16.msra.mxu0 %v4354
        %6592 = vmatpush.bf16.msra.mxu0 %v4350
        %6593 = vmatmul.bf16.gmra.mxu0 %v1468
        %v6594 = vpop.f32.mrf.mxu0
        %v6595 = vadd.f32 %v6581, %v6594
        %v6596 = vpop.f32.mrf.mxu0
        %v6597 = vadd.f32 %v6583, %v6596
        %6598 = vdwg.mxu0
        %6599 = vmatpush.bf16.msra.mxu0 %v4410
        %6600 = vmatpush.bf16.msra.mxu0 %v4406
        %6601 = vmatpush.bf16.msra.mxu0 %v4402
        %6602 = vmatpush.bf16.msra.mxu0 %v4398
        %6603 = vmatpush.bf16.msra.mxu0 %v4394
        %6604 = vmatpush.bf16.msra.mxu0 %v4390
        %6605 = vmatpush.bf16.msra.mxu0 %v4386
        %6606 = vmatpush.bf16.msra.mxu0 %v4382
        %6607 = vmatmul.bf16.gmra.mxu0 %v1469
        %v6608 = vpop.f32.mrf.mxu0
        %v6609 = vadd.f32 %v6595, %v6608
        %v6610 = vpop.f32.mrf.mxu0
        %v6611 = vadd.f32 %v6597, %v6610
        %6612 = vdwg.mxu0
        %6613 = vmatpush.bf16.msra.mxu0 %v4442
        %6614 = vmatpush.bf16.msra.mxu0 %v4438
        %6615 = vmatpush.bf16.msra.mxu0 %v4434
        %6616 = vmatpush.bf16.msra.mxu0 %v4430
        %6617 = vmatpush.bf16.msra.mxu0 %v4426
        %6618 = vmatpush.bf16.msra.mxu0 %v4422
        %6619 = vmatpush.bf16.msra.mxu0 %v4418
        %6620 = vmatpush.bf16.msra.mxu0 %v4414
        %6621 = vmatmul.bf16.gmra.mxu0 %v1470
        %v6622 = vpop.f32.mrf.mxu0
        %v6623 = vadd.f32 %v6609, %v6622
        %v6624 = vpop.f32.mrf.mxu0
        %v6625 = vadd.f32 %v6611, %v6624
        %6626 = vdwg.mxu0
        %6627 = vmatpush.bf16.msra.mxu0 %v4474
        %6628 = vmatpush.bf16.msra.mxu0 %v4470
        %6629 = vmatpush.bf16.msra.mxu0 %v4466
        %6630 = vmatpush.bf16.msra.mxu0 %v4462
        %6631 = vmatpush.bf16.msra.mxu0 %v4458
        %6632 = vmatpush.bf16.msra.mxu0 %v4454
        %6633 = vmatpush.bf16.msra.mxu0 %v4450
        %6634 = vmatpush.bf16.msra.mxu0 %v4446
        %6635 = vmatmul.bf16.gmra.mxu0 %v1471
        %v6636 = vpop.f32.mrf.mxu0
        %v6637 = vadd.f32 %v6623, %v6636
        %v6638 = vpop.f32.mrf.mxu0
        %v6639 = vadd.f32 %v6625, %v6638
        %6640 = vdwg.mxu0
        %6641 = vmatpush.bf16.msra.mxu0 %v4506
        %6642 = vmatpush.bf16.msra.mxu0 %v4502
        %6643 = vmatpush.bf16.msra.mxu0 %v4498
        %6644 = vmatpush.bf16.msra.mxu0 %v4494
        %6645 = vmatpush.bf16.msra.mxu0 %v4490
        %6646 = vmatpush.bf16.msra.mxu0 %v4486
        %6647 = vmatpush.bf16.msra.mxu0 %v4482
        %6648 = vmatpush.bf16.msra.mxu0 %v4478
        %6649 = vmatmul.bf16.gmra.mxu0 %v1472
        %v6650 = vpop.f32.mrf.mxu0
        %v6651 = vadd.f32 %v6637, %v6650
        %v6652 = vpop.f32.mrf.mxu0
        %v6653 = vadd.f32 %v6639, %v6652
        %6654 = vdwg.mxu0
        %6655 = vmatpush.bf16.msra.mxu0 %v4538
        %6656 = vmatpush.bf16.msra.mxu0 %v4534
        %6657 = vmatpush.bf16.msra.mxu0 %v4530
        %6658 = vmatpush.bf16.msra.mxu0 %v4526
        %6659 = vmatpush.bf16.msra.mxu0 %v4522
        %6660 = vmatpush.bf16.msra.mxu0 %v4518
        %6661 = vmatpush.bf16.msra.mxu0 %v4514
        %6662 = vmatpush.bf16.msra.mxu0 %v4510
        %6663 = vmatmul.bf16.gmra.mxu0 %v1473
        %v6664 = vpop.f32.mrf.mxu0
        %v6665 = vadd.f32 %v6651, %v6664
        %v6666 = vpop.f32.mrf.mxu0
        %v6667 = vadd.f32 %v6653, %v6666
        %6668 = vdwg.mxu0
        %6669 = vmatpush.bf16.msra.mxu0 %v4570
        %6670 = vmatpush.bf16.msra.mxu0 %v4566
        %6671 = vmatpush.bf16.msra.mxu0 %v4562
        %6672 = vmatpush.bf16.msra.mxu0 %v4558
        %6673 = vmatpush.bf16.msra.mxu0 %v4554
        %6674 = vmatpush.bf16.msra.mxu0 %v4550
        %6675 = vmatpush.bf16.msra.mxu0 %v4546
        %6676 = vmatpush.bf16.msra.mxu0 %v4542
        %6677 = vmatmul.bf16.gmra.mxu0 %v1474
        %v6678 = vpop.f32.mrf.mxu0
        %v6679 = vadd.f32 %v6665, %v6678
        %v6680 = vpop.f32.mrf.mxu0
        %v6681 = vadd.f32 %v6667, %v6680
        %6682 = vdwg.mxu0
        %v6683 = vmax.f32 %v5671, 0.0
        %v6684 = vmax.f32 %v6007, 0.0
        %v6685 = vmax.f32 %v6343, 0.0
        %v6686 = vmax.f32 %v6679, 0.0
        %v6687 = vmax.f32 %v5673, 0.0
        %v6688 = vmax.f32 %v6009, 0.0
        %v6689 = vmax.f32 %v6345, 0.0
        %v6690 = vmax.f32 %v6681, 0.0
        %v6691 = vld [vmem:[#allocation2] sm:$0xff]
        %v6692 = vld [vmem:[#allocation2 + $0x8] sm:$0xff]
        %v6693 = vld [vmem:[#allocation2 + $0x10] sm:$0xff]
        %v6694 = vld [vmem:[#allocation2 + $0x18] sm:$0xff]
        %v6695 = vld [vmem:[#allocation2 + $0x20] sm:$0xff]
        %v6696 = vld [vmem:[#allocation2 + $0x28] sm:$0xff]
        %v6697 = vld [vmem:[#allocation2 + $0x30] sm:$0xff]
        %v6698 = vld [vmem:[#allocation2 + $0x38] sm:$0xff]
        %v6699 = vld [vmem:[#allocation2 + $0x40] sm:$0xff]
        %v6700 = vld [vmem:[#allocation2 + $0x48] sm:$0xff]
        %v6701 = vld [vmem:[#allocation2 + $0x50] sm:$0xff]
        %v6702 = vld [vmem:[#allocation2 + $0x58] sm:$0xff]
        %v6703 = vld [vmem:[#allocation2 + $0x60] sm:$0xff]
        %v6704 = vld [vmem:[#allocation2 + $0x68] sm:$0xff]
        %v6705 = vld [vmem:[#allocation2 + $0x70] sm:$0xff]
        %v6706 = vld [vmem:[#allocation2 + $0x78] sm:$0xff]
        %v6707 = vpack.c.bf16 %v6687, %v6683
        %v6708 = vpack.c.bf16 %v6688, %v6684
        %v6709 = vpack.c.bf16 %v6689, %v6685
        %v6710 = vpack.c.bf16 %v6690, %v6686
        %v6711 = vld [vmem:[%s482] sm:$0xff]
        %v6712 = vld [vmem:[%s482 + $0x8] sm:$0xff]
        %v6713 = vld [vmem:[%s482 + $0x10] sm:$0xff]
        %v6714 = vld [vmem:[%s482 + $0x18] sm:$0xff]
        %v6715 = vld [vmem:[%s482 + $0x20] sm:$0xff]
        %v6716 = vld [vmem:[%s482 + $0x28] sm:$0xff]
        %v6717 = vld [vmem:[%s482 + $0x30] sm:$0xff]
        %v6718 = vld [vmem:[%s482 + $0x38] sm:$0xff]
        %v6719 = vld [vmem:[%s482 + $0x40] sm:$0xff]
        %v6720 = vld [vmem:[%s482 + $0x48] sm:$0xff]
        %v6721 = vld [vmem:[%s482 + $0x50] sm:$0xff]
        %v6722 = vld [vmem:[%s482 + $0x58] sm:$0xff]
        %v6723 = vld [vmem:[%s482 + $0x60] sm:$0xff]
        %v6724 = vld [vmem:[%s482 + $0x68] sm:$0xff]
        %v6725 = vld [vmem:[%s482 + $0x70] sm:$0xff]
        %v6726 = vld [vmem:[%s482 + $0x78] sm:$0xff]
        %v6727 = vld [vmem:[%s482 + $0x80] sm:$0xff]
        %v6728 = vld [vmem:[%s482 + $0x88] sm:$0xff]
        %v6729 = vld [vmem:[%s482 + $0x90] sm:$0xff]
        %v6730 = vld [vmem:[%s482 + $0x98] sm:$0xff]
        %v6731 = vld [vmem:[%s482 + $0xa0] sm:$0xff]
        %v6732 = vld [vmem:[%s482 + $0xa8] sm:$0xff]
        %v6733 = vld [vmem:[%s482 + $0xb0] sm:$0xff]
        %v6734 = vld [vmem:[%s482 + $0xb8] sm:$0xff]
        %v6735 = vld [vmem:[%s482 + $0xc0] sm:$0xff]
        %v6736 = vld [vmem:[%s482 + $0xc8] sm:$0xff]
        %v6737 = vld [vmem:[%s482 + $0xd0] sm:$0xff]
        %v6738 = vld [vmem:[%s482 + $0xd8] sm:$0xff]
        %v6739 = vld [vmem:[%s482 + $0xe0] sm:$0xff]
        %v6740 = vld [vmem:[%s482 + $0xe8] sm:$0xff]
        %v6741 = vld [vmem:[%s482 + $0xf0] sm:$0xff]
        %v6742 = vld [vmem:[%s482 + $0xf8] sm:$0xff]
        %v6743 = vld [vmem:[%s482 + $0x100] sm:$0xff]
        %v6744 = vld [vmem:[%s482 + $0x108] sm:$0xff]
        %v6745 = vld [vmem:[%s482 + $0x110] sm:$0xff]
        %v6746 = vld [vmem:[%s482 + $0x118] sm:$0xff]
        %v6747 = vld [vmem:[%s482 + $0x120] sm:$0xff]
        %v6748 = vld [vmem:[%s482 + $0x128] sm:$0xff]
        %v6749 = vld [vmem:[%s482 + $0x130] sm:$0xff]
        %v6750 = vld [vmem:[%s482 + $0x138] sm:$0xff]
        %v6751 = vld [vmem:[%s482 + $0x140] sm:$0xff]
        %v6752 = vld [vmem:[%s482 + $0x148] sm:$0xff]
        %v6753 = vld [vmem:[%s482 + $0x150] sm:$0xff]
        %v6754 = vld [vmem:[%s482 + $0x158] sm:$0xff]
        %v6755 = vld [vmem:[%s482 + $0x160] sm:$0xff]
        %v6756 = vld [vmem:[%s482 + $0x168] sm:$0xff]
        %v6757 = vld [vmem:[%s482 + $0x170] sm:$0xff]
        %v6758 = vld [vmem:[%s482 + $0x178] sm:$0xff]
        %v6759 = vld [vmem:[%s482 + $0x180] sm:$0xff]
        %v6760 = vld [vmem:[%s482 + $0x188] sm:$0xff]
        %v6761 = vld [vmem:[%s482 + $0x190] sm:$0xff]
        %v6762 = vld [vmem:[%s482 + $0x198] sm:$0xff]
        %v6763 = vld [vmem:[%s482 + $0x1a0] sm:$0xff]
        %v6764 = vld [vmem:[%s482 + $0x1a8] sm:$0xff]
        %v6765 = vld [vmem:[%s482 + $0x1b0] sm:$0xff]
        %v6766 = vld [vmem:[%s482 + $0x1b8] sm:$0xff]
        %v6767 = vld [vmem:[%s482 + $0x1c0] sm:$0xff]
        %v6768 = vld [vmem:[%s482 + $0x1c8] sm:$0xff]
        %v6769 = vld [vmem:[%s482 + $0x1d0] sm:$0xff]
        %v6770 = vld [vmem:[%s482 + $0x1d8] sm:$0xff]
        %v6771 = vld [vmem:[%s482 + $0x1e0] sm:$0xff]
        %v6772 = vld [vmem:[%s482 + $0x1e8] sm:$0xff]
        %v6773 = vld [vmem:[%s482 + $0x1f0] sm:$0xff]
        %v6774 = vld [vmem:[%s482 + $0x1f8] sm:$0xff]
        %v6775 = vld [vmem:[%s482 + $0x200] sm:$0xff]
        %v6776 = vld [vmem:[%s482 + $0x208] sm:$0xff]
        %v6777 = vld [vmem:[%s482 + $0x210] sm:$0xff]
        %v6778 = vld [vmem:[%s482 + $0x218] sm:$0xff]
        %v6779 = vld [vmem:[%s482 + $0x220] sm:$0xff]
        %v6780 = vld [vmem:[%s482 + $0x228] sm:$0xff]
        %v6781 = vld [vmem:[%s482 + $0x230] sm:$0xff]
        %v6782 = vld [vmem:[%s482 + $0x238] sm:$0xff]
        %v6783 = vld [vmem:[%s482 + $0x240] sm:$0xff]
        %v6784 = vld [vmem:[%s482 + $0x248] sm:$0xff]
        %v6785 = vld [vmem:[%s482 + $0x250] sm:$0xff]
        %v6786 = vld [vmem:[%s482 + $0x258] sm:$0xff]
        %v6787 = vld [vmem:[%s482 + $0x260] sm:$0xff]
        %v6788 = vld [vmem:[%s482 + $0x268] sm:$0xff]
        %v6789 = vld [vmem:[%s482 + $0x270] sm:$0xff]
        %v6790 = vld [vmem:[%s482 + $0x278] sm:$0xff]
        %v6791 = vld [vmem:[%s482 + $0x280] sm:$0xff]
        %v6792 = vld [vmem:[%s482 + $0x288] sm:$0xff]
        %v6793 = vld [vmem:[%s482 + $0x290] sm:$0xff]
        %v6794 = vld [vmem:[%s482 + $0x298] sm:$0xff]
        %v6795 = vld [vmem:[%s482 + $0x2a0] sm:$0xff]
        %v6796 = vld [vmem:[%s482 + $0x2a8] sm:$0xff]
        %v6797 = vld [vmem:[%s482 + $0x2b0] sm:$0xff]
        %v6798 = vld [vmem:[%s482 + $0x2b8] sm:$0xff]
        %v6799 = vld [vmem:[%s482 + $0x2c0] sm:$0xff]
        %v6800 = vld [vmem:[%s482 + $0x2c8] sm:$0xff]
        %v6801 = vld [vmem:[%s482 + $0x2d0] sm:$0xff]
        %v6802 = vld [vmem:[%s482 + $0x2d8] sm:$0xff]
        %v6803 = vld [vmem:[%s482 + $0x2e0] sm:$0xff]
        %v6804 = vld [vmem:[%s482 + $0x2e8] sm:$0xff]
        %v6805 = vld [vmem:[%s482 + $0x2f0] sm:$0xff]
        %v6806 = vld [vmem:[%s482 + $0x2f8] sm:$0xff]
        %v6807 = vld [vmem:[%s482 + $0x300] sm:$0xff]
        %v6808 = vld [vmem:[%s482 + $0x308] sm:$0xff]
        %v6809 = vld [vmem:[%s482 + $0x310] sm:$0xff]
        %v6810 = vld [vmem:[%s482 + $0x318] sm:$0xff]
        %v6811 = vld [vmem:[%s482 + $0x320] sm:$0xff]
        %v6812 = vld [vmem:[%s482 + $0x328] sm:$0xff]
        %v6813 = vld [vmem:[%s482 + $0x330] sm:$0xff]
        %v6814 = vld [vmem:[%s482 + $0x338] sm:$0xff]
        %v6815 = vld [vmem:[%s482 + $0x340] sm:$0xff]
        %v6816 = vld [vmem:[%s482 + $0x348] sm:$0xff]
        %v6817 = vld [vmem:[%s482 + $0x350] sm:$0xff]
        %v6818 = vld [vmem:[%s482 + $0x358] sm:$0xff]
        %v6819 = vld [vmem:[%s482 + $0x360] sm:$0xff]
        %v6820 = vld [vmem:[%s482 + $0x368] sm:$0xff]
        %v6821 = vld [vmem:[%s482 + $0x370] sm:$0xff]
        %v6822 = vld [vmem:[%s482 + $0x378] sm:$0xff]
        %v6823 = vld [vmem:[%s482 + $0x380] sm:$0xff]
        %v6824 = vld [vmem:[%s482 + $0x388] sm:$0xff]
        %v6825 = vld [vmem:[%s482 + $0x390] sm:$0xff]
        %v6826 = vld [vmem:[%s482 + $0x398] sm:$0xff]
        %v6827 = vld [vmem:[%s482 + $0x3a0] sm:$0xff]
        %v6828 = vld [vmem:[%s482 + $0x3a8] sm:$0xff]
        %v6829 = vld [vmem:[%s482 + $0x3b0] sm:$0xff]
        %v6830 = vld [vmem:[%s482 + $0x3b8] sm:$0xff]
        %v6831 = vld [vmem:[%s482 + $0x3c0] sm:$0xff]
        %v6832 = vld [vmem:[%s482 + $0x3c8] sm:$0xff]
        %v6833 = vld [vmem:[%s482 + $0x3d0] sm:$0xff]
        %v6834 = vld [vmem:[%s482 + $0x3d8] sm:$0xff]
        %v6835 = vld [vmem:[%s482 + $0x3e0] sm:$0xff]
        %v6836 = vld [vmem:[%s482 + $0x3e8] sm:$0xff]
        %v6837 = vld [vmem:[%s482 + $0x3f0] sm:$0xff]
        %v6838 = vld [vmem:[%s482 + $0x3f8] sm:$0xff]
        %v6839 = vld [vmem:[%s482 + $0x400] sm:$0xff]
        %v6840 = vld [vmem:[%s482 + $0x408] sm:$0xff]
        %v6841 = vld [vmem:[%s482 + $0x410] sm:$0xff]
        %v6842 = vld [vmem:[%s482 + $0x418] sm:$0xff]
        %v6843 = vld [vmem:[%s482 + $0x420] sm:$0xff]
        %v6844 = vld [vmem:[%s482 + $0x428] sm:$0xff]
        %v6845 = vld [vmem:[%s482 + $0x430] sm:$0xff]
        %v6846 = vld [vmem:[%s482 + $0x438] sm:$0xff]
        %v6847 = vld [vmem:[%s482 + $0x440] sm:$0xff]
        %v6848 = vld [vmem:[%s482 + $0x448] sm:$0xff]
        %v6849 = vld [vmem:[%s482 + $0x450] sm:$0xff]
        %v6850 = vld [vmem:[%s482 + $0x458] sm:$0xff]
        %v6851 = vld [vmem:[%s482 + $0x460] sm:$0xff]
        %v6852 = vld [vmem:[%s482 + $0x468] sm:$0xff]
        %v6853 = vld [vmem:[%s482 + $0x470] sm:$0xff]
        %v6854 = vld [vmem:[%s482 + $0x478] sm:$0xff]
        %v6855 = vld [vmem:[%s482 + $0x480] sm:$0xff]
        %v6856 = vld [vmem:[%s482 + $0x488] sm:$0xff]
        %v6857 = vld [vmem:[%s482 + $0x490] sm:$0xff]
        %v6858 = vld [vmem:[%s482 + $0x498] sm:$0xff]
        %v6859 = vld [vmem:[%s482 + $0x4a0] sm:$0xff]
        %v6860 = vld [vmem:[%s482 + $0x4a8] sm:$0xff]
        %v6861 = vld [vmem:[%s482 + $0x4b0] sm:$0xff]
        %v6862 = vld [vmem:[%s482 + $0x4b8] sm:$0xff]
        %v6863 = vld [vmem:[%s482 + $0x4c0] sm:$0xff]
        %v6864 = vld [vmem:[%s482 + $0x4c8] sm:$0xff]
        %v6865 = vld [vmem:[%s482 + $0x4d0] sm:$0xff]
        %v6866 = vld [vmem:[%s482 + $0x4d8] sm:$0xff]
        %v6867 = vld [vmem:[%s482 + $0x4e0] sm:$0xff]
        %v6868 = vld [vmem:[%s482 + $0x4e8] sm:$0xff]
        %v6869 = vld [vmem:[%s482 + $0x4f0] sm:$0xff]
        %v6870 = vld [vmem:[%s482 + $0x4f8] sm:$0xff]
        %v6871 = vld [vmem:[%s482 + $0x500] sm:$0xff]
        %v6872 = vld [vmem:[%s482 + $0x508] sm:$0xff]
        %v6873 = vld [vmem:[%s482 + $0x510] sm:$0xff]
        %v6874 = vld [vmem:[%s482 + $0x518] sm:$0xff]
        %v6875 = vld [vmem:[%s482 + $0x520] sm:$0xff]
        %v6876 = vld [vmem:[%s482 + $0x528] sm:$0xff]
        %v6877 = vld [vmem:[%s482 + $0x530] sm:$0xff]
        %v6878 = vld [vmem:[%s482 + $0x538] sm:$0xff]
        %v6879 = vld [vmem:[%s482 + $0x540] sm:$0xff]
        %v6880 = vld [vmem:[%s482 + $0x548] sm:$0xff]
        %v6881 = vld [vmem:[%s482 + $0x550] sm:$0xff]
        %v6882 = vld [vmem:[%s482 + $0x558] sm:$0xff]
        %v6883 = vld [vmem:[%s482 + $0x560] sm:$0xff]
        %v6884 = vld [vmem:[%s482 + $0x568] sm:$0xff]
        %v6885 = vld [vmem:[%s482 + $0x570] sm:$0xff]
        %v6886 = vld [vmem:[%s482 + $0x578] sm:$0xff]
        %v6887 = vld [vmem:[%s482 + $0x580] sm:$0xff]
        %v6888 = vld [vmem:[%s482 + $0x588] sm:$0xff]
        %v6889 = vld [vmem:[%s482 + $0x590] sm:$0xff]
        %v6890 = vld [vmem:[%s482 + $0x598] sm:$0xff]
        %v6891 = vld [vmem:[%s482 + $0x5a0] sm:$0xff]
        %v6892 = vld [vmem:[%s482 + $0x5a8] sm:$0xff]
        %v6893 = vld [vmem:[%s482 + $0x5b0] sm:$0xff]
        %v6894 = vld [vmem:[%s482 + $0x5b8] sm:$0xff]
        %v6895 = vld [vmem:[%s482 + $0x5c0] sm:$0xff]
        %v6896 = vld [vmem:[%s482 + $0x5c8] sm:$0xff]
        %v6897 = vld [vmem:[%s482 + $0x5d0] sm:$0xff]
        %v6898 = vld [vmem:[%s482 + $0x5d8] sm:$0xff]
        %v6899 = vld [vmem:[%s482 + $0x5e0] sm:$0xff]
        %v6900 = vld [vmem:[%s482 + $0x5e8] sm:$0xff]
        %v6901 = vld [vmem:[%s482 + $0x5f0] sm:$0xff]
        %v6902 = vld [vmem:[%s482 + $0x5f8] sm:$0xff]
        %v6903 = vld [vmem:[%s482 + $0x600] sm:$0xff]
        %v6904 = vld [vmem:[%s482 + $0x608] sm:$0xff]
        %v6905 = vld [vmem:[%s482 + $0x610] sm:$0xff]
        %v6906 = vld [vmem:[%s482 + $0x618] sm:$0xff]
        %v6907 = vld [vmem:[%s482 + $0x620] sm:$0xff]
        %v6908 = vld [vmem:[%s482 + $0x628] sm:$0xff]
        %v6909 = vld [vmem:[%s482 + $0x630] sm:$0xff]
        %v6910 = vld [vmem:[%s482 + $0x638] sm:$0xff]
        %v6911 = vld [vmem:[%s482 + $0x640] sm:$0xff]
        %v6912 = vld [vmem:[%s482 + $0x648] sm:$0xff]
        %v6913 = vld [vmem:[%s482 + $0x650] sm:$0xff]
        %v6914 = vld [vmem:[%s482 + $0x658] sm:$0xff]
        %v6915 = vld [vmem:[%s482 + $0x660] sm:$0xff]
        %v6916 = vld [vmem:[%s482 + $0x668] sm:$0xff]
        %v6917 = vld [vmem:[%s482 + $0x670] sm:$0xff]
        %v6918 = vld [vmem:[%s482 + $0x678] sm:$0xff]
        %v6919 = vld [vmem:[%s482 + $0x680] sm:$0xff]
        %v6920 = vld [vmem:[%s482 + $0x688] sm:$0xff]
        %v6921 = vld [vmem:[%s482 + $0x690] sm:$0xff]
        %v6922 = vld [vmem:[%s482 + $0x698] sm:$0xff]
        %v6923 = vld [vmem:[%s482 + $0x6a0] sm:$0xff]
        %v6924 = vld [vmem:[%s482 + $0x6a8] sm:$0xff]
        %v6925 = vld [vmem:[%s482 + $0x6b0] sm:$0xff]
        %v6926 = vld [vmem:[%s482 + $0x6b8] sm:$0xff]
        %v6927 = vld [vmem:[%s482 + $0x6c0] sm:$0xff]
        %v6928 = vld [vmem:[%s482 + $0x6c8] sm:$0xff]
        %v6929 = vld [vmem:[%s482 + $0x6d0] sm:$0xff]
        %v6930 = vld [vmem:[%s482 + $0x6d8] sm:$0xff]
        %v6931 = vld [vmem:[%s482 + $0x6e0] sm:$0xff]
        %v6932 = vld [vmem:[%s482 + $0x6e8] sm:$0xff]
        %v6933 = vld [vmem:[%s482 + $0x6f0] sm:$0xff]
        %v6934 = vld [vmem:[%s482 + $0x6f8] sm:$0xff]
        %v6935 = vld [vmem:[%s482 + $0x700] sm:$0xff]
        %v6936 = vld [vmem:[%s482 + $0x708] sm:$0xff]
        %v6937 = vld [vmem:[%s482 + $0x710] sm:$0xff]
        %v6938 = vld [vmem:[%s482 + $0x718] sm:$0xff]
        %v6939 = vld [vmem:[%s482 + $0x720] sm:$0xff]
        %v6940 = vld [vmem:[%s482 + $0x728] sm:$0xff]
        %v6941 = vld [vmem:[%s482 + $0x730] sm:$0xff]
        %v6942 = vld [vmem:[%s482 + $0x738] sm:$0xff]
        %v6943 = vld [vmem:[%s482 + $0x740] sm:$0xff]
        %v6944 = vld [vmem:[%s482 + $0x748] sm:$0xff]
        %v6945 = vld [vmem:[%s482 + $0x750] sm:$0xff]
        %v6946 = vld [vmem:[%s482 + $0x758] sm:$0xff]
        %v6947 = vld [vmem:[%s482 + $0x760] sm:$0xff]
        %v6948 = vld [vmem:[%s482 + $0x768] sm:$0xff]
        %v6949 = vld [vmem:[%s482 + $0x770] sm:$0xff]
        %v6950 = vld [vmem:[%s482 + $0x778] sm:$0xff]
        %v6951 = vld [vmem:[%s482 + $0x780] sm:$0xff]
        %v6952 = vld [vmem:[%s482 + $0x788] sm:$0xff]
        %v6953 = vld [vmem:[%s482 + $0x790] sm:$0xff]
        %v6954 = vld [vmem:[%s482 + $0x798] sm:$0xff]
        %v6955 = vld [vmem:[%s482 + $0x7a0] sm:$0xff]
        %v6956 = vld [vmem:[%s482 + $0x7a8] sm:$0xff]
        %v6957 = vld [vmem:[%s482 + $0x7b0] sm:$0xff]
        %v6958 = vld [vmem:[%s482 + $0x7b8] sm:$0xff]
        %v6959 = vld [vmem:[%s482 + $0x7c0] sm:$0xff]
        %v6960 = vld [vmem:[%s482 + $0x7c8] sm:$0xff]
        %v6961 = vld [vmem:[%s482 + $0x7d0] sm:$0xff]
        %v6962 = vld [vmem:[%s482 + $0x7d8] sm:$0xff]
        %v6963 = vld [vmem:[%s482 + $0x7e0] sm:$0xff]
        %v6964 = vld [vmem:[%s482 + $0x7e8] sm:$0xff]
        %v6965 = vld [vmem:[%s482 + $0x7f0] sm:$0xff]
        %v6966 = vld [vmem:[%s482 + $0x7f8] sm:$0xff]
        %v7223 = vunpack.c.l.b16 %v6711
        %v7224 = vunpack.c.h.b16 %v6711
        %v7225 = vunpack.c.l.b16 %v6712
        %v7226 = vunpack.c.h.b16 %v6712
        %v7227 = vunpack.c.l.b16 %v6713
        %v7228 = vunpack.c.h.b16 %v6713
        %v7229 = vunpack.c.l.b16 %v6714
        %v7230 = vunpack.c.h.b16 %v6714
        %v7231 = vunpack.c.l.b16 %v6715
        %v7232 = vunpack.c.h.b16 %v6715
        %v7233 = vunpack.c.l.b16 %v6716
        %v7234 = vunpack.c.h.b16 %v6716
        %v7235 = vunpack.c.l.b16 %v6717
        %v7236 = vunpack.c.h.b16 %v6717
        %v7237 = vunpack.c.l.b16 %v6718
        %v7238 = vunpack.c.h.b16 %v6718
        %v7239 = vunpack.c.l.b16 %v6719
        %v7240 = vunpack.c.h.b16 %v6719
        %v7241 = vunpack.c.l.b16 %v6720
        %v7242 = vunpack.c.h.b16 %v6720
        %v7243 = vunpack.c.l.b16 %v6721
        %v7244 = vunpack.c.h.b16 %v6721
        %v7245 = vunpack.c.l.b16 %v6722
        %v7246 = vunpack.c.h.b16 %v6722
        %v7247 = vunpack.c.l.b16 %v6723
        %v7248 = vunpack.c.h.b16 %v6723
        %v7249 = vunpack.c.l.b16 %v6724
        %v7250 = vunpack.c.h.b16 %v6724
        %v7251 = vunpack.c.l.b16 %v6725
        %v7252 = vunpack.c.h.b16 %v6725
        %v7253 = vunpack.c.l.b16 %v6726
        %v7254 = vunpack.c.h.b16 %v6726
        %v7255 = vunpack.c.l.b16 %v6727
        %v7256 = vunpack.c.h.b16 %v6727
        %v7257 = vunpack.c.l.b16 %v6728
        %v7258 = vunpack.c.h.b16 %v6728
        %v7259 = vunpack.c.l.b16 %v6729
        %v7260 = vunpack.c.h.b16 %v6729
        %v7261 = vunpack.c.l.b16 %v6730
        %v7262 = vunpack.c.h.b16 %v6730
        %v7263 = vunpack.c.l.b16 %v6731
        %v7264 = vunpack.c.h.b16 %v6731
        %v7265 = vunpack.c.l.b16 %v6732
        %v7266 = vunpack.c.h.b16 %v6732
        %v7267 = vunpack.c.l.b16 %v6733
        %v7268 = vunpack.c.h.b16 %v6733
        %v7269 = vunpack.c.l.b16 %v6734
        %v7270 = vunpack.c.h.b16 %v6734
        %v7271 = vunpack.c.l.b16 %v6735
        %v7272 = vunpack.c.h.b16 %v6735
        %v7273 = vunpack.c.l.b16 %v6736
        %v7274 = vunpack.c.h.b16 %v6736
        %v7275 = vunpack.c.l.b16 %v6737
        %v7276 = vunpack.c.h.b16 %v6737
        %v7277 = vunpack.c.l.b16 %v6738
        %v7278 = vunpack.c.h.b16 %v6738
        %v7279 = vunpack.c.l.b16 %v6739
        %v7280 = vunpack.c.h.b16 %v6739
        %v7281 = vunpack.c.l.b16 %v6740
        %v7282 = vunpack.c.h.b16 %v6740
        %v7283 = vunpack.c.l.b16 %v6741
        %v7284 = vunpack.c.h.b16 %v6741
        %v7285 = vunpack.c.l.b16 %v6742
        %v7286 = vunpack.c.h.b16 %v6742
        %v7287 = vunpack.c.l.b16 %v6743
        %v7288 = vunpack.c.h.b16 %v6743
        %v7289 = vunpack.c.l.b16 %v6744
        %v7290 = vunpack.c.h.b16 %v6744
        %v7291 = vunpack.c.l.b16 %v6745
        %v7292 = vunpack.c.h.b16 %v6745
        %v7293 = vunpack.c.l.b16 %v6746
        %v7294 = vunpack.c.h.b16 %v6746
        %v7295 = vunpack.c.l.b16 %v6747
        %v7296 = vunpack.c.h.b16 %v6747
        %v7297 = vunpack.c.l.b16 %v6748
        %v7298 = vunpack.c.h.b16 %v6748
        %v7299 = vunpack.c.l.b16 %v6749
        %v7300 = vunpack.c.h.b16 %v6749
        %v7301 = vunpack.c.l.b16 %v6750
        %v7302 = vunpack.c.h.b16 %v6750
        %v7303 = vunpack.c.l.b16 %v6751
        %v7304 = vunpack.c.h.b16 %v6751
        %v7305 = vunpack.c.l.b16 %v6752
        %v7306 = vunpack.c.h.b16 %v6752
        %v7307 = vunpack.c.l.b16 %v6753
        %v7308 = vunpack.c.h.b16 %v6753
        %v7309 = vunpack.c.l.b16 %v6754
        %v7310 = vunpack.c.h.b16 %v6754
        %v7311 = vunpack.c.l.b16 %v6755
        %v7312 = vunpack.c.h.b16 %v6755
        %v7313 = vunpack.c.l.b16 %v6756
        %v7314 = vunpack.c.h.b16 %v6756
        %v7315 = vunpack.c.l.b16 %v6757
        %v7316 = vunpack.c.h.b16 %v6757
        %v7317 = vunpack.c.l.b16 %v6758
        %v7318 = vunpack.c.h.b16 %v6758
        %v7319 = vunpack.c.l.b16 %v6759
        %v7320 = vunpack.c.h.b16 %v6759
        %v7321 = vunpack.c.l.b16 %v6760
        %v7322 = vunpack.c.h.b16 %v6760
        %v7323 = vunpack.c.l.b16 %v6761
        %v7324 = vunpack.c.h.b16 %v6761
        %v7325 = vunpack.c.l.b16 %v6762
        %v7326 = vunpack.c.h.b16 %v6762
        %v7327 = vunpack.c.l.b16 %v6763
        %v7328 = vunpack.c.h.b16 %v6763
        %v7329 = vunpack.c.l.b16 %v6764
        %v7330 = vunpack.c.h.b16 %v6764
        %v7331 = vunpack.c.l.b16 %v6765
        %v7332 = vunpack.c.h.b16 %v6765
        %v7333 = vunpack.c.l.b16 %v6766
        %v7334 = vunpack.c.h.b16 %v6766
        %v7335 = vunpack.c.l.b16 %v6767
        %v7336 = vunpack.c.h.b16 %v6767
        %v7337 = vunpack.c.l.b16 %v6768
        %v7338 = vunpack.c.h.b16 %v6768
        %v7339 = vunpack.c.l.b16 %v6769
        %v7340 = vunpack.c.h.b16 %v6769
        %v7341 = vunpack.c.l.b16 %v6770
        %v7342 = vunpack.c.h.b16 %v6770
        %v7343 = vunpack.c.l.b16 %v6771
        %v7344 = vunpack.c.h.b16 %v6771
        %v7345 = vunpack.c.l.b16 %v6772
        %v7346 = vunpack.c.h.b16 %v6772
        %v7347 = vunpack.c.l.b16 %v6773
        %v7348 = vunpack.c.h.b16 %v6773
        %v7349 = vunpack.c.l.b16 %v6774
        %v7350 = vunpack.c.h.b16 %v6774
        %v7351 = vunpack.c.l.b16 %v6775
        %v7352 = vunpack.c.h.b16 %v6775
        %v7353 = vunpack.c.l.b16 %v6776
        %v7354 = vunpack.c.h.b16 %v6776
        %v7355 = vunpack.c.l.b16 %v6777
        %v7356 = vunpack.c.h.b16 %v6777
        %v7357 = vunpack.c.l.b16 %v6778
        %v7358 = vunpack.c.h.b16 %v6778
        %v7359 = vunpack.c.l.b16 %v6779
        %v7360 = vunpack.c.h.b16 %v6779
        %v7361 = vunpack.c.l.b16 %v6780
        %v7362 = vunpack.c.h.b16 %v6780
        %v7363 = vunpack.c.l.b16 %v6781
        %v7364 = vunpack.c.h.b16 %v6781
        %v7365 = vunpack.c.l.b16 %v6782
        %v7366 = vunpack.c.h.b16 %v6782
        %v7367 = vunpack.c.l.b16 %v6783
        %v7368 = vunpack.c.h.b16 %v6783
        %v7369 = vunpack.c.l.b16 %v6784
        %v7370 = vunpack.c.h.b16 %v6784
        %v7371 = vunpack.c.l.b16 %v6785
        %v7372 = vunpack.c.h.b16 %v6785
        %v7373 = vunpack.c.l.b16 %v6786
        %v7374 = vunpack.c.h.b16 %v6786
        %v7375 = vunpack.c.l.b16 %v6787
        %v7376 = vunpack.c.h.b16 %v6787
        %v7377 = vunpack.c.l.b16 %v6788
        %v7378 = vunpack.c.h.b16 %v6788
        %v7379 = vunpack.c.l.b16 %v6789
        %v7380 = vunpack.c.h.b16 %v6789
        %v7381 = vunpack.c.l.b16 %v6790
        %v7382 = vunpack.c.h.b16 %v6790
        %v7383 = vunpack.c.l.b16 %v6791
        %v7384 = vunpack.c.h.b16 %v6791
        %v7385 = vunpack.c.l.b16 %v6792
        %v7386 = vunpack.c.h.b16 %v6792
        %v7387 = vunpack.c.l.b16 %v6793
        %v7388 = vunpack.c.h.b16 %v6793
        %v7389 = vunpack.c.l.b16 %v6794
        %v7390 = vunpack.c.h.b16 %v6794
        %v7391 = vunpack.c.l.b16 %v6795
        %v7392 = vunpack.c.h.b16 %v6795
        %v7393 = vunpack.c.l.b16 %v6796
        %v7394 = vunpack.c.h.b16 %v6796
        %v7395 = vunpack.c.l.b16 %v6797
        %v7396 = vunpack.c.h.b16 %v6797
        %v7397 = vunpack.c.l.b16 %v6798
        %v7398 = vunpack.c.h.b16 %v6798
        %v7399 = vunpack.c.l.b16 %v6799
        %v7400 = vunpack.c.h.b16 %v6799
        %v7401 = vunpack.c.l.b16 %v6800
        %v7402 = vunpack.c.h.b16 %v6800
        %v7403 = vunpack.c.l.b16 %v6801
        %v7404 = vunpack.c.h.b16 %v6801
        %v7405 = vunpack.c.l.b16 %v6802
        %v7406 = vunpack.c.h.b16 %v6802
        %v7407 = vunpack.c.l.b16 %v6803
        %v7408 = vunpack.c.h.b16 %v6803
        %v7409 = vunpack.c.l.b16 %v6804
        %v7410 = vunpack.c.h.b16 %v6804
        %v7411 = vunpack.c.l.b16 %v6805
        %v7412 = vunpack.c.h.b16 %v6805
        %v7413 = vunpack.c.l.b16 %v6806
        %v7414 = vunpack.c.h.b16 %v6806
        %v7415 = vunpack.c.l.b16 %v6807
        %v7416 = vunpack.c.h.b16 %v6807
        %v7417 = vunpack.c.l.b16 %v6808
        %v7418 = vunpack.c.h.b16 %v6808
        %v7419 = vunpack.c.l.b16 %v6809
        %v7420 = vunpack.c.h.b16 %v6809
        %v7421 = vunpack.c.l.b16 %v6810
        %v7422 = vunpack.c.h.b16 %v6810
        %v7423 = vunpack.c.l.b16 %v6811
        %v7424 = vunpack.c.h.b16 %v6811
        %v7425 = vunpack.c.l.b16 %v6812
        %v7426 = vunpack.c.h.b16 %v6812
        %v7427 = vunpack.c.l.b16 %v6813
        %v7428 = vunpack.c.h.b16 %v6813
        %v7429 = vunpack.c.l.b16 %v6814
        %v7430 = vunpack.c.h.b16 %v6814
        %v7431 = vunpack.c.l.b16 %v6815
        %v7432 = vunpack.c.h.b16 %v6815
        %v7433 = vunpack.c.l.b16 %v6816
        %v7434 = vunpack.c.h.b16 %v6816
        %v7435 = vunpack.c.l.b16 %v6817
        %v7436 = vunpack.c.h.b16 %v6817
        %v7437 = vunpack.c.l.b16 %v6818
        %v7438 = vunpack.c.h.b16 %v6818
        %v7439 = vunpack.c.l.b16 %v6819
        %v7440 = vunpack.c.h.b16 %v6819
        %v7441 = vunpack.c.l.b16 %v6820
        %v7442 = vunpack.c.h.b16 %v6820
        %v7443 = vunpack.c.l.b16 %v6821
        %v7444 = vunpack.c.h.b16 %v6821
        %v7445 = vunpack.c.l.b16 %v6822
        %v7446 = vunpack.c.h.b16 %v6822
        %v7447 = vunpack.c.l.b16 %v6823
        %v7448 = vunpack.c.h.b16 %v6823
        %v7449 = vunpack.c.l.b16 %v6824
        %v7450 = vunpack.c.h.b16 %v6824
        %v7451 = vunpack.c.l.b16 %v6825
        %v7452 = vunpack.c.h.b16 %v6825
        %v7453 = vunpack.c.l.b16 %v6826
        %v7454 = vunpack.c.h.b16 %v6826
        %v7455 = vunpack.c.l.b16 %v6827
        %v7456 = vunpack.c.h.b16 %v6827
        %v7457 = vunpack.c.l.b16 %v6828
        %v7458 = vunpack.c.h.b16 %v6828
        %v7459 = vunpack.c.l.b16 %v6829
        %v7460 = vunpack.c.h.b16 %v6829
        %v7461 = vunpack.c.l.b16 %v6830
        %v7462 = vunpack.c.h.b16 %v6830
        %v7463 = vunpack.c.l.b16 %v6831
        %v7464 = vunpack.c.h.b16 %v6831
        %v7465 = vunpack.c.l.b16 %v6832
        %v7466 = vunpack.c.h.b16 %v6832
        %v7467 = vunpack.c.l.b16 %v6833
        %v7468 = vunpack.c.h.b16 %v6833
        %v7469 = vunpack.c.l.b16 %v6834
        %v7470 = vunpack.c.h.b16 %v6834
        %v7471 = vunpack.c.l.b16 %v6835
        %v7472 = vunpack.c.h.b16 %v6835
        %v7473 = vunpack.c.l.b16 %v6836
        %v7474 = vunpack.c.h.b16 %v6836
        %v7475 = vunpack.c.l.b16 %v6837
        %v7476 = vunpack.c.h.b16 %v6837
        %v7477 = vunpack.c.l.b16 %v6838
        %v7478 = vunpack.c.h.b16 %v6838
        %v7479 = vunpack.c.l.b16 %v6839
        %v7480 = vunpack.c.h.b16 %v6839
        %v7481 = vunpack.c.l.b16 %v6840
        %v7482 = vunpack.c.h.b16 %v6840
        %v7483 = vunpack.c.l.b16 %v6841
        %v7484 = vunpack.c.h.b16 %v6841
        %v7485 = vunpack.c.l.b16 %v6842
        %v7486 = vunpack.c.h.b16 %v6842
        %v7487 = vunpack.c.l.b16 %v6843
        %v7488 = vunpack.c.h.b16 %v6843
        %v7489 = vunpack.c.l.b16 %v6844
        %v7490 = vunpack.c.h.b16 %v6844
        %v7491 = vunpack.c.l.b16 %v6845
        %v7492 = vunpack.c.h.b16 %v6845
        %v7493 = vunpack.c.l.b16 %v6846
        %v7494 = vunpack.c.h.b16 %v6846
        %v7495 = vunpack.c.l.b16 %v6847
        %v7496 = vunpack.c.h.b16 %v6847
        %v7497 = vunpack.c.l.b16 %v6848
        %v7498 = vunpack.c.h.b16 %v6848
        %v7499 = vunpack.c.l.b16 %v6849
        %v7500 = vunpack.c.h.b16 %v6849
        %v7501 = vunpack.c.l.b16 %v6850
        %v7502 = vunpack.c.h.b16 %v6850
        %v7503 = vunpack.c.l.b16 %v6851
        %v7504 = vunpack.c.h.b16 %v6851
        %v7505 = vunpack.c.l.b16 %v6852
        %v7506 = vunpack.c.h.b16 %v6852
        %v7507 = vunpack.c.l.b16 %v6853
        %v7508 = vunpack.c.h.b16 %v6853
        %v7509 = vunpack.c.l.b16 %v6854
        %v7510 = vunpack.c.h.b16 %v6854
        %v7511 = vunpack.c.l.b16 %v6855
        %v7512 = vunpack.c.h.b16 %v6855
        %v7513 = vunpack.c.l.b16 %v6856
        %v7514 = vunpack.c.h.b16 %v6856
        %v7515 = vunpack.c.l.b16 %v6857
        %v7516 = vunpack.c.h.b16 %v6857
        %v7517 = vunpack.c.l.b16 %v6858
        %v7518 = vunpack.c.h.b16 %v6858
        %v7519 = vunpack.c.l.b16 %v6859
        %v7520 = vunpack.c.h.b16 %v6859
        %v7521 = vunpack.c.l.b16 %v6860
        %v7522 = vunpack.c.h.b16 %v6860
        %v7523 = vunpack.c.l.b16 %v6861
        %v7524 = vunpack.c.h.b16 %v6861
        %v7525 = vunpack.c.l.b16 %v6862
        %v7526 = vunpack.c.h.b16 %v6862
        %v7527 = vunpack.c.l.b16 %v6863
        %v7528 = vunpack.c.h.b16 %v6863
        %v7529 = vunpack.c.l.b16 %v6864
        %v7530 = vunpack.c.h.b16 %v6864
        %v7531 = vunpack.c.l.b16 %v6865
        %v7532 = vunpack.c.h.b16 %v6865
        %v7533 = vunpack.c.l.b16 %v6866
        %v7534 = vunpack.c.h.b16 %v6866
        %v7535 = vunpack.c.l.b16 %v6867
        %v7536 = vunpack.c.h.b16 %v6867
        %v7537 = vunpack.c.l.b16 %v6868
        %v7538 = vunpack.c.h.b16 %v6868
        %v7539 = vunpack.c.l.b16 %v6869
        %v7540 = vunpack.c.h.b16 %v6869
        %v7541 = vunpack.c.l.b16 %v6870
        %v7542 = vunpack.c.h.b16 %v6870
        %v7543 = vunpack.c.l.b16 %v6871
        %v7544 = vunpack.c.h.b16 %v6871
        %v7545 = vunpack.c.l.b16 %v6872
        %v7546 = vunpack.c.h.b16 %v6872
        %v7547 = vunpack.c.l.b16 %v6873
        %v7548 = vunpack.c.h.b16 %v6873
        %v7549 = vunpack.c.l.b16 %v6874
        %v7550 = vunpack.c.h.b16 %v6874
        %v7551 = vunpack.c.l.b16 %v6875
        %v7552 = vunpack.c.h.b16 %v6875
        %v7553 = vunpack.c.l.b16 %v6876
        %v7554 = vunpack.c.h.b16 %v6876
        %v7555 = vunpack.c.l.b16 %v6877
        %v7556 = vunpack.c.h.b16 %v6877
        %v7557 = vunpack.c.l.b16 %v6878
        %v7558 = vunpack.c.h.b16 %v6878
        %v7559 = vunpack.c.l.b16 %v6879
        %v7560 = vunpack.c.h.b16 %v6879
        %v7561 = vunpack.c.l.b16 %v6880
        %v7562 = vunpack.c.h.b16 %v6880
        %v7563 = vunpack.c.l.b16 %v6881
        %v7564 = vunpack.c.h.b16 %v6881
        %v7565 = vunpack.c.l.b16 %v6882
        %v7566 = vunpack.c.h.b16 %v6882
        %v7567 = vunpack.c.l.b16 %v6883
        %v7568 = vunpack.c.h.b16 %v6883
        %v7569 = vunpack.c.l.b16 %v6884
        %v7570 = vunpack.c.h.b16 %v6884
        %v7571 = vunpack.c.l.b16 %v6885
        %v7572 = vunpack.c.h.b16 %v6885
        %v7573 = vunpack.c.l.b16 %v6886
        %v7574 = vunpack.c.h.b16 %v6886
        %v7575 = vunpack.c.l.b16 %v6887
        %v7576 = vunpack.c.h.b16 %v6887
        %v7577 = vunpack.c.l.b16 %v6888
        %v7578 = vunpack.c.h.b16 %v6888
        %v7579 = vunpack.c.l.b16 %v6889
        %v7580 = vunpack.c.h.b16 %v6889
        %v7581 = vunpack.c.l.b16 %v6890
        %v7582 = vunpack.c.h.b16 %v6890
        %v7583 = vunpack.c.l.b16 %v6891
        %v7584 = vunpack.c.h.b16 %v6891
        %v7585 = vunpack.c.l.b16 %v6892
        %v7586 = vunpack.c.h.b16 %v6892
        %v7587 = vunpack.c.l.b16 %v6893
        %v7588 = vunpack.c.h.b16 %v6893
        %v7589 = vunpack.c.l.b16 %v6894
        %v7590 = vunpack.c.h.b16 %v6894
        %v7591 = vunpack.c.l.b16 %v6895
        %v7592 = vunpack.c.h.b16 %v6895
        %v7593 = vunpack.c.l.b16 %v6896
        %v7594 = vunpack.c.h.b16 %v6896
        %v7595 = vunpack.c.l.b16 %v6897
        %v7596 = vunpack.c.h.b16 %v6897
        %v7597 = vunpack.c.l.b16 %v6898
        %v7598 = vunpack.c.h.b16 %v6898
        %v7599 = vunpack.c.l.b16 %v6899
        %v7600 = vunpack.c.h.b16 %v6899
        %v7601 = vunpack.c.l.b16 %v6900
        %v7602 = vunpack.c.h.b16 %v6900
        %v7603 = vunpack.c.l.b16 %v6901
        %v7604 = vunpack.c.h.b16 %v6901
        %v7605 = vunpack.c.l.b16 %v6902
        %v7606 = vunpack.c.h.b16 %v6902
        %v7607 = vunpack.c.l.b16 %v6903
        %v7608 = vunpack.c.h.b16 %v6903
        %v7609 = vunpack.c.l.b16 %v6904
        %v7610 = vunpack.c.h.b16 %v6904
        %v7611 = vunpack.c.l.b16 %v6905
        %v7612 = vunpack.c.h.b16 %v6905
        %v7613 = vunpack.c.l.b16 %v6906
        %v7614 = vunpack.c.h.b16 %v6906
        %v7615 = vunpack.c.l.b16 %v6907
        %v7616 = vunpack.c.h.b16 %v6907
        %v7617 = vunpack.c.l.b16 %v6908
        %v7618 = vunpack.c.h.b16 %v6908
        %v7619 = vunpack.c.l.b16 %v6909
        %v7620 = vunpack.c.h.b16 %v6909
        %v7621 = vunpack.c.l.b16 %v6910
        %v7622 = vunpack.c.h.b16 %v6910
        %v7623 = vunpack.c.l.b16 %v6911
        %v7624 = vunpack.c.h.b16 %v6911
        %v7625 = vunpack.c.l.b16 %v6912
        %v7626 = vunpack.c.h.b16 %v6912
        %v7627 = vunpack.c.l.b16 %v6913
        %v7628 = vunpack.c.h.b16 %v6913
        %v7629 = vunpack.c.l.b16 %v6914
        %v7630 = vunpack.c.h.b16 %v6914
        %v7631 = vunpack.c.l.b16 %v6915
        %v7632 = vunpack.c.h.b16 %v6915
        %v7633 = vunpack.c.l.b16 %v6916
        %v7634 = vunpack.c.h.b16 %v6916
        %v7635 = vunpack.c.l.b16 %v6917
        %v7636 = vunpack.c.h.b16 %v6917
        %v7637 = vunpack.c.l.b16 %v6918
        %v7638 = vunpack.c.h.b16 %v6918
        %v7639 = vunpack.c.l.b16 %v6919
        %v7640 = vunpack.c.h.b16 %v6919
        %v7641 = vunpack.c.l.b16 %v6920
        %v7642 = vunpack.c.h.b16 %v6920
        %v7643 = vunpack.c.l.b16 %v6921
        %v7644 = vunpack.c.h.b16 %v6921
        %v7645 = vunpack.c.l.b16 %v6922
        %v7646 = vunpack.c.h.b16 %v6922
        %v7647 = vunpack.c.l.b16 %v6923
        %v7648 = vunpack.c.h.b16 %v6923
        %v7649 = vunpack.c.l.b16 %v6924
        %v7650 = vunpack.c.h.b16 %v6924
        %v7651 = vunpack.c.l.b16 %v6925
        %v7652 = vunpack.c.h.b16 %v6925
        %v7653 = vunpack.c.l.b16 %v6926
        %v7654 = vunpack.c.h.b16 %v6926
        %v7655 = vunpack.c.l.b16 %v6927
        %v7656 = vunpack.c.h.b16 %v6927
        %v7657 = vunpack.c.l.b16 %v6928
        %v7658 = vunpack.c.h.b16 %v6928
        %v7659 = vunpack.c.l.b16 %v6929
        %v7660 = vunpack.c.h.b16 %v6929
        %v7661 = vunpack.c.l.b16 %v6930
        %v7662 = vunpack.c.h.b16 %v6930
        %v7663 = vunpack.c.l.b16 %v6931
        %v7664 = vunpack.c.h.b16 %v6931
        %v7665 = vunpack.c.l.b16 %v6932
        %v7666 = vunpack.c.h.b16 %v6932
        %v7667 = vunpack.c.l.b16 %v6933
        %v7668 = vunpack.c.h.b16 %v6933
        %v7669 = vunpack.c.l.b16 %v6934
        %v7670 = vunpack.c.h.b16 %v6934
        %v7671 = vunpack.c.l.b16 %v6935
        %v7672 = vunpack.c.h.b16 %v6935
        %v7673 = vunpack.c.l.b16 %v6936
        %v7674 = vunpack.c.h.b16 %v6936
        %v7675 = vunpack.c.l.b16 %v6937
        %v7676 = vunpack.c.h.b16 %v6937
        %v7677 = vunpack.c.l.b16 %v6938
        %v7678 = vunpack.c.h.b16 %v6938
        %v7679 = vunpack.c.l.b16 %v6939
        %v7680 = vunpack.c.h.b16 %v6939
        %v7681 = vunpack.c.l.b16 %v6940
        %v7682 = vunpack.c.h.b16 %v6940
        %v7683 = vunpack.c.l.b16 %v6941
        %v7684 = vunpack.c.h.b16 %v6941
        %v7685 = vunpack.c.l.b16 %v6942
        %v7686 = vunpack.c.h.b16 %v6942
        %v7687 = vunpack.c.l.b16 %v6943
        %v7688 = vunpack.c.h.b16 %v6943
        %v7689 = vunpack.c.l.b16 %v6944
        %v7690 = vunpack.c.h.b16 %v6944
        %v7691 = vunpack.c.l.b16 %v6945
        %v7692 = vunpack.c.h.b16 %v6945
        %v7693 = vunpack.c.l.b16 %v6946
        %v7694 = vunpack.c.h.b16 %v6946
        %v7695 = vunpack.c.l.b16 %v6947
        %v7696 = vunpack.c.h.b16 %v6947
        %v7697 = vunpack.c.l.b16 %v6948
        %v7698 = vunpack.c.h.b16 %v6948
        %v7699 = vunpack.c.l.b16 %v6949
        %v7700 = vunpack.c.h.b16 %v6949
        %v7701 = vunpack.c.l.b16 %v6950
        %v7702 = vunpack.c.h.b16 %v6950
        %v7703 = vunpack.c.l.b16 %v6951
        %v7704 = vunpack.c.h.b16 %v6951
        %v7705 = vunpack.c.l.b16 %v6952
        %v7706 = vunpack.c.h.b16 %v6952
        %v7707 = vunpack.c.l.b16 %v6953
        %v7708 = vunpack.c.h.b16 %v6953
        %v7709 = vunpack.c.l.b16 %v6954
        %v7710 = vunpack.c.h.b16 %v6954
        %v7711 = vunpack.c.l.b16 %v6955
        %v7712 = vunpack.c.h.b16 %v6955
        %v7713 = vunpack.c.l.b16 %v6956
        %v7714 = vunpack.c.h.b16 %v6956
        %v7715 = vunpack.c.l.b16 %v6957
        %v7716 = vunpack.c.h.b16 %v6957
        %v7717 = vunpack.c.l.b16 %v6958
        %v7718 = vunpack.c.h.b16 %v6958
        %v7719 = vunpack.c.l.b16 %v6959
        %v7720 = vunpack.c.h.b16 %v6959
        %v7721 = vunpack.c.l.b16 %v6960
        %v7722 = vunpack.c.h.b16 %v6960
        %v7723 = vunpack.c.l.b16 %v6961
        %v7724 = vunpack.c.h.b16 %v6961
        %v7725 = vunpack.c.l.b16 %v6962
        %v7726 = vunpack.c.h.b16 %v6962
        %v7727 = vunpack.c.l.b16 %v6963
        %v7728 = vunpack.c.h.b16 %v6963
        %v7729 = vunpack.c.l.b16 %v6964
        %v7730 = vunpack.c.h.b16 %v6964
        %v7731 = vunpack.c.l.b16 %v6965
        %v7732 = vunpack.c.h.b16 %v6965
        %v7733 = vunpack.c.l.b16 %v6966
        %v7734 = vunpack.c.h.b16 %v6966
        %v7735 = vpack.c.b16 %v7231, %v7223
        %v7736 = vpack.c.b16 %v7232, %v7224
        %v7737 = vpack.c.b16 %v7233, %v7225
        %v7738 = vpack.c.b16 %v7234, %v7226
        %v7739 = vpack.c.b16 %v7235, %v7227
        %v7740 = vpack.c.b16 %v7236, %v7228
        %v7741 = vpack.c.b16 %v7237, %v7229
        %v7742 = vpack.c.b16 %v7238, %v7230
        %v7743 = vpack.c.b16 %v7247, %v7239
        %v7744 = vpack.c.b16 %v7248, %v7240
        %v7745 = vpack.c.b16 %v7249, %v7241
        %v7746 = vpack.c.b16 %v7250, %v7242
        %v7747 = vpack.c.b16 %v7251, %v7243
        %v7748 = vpack.c.b16 %v7252, %v7244
        %v7749 = vpack.c.b16 %v7253, %v7245
        %v7750 = vpack.c.b16 %v7254, %v7246
        %v7751 = vpack.c.b16 %v7263, %v7255
        %v7752 = vpack.c.b16 %v7264, %v7256
        %v7753 = vpack.c.b16 %v7265, %v7257
        %v7754 = vpack.c.b16 %v7266, %v7258
        %v7755 = vpack.c.b16 %v7267, %v7259
        %v7756 = vpack.c.b16 %v7268, %v7260
        %v7757 = vpack.c.b16 %v7269, %v7261
        %v7758 = vpack.c.b16 %v7270, %v7262
        %v7759 = vpack.c.b16 %v7279, %v7271
        %v7760 = vpack.c.b16 %v7280, %v7272
        %v7761 = vpack.c.b16 %v7281, %v7273
        %v7762 = vpack.c.b16 %v7282, %v7274
        %v7763 = vpack.c.b16 %v7283, %v7275
        %v7764 = vpack.c.b16 %v7284, %v7276
        %v7765 = vpack.c.b16 %v7285, %v7277
        %v7766 = vpack.c.b16 %v7286, %v7278
        %v7767 = vpack.c.b16 %v7295, %v7287
        %v7768 = vpack.c.b16 %v7296, %v7288
        %v7769 = vpack.c.b16 %v7297, %v7289
        %v7770 = vpack.c.b16 %v7298, %v7290
        %v7771 = vpack.c.b16 %v7299, %v7291
        %v7772 = vpack.c.b16 %v7300, %v7292
        %v7773 = vpack.c.b16 %v7301, %v7293
        %v7774 = vpack.c.b16 %v7302, %v7294
        %v7775 = vpack.c.b16 %v7311, %v7303
        %v7776 = vpack.c.b16 %v7312, %v7304
        %v7777 = vpack.c.b16 %v7313, %v7305
        %v7778 = vpack.c.b16 %v7314, %v7306
        %v7779 = vpack.c.b16 %v7315, %v7307
        %v7780 = vpack.c.b16 %v7316, %v7308
        %v7781 = vpack.c.b16 %v7317, %v7309
        %v7782 = vpack.c.b16 %v7318, %v7310
        %v7783 = vpack.c.b16 %v7327, %v7319
        %v7784 = vpack.c.b16 %v7328, %v7320
        %v7785 = vpack.c.b16 %v7329, %v7321
        %v7786 = vpack.c.b16 %v7330, %v7322
        %v7787 = vpack.c.b16 %v7331, %v7323
        %v7788 = vpack.c.b16 %v7332, %v7324
        %v7789 = vpack.c.b16 %v7333, %v7325
        %v7790 = vpack.c.b16 %v7334, %v7326
        %v7791 = vpack.c.b16 %v7343, %v7335
        %v7792 = vpack.c.b16 %v7344, %v7336
        %v7793 = vpack.c.b16 %v7345, %v7337
        %v7794 = vpack.c.b16 %v7346, %v7338
        %v7795 = vpack.c.b16 %v7347, %v7339
        %v7796 = vpack.c.b16 %v7348, %v7340
        %v7797 = vpack.c.b16 %v7349, %v7341
        %v7798 = vpack.c.b16 %v7350, %v7342
        %v7799 = vpack.c.b16 %v7359, %v7351
        %v7800 = vpack.c.b16 %v7360, %v7352
        %v7801 = vpack.c.b16 %v7361, %v7353
        %v7802 = vpack.c.b16 %v7362, %v7354
        %v7803 = vpack.c.b16 %v7363, %v7355
        %v7804 = vpack.c.b16 %v7364, %v7356
        %v7805 = vpack.c.b16 %v7365, %v7357
        %v7806 = vpack.c.b16 %v7366, %v7358
        %v7807 = vpack.c.b16 %v7375, %v7367
        %v7808 = vpack.c.b16 %v7376, %v7368
        %v7809 = vpack.c.b16 %v7377, %v7369
        %v7810 = vpack.c.b16 %v7378, %v7370
        %v7811 = vpack.c.b16 %v7379, %v7371
        %v7812 = vpack.c.b16 %v7380, %v7372
        %v7813 = vpack.c.b16 %v7381, %v7373
        %v7814 = vpack.c.b16 %v7382, %v7374
        %v7815 = vpack.c.b16 %v7391, %v7383
        %v7816 = vpack.c.b16 %v7392, %v7384
        %v7817 = vpack.c.b16 %v7393, %v7385
        %v7818 = vpack.c.b16 %v7394, %v7386
        %v7819 = vpack.c.b16 %v7395, %v7387
        %v7820 = vpack.c.b16 %v7396, %v7388
        %v7821 = vpack.c.b16 %v7397, %v7389
        %v7822 = vpack.c.b16 %v7398, %v7390
        %v7823 = vpack.c.b16 %v7407, %v7399
        %v7824 = vpack.c.b16 %v7408, %v7400
        %v7825 = vpack.c.b16 %v7409, %v7401
        %v7826 = vpack.c.b16 %v7410, %v7402
        %v7827 = vpack.c.b16 %v7411, %v7403
        %v7828 = vpack.c.b16 %v7412, %v7404
        %v7829 = vpack.c.b16 %v7413, %v7405
        %v7830 = vpack.c.b16 %v7414, %v7406
        %v7831 = vpack.c.b16 %v7423, %v7415
        %v7832 = vpack.c.b16 %v7424, %v7416
        %v7833 = vpack.c.b16 %v7425, %v7417
        %v7834 = vpack.c.b16 %v7426, %v7418
        %v7835 = vpack.c.b16 %v7427, %v7419
        %v7836 = vpack.c.b16 %v7428, %v7420
        %v7837 = vpack.c.b16 %v7429, %v7421
        %v7838 = vpack.c.b16 %v7430, %v7422
        %v7839 = vpack.c.b16 %v7439, %v7431
        %v7840 = vpack.c.b16 %v7440, %v7432
        %v7841 = vpack.c.b16 %v7441, %v7433
        %v7842 = vpack.c.b16 %v7442, %v7434
        %v7843 = vpack.c.b16 %v7443, %v7435
        %v7844 = vpack.c.b16 %v7444, %v7436
        %v7845 = vpack.c.b16 %v7445, %v7437
        %v7846 = vpack.c.b16 %v7446, %v7438
        %v7847 = vpack.c.b16 %v7455, %v7447
        %v7848 = vpack.c.b16 %v7456, %v7448
        %v7849 = vpack.c.b16 %v7457, %v7449
        %v7850 = vpack.c.b16 %v7458, %v7450
        %v7851 = vpack.c.b16 %v7459, %v7451
        %v7852 = vpack.c.b16 %v7460, %v7452
        %v7853 = vpack.c.b16 %v7461, %v7453
        %v7854 = vpack.c.b16 %v7462, %v7454
        %v7855 = vpack.c.b16 %v7471, %v7463
        %v7856 = vpack.c.b16 %v7472, %v7464
        %v7857 = vpack.c.b16 %v7473, %v7465
        %v7858 = vpack.c.b16 %v7474, %v7466
        %v7859 = vpack.c.b16 %v7475, %v7467
        %v7860 = vpack.c.b16 %v7476, %v7468
        %v7861 = vpack.c.b16 %v7477, %v7469
        %v7862 = vpack.c.b16 %v7478, %v7470
        %v7863 = vpack.c.b16 %v7487, %v7479
        %v7864 = vpack.c.b16 %v7488, %v7480
        %v7865 = vpack.c.b16 %v7489, %v7481
        %v7866 = vpack.c.b16 %v7490, %v7482
        %v7867 = vpack.c.b16 %v7491, %v7483
        %v7868 = vpack.c.b16 %v7492, %v7484
        %v7869 = vpack.c.b16 %v7493, %v7485
        %v7870 = vpack.c.b16 %v7494, %v7486
        %v7871 = vpack.c.b16 %v7503, %v7495
        %v7872 = vpack.c.b16 %v7504, %v7496
        %v7873 = vpack.c.b16 %v7505, %v7497
        %v7874 = vpack.c.b16 %v7506, %v7498
        %v7875 = vpack.c.b16 %v7507, %v7499
        %v7876 = vpack.c.b16 %v7508, %v7500
        %v7877 = vpack.c.b16 %v7509, %v7501
        %v7878 = vpack.c.b16 %v7510, %v7502
        %v7879 = vpack.c.b16 %v7519, %v7511
        %v7880 = vpack.c.b16 %v7520, %v7512
        %v7881 = vpack.c.b16 %v7521, %v7513
        %v7882 = vpack.c.b16 %v7522, %v7514
        %v7883 = vpack.c.b16 %v7523, %v7515
        %v7884 = vpack.c.b16 %v7524, %v7516
        %v7885 = vpack.c.b16 %v7525, %v7517
        %v7886 = vpack.c.b16 %v7526, %v7518
        %v7887 = vpack.c.b16 %v7535, %v7527
        %v7888 = vpack.c.b16 %v7536, %v7528
        %v7889 = vpack.c.b16 %v7537, %v7529
        %v7890 = vpack.c.b16 %v7538, %v7530
        %v7891 = vpack.c.b16 %v7539, %v7531
        %v7892 = vpack.c.b16 %v7540, %v7532
        %v7893 = vpack.c.b16 %v7541, %v7533
        %v7894 = vpack.c.b16 %v7542, %v7534
        %v7895 = vpack.c.b16 %v7551, %v7543
        %v7896 = vpack.c.b16 %v7552, %v7544
        %v7897 = vpack.c.b16 %v7553, %v7545
        %v7898 = vpack.c.b16 %v7554, %v7546
        %v7899 = vpack.c.b16 %v7555, %v7547
        %v7900 = vpack.c.b16 %v7556, %v7548
        %v7901 = vpack.c.b16 %v7557, %v7549
        %v7902 = vpack.c.b16 %v7558, %v7550
        %v7903 = vpack.c.b16 %v7567, %v7559
        %v7904 = vpack.c.b16 %v7568, %v7560
        %v7905 = vpack.c.b16 %v7569, %v7561
        %v7906 = vpack.c.b16 %v7570, %v7562
        %v7907 = vpack.c.b16 %v7571, %v7563
        %v7908 = vpack.c.b16 %v7572, %v7564
        %v7909 = vpack.c.b16 %v7573, %v7565
        %v7910 = vpack.c.b16 %v7574, %v7566
        %v7911 = vpack.c.b16 %v7583, %v7575
        %v7912 = vpack.c.b16 %v7584, %v7576
        %v7913 = vpack.c.b16 %v7585, %v7577
        %v7914 = vpack.c.b16 %v7586, %v7578
        %v7915 = vpack.c.b16 %v7587, %v7579
        %v7916 = vpack.c.b16 %v7588, %v7580
        %v7917 = vpack.c.b16 %v7589, %v7581
        %v7918 = vpack.c.b16 %v7590, %v7582
        %v7919 = vpack.c.b16 %v7599, %v7591
        %v7920 = vpack.c.b16 %v7600, %v7592
        %v7921 = vpack.c.b16 %v7601, %v7593
        %v7922 = vpack.c.b16 %v7602, %v7594
        %v7923 = vpack.c.b16 %v7603, %v7595
        %v7924 = vpack.c.b16 %v7604, %v7596
        %v7925 = vpack.c.b16 %v7605, %v7597
        %v7926 = vpack.c.b16 %v7606, %v7598
        %v7927 = vpack.c.b16 %v7615, %v7607
        %v7928 = vpack.c.b16 %v7616, %v7608
        %v7929 = vpack.c.b16 %v7617, %v7609
        %v7930 = vpack.c.b16 %v7618, %v7610
        %v7931 = vpack.c.b16 %v7619, %v7611
        %v7932 = vpack.c.b16 %v7620, %v7612
        %v7933 = vpack.c.b16 %v7621, %v7613
        %v7934 = vpack.c.b16 %v7622, %v7614
        %v7935 = vpack.c.b16 %v7631, %v7623
        %v7936 = vpack.c.b16 %v7632, %v7624
        %v7937 = vpack.c.b16 %v7633, %v7625
        %v7938 = vpack.c.b16 %v7634, %v7626
        %v7939 = vpack.c.b16 %v7635, %v7627
        %v7940 = vpack.c.b16 %v7636, %v7628
        %v7941 = vpack.c.b16 %v7637, %v7629
        %v7942 = vpack.c.b16 %v7638, %v7630
        %v7943 = vpack.c.b16 %v7647, %v7639
        %v7944 = vpack.c.b16 %v7648, %v7640
        %v7945 = vpack.c.b16 %v7649, %v7641
        %v7946 = vpack.c.b16 %v7650, %v7642
        %v7947 = vpack.c.b16 %v7651, %v7643
        %v7948 = vpack.c.b16 %v7652, %v7644
        %v7949 = vpack.c.b16 %v7653, %v7645
        %v7950 = vpack.c.b16 %v7654, %v7646
        %v7951 = vpack.c.b16 %v7663, %v7655
        %v7952 = vpack.c.b16 %v7664, %v7656
        %v7953 = vpack.c.b16 %v7665, %v7657
        %v7954 = vpack.c.b16 %v7666, %v7658
        %v7955 = vpack.c.b16 %v7667, %v7659
        %v7956 = vpack.c.b16 %v7668, %v7660
        %v7957 = vpack.c.b16 %v7669, %v7661
        %v7958 = vpack.c.b16 %v7670, %v7662
        %v7959 = vpack.c.b16 %v7679, %v7671
        %v7960 = vpack.c.b16 %v7680, %v7672
        %v7961 = vpack.c.b16 %v7681, %v7673
        %v7962 = vpack.c.b16 %v7682, %v7674
        %v7963 = vpack.c.b16 %v7683, %v7675
        %v7964 = vpack.c.b16 %v7684, %v7676
        %v7965 = vpack.c.b16 %v7685, %v7677
        %v7966 = vpack.c.b16 %v7686, %v7678
        %v7967 = vpack.c.b16 %v7695, %v7687
        %v7968 = vpack.c.b16 %v7696, %v7688
        %v7969 = vpack.c.b16 %v7697, %v7689
        %v7970 = vpack.c.b16 %v7698, %v7690
        %v7971 = vpack.c.b16 %v7699, %v7691
        %v7972 = vpack.c.b16 %v7700, %v7692
        %v7973 = vpack.c.b16 %v7701, %v7693
        %v7974 = vpack.c.b16 %v7702, %v7694
        %v7975 = vpack.c.b16 %v7711, %v7703
        %v7976 = vpack.c.b16 %v7712, %v7704
        %v7977 = vpack.c.b16 %v7713, %v7705
        %v7978 = vpack.c.b16 %v7714, %v7706
        %v7979 = vpack.c.b16 %v7715, %v7707
        %v7980 = vpack.c.b16 %v7716, %v7708
        %v7981 = vpack.c.b16 %v7717, %v7709
        %v7982 = vpack.c.b16 %v7718, %v7710
        %v7983 = vpack.c.b16 %v7727, %v7719
        %v7984 = vpack.c.b16 %v7728, %v7720
        %v7985 = vpack.c.b16 %v7729, %v7721
        %v7986 = vpack.c.b16 %v7730, %v7722
        %v7987 = vpack.c.b16 %v7731, %v7723
        %v7988 = vpack.c.b16 %v7732, %v7724
        %v7989 = vpack.c.b16 %v7733, %v7725
        %v7990 = vpack.c.b16 %v7734, %v7726
        %8247 = vmatpush.bf16.msra.mxu0 %v7791
        %8248 = vmatpush.bf16.msra.mxu0 %v7783
        %8249 = vmatpush.bf16.msra.mxu0 %v7775
        %8250 = vmatpush.bf16.msra.mxu0 %v7767
        %8251 = vmatpush.bf16.msra.mxu0 %v7759
        %8252 = vmatpush.bf16.msra.mxu0 %v7751
        %8253 = vmatpush.bf16.msra.mxu0 %v7743
        %8254 = vmatpush.bf16.msra.mxu0 %v7735
        %8255 = vmatmul.bf16.gmra.mxu0 %v6707
        %v8256 = vpop.f32.mrf.mxu0
        %v8257 = vadd.f32 0.0, %v8256
        %v8258 = vpop.f32.mrf.mxu0
        %v8259 = vadd.f32 0.0, %v8258
        %8260 = vdwg.mxu0
        %8261 = vmatpush.bf16.msra.mxu0 %v7855
        %8262 = vmatpush.bf16.msra.mxu0 %v7847
        %8263 = vmatpush.bf16.msra.mxu0 %v7839
        %8264 = vmatpush.bf16.msra.mxu0 %v7831
        %8265 = vmatpush.bf16.msra.mxu0 %v7823
        %8266 = vmatpush.bf16.msra.mxu0 %v7815
        %8267 = vmatpush.bf16.msra.mxu0 %v7807
        %8268 = vmatpush.bf16.msra.mxu0 %v7799
        %8269 = vmatmul.bf16.gmra.mxu0 %v6708
        %v8270 = vpop.f32.mrf.mxu0
        %v8271 = vadd.f32 %v8257, %v8270
        %v8272 = vpop.f32.mrf.mxu0
        %v8273 = vadd.f32 %v8259, %v8272
        %8274 = vdwg.mxu0
        %8275 = vmatpush.bf16.msra.mxu0 %v7919
        %8276 = vmatpush.bf16.msra.mxu0 %v7911
        %8277 = vmatpush.bf16.msra.mxu0 %v7903
        %8278 = vmatpush.bf16.msra.mxu0 %v7895
        %8279 = vmatpush.bf16.msra.mxu0 %v7887
        %8280 = vmatpush.bf16.msra.mxu0 %v7879
        %8281 = vmatpush.bf16.msra.mxu0 %v7871
        %8282 = vmatpush.bf16.msra.mxu0 %v7863
        %8283 = vmatmul.bf16.gmra.mxu0 %v6709
        %v8284 = vpop.f32.mrf.mxu0
        %v8285 = vadd.f32 %v8271, %v8284
        %v8286 = vpop.f32.mrf.mxu0
        %v8287 = vadd.f32 %v8273, %v8286
        %8288 = vdwg.mxu0
        %8289 = vmatpush.bf16.msra.mxu0 %v7983
        %8290 = vmatpush.bf16.msra.mxu0 %v7975
        %8291 = vmatpush.bf16.msra.mxu0 %v7967
        %8292 = vmatpush.bf16.msra.mxu0 %v7959
        %8293 = vmatpush.bf16.msra.mxu0 %v7951
        %8294 = vmatpush.bf16.msra.mxu0 %v7943
        %8295 = vmatpush.bf16.msra.mxu0 %v7935
        %8296 = vmatpush.bf16.msra.mxu0 %v7927
        %8297 = vmatmul.bf16.gmra.mxu0 %v6710
        %v8298 = vpop.f32.mrf.mxu0
        %v8299 = vadd.f32 %v8285, %v8298
        %v8300 = vpop.f32.mrf.mxu0
        %v8301 = vadd.f32 %v8287, %v8300
        %8302 = vdwg.mxu0
        %8303 = vmatpush.bf16.msra.mxu0 %v7792
        %8304 = vmatpush.bf16.msra.mxu0 %v7784
        %8305 = vmatpush.bf16.msra.mxu0 %v7776
        %8306 = vmatpush.bf16.msra.mxu0 %v7768
        %8307 = vmatpush.bf16.msra.mxu0 %v7760
        %8308 = vmatpush.bf16.msra.mxu0 %v7752
        %8309 = vmatpush.bf16.msra.mxu0 %v7744
        %8310 = vmatpush.bf16.msra.mxu0 %v7736
        %8311 = vmatmul.bf16.gmra.mxu0 %v6707
        %v8312 = vpop.f32.mrf.mxu0
        %v8313 = vadd.f32 0.0, %v8312
        %v8314 = vpop.f32.mrf.mxu0
        %v8315 = vadd.f32 0.0, %v8314
        %8316 = vdwg.mxu0
        %8317 = vmatpush.bf16.msra.mxu0 %v7856
        %8318 = vmatpush.bf16.msra.mxu0 %v7848
        %8319 = vmatpush.bf16.msra.mxu0 %v7840
        %8320 = vmatpush.bf16.msra.mxu0 %v7832
        %8321 = vmatpush.bf16.msra.mxu0 %v7824
        %8322 = vmatpush.bf16.msra.mxu0 %v7816
        %8323 = vmatpush.bf16.msra.mxu0 %v7808
        %8324 = vmatpush.bf16.msra.mxu0 %v7800
        %8325 = vmatmul.bf16.gmra.mxu0 %v6708
        %v8326 = vpop.f32.mrf.mxu0
        %v8327 = vadd.f32 %v8313, %v8326
        %v8328 = vpop.f32.mrf.mxu0
        %v8329 = vadd.f32 %v8315, %v8328
        %8330 = vdwg.mxu0
        %8331 = vmatpush.bf16.msra.mxu0 %v7920
        %8332 = vmatpush.bf16.msra.mxu0 %v7912
        %8333 = vmatpush.bf16.msra.mxu0 %v7904
        %8334 = vmatpush.bf16.msra.mxu0 %v7896
        %8335 = vmatpush.bf16.msra.mxu0 %v7888
        %8336 = vmatpush.bf16.msra.mxu0 %v7880
        %8337 = vmatpush.bf16.msra.mxu0 %v7872
        %8338 = vmatpush.bf16.msra.mxu0 %v7864
        %8339 = vmatmul.bf16.gmra.mxu0 %v6709
        %v8340 = vpop.f32.mrf.mxu0
        %v8341 = vadd.f32 %v8327, %v8340
        %v8342 = vpop.f32.mrf.mxu0
        %v8343 = vadd.f32 %v8329, %v8342
        %8344 = vdwg.mxu0
        %8345 = vmatpush.bf16.msra.mxu0 %v7984
        %8346 = vmatpush.bf16.msra.mxu0 %v7976
        %8347 = vmatpush.bf16.msra.mxu0 %v7968
        %8348 = vmatpush.bf16.msra.mxu0 %v7960
        %8349 = vmatpush.bf16.msra.mxu0 %v7952
        %8350 = vmatpush.bf16.msra.mxu0 %v7944
        %8351 = vmatpush.bf16.msra.mxu0 %v7936
        %8352 = vmatpush.bf16.msra.mxu0 %v7928
        %8353 = vmatmul.bf16.gmra.mxu0 %v6710
        %v8354 = vpop.f32.mrf.mxu0
        %v8355 = vadd.f32 %v8341, %v8354
        %v8356 = vpop.f32.mrf.mxu0
        %v8357 = vadd.f32 %v8343, %v8356
        %8358 = vdwg.mxu0
        %8359 = vmatpush.bf16.msra.mxu0 %v7793
        %8360 = vmatpush.bf16.msra.mxu0 %v7785
        %8361 = vmatpush.bf16.msra.mxu0 %v7777
        %8362 = vmatpush.bf16.msra.mxu0 %v7769
        %8363 = vmatpush.bf16.msra.mxu0 %v7761
        %8364 = vmatpush.bf16.msra.mxu0 %v7753
        %8365 = vmatpush.bf16.msra.mxu0 %v7745
        %8366 = vmatpush.bf16.msra.mxu0 %v7737
        %8367 = vmatmul.bf16.gmra.mxu0 %v6707
        %v8368 = vpop.f32.mrf.mxu0
        %v8369 = vadd.f32 0.0, %v8368
        %v8370 = vpop.f32.mrf.mxu0
        %v8371 = vadd.f32 0.0, %v8370
        %8372 = vdwg.mxu0
        %8373 = vmatpush.bf16.msra.mxu0 %v7857
        %8374 = vmatpush.bf16.msra.mxu0 %v7849
        %8375 = vmatpush.bf16.msra.mxu0 %v7841
        %8376 = vmatpush.bf16.msra.mxu0 %v7833
        %8377 = vmatpush.bf16.msra.mxu0 %v7825
        %8378 = vmatpush.bf16.msra.mxu0 %v7817
        %8379 = vmatpush.bf16.msra.mxu0 %v7809
        %8380 = vmatpush.bf16.msra.mxu0 %v7801
        %8381 = vmatmul.bf16.gmra.mxu0 %v6708
        %v8382 = vpop.f32.mrf.mxu0
        %v8383 = vadd.f32 %v8369, %v8382
        %v8384 = vpop.f32.mrf.mxu0
        %v8385 = vadd.f32 %v8371, %v8384
        %8386 = vdwg.mxu0
        %8387 = vmatpush.bf16.msra.mxu0 %v7921
        %8388 = vmatpush.bf16.msra.mxu0 %v7913
        %8389 = vmatpush.bf16.msra.mxu0 %v7905
        %8390 = vmatpush.bf16.msra.mxu0 %v7897
        %8391 = vmatpush.bf16.msra.mxu0 %v7889
        %8392 = vmatpush.bf16.msra.mxu0 %v7881
        %8393 = vmatpush.bf16.msra.mxu0 %v7873
        %8394 = vmatpush.bf16.msra.mxu0 %v7865
        %8395 = vmatmul.bf16.gmra.mxu0 %v6709
        %v8396 = vpop.f32.mrf.mxu0
        %v8397 = vadd.f32 %v8383, %v8396
        %v8398 = vpop.f32.mrf.mxu0
        %v8399 = vadd.f32 %v8385, %v8398
        %8400 = vdwg.mxu0
        %8401 = vmatpush.bf16.msra.mxu0 %v7985
        %8402 = vmatpush.bf16.msra.mxu0 %v7977
        %8403 = vmatpush.bf16.msra.mxu0 %v7969
        %8404 = vmatpush.bf16.msra.mxu0 %v7961
        %8405 = vmatpush.bf16.msra.mxu0 %v7953
        %8406 = vmatpush.bf16.msra.mxu0 %v7945
        %8407 = vmatpush.bf16.msra.mxu0 %v7937
        %8408 = vmatpush.bf16.msra.mxu0 %v7929
        %8409 = vmatmul.bf16.gmra.mxu0 %v6710
        %v8410 = vpop.f32.mrf.mxu0
        %v8411 = vadd.f32 %v8397, %v8410
        %v8412 = vpop.f32.mrf.mxu0
        %v8413 = vadd.f32 %v8399, %v8412
        %8414 = vdwg.mxu0
        %8415 = vmatpush.bf16.msra.mxu0 %v7794
        %8416 = vmatpush.bf16.msra.mxu0 %v7786
        %8417 = vmatpush.bf16.msra.mxu0 %v7778
        %8418 = vmatpush.bf16.msra.mxu0 %v7770
        %8419 = vmatpush.bf16.msra.mxu0 %v7762
        %8420 = vmatpush.bf16.msra.mxu0 %v7754
        %8421 = vmatpush.bf16.msra.mxu0 %v7746
        %8422 = vmatpush.bf16.msra.mxu0 %v7738
        %8423 = vmatmul.bf16.gmra.mxu0 %v6707
        %v8424 = vpop.f32.mrf.mxu0
        %v8425 = vadd.f32 0.0, %v8424
        %v8426 = vpop.f32.mrf.mxu0
        %v8427 = vadd.f32 0.0, %v8426
        %8428 = vdwg.mxu0
        %8429 = vmatpush.bf16.msra.mxu0 %v7858
        %8430 = vmatpush.bf16.msra.mxu0 %v7850
        %8431 = vmatpush.bf16.msra.mxu0 %v7842
        %8432 = vmatpush.bf16.msra.mxu0 %v7834
        %8433 = vmatpush.bf16.msra.mxu0 %v7826
        %8434 = vmatpush.bf16.msra.mxu0 %v7818
        %8435 = vmatpush.bf16.msra.mxu0 %v7810
        %8436 = vmatpush.bf16.msra.mxu0 %v7802
        %8437 = vmatmul.bf16.gmra.mxu0 %v6708
        %v8438 = vpop.f32.mrf.mxu0
        %v8439 = vadd.f32 %v8425, %v8438
        %v8440 = vpop.f32.mrf.mxu0
        %v8441 = vadd.f32 %v8427, %v8440
        %8442 = vdwg.mxu0
        %8443 = vmatpush.bf16.msra.mxu0 %v7922
        %8444 = vmatpush.bf16.msra.mxu0 %v7914
        %8445 = vmatpush.bf16.msra.mxu0 %v7906
        %8446 = vmatpush.bf16.msra.mxu0 %v7898
        %8447 = vmatpush.bf16.msra.mxu0 %v7890
        %8448 = vmatpush.bf16.msra.mxu0 %v7882
        %8449 = vmatpush.bf16.msra.mxu0 %v7874
        %8450 = vmatpush.bf16.msra.mxu0 %v7866
        %8451 = vmatmul.bf16.gmra.mxu0 %v6709
        %v8452 = vpop.f32.mrf.mxu0
        %v8453 = vadd.f32 %v8439, %v8452
        %v8454 = vpop.f32.mrf.mxu0
        %v8455 = vadd.f32 %v8441, %v8454
        %8456 = vdwg.mxu0
        %8457 = vmatpush.bf16.msra.mxu0 %v7986
        %8458 = vmatpush.bf16.msra.mxu0 %v7978
        %8459 = vmatpush.bf16.msra.mxu0 %v7970
        %8460 = vmatpush.bf16.msra.mxu0 %v7962
        %8461 = vmatpush.bf16.msra.mxu0 %v7954
        %8462 = vmatpush.bf16.msra.mxu0 %v7946
        %8463 = vmatpush.bf16.msra.mxu0 %v7938
        %8464 = vmatpush.bf16.msra.mxu0 %v7930
        %8465 = vmatmul.bf16.gmra.mxu0 %v6710
        %v8466 = vpop.f32.mrf.mxu0
        %v8467 = vadd.f32 %v8453, %v8466
        %v8468 = vpop.f32.mrf.mxu0
        %v8469 = vadd.f32 %v8455, %v8468
        %8470 = vdwg.mxu0
        %8471 = vmatpush.bf16.msra.mxu0 %v7795
        %8472 = vmatpush.bf16.msra.mxu0 %v7787
        %8473 = vmatpush.bf16.msra.mxu0 %v7779
        %8474 = vmatpush.bf16.msra.mxu0 %v7771
        %8475 = vmatpush.bf16.msra.mxu0 %v7763
        %8476 = vmatpush.bf16.msra.mxu0 %v7755
        %8477 = vmatpush.bf16.msra.mxu0 %v7747
        %8478 = vmatpush.bf16.msra.mxu0 %v7739
        %8479 = vmatmul.bf16.gmra.mxu0 %v6707
        %v8480 = vpop.f32.mrf.mxu0
        %v8481 = vadd.f32 0.0, %v8480
        %v8482 = vpop.f32.mrf.mxu0
        %v8483 = vadd.f32 0.0, %v8482
        %8484 = vdwg.mxu0
        %8485 = vmatpush.bf16.msra.mxu0 %v7859
        %8486 = vmatpush.bf16.msra.mxu0 %v7851
        %8487 = vmatpush.bf16.msra.mxu0 %v7843
        %8488 = vmatpush.bf16.msra.mxu0 %v7835
        %8489 = vmatpush.bf16.msra.mxu0 %v7827
        %8490 = vmatpush.bf16.msra.mxu0 %v7819
        %8491 = vmatpush.bf16.msra.mxu0 %v7811
        %8492 = vmatpush.bf16.msra.mxu0 %v7803
        %8493 = vmatmul.bf16.gmra.mxu0 %v6708
        %v8494 = vpop.f32.mrf.mxu0
        %v8495 = vadd.f32 %v8481, %v8494
        %v8496 = vpop.f32.mrf.mxu0
        %v8497 = vadd.f32 %v8483, %v8496
        %8498 = vdwg.mxu0
        %8499 = vmatpush.bf16.msra.mxu0 %v7923
        %8500 = vmatpush.bf16.msra.mxu0 %v7915
        %8501 = vmatpush.bf16.msra.mxu0 %v7907
        %8502 = vmatpush.bf16.msra.mxu0 %v7899
        %8503 = vmatpush.bf16.msra.mxu0 %v7891
        %8504 = vmatpush.bf16.msra.mxu0 %v7883
        %8505 = vmatpush.bf16.msra.mxu0 %v7875
        %8506 = vmatpush.bf16.msra.mxu0 %v7867
        %8507 = vmatmul.bf16.gmra.mxu0 %v6709
        %v8508 = vpop.f32.mrf.mxu0
        %v8509 = vadd.f32 %v8495, %v8508
        %v8510 = vpop.f32.mrf.mxu0
        %v8511 = vadd.f32 %v8497, %v8510
        %8512 = vdwg.mxu0
        %8513 = vmatpush.bf16.msra.mxu0 %v7987
        %8514 = vmatpush.bf16.msra.mxu0 %v7979
        %8515 = vmatpush.bf16.msra.mxu0 %v7971
        %8516 = vmatpush.bf16.msra.mxu0 %v7963
        %8517 = vmatpush.bf16.msra.mxu0 %v7955
        %8518 = vmatpush.bf16.msra.mxu0 %v7947
        %8519 = vmatpush.bf16.msra.mxu0 %v7939
        %8520 = vmatpush.bf16.msra.mxu0 %v7931
        %8521 = vmatmul.bf16.gmra.mxu0 %v6710
        %v8522 = vpop.f32.mrf.mxu0
        %v8523 = vadd.f32 %v8509, %v8522
        %v8524 = vpop.f32.mrf.mxu0
        %v8525 = vadd.f32 %v8511, %v8524
        %8526 = vdwg.mxu0
        %8527 = vmatpush.bf16.msra.mxu0 %v7796
        %8528 = vmatpush.bf16.msra.mxu0 %v7788
        %8529 = vmatpush.bf16.msra.mxu0 %v7780
        %8530 = vmatpush.bf16.msra.mxu0 %v7772
        %8531 = vmatpush.bf16.msra.mxu0 %v7764
        %8532 = vmatpush.bf16.msra.mxu0 %v7756
        %8533 = vmatpush.bf16.msra.mxu0 %v7748
        %8534 = vmatpush.bf16.msra.mxu0 %v7740
        %8535 = vmatmul.bf16.gmra.mxu0 %v6707
        %v8536 = vpop.f32.mrf.mxu0
        %v8537 = vadd.f32 0.0, %v8536
        %v8538 = vpop.f32.mrf.mxu0
        %v8539 = vadd.f32 0.0, %v8538
        %8540 = vdwg.mxu0
        %8541 = vmatpush.bf16.msra.mxu0 %v7860
        %8542 = vmatpush.bf16.msra.mxu0 %v7852
        %8543 = vmatpush.bf16.msra.mxu0 %v7844
        %8544 = vmatpush.bf16.msra.mxu0 %v7836
        %8545 = vmatpush.bf16.msra.mxu0 %v7828
        %8546 = vmatpush.bf16.msra.mxu0 %v7820
        %8547 = vmatpush.bf16.msra.mxu0 %v7812
        %8548 = vmatpush.bf16.msra.mxu0 %v7804
        %8549 = vmatmul.bf16.gmra.mxu0 %v6708
        %v8550 = vpop.f32.mrf.mxu0
        %v8551 = vadd.f32 %v8537, %v8550
        %v8552 = vpop.f32.mrf.mxu0
        %v8553 = vadd.f32 %v8539, %v8552
        %8554 = vdwg.mxu0
        %8555 = vmatpush.bf16.msra.mxu0 %v7924
        %8556 = vmatpush.bf16.msra.mxu0 %v7916
        %8557 = vmatpush.bf16.msra.mxu0 %v7908
        %8558 = vmatpush.bf16.msra.mxu0 %v7900
        %8559 = vmatpush.bf16.msra.mxu0 %v7892
        %8560 = vmatpush.bf16.msra.mxu0 %v7884
        %8561 = vmatpush.bf16.msra.mxu0 %v7876
        %8562 = vmatpush.bf16.msra.mxu0 %v7868
        %8563 = vmatmul.bf16.gmra.mxu0 %v6709
        %v8564 = vpop.f32.mrf.mxu0
        %v8565 = vadd.f32 %v8551, %v8564
        %v8566 = vpop.f32.mrf.mxu0
        %v8567 = vadd.f32 %v8553, %v8566
        %8568 = vdwg.mxu0
        %8569 = vmatpush.bf16.msra.mxu0 %v7988
        %8570 = vmatpush.bf16.msra.mxu0 %v7980
        %8571 = vmatpush.bf16.msra.mxu0 %v7972
        %8572 = vmatpush.bf16.msra.mxu0 %v7964
        %8573 = vmatpush.bf16.msra.mxu0 %v7956
        %8574 = vmatpush.bf16.msra.mxu0 %v7948
        %8575 = vmatpush.bf16.msra.mxu0 %v7940
        %8576 = vmatpush.bf16.msra.mxu0 %v7932
        %8577 = vmatmul.bf16.gmra.mxu0 %v6710
        %v8578 = vpop.f32.mrf.mxu0
        %v8579 = vadd.f32 %v8565, %v8578
        %v8580 = vpop.f32.mrf.mxu0
        %v8581 = vadd.f32 %v8567, %v8580
        %8582 = vdwg.mxu0
        %8583 = vmatpush.bf16.msra.mxu0 %v7797
        %8584 = vmatpush.bf16.msra.mxu0 %v7789
        %8585 = vmatpush.bf16.msra.mxu0 %v7781
        %8586 = vmatpush.bf16.msra.mxu0 %v7773
        %8587 = vmatpush.bf16.msra.mxu0 %v7765
        %8588 = vmatpush.bf16.msra.mxu0 %v7757
        %8589 = vmatpush.bf16.msra.mxu0 %v7749
        %8590 = vmatpush.bf16.msra.mxu0 %v7741
        %8591 = vmatmul.bf16.gmra.mxu0 %v6707
        %v8592 = vpop.f32.mrf.mxu0
        %v8593 = vadd.f32 0.0, %v8592
        %v8594 = vpop.f32.mrf.mxu0
        %v8595 = vadd.f32 0.0, %v8594
        %8596 = vdwg.mxu0
        %8597 = vmatpush.bf16.msra.mxu0 %v7861
        %8598 = vmatpush.bf16.msra.mxu0 %v7853
        %8599 = vmatpush.bf16.msra.mxu0 %v7845
        %8600 = vmatpush.bf16.msra.mxu0 %v7837
        %8601 = vmatpush.bf16.msra.mxu0 %v7829
        %8602 = vmatpush.bf16.msra.mxu0 %v7821
        %8603 = vmatpush.bf16.msra.mxu0 %v7813
        %8604 = vmatpush.bf16.msra.mxu0 %v7805
        %8605 = vmatmul.bf16.gmra.mxu0 %v6708
        %v8606 = vpop.f32.mrf.mxu0
        %v8607 = vadd.f32 %v8593, %v8606
        %v8608 = vpop.f32.mrf.mxu0
        %v8609 = vadd.f32 %v8595, %v8608
        %8610 = vdwg.mxu0
        %8611 = vmatpush.bf16.msra.mxu0 %v7925
        %8612 = vmatpush.bf16.msra.mxu0 %v7917
        %8613 = vmatpush.bf16.msra.mxu0 %v7909
        %8614 = vmatpush.bf16.msra.mxu0 %v7901
        %8615 = vmatpush.bf16.msra.mxu0 %v7893
        %8616 = vmatpush.bf16.msra.mxu0 %v7885
        %8617 = vmatpush.bf16.msra.mxu0 %v7877
        %8618 = vmatpush.bf16.msra.mxu0 %v7869
        %8619 = vmatmul.bf16.gmra.mxu0 %v6709
        %v8620 = vpop.f32.mrf.mxu0
        %v8621 = vadd.f32 %v8607, %v8620
        %v8622 = vpop.f32.mrf.mxu0
        %v8623 = vadd.f32 %v8609, %v8622
        %8624 = vdwg.mxu0
        %8625 = vmatpush.bf16.msra.mxu0 %v7989
        %8626 = vmatpush.bf16.msra.mxu0 %v7981
        %8627 = vmatpush.bf16.msra.mxu0 %v7973
        %8628 = vmatpush.bf16.msra.mxu0 %v7965
        %8629 = vmatpush.bf16.msra.mxu0 %v7957
        %8630 = vmatpush.bf16.msra.mxu0 %v7949
        %8631 = vmatpush.bf16.msra.mxu0 %v7941
        %8632 = vmatpush.bf16.msra.mxu0 %v7933
        %8633 = vmatmul.bf16.gmra.mxu0 %v6710
        %v8634 = vpop.f32.mrf.mxu0
        %v8635 = vadd.f32 %v8621, %v8634
        %v8636 = vpop.f32.mrf.mxu0
        %v8637 = vadd.f32 %v8623, %v8636
        %8638 = vdwg.mxu0
        %8639 = vmatpush.bf16.msra.mxu0 %v7798
        %8640 = vmatpush.bf16.msra.mxu0 %v7790
        %8641 = vmatpush.bf16.msra.mxu0 %v7782
        %8642 = vmatpush.bf16.msra.mxu0 %v7774
        %8643 = vmatpush.bf16.msra.mxu0 %v7766
        %8644 = vmatpush.bf16.msra.mxu0 %v7758
        %8645 = vmatpush.bf16.msra.mxu0 %v7750
        %8646 = vmatpush.bf16.msra.mxu0 %v7742
        %8647 = vmatmul.bf16.gmra.mxu0 %v6707
        %v8648 = vpop.f32.mrf.mxu0
        %v8649 = vadd.f32 0.0, %v8648
        %v8650 = vpop.f32.mrf.mxu0
        %v8651 = vadd.f32 0.0, %v8650
        %8652 = vdwg.mxu0
        %8653 = vmatpush.bf16.msra.mxu0 %v7862
        %8654 = vmatpush.bf16.msra.mxu0 %v7854
        %8655 = vmatpush.bf16.msra.mxu0 %v7846
        %8656 = vmatpush.bf16.msra.mxu0 %v7838
        %8657 = vmatpush.bf16.msra.mxu0 %v7830
        %8658 = vmatpush.bf16.msra.mxu0 %v7822
        %8659 = vmatpush.bf16.msra.mxu0 %v7814
        %8660 = vmatpush.bf16.msra.mxu0 %v7806
        %8661 = vmatmul.bf16.gmra.mxu0 %v6708
        %v8662 = vpop.f32.mrf.mxu0
        %v8663 = vadd.f32 %v8649, %v8662
        %v8664 = vpop.f32.mrf.mxu0
        %v8665 = vadd.f32 %v8651, %v8664
        %8666 = vdwg.mxu0
        %8667 = vmatpush.bf16.msra.mxu0 %v7926
        %8668 = vmatpush.bf16.msra.mxu0 %v7918
        %8669 = vmatpush.bf16.msra.mxu0 %v7910
        %8670 = vmatpush.bf16.msra.mxu0 %v7902
        %8671 = vmatpush.bf16.msra.mxu0 %v7894
        %8672 = vmatpush.bf16.msra.mxu0 %v7886
        %8673 = vmatpush.bf16.msra.mxu0 %v7878
        %8674 = vmatpush.bf16.msra.mxu0 %v7870
        %8675 = vmatmul.bf16.gmra.mxu0 %v6709
        %v8676 = vpop.f32.mrf.mxu0
        %v8677 = vadd.f32 %v8663, %v8676
        %v8678 = vpop.f32.mrf.mxu0
        %v8679 = vadd.f32 %v8665, %v8678
        %8680 = vdwg.mxu0
        %8681 = vmatpush.bf16.msra.mxu0 %v7990
        %8682 = vmatpush.bf16.msra.mxu0 %v7982
        %8683 = vmatpush.bf16.msra.mxu0 %v7974
        %8684 = vmatpush.bf16.msra.mxu0 %v7966
        %8685 = vmatpush.bf16.msra.mxu0 %v7958
        %8686 = vmatpush.bf16.msra.mxu0 %v7950
        %8687 = vmatpush.bf16.msra.mxu0 %v7942
        %8688 = vmatpush.bf16.msra.mxu0 %v7934
        %8689 = vmatmul.bf16.gmra.mxu0 %v6710
        %v8690 = vpop.f32.mrf.mxu0
        %v8691 = vadd.f32 %v8677, %v8690
        %v8692 = vpop.f32.mrf.mxu0
        %v8693 = vadd.f32 %v8679, %v8692
        %8694 = vdwg.mxu0
        %v8695 = vadd.f32 %v6691, %v8299
        %v8696 = vadd.f32 %v6692, %v8355
        %v8697 = vadd.f32 %v6693, %v8411
        %v8698 = vadd.f32 %v6694, %v8467
        %v8699 = vadd.f32 %v6695, %v8523
        %v8700 = vadd.f32 %v6696, %v8579
        %v8701 = vadd.f32 %v6697, %v8635
        %v8702 = vadd.f32 %v6698, %v8691
        %v8703 = vadd.f32 %v6699, %v8301
        %v8704 = vadd.f32 %v6700, %v8357
        %v8705 = vadd.f32 %v6701, %v8413
        %v8706 = vadd.f32 %v6702, %v8469
        %v8707 = vadd.f32 %v6703, %v8525
        %v8708 = vadd.f32 %v6704, %v8581
        %v8709 = vadd.f32 %v6705, %v8637
        %v8710 = vadd.f32 %v6706, %v8693
        %8711 = vst [vmem:[#allocation2] sm:$0xff] %v8695
        %8712 = vst [vmem:[#allocation2 + $0x8] sm:$0xff] %v8696
        %8713 = vst [vmem:[#allocation2 + $0x10] sm:$0xff] %v8697
        %8714 = vst [vmem:[#allocation2 + $0x18] sm:$0xff] %v8698
        %8715 = vst [vmem:[#allocation2 + $0x20] sm:$0xff] %v8699
        %8716 = vst [vmem:[#allocation2 + $0x28] sm:$0xff] %v8700
        %8717 = vst [vmem:[#allocation2 + $0x30] sm:$0xff] %v8701
        %8718 = vst [vmem:[#allocation2 + $0x38] sm:$0xff] %v8702
        %8719 = vst [vmem:[#allocation2 + $0x40] sm:$0xff] %v8703
        %8720 = vst [vmem:[#allocation2 + $0x48] sm:$0xff] %v8704
        %8721 = vst [vmem:[#allocation2 + $0x50] sm:$0xff] %v8705
        %8722 = vst [vmem:[#allocation2 + $0x58] sm:$0xff] %v8706
        %8723 = vst [vmem:[#allocation2 + $0x60] sm:$0xff] %v8707
        %8724 = vst [vmem:[#allocation2 + $0x68] sm:$0xff] %v8708
        %8725 = vst [vmem:[#allocation2 + $0x70] sm:$0xff] %v8709
        %8726 = vst [vmem:[#allocation2 + $0x78] sm:$0xff] %v8710
        %p8727 = scmp.eq.s32.totalorder %s32, 1
        // Predicated region
        $region105: #{tpu_custom_call.1} parent=59 // pred_check
          %p8728 = pneg %p8727
        $region106: #{tpu_custom_call.1} parent=59 // pred_check_branch
          %8730 = sbr.rel (%p8728) target = $region108
        $region107: #{tpu_custom_call.1} parent=59 // pred_region
          %v8731 = vld [vmem:[#allocation2] sm:$0xff]
          %v8732 = vld [vmem:[#allocation2 + $0x8] sm:$0xff]
          %v8733 = vld [vmem:[#allocation2 + $0x10] sm:$0xff]
          %v8734 = vld [vmem:[#allocation2 + $0x18] sm:$0xff]
          %v8735 = vld [vmem:[#allocation2 + $0x20] sm:$0xff]
          %v8736 = vld [vmem:[#allocation2 + $0x28] sm:$0xff]
          %v8737 = vld [vmem:[#allocation2 + $0x30] sm:$0xff]
          %v8738 = vld [vmem:[#allocation2 + $0x38] sm:$0xff]
          %v8739 = vld [vmem:[#allocation2 + $0x40] sm:$0xff]
          %v8740 = vld [vmem:[#allocation2 + $0x48] sm:$0xff]
          %v8741 = vld [vmem:[#allocation2 + $0x50] sm:$0xff]
          %v8742 = vld [vmem:[#allocation2 + $0x58] sm:$0xff]
          %v8743 = vld [vmem:[#allocation2 + $0x60] sm:$0xff]
          %v8744 = vld [vmem:[#allocation2 + $0x68] sm:$0xff]
          %v8745 = vld [vmem:[#allocation2 + $0x70] sm:$0xff]
          %v8746 = vld [vmem:[#allocation2 + $0x78] sm:$0xff]
          %v8747 = vld [vmem:[#allocation11] sm:$0xff]
          %v8749 = vperm.slane %v8747, 0
          %v8750 = vperm.slane %v8747, 1
          %v8751 = vperm.slane %v8747, 2
          %v8752 = vperm.slane %v8747, 3
          %v8753 = vperm.slane %v8747, 4
          %v8754 = vperm.slane %v8747, 5
          %v8755 = vperm.slane %v8747, 6
          %v8756 = vperm.slane %v8747, 7
          %v8765 = vadd.f32 %v8731, %v8749
          %v8766 = vadd.f32 %v8732, %v8750
          %v8767 = vadd.f32 %v8733, %v8751
          %v8768 = vadd.f32 %v8734, %v8752
          %v8769 = vadd.f32 %v8735, %v8753
          %v8770 = vadd.f32 %v8736, %v8754
          %v8771 = vadd.f32 %v8737, %v8755
          %v8772 = vadd.f32 %v8738, %v8756
          %v8773 = vadd.f32 %v8739, %v8749
          %v8774 = vadd.f32 %v8740, %v8750
          %v8775 = vadd.f32 %v8741, %v8751
          %v8776 = vadd.f32 %v8742, %v8752
          %v8777 = vadd.f32 %v8743, %v8753
          %v8778 = vadd.f32 %v8744, %v8754
          %v8779 = vadd.f32 %v8745, %v8755
          %v8780 = vadd.f32 %v8746, %v8756
          %v8781 = vmax.f32 %v8765, 0.0
          %v8782 = vmax.f32 %v8766, 0.0
          %v8783 = vmax.f32 %v8767, 0.0
          %v8784 = vmax.f32 %v8768, 0.0
          %v8785 = vmax.f32 %v8769, 0.0
          %v8786 = vmax.f32 %v8770, 0.0
          %v8787 = vmax.f32 %v8771, 0.0
          %v8788 = vmax.f32 %v8772, 0.0
          %v8789 = vmax.f32 %v8773, 0.0
          %v8790 = vmax.f32 %v8774, 0.0
          %v8791 = vmax.f32 %v8775, 0.0
          %v8792 = vmax.f32 %v8776, 0.0
          %v8793 = vmax.f32 %v8777, 0.0
          %v8794 = vmax.f32 %v8778, 0.0
          %v8795 = vmax.f32 %v8779, 0.0
          %v8796 = vmax.f32 %v8780, 0.0
          %v8797 = vld [vmem:[#allocation12] sm:$0xff]
          %v8798 = vld [vmem:[#allocation14] sm:$0xff]
          %v8799 = vld [vmem:[#allocation15] sm:$0xff]
          %v8800 = vld [vmem:[#allocation15 + $0x8] sm:$0xff]
          %v8801 = vld [vmem:[#allocation15 + $0x10] sm:$0xff]
          %v8802 = vld [vmem:[#allocation15 + $0x18] sm:$0xff]
          %v8803 = vld [vmem:[#allocation15 + $0x20] sm:$0xff]
          %v8804 = vld [vmem:[#allocation15 + $0x28] sm:$0xff]
          %v8805 = vld [vmem:[#allocation15 + $0x30] sm:$0xff]
          %v8806 = vld [vmem:[#allocation15 + $0x38] sm:$0xff]
          %v8807 = vld [vmem:[#allocation15 + $0x40] sm:$0xff]
          %v8808 = vld [vmem:[#allocation15 + $0x48] sm:$0xff]
          %v8809 = vld [vmem:[#allocation15 + $0x50] sm:$0xff]
          %v8810 = vld [vmem:[#allocation15 + $0x58] sm:$0xff]
          %v8811 = vld [vmem:[#allocation15 + $0x60] sm:$0xff]
          %v8812 = vld [vmem:[#allocation15 + $0x68] sm:$0xff]
          %v8813 = vld [vmem:[#allocation15 + $0x70] sm:$0xff]
          %v8814 = vld [vmem:[#allocation15 + $0x78] sm:$0xff]
          %v8816 = vperm.slane %v8798, 0
          %v8817 = vperm.slane %v8798, 1
          %v8818 = vperm.slane %v8798, 2
          %v8819 = vperm.slane %v8798, 3
          %v8820 = vperm.slane %v8798, 4
          %v8821 = vperm.slane %v8798, 5
          %v8822 = vperm.slane %v8798, 6
          %v8823 = vperm.slane %v8798, 7
          %v8832 = vmul.f32 %v8816, %v8799
          %v8833 = vmul.f32 %v8817, %v8800
          %v8834 = vmul.f32 %v8818, %v8801
          %v8835 = vmul.f32 %v8819, %v8802
          %v8836 = vmul.f32 %v8820, %v8803
          %v8837 = vmul.f32 %v8821, %v8804
          %v8838 = vmul.f32 %v8822, %v8805
          %v8839 = vmul.f32 %v8823, %v8806
          %v8840 = vmul.f32 %v8816, %v8807
          %v8841 = vmul.f32 %v8817, %v8808
          %v8842 = vmul.f32 %v8818, %v8809
          %v8843 = vmul.f32 %v8819, %v8810
          %v8844 = vmul.f32 %v8820, %v8811
          %v8845 = vmul.f32 %v8821, %v8812
          %v8846 = vmul.f32 %v8822, %v8813
          %v8847 = vmul.f32 %v8823, %v8814
          %v8849 = vperm.slane %v8797, 0
          %v8850 = vperm.slane %v8797, 1
          %v8851 = vperm.slane %v8797, 2
          %v8852 = vperm.slane %v8797, 3
          %v8853 = vperm.slane %v8797, 4
          %v8854 = vperm.slane %v8797, 5
          %v8855 = vperm.slane %v8797, 6
          %v8856 = vperm.slane %v8797, 7
          %v8865 = vadd.f32 %v8849, %v8832
          %v8866 = vadd.f32 %v8850, %v8833
          %v8867 = vadd.f32 %v8851, %v8834
          %v8868 = vadd.f32 %v8852, %v8835
          %v8869 = vadd.f32 %v8853, %v8836
          %v8870 = vadd.f32 %v8854, %v8837
          %v8871 = vadd.f32 %v8855, %v8838
          %v8872 = vadd.f32 %v8856, %v8839
          %v8873 = vadd.f32 %v8849, %v8840
          %v8874 = vadd.f32 %v8850, %v8841
          %v8875 = vadd.f32 %v8851, %v8842
          %v8876 = vadd.f32 %v8852, %v8843
          %v8877 = vadd.f32 %v8853, %v8844
          %v8878 = vadd.f32 %v8854, %v8845
          %v8879 = vadd.f32 %v8855, %v8846
          %v8880 = vadd.f32 %v8856, %v8847
          %v8881 = vmul.f32 %v8781, %v8865
          %v8882 = vmul.f32 %v8782, %v8866
          %v8883 = vmul.f32 %v8783, %v8867
          %v8884 = vmul.f32 %v8784, %v8868
          %v8885 = vmul.f32 %v8785, %v8869
          %v8886 = vmul.f32 %v8786, %v8870
          %v8887 = vmul.f32 %v8787, %v8871
          %v8888 = vmul.f32 %v8788, %v8872
          %v8889 = vmul.f32 %v8789, %v8873
          %v8890 = vmul.f32 %v8790, %v8874
          %v8891 = vmul.f32 %v8791, %v8875
          %v8892 = vmul.f32 %v8792, %v8876
          %v8893 = vmul.f32 %v8793, %v8877
          %v8894 = vmul.f32 %v8794, %v8878
          %v8895 = vmul.f32 %v8795, %v8879
          %v8896 = vmul.f32 %v8796, %v8880
          %v8897 = vpack.c.bf16 %v8889, %v8881
          %v8898 = vpack.c.bf16 %v8890, %v8882
          %v8899 = vpack.c.bf16 %v8891, %v8883
          %v8900 = vpack.c.bf16 %v8892, %v8884
          %v8901 = vpack.c.bf16 %v8893, %v8885
          %v8902 = vpack.c.bf16 %v8894, %v8886
          %v8903 = vpack.c.bf16 %v8895, %v8887
          %v8904 = vpack.c.bf16 %v8896, %v8888
          %v8905 = vld [vmem:[#allocation17] sm:$0xf]
          %v8906 = vld [vmem:[#allocation17 + $0x4] sm:$0xf]
          %v8907 = vld [vmem:[#allocation17 + $0x8] sm:$0xf]
          %v8908 = vld [vmem:[#allocation17 + $0xc] sm:$0xf]
          %v8909 = vld [vmem:[#allocation17 + $0x10] sm:$0xf]
          %v8910 = vld [vmem:[#allocation17 + $0x14] sm:$0xf]
          %v8911 = vld [vmem:[#allocation17 + $0x18] sm:$0xf]
          %v8912 = vld [vmem:[#allocation17 + $0x1c] sm:$0xf]
          %v8913 = vld [vmem:[#allocation17 + $0x20] sm:$0xf]
          %v8914 = vld [vmem:[#allocation17 + $0x24] sm:$0xf]
          %v8915 = vld [vmem:[#allocation17 + $0x28] sm:$0xf]
          %v8916 = vld [vmem:[#allocation17 + $0x2c] sm:$0xf]
          %v8917 = vld [vmem:[#allocation17 + $0x30] sm:$0xf]
          %v8918 = vld [vmem:[#allocation17 + $0x34] sm:$0xf]
          %v8919 = vld [vmem:[#allocation17 + $0x38] sm:$0xf]
          %v8920 = vld [vmem:[#allocation17 + $0x3c] sm:$0xf]
          %v8921 = vld [vmem:[#allocation17 + $0x40] sm:$0xf]
          %v8922 = vld [vmem:[#allocation17 + $0x44] sm:$0xf]
          %v8923 = vld [vmem:[#allocation17 + $0x48] sm:$0xf]
          %v8924 = vld [vmem:[#allocation17 + $0x4c] sm:$0xf]
          %v8925 = vld [vmem:[#allocation17 + $0x50] sm:$0xf]
          %v8926 = vld [vmem:[#allocation17 + $0x54] sm:$0xf]
          %v8927 = vld [vmem:[#allocation17 + $0x58] sm:$0xf]
          %v8928 = vld [vmem:[#allocation17 + $0x5c] sm:$0xf]
          %v8929 = vld [vmem:[#allocation17 + $0x60] sm:$0xf]
          %v8930 = vld [vmem:[#allocation17 + $0x64] sm:$0xf]
          %v8931 = vld [vmem:[#allocation17 + $0x68] sm:$0xf]
          %v8932 = vld [vmem:[#allocation17 + $0x6c] sm:$0xf]
          %v8933 = vld [vmem:[#allocation17 + $0x70] sm:$0xf]
          %v8934 = vld [vmem:[#allocation17 + $0x74] sm:$0xf]
          %v8935 = vld [vmem:[#allocation17 + $0x78] sm:$0xf]
          %v8936 = vld [vmem:[#allocation17 + $0x7c] sm:$0xf]
          %v8937 = vld [vmem:[#allocation17 + $0x80] sm:$0xf]
          %v8938 = vld [vmem:[#allocation17 + $0x84] sm:$0xf]
          %v8939 = vld [vmem:[#allocation17 + $0x88] sm:$0xf]
          %v8940 = vld [vmem:[#allocation17 + $0x8c] sm:$0xf]
          %v8941 = vld [vmem:[#allocation17 + $0x90] sm:$0xf]
          %v8942 = vld [vmem:[#allocation17 + $0x94] sm:$0xf]
          %v8943 = vld [vmem:[#allocation17 + $0x98] sm:$0xf]
          %v8944 = vld [vmem:[#allocation17 + $0x9c] sm:$0xf]
          %v8945 = vld [vmem:[#allocation17 + $0xa0] sm:$0xf]
          %v8946 = vld [vmem:[#allocation17 + $0xa4] sm:$0xf]
          %v8947 = vld [vmem:[#allocation17 + $0xa8] sm:$0xf]
          %v8948 = vld [vmem:[#allocation17 + $0xac] sm:$0xf]
          %v8949 = vld [vmem:[#allocation17 + $0xb0] sm:$0xf]
          %v8950 = vld [vmem:[#allocation17 + $0xb4] sm:$0xf]
          %v8951 = vld [vmem:[#allocation17 + $0xb8] sm:$0xf]
          %v8952 = vld [vmem:[#allocation17 + $0xbc] sm:$0xf]
          %v8953 = vld [vmem:[#allocation17 + $0xc0] sm:$0xf]
          %v8954 = vld [vmem:[#allocation17 + $0xc4] sm:$0xf]
          %v8955 = vld [vmem:[#allocation17 + $0xc8] sm:$0xf]
          %v8956 = vld [vmem:[#allocation17 + $0xcc] sm:$0xf]
          %v8957 = vld [vmem:[#allocation17 + $0xd0] sm:$0xf]
          %v8958 = vld [vmem:[#allocation17 + $0xd4] sm:$0xf]
          %v8959 = vld [vmem:[#allocation17 + $0xd8] sm:$0xf]
          %v8960 = vld [vmem:[#allocation17 + $0xdc] sm:$0xf]
          %v8961 = vld [vmem:[#allocation17 + $0xe0] sm:$0xf]
          %v8962 = vld [vmem:[#allocation17 + $0xe4] sm:$0xf]
          %v8963 = vld [vmem:[#allocation17 + $0xe8] sm:$0xf]
          %v8964 = vld [vmem:[#allocation17 + $0xec] sm:$0xf]
          %v8965 = vld [vmem:[#allocation17 + $0xf0] sm:$0xf]
          %v8966 = vld [vmem:[#allocation17 + $0xf4] sm:$0xf]
          %v8967 = vld [vmem:[#allocation17 + $0xf8] sm:$0xf]
          %v8968 = vld [vmem:[#allocation17 + $0xfc] sm:$0xf]
          %v8969 = vld [vmem:[#allocation17 + $0x100] sm:$0xf]
          %v8970 = vld [vmem:[#allocation17 + $0x104] sm:$0xf]
          %v8971 = vld [vmem:[#allocation17 + $0x108] sm:$0xf]
          %v8972 = vld [vmem:[#allocation17 + $0x10c] sm:$0xf]
          %v8973 = vld [vmem:[#allocation17 + $0x110] sm:$0xf]
          %v8974 = vld [vmem:[#allocation17 + $0x114] sm:$0xf]
          %v8975 = vld [vmem:[#allocation17 + $0x118] sm:$0xf]
          %v8976 = vld [vmem:[#allocation17 + $0x11c] sm:$0xf]
          %v8977 = vld [vmem:[#allocation17 + $0x120] sm:$0xf]
          %v8978 = vld [vmem:[#allocation17 + $0x124] sm:$0xf]
          %v8979 = vld [vmem:[#allocation17 + $0x128] sm:$0xf]
          %v8980 = vld [vmem:[#allocation17 + $0x12c] sm:$0xf]
          %v8981 = vld [vmem:[#allocation17 + $0x130] sm:$0xf]
          %v8982 = vld [vmem:[#allocation17 + $0x134] sm:$0xf]
          %v8983 = vld [vmem:[#allocation17 + $0x138] sm:$0xf]
          %v8984 = vld [vmem:[#allocation17 + $0x13c] sm:$0xf]
          %v8985 = vld [vmem:[#allocation17 + $0x140] sm:$0xf]
          %v8986 = vld [vmem:[#allocation17 + $0x144] sm:$0xf]
          %v8987 = vld [vmem:[#allocation17 + $0x148] sm:$0xf]
          %v8988 = vld [vmem:[#allocation17 + $0x14c] sm:$0xf]
          %v8989 = vld [vmem:[#allocation17 + $0x150] sm:$0xf]
          %v8990 = vld [vmem:[#allocation17 + $0x154] sm:$0xf]
          %v8991 = vld [vmem:[#allocation17 + $0x158] sm:$0xf]
          %v8992 = vld [vmem:[#allocation17 + $0x15c] sm:$0xf]
          %v8993 = vld [vmem:[#allocation17 + $0x160] sm:$0xf]
          %v8994 = vld [vmem:[#allocation17 + $0x164] sm:$0xf]
          %v8995 = vld [vmem:[#allocation17 + $0x168] sm:$0xf]
          %v8996 = vld [vmem:[#allocation17 + $0x16c] sm:$0xf]
          %v8997 = vld [vmem:[#allocation17 + $0x170] sm:$0xf]
          %v8998 = vld [vmem:[#allocation17 + $0x174] sm:$0xf]
          %v8999 = vld [vmem:[#allocation17 + $0x178] sm:$0xf]
          %v9000 = vld [vmem:[#allocation17 + $0x17c] sm:$0xf]
          %v9001 = vld [vmem:[#allocation17 + $0x180] sm:$0xf]
          %v9002 = vld [vmem:[#allocation17 + $0x184] sm:$0xf]
          %v9003 = vld [vmem:[#allocation17 + $0x188] sm:$0xf]
          %v9004 = vld [vmem:[#allocation17 + $0x18c] sm:$0xf]
          %v9005 = vld [vmem:[#allocation17 + $0x190] sm:$0xf]
          %v9006 = vld [vmem:[#allocation17 + $0x194] sm:$0xf]
          %v9007 = vld [vmem:[#allocation17 + $0x198] sm:$0xf]
          %v9008 = vld [vmem:[#allocation17 + $0x19c] sm:$0xf]
          %v9009 = vld [vmem:[#allocation17 + $0x1a0] sm:$0xf]
          %v9010 = vld [vmem:[#allocation17 + $0x1a4] sm:$0xf]
          %v9011 = vld [vmem:[#allocation17 + $0x1a8] sm:$0xf]
          %v9012 = vld [vmem:[#allocation17 + $0x1ac] sm:$0xf]
          %v9013 = vld [vmem:[#allocation17 + $0x1b0] sm:$0xf]
          %v9014 = vld [vmem:[#allocation17 + $0x1b4] sm:$0xf]
          %v9015 = vld [vmem:[#allocation17 + $0x1b8] sm:$0xf]
          %v9016 = vld [vmem:[#allocation17 + $0x1bc] sm:$0xf]
          %v9017 = vld [vmem:[#allocation17 + $0x1c0] sm:$0xf]
          %v9018 = vld [vmem:[#allocation17 + $0x1c4] sm:$0xf]
          %v9019 = vld [vmem:[#allocation17 + $0x1c8] sm:$0xf]
          %v9020 = vld [vmem:[#allocation17 + $0x1cc] sm:$0xf]
          %v9021 = vld [vmem:[#allocation17 + $0x1d0] sm:$0xf]
          %v9022 = vld [vmem:[#allocation17 + $0x1d4] sm:$0xf]
          %v9023 = vld [vmem:[#allocation17 + $0x1d8] sm:$0xf]
          %v9024 = vld [vmem:[#allocation17 + $0x1dc] sm:$0xf]
          %v9025 = vld [vmem:[#allocation17 + $0x1e0] sm:$0xf]
          %v9026 = vld [vmem:[#allocation17 + $0x1e4] sm:$0xf]
          %v9027 = vld [vmem:[#allocation17 + $0x1e8] sm:$0xf]
          %v9028 = vld [vmem:[#allocation17 + $0x1ec] sm:$0xf]
          %v9029 = vld [vmem:[#allocation17 + $0x1f0] sm:$0xf]
          %v9030 = vld [vmem:[#allocation17 + $0x1f4] sm:$0xf]
          %v9031 = vld [vmem:[#allocation17 + $0x1f8] sm:$0xf]
          %v9032 = vld [vmem:[#allocation17 + $0x1fc] sm:$0xf]
          %v9033 = vld [vmem:[#allocation18] sm:$0x1]
          %v9035 = vperm.slane %v9033, 0
          %v9165 = vunpack.c.l.b16 %v8905
          %v9166 = vunpack.c.l.b16 %v8906
          %v9167 = vunpack.c.l.b16 %v8907
          %v9168 = vunpack.c.l.b16 %v8908
          %v9169 = vunpack.c.l.b16 %v8909
          %v9170 = vunpack.c.l.b16 %v8910
          %v9171 = vunpack.c.l.b16 %v8911
          %v9172 = vunpack.c.l.b16 %v8912
          %v9173 = vunpack.c.l.b16 %v8913
          %v9174 = vunpack.c.l.b16 %v8914
          %v9175 = vunpack.c.l.b16 %v8915
          %v9176 = vunpack.c.l.b16 %v8916
          %v9177 = vunpack.c.l.b16 %v8917
          %v9178 = vunpack.c.l.b16 %v8918
          %v9179 = vunpack.c.l.b16 %v8919
          %v9180 = vunpack.c.l.b16 %v8920
          %v9181 = vunpack.c.l.b16 %v8921
          %v9182 = vunpack.c.l.b16 %v8922
          %v9183 = vunpack.c.l.b16 %v8923
          %v9184 = vunpack.c.l.b16 %v8924
          %v9185 = vunpack.c.l.b16 %v8925
          %v9186 = vunpack.c.l.b16 %v8926
          %v9187 = vunpack.c.l.b16 %v8927
          %v9188 = vunpack.c.l.b16 %v8928
          %v9189 = vunpack.c.l.b16 %v8929
          %v9190 = vunpack.c.l.b16 %v8930
          %v9191 = vunpack.c.l.b16 %v8931
          %v9192 = vunpack.c.l.b16 %v8932
          %v9193 = vunpack.c.l.b16 %v8933
          %v9194 = vunpack.c.l.b16 %v8934
          %v9195 = vunpack.c.l.b16 %v8935
          %v9196 = vunpack.c.l.b16 %v8936
          %v9197 = vunpack.c.l.b16 %v8937
          %v9198 = vunpack.c.l.b16 %v8938
          %v9199 = vunpack.c.l.b16 %v8939
          %v9200 = vunpack.c.l.b16 %v8940
          %v9201 = vunpack.c.l.b16 %v8941
          %v9202 = vunpack.c.l.b16 %v8942
          %v9203 = vunpack.c.l.b16 %v8943
          %v9204 = vunpack.c.l.b16 %v8944
          %v9205 = vunpack.c.l.b16 %v8945
          %v9206 = vunpack.c.l.b16 %v8946
          %v9207 = vunpack.c.l.b16 %v8947
          %v9208 = vunpack.c.l.b16 %v8948
          %v9209 = vunpack.c.l.b16 %v8949
          %v9210 = vunpack.c.l.b16 %v8950
          %v9211 = vunpack.c.l.b16 %v8951
          %v9212 = vunpack.c.l.b16 %v8952
          %v9213 = vunpack.c.l.b16 %v8953
          %v9214 = vunpack.c.l.b16 %v8954
          %v9215 = vunpack.c.l.b16 %v8955
          %v9216 = vunpack.c.l.b16 %v8956
          %v9217 = vunpack.c.l.b16 %v8957
          %v9218 = vunpack.c.l.b16 %v8958
          %v9219 = vunpack.c.l.b16 %v8959
          %v9220 = vunpack.c.l.b16 %v8960
          %v9221 = vunpack.c.l.b16 %v8961
          %v9222 = vunpack.c.l.b16 %v8962
          %v9223 = vunpack.c.l.b16 %v8963
          %v9224 = vunpack.c.l.b16 %v8964
          %v9225 = vunpack.c.l.b16 %v8965
          %v9226 = vunpack.c.l.b16 %v8966
          %v9227 = vunpack.c.l.b16 %v8967
          %v9228 = vunpack.c.l.b16 %v8968
          %v9229 = vunpack.c.l.b16 %v8969
          %v9230 = vunpack.c.l.b16 %v8970
          %v9231 = vunpack.c.l.b16 %v8971
          %v9232 = vunpack.c.l.b16 %v8972
          %v9233 = vunpack.c.l.b16 %v8973
          %v9234 = vunpack.c.l.b16 %v8974
          %v9235 = vunpack.c.l.b16 %v8975
          %v9236 = vunpack.c.l.b16 %v8976
          %v9237 = vunpack.c.l.b16 %v8977
          %v9238 = vunpack.c.l.b16 %v8978
          %v9239 = vunpack.c.l.b16 %v8979
          %v9240 = vunpack.c.l.b16 %v8980
          %v9241 = vunpack.c.l.b16 %v8981
          %v9242 = vunpack.c.l.b16 %v8982
          %v9243 = vunpack.c.l.b16 %v8983
          %v9244 = vunpack.c.l.b16 %v8984
          %v9245 = vunpack.c.l.b16 %v8985
          %v9246 = vunpack.c.l.b16 %v8986
          %v9247 = vunpack.c.l.b16 %v8987
          %v9248 = vunpack.c.l.b16 %v8988
          %v9249 = vunpack.c.l.b16 %v8989
          %v9250 = vunpack.c.l.b16 %v8990
          %v9251 = vunpack.c.l.b16 %v8991
          %v9252 = vunpack.c.l.b16 %v8992
          %v9253 = vunpack.c.l.b16 %v8993
          %v9254 = vunpack.c.l.b16 %v8994
          %v9255 = vunpack.c.l.b16 %v8995
          %v9256 = vunpack.c.l.b16 %v8996
          %v9257 = vunpack.c.l.b16 %v8997
          %v9258 = vunpack.c.l.b16 %v8998
          %v9259 = vunpack.c.l.b16 %v8999
          %v9260 = vunpack.c.l.b16 %v9000
          %v9261 = vunpack.c.l.b16 %v9001
          %v9262 = vunpack.c.l.b16 %v9002
          %v9263 = vunpack.c.l.b16 %v9003
          %v9264 = vunpack.c.l.b16 %v9004
          %v9265 = vunpack.c.l.b16 %v9005
          %v9266 = vunpack.c.l.b16 %v9006
          %v9267 = vunpack.c.l.b16 %v9007
          %v9268 = vunpack.c.l.b16 %v9008
          %v9269 = vunpack.c.l.b16 %v9009
          %v9270 = vunpack.c.l.b16 %v9010
          %v9271 = vunpack.c.l.b16 %v9011
          %v9272 = vunpack.c.l.b16 %v9012
          %v9273 = vunpack.c.l.b16 %v9013
          %v9274 = vunpack.c.l.b16 %v9014
          %v9275 = vunpack.c.l.b16 %v9015
          %v9276 = vunpack.c.l.b16 %v9016
          %v9277 = vunpack.c.l.b16 %v9017
          %v9278 = vunpack.c.l.b16 %v9018
          %v9279 = vunpack.c.l.b16 %v9019
          %v9280 = vunpack.c.l.b16 %v9020
          %v9281 = vunpack.c.l.b16 %v9021
          %v9282 = vunpack.c.l.b16 %v9022
          %v9283 = vunpack.c.l.b16 %v9023
          %v9284 = vunpack.c.l.b16 %v9024
          %v9285 = vunpack.c.l.b16 %v9025
          %v9286 = vunpack.c.l.b16 %v9026
          %v9287 = vunpack.c.l.b16 %v9027
          %v9288 = vunpack.c.l.b16 %v9028
          %v9289 = vunpack.c.l.b16 %v9029
          %v9290 = vunpack.c.l.b16 %v9030
          %v9291 = vunpack.c.l.b16 %v9031
          %v9292 = vunpack.c.l.b16 %v9032
          %v9293 = vpack.c.b16 %v9166, %v9165
          %v9294 = vpack.c.b16 %v9168, %v9167
          %v9295 = vpack.c.b16 %v9170, %v9169
          %v9296 = vpack.c.b16 %v9172, %v9171
          %v9297 = vpack.c.b16 %v9174, %v9173
          %v9298 = vpack.c.b16 %v9176, %v9175
          %v9299 = vpack.c.b16 %v9178, %v9177
          %v9300 = vpack.c.b16 %v9180, %v9179
          %v9301 = vpack.c.b16 %v9182, %v9181
          %v9302 = vpack.c.b16 %v9184, %v9183
          %v9303 = vpack.c.b16 %v9186, %v9185
          %v9304 = vpack.c.b16 %v9188, %v9187
          %v9305 = vpack.c.b16 %v9190, %v9189
          %v9306 = vpack.c.b16 %v9192, %v9191
          %v9307 = vpack.c.b16 %v9194, %v9193
          %v9308 = vpack.c.b16 %v9196, %v9195
          %v9309 = vpack.c.b16 %v9198, %v9197
          %v9310 = vpack.c.b16 %v9200, %v9199
          %v9311 = vpack.c.b16 %v9202, %v9201
          %v9312 = vpack.c.b16 %v9204, %v9203
          %v9313 = vpack.c.b16 %v9206, %v9205
          %v9314 = vpack.c.b16 %v9208, %v9207
          %v9315 = vpack.c.b16 %v9210, %v9209
          %v9316 = vpack.c.b16 %v9212, %v9211
          %v9317 = vpack.c.b16 %v9214, %v9213
          %v9318 = vpack.c.b16 %v9216, %v9215
          %v9319 = vpack.c.b16 %v9218, %v9217
          %v9320 = vpack.c.b16 %v9220, %v9219
          %v9321 = vpack.c.b16 %v9222, %v9221
          %v9322 = vpack.c.b16 %v9224, %v9223
          %v9323 = vpack.c.b16 %v9226, %v9225
          %v9324 = vpack.c.b16 %v9228, %v9227
          %v9325 = vpack.c.b16 %v9230, %v9229
          %v9326 = vpack.c.b16 %v9232, %v9231
          %v9327 = vpack.c.b16 %v9234, %v9233
          %v9328 = vpack.c.b16 %v9236, %v9235
          %v9329 = vpack.c.b16 %v9238, %v9237
          %v9330 = vpack.c.b16 %v9240, %v9239
          %v9331 = vpack.c.b16 %v9242, %v9241
          %v9332 = vpack.c.b16 %v9244, %v9243
          %v9333 = vpack.c.b16 %v9246, %v9245
          %v9334 = vpack.c.b16 %v9248, %v9247
          %v9335 = vpack.c.b16 %v9250, %v9249
          %v9336 = vpack.c.b16 %v9252, %v9251
          %v9337 = vpack.c.b16 %v9254, %v9253
          %v9338 = vpack.c.b16 %v9256, %v9255
          %v9339 = vpack.c.b16 %v9258, %v9257
          %v9340 = vpack.c.b16 %v9260, %v9259
          %v9341 = vpack.c.b16 %v9262, %v9261
          %v9342 = vpack.c.b16 %v9264, %v9263
          %v9343 = vpack.c.b16 %v9266, %v9265
          %v9344 = vpack.c.b16 %v9268, %v9267
          %v9345 = vpack.c.b16 %v9270, %v9269
          %v9346 = vpack.c.b16 %v9272, %v9271
          %v9347 = vpack.c.b16 %v9274, %v9273
          %v9348 = vpack.c.b16 %v9276, %v9275
          %v9349 = vpack.c.b16 %v9278, %v9277
          %v9350 = vpack.c.b16 %v9280, %v9279
          %v9351 = vpack.c.b16 %v9282, %v9281
          %v9352 = vpack.c.b16 %v9284, %v9283
          %v9353 = vpack.c.b16 %v9286, %v9285
          %v9354 = vpack.c.b16 %v9288, %v9287
          %v9355 = vpack.c.b16 %v9290, %v9289
          %v9356 = vpack.c.b16 %v9292, %v9291
          %9421 = vmatpush.bf16.msra.mxu0 %v9300
          %9422 = vmatpush.bf16.msra.mxu0 %v9299
          %9423 = vmatpush.bf16.msra.mxu0 %v9298
          %9424 = vmatpush.bf16.msra.mxu0 %v9297
          %9425 = vmatpush.bf16.msra.mxu0 %v9296
          %9426 = vmatpush.bf16.msra.mxu0 %v9295
          %9427 = vmatpush.bf16.msra.mxu0 %v9294
          %9428 = vmatpush.bf16.msra.mxu0 %v9293
          %9429 = vmatmul.bf16.gmra.mxu0 %v8897
          %v9430 = vpop.f32.mrf.mxu0
          %v9431 = vadd.f32 %v9035, %v9430
          %v9432 = vpop.f32.mrf.mxu0
          %v9433 = vadd.f32 %v9035, %v9432
          %9434 = vdwg.mxu0
          %9435 = vmatpush.bf16.msra.mxu0 %v9308
          %9436 = vmatpush.bf16.msra.mxu0 %v9307
          %9437 = vmatpush.bf16.msra.mxu0 %v9306
          %9438 = vmatpush.bf16.msra.mxu0 %v9305
          %9439 = vmatpush.bf16.msra.mxu0 %v9304
          %9440 = vmatpush.bf16.msra.mxu0 %v9303
          %9441 = vmatpush.bf16.msra.mxu0 %v9302
          %9442 = vmatpush.bf16.msra.mxu0 %v9301
          %9443 = vmatmul.bf16.gmra.mxu0 %v8898
          %v9444 = vpop.f32.mrf.mxu0
          %v9445 = vadd.f32 %v9431, %v9444
          %v9446 = vpop.f32.mrf.mxu0
          %v9447 = vadd.f32 %v9433, %v9446
          %9448 = vdwg.mxu0
          %9449 = vmatpush.bf16.msra.mxu0 %v9316
          %9450 = vmatpush.bf16.msra.mxu0 %v9315
          %9451 = vmatpush.bf16.msra.mxu0 %v9314
          %9452 = vmatpush.bf16.msra.mxu0 %v9313
          %9453 = vmatpush.bf16.msra.mxu0 %v9312
          %9454 = vmatpush.bf16.msra.mxu0 %v9311
          %9455 = vmatpush.bf16.msra.mxu0 %v9310
          %9456 = vmatpush.bf16.msra.mxu0 %v9309
          %9457 = vmatmul.bf16.gmra.mxu0 %v8899
          %v9458 = vpop.f32.mrf.mxu0
          %v9459 = vadd.f32 %v9445, %v9458
          %v9460 = vpop.f32.mrf.mxu0
          %v9461 = vadd.f32 %v9447, %v9460
          %9462 = vdwg.mxu0
          %9463 = vmatpush.bf16.msra.mxu0 %v9324
          %9464 = vmatpush.bf16.msra.mxu0 %v9323
          %9465 = vmatpush.bf16.msra.mxu0 %v9322
          %9466 = vmatpush.bf16.msra.mxu0 %v9321
          %9467 = vmatpush.bf16.msra.mxu0 %v9320
          %9468 = vmatpush.bf16.msra.mxu0 %v9319
          %9469 = vmatpush.bf16.msra.mxu0 %v9318
          %9470 = vmatpush.bf16.msra.mxu0 %v9317
          %9471 = vmatmul.bf16.gmra.mxu0 %v8900
          %v9472 = vpop.f32.mrf.mxu0
          %v9473 = vadd.f32 %v9459, %v9472
          %v9474 = vpop.f32.mrf.mxu0
          %v9475 = vadd.f32 %v9461, %v9474
          %9476 = vdwg.mxu0
          %9477 = vmatpush.bf16.msra.mxu0 %v9332
          %9478 = vmatpush.bf16.msra.mxu0 %v9331
          %9479 = vmatpush.bf16.msra.mxu0 %v9330
          %9480 = vmatpush.bf16.msra.mxu0 %v9329
          %9481 = vmatpush.bf16.msra.mxu0 %v9328
          %9482 = vmatpush.bf16.msra.mxu0 %v9327
          %9483 = vmatpush.bf16.msra.mxu0 %v9326
          %9484 = vmatpush.bf16.msra.mxu0 %v9325
          %9485 = vmatmul.bf16.gmra.mxu0 %v8901
          %v9486 = vpop.f32.mrf.mxu0
          %v9487 = vadd.f32 %v9473, %v9486
          %v9488 = vpop.f32.mrf.mxu0
          %v9489 = vadd.f32 %v9475, %v9488
          %9490 = vdwg.mxu0
          %9491 = vmatpush.bf16.msra.mxu0 %v9340
          %9492 = vmatpush.bf16.msra.mxu0 %v9339
          %9493 = vmatpush.bf16.msra.mxu0 %v9338
          %9494 = vmatpush.bf16.msra.mxu0 %v9337
          %9495 = vmatpush.bf16.msra.mxu0 %v9336
          %9496 = vmatpush.bf16.msra.mxu0 %v9335
          %9497 = vmatpush.bf16.msra.mxu0 %v9334
          %9498 = vmatpush.bf16.msra.mxu0 %v9333
          %9499 = vmatmul.bf16.gmra.mxu0 %v8902
          %v9500 = vpop.f32.mrf.mxu0
          %v9501 = vadd.f32 %v9487, %v9500
          %v9502 = vpop.f32.mrf.mxu0
          %v9503 = vadd.f32 %v9489, %v9502
          %9504 = vdwg.mxu0
          %9505 = vmatpush.bf16.msra.mxu0 %v9348
          %9506 = vmatpush.bf16.msra.mxu0 %v9347
          %9507 = vmatpush.bf16.msra.mxu0 %v9346
          %9508 = vmatpush.bf16.msra.mxu0 %v9345
          %9509 = vmatpush.bf16.msra.mxu0 %v9344
          %9510 = vmatpush.bf16.msra.mxu0 %v9343
          %9511 = vmatpush.bf16.msra.mxu0 %v9342
          %9512 = vmatpush.bf16.msra.mxu0 %v9341
          %9513 = vmatmul.bf16.gmra.mxu0 %v8903
          %v9514 = vpop.f32.mrf.mxu0
          %v9515 = vadd.f32 %v9501, %v9514
          %v9516 = vpop.f32.mrf.mxu0
          %v9517 = vadd.f32 %v9503, %v9516
          %9518 = vdwg.mxu0
          %9519 = vmatpush.bf16.msra.mxu0 %v9356
          %9520 = vmatpush.bf16.msra.mxu0 %v9355
          %9521 = vmatpush.bf16.msra.mxu0 %v9354
          %9522 = vmatpush.bf16.msra.mxu0 %v9353
          %9523 = vmatpush.bf16.msra.mxu0 %v9352
          %9524 = vmatpush.bf16.msra.mxu0 %v9351
          %9525 = vmatpush.bf16.msra.mxu0 %v9350
          %9526 = vmatpush.bf16.msra.mxu0 %v9349
          %9527 = vmatmul.bf16.gmra.mxu0 %v8904
          %v9528 = vpop.f32.mrf.mxu0
          %v9529 = vadd.f32 %v9515, %v9528
          %v9530 = vpop.f32.mrf.mxu0
          %v9531 = vadd.f32 %v9517, %v9530
          %9532 = vdwg.mxu0
          %9533 = vst [vmem:[#allocation20] sm:$0xff] %v9529
          %9534 = vst [vmem:[#allocation20 + $0x8] sm:$0xff] %v9531
        $region108: #{tpu_custom_call.1} parent=59 // pred_fallthru
          _
        // Predicated region
        $region109: #{tpu_custom_call.1} parent=59 // pred_check
          %p9535 = pneg %p270
        $region110: #{tpu_custom_call.1} parent=59 // pred_check_branch
          %9537 = sbr.rel (%p9535) target = $region112
        $region111: #{tpu_custom_call.1} parent=59 // pred_region
          %9539 = vsyncadd [#allocation5], 0
          %s9540 = sshll.u32 [#allocation20], 4
          %s9541 = int_to_ptr.vmem [resolvable:$true] %s9540
          %s9542 = sshll.u32 %s10, 4
          %s9543 = int_to_ptr.hbm [resolvable:$true] %s9542
          %9548 = dma.vmem_to_hbm [thread:$0]  %s9541, 256, %s9543, [#allocation5], 128, 128, 8
        $region112: #{tpu_custom_call.1} parent=59 // pred_fallthru
          _
        // Predicated region
        $region113: #{tpu_custom_call.1} parent=59 // pred_check
          %p9549 = pneg %p270
        $region114: #{tpu_custom_call.1} parent=59 // pred_check_branch
          %9551 = sbr.rel (%p9549) target = $region116
        $region115: #{tpu_custom_call.1} parent=59 // pred_region
          %9553 = dma.done [#allocation5], 256
        $region116: #{tpu_custom_call.1} parent=59 // pred_fallthru
          _
      $region60: #{tpu_custom_call.1} parent=5 // pred_fallthru
        _
      %p9554 = scmp.le.s32.totalorder 2, %s27
      // Predicated region
      $region117: #{tpu_custom_call.1} parent=5 // pred_check
        %p9555 = pneg %p9554
      $region118: #{tpu_custom_call.1} parent=5 // pred_check_branch
        %9557 = sbr.rel (%p9555) target = $region120
      $region119: #{tpu_custom_call.1} parent=5 // pred_region
        %s9558 = ssub.s32 %s27, 2
      $region120: #{tpu_custom_call.1} parent=5 // pred_fallthru
        _
    $region6: #{tpu_custom_call.1} parent=1 // loop_footer
      %s31 = sadd.s32 1, %s27
    $region7: #{tpu_custom_call.1} parent=1 // loop_footer_branch
      %26 = sbr.rel target = $region3
    $region8: #{tpu_custom_call.1} parent=1 // loop_exit
      _
    %9559 = vsyncpa [#allocation4], 1
    %s9560 = scalar_lea.sflag [#allocation4], 1
    %9561 = vsyncpa %s9560, 1
    %9562 = vsyncpa [#allocation7], 1
    %s9563 = scalar_lea.sflag [#allocation7], 1
    %9564 = vsyncpa %s9563, 1
    %9565 = vsyncpa [#allocation10], 1
    %s9566 = scalar_lea.sflag [#allocation10], 1
    %9567 = vsyncpa %s9566, 1
    %9568 = vsyncpa [#allocation13], 1
    %9569 = vsyncpa [#allocation16], 1
    %9570 = vsyncpa [#allocation19], 1
    %9571 = vsyncpa [#allocation5], 1
    %s9572 = scalar_lea.sflag [#allocation5], 1
    %9573 = vsyncpa %s9572, 1

</llo_original>
